<compile_context>
chip_gen: v6e
topology: v6e:2x2x1
jax: 0.10.0
libtpu: 0.0.40
codegen_flags: <defaults>
</compile_context>

<pallas_src>
import math

import jax
import jax.numpy as jnp
import numpy as np
from jax.experimental import pallas as pl
from jax.experimental.pallas import tpu as pltpu


# ----------------------------------------------------------------------------
# Fused kernel
# ----------------------------------------------------------------------------
def _mnist_kernel(x_ref, m1_ref, b1t_ref, m2_ref, b2t_ref,
                  wfc1_ref, bfc1_ref, wfc2_ref, bfc2_ref, o_ref):
    f32 = jnp.float32
    bf16 = jnp.bfloat16
    bt = o_ref.shape[0]                                   # batch tile

    # ---- conv1 (+ fused 2x2 max-pool): 4 pooling-quadrant accumulators ----
    # acc1[2*di+dj] rows = (pooled_row ip in 12, b), lanes = (pooled_col jp in 12, ch in 10)
    acc1 = [jnp.zeros((12 * bt, 120), f32) for _ in range(4)]
    for t in range(6):                                    # t = di + kh (shared x slab)
        base = (t % 2) * 14 + t // 2
        lhs = x_ref[base:base + 12, :, :].reshape(12 * bt, 28)   # bf16, free reshape
        for di in range(2):
            kh = t - di
            if 0 <= kh <= 4:
                for dj in range(2):
                    acc1[2 * di + dj] += jnp.dot(
                        lhs, m1_ref[kh * 2 + dj],
                        preferred_element_type=f32)
    p1 = jnp.maximum(jnp.maximum(acc1[0], acc1[1]),
                     jnp.maximum(acc1[2], acc1[3]))
    p1 = jnp.maximum(p1 + b1t_ref[...], 0.0)              # bias + relu after pool
    p1 = p1.reshape(6, 2, bt, 120).astype(bf16)           # rows (ip) -> (r, parity)

    # ---- conv2 (+ fused 2x2 max-pool); conv2_drop is identity at inference ----
    acc2 = [jnp.zeros((4 * bt, 80), f32) for _ in range(4)]
    for t in range(6):                                    # t = di + kh
        lhs = p1[t // 2: t // 2 + 4, t % 2].reshape(4 * bt, 120)
        for di in range(2):
            kh = t - di
            if 0 <= kh <= 4:
                for dj in range(2):
                    acc2[2 * di + dj] += jnp.dot(
                        lhs, m2_ref[kh * 2 + dj],
                        preferred_element_type=f32)
    p2 = jnp.maximum(jnp.maximum(acc2[0], acc2[1]),
                     jnp.maximum(acc2[2], acc2[3]))
    p2 = jnp.maximum(p2 + b2t_ref[...], 0.0)              # bias + relu after pool
    p2 = p2.reshape(4, bt, 80).astype(bf16)               # (h, b, (w, ch))

    # ---- fc1 + relu : 4 accumulated K=80 dots on free leading-dim slices ----
    h = jnp.zeros((bt, 50), f32)
    for hh in range(4):
        h += jnp.dot(p2[hh], wfc1_ref[hh], preferred_element_type=f32)
    h = jnp.maximum(h + bfc1_ref[...], 0.0)
    # F.dropout: identity at inference

    # ---- fc2 + log_softmax ----
    logits = jnp.dot(h.astype(bf16), wfc2_ref[...],
                     preferred_element_type=f32) + bfc2_ref[...]
    z = logits - jnp.max(logits, axis=-1, keepdims=True)
    z = z - jnp.log(jnp.sum(jnp.exp(z), axis=-1, keepdims=True))
    o_ref[...] = z.astype(o_ref.dtype)


# ----------------------------------------------------------------------------
# Wrapper: batch-tiled grid, everything else whole-array resident in VMEM
# ----------------------------------------------------------------------------
def _whole(shape):
    zeros = (0,) * len(shape)
    return pl.BlockSpec(shape, lambda i, _z=zeros: _z)


def simple_mnist_forward(prep, x):
    """x: (N, 1, 28, 28) NCHW -> (N, 10) log-probs."""
    n = x.shape[0]
    padded = ((n + 15) // 16) * 16                        # keep tiles 16-aligned (bf16 sublanes)
    bt = math.gcd(padded, 64)                             # 16 <= bt <= 64, divides padded

    xs = x.reshape(n, 28, 28)
    if padded != n:
        xs = jnp.pad(xs, ((0, padded - n), (0, 0), (0, 0)))
    # (N,28,28) -> (28, N, 28): dim0 = parity*14 + row_half  (image row = 2r+p)
    xs = (xs.reshape(padded, 14, 2, 28)
            .transpose(2, 1, 0, 3)
            .reshape(28, padded, 28)
            .astype(jnp.bfloat16))

    out = pl.pallas_call(
        _mnist_kernel,
        out_shape=jax.ShapeDtypeStruct((padded, 10), jnp.float32),
        grid=(padded // bt,),
        in_specs=[
            pl.BlockSpec((28, bt, 28), lambda i: (0, i, 0)),   # image tile
            _whole((10, 28, 120)),                             # conv1 band matrices (kh, dj)
            _whole((1, 120)),                                   # conv1 bias, tiled over jp
            _whole((10, 120, 80)),                              # conv2 band matrices (kh, dj)
            _whole((1, 80)),                                    # conv2 bias, tiled over jp
            _whole((4, 80, 50)),                                # fc1 weight, per-h blocks
            _whole((1, 50)),
            _whole((50, 10)),                                   # fc2 weight
            _whole((1, 10)),
        ],
        out_specs=pl.BlockSpec((bt, 10), lambda i: (i, 0)),
        compiler_params=pltpu.CompilerParams(
            dimension_semantics=("parallel",),
            vmem_limit_bytes=32 * 1024 * 1024),
    )(xs, prep["m1"], prep["b1t"], prep["m2"], prep["b2t"],
      prep["wfc1"], prep["bfc1"], prep["wfc2"], prep["bfc2"])
    return out[:n]


# ----------------------------------------------------------------------------
# Parameters (PyTorch layout) + one-time prep into kernel-friendly layout
# ----------------------------------------------------------------------------
def init_params(key):
    """Deterministic PyTorch-style uniform(-1/sqrt(fan_in), 1/sqrt(fan_in)) init."""
    ks = jax.random.split(key, 8)

    def u(k, shape, fan_in):
        bound = 1.0 / float(fan_in) ** 0.5
        return jax.random.uniform(k, shape, jnp.float32, -bound, bound)

    return {
        "conv1_w": u(ks[0], (10, 1, 5, 5), 1 * 5 * 5),
        "conv1_b": u(ks[1], (10,), 1 * 5 * 5),
        "conv2_w": u(ks[2], (20, 10, 5, 5), 10 * 5 * 5),
        "conv2_b": u(ks[3], (20,), 10 * 5 * 5),
        "fc1_w":   u(ks[4], (50, 320), 320),
        "fc1_b":   u(ks[5], (50,), 320),
        "fc2_w":   u(ks[6], (10, 50), 50),
        "fc2_b":   u(ks[7], (10,), 50),
    }


def prepare_params(params):
    """One-time (host-side) weight rearrangement into band matrices / fc blocks."""
    # conv1 band matrices: m1[kh, dj, j_in, jp*10 + o] = w1[o, 0, kh, j_in - (2*jp+dj)]
    w1 = np.asarray(params["conv1_w"], np.float32).reshape(10, 5, 5)     # (o, kh, kw)
    m1 = np.zeros((5, 2, 28, 12, 10), np.float32)
    for kh in range(5):
        for dj in range(2):
            for jp in range(12):
                for kw in range(5):
                    m1[kh, dj, 2 * jp + dj + kw, jp, :] = w1[:, kh, kw]
    m1 = m1.reshape(10, 28, 120)                                          # index = kh*2 + dj

    # conv2 band matrices: m2[kh, dj, j1*10 + c, jp*20 + oc] = w2[oc, c, kh, j1-(2*jp+dj)]
    w2 = np.asarray(params["conv2_w"], np.float32)                        # (20, 10, 5, 5)
    m2 = np.zeros((5, 2, 12, 10, 4, 20), np.float32)
    for kh in range(5):
        for dj in range(2):
            for jp in range(4):
                for kw in range(5):
                    m2[kh, dj, 2 * jp + dj + kw, :, jp, :] = w2[:, :, kh, kw].T
    m2 = m2.reshape(10, 120, 80)

    # fc1: PyTorch columns are (c, h, w); kernel needs per-h blocks with (w, c) lanes.
    wfc1 = (np.asarray(params["fc1_w"], np.float32).reshape(50, 20, 4, 4)
            .transpose(2, 3, 1, 0)                                        # (h, w, c, f)
            .reshape(4, 80, 50))

    return {
        "m1":   jnp.asarray(m1, jnp.bfloat16),
        "b1t":  jnp.asarray(np.tile(np.asarray(params["conv1_b"], np.float32), 12)
                            .reshape(1, 120)),
        "m2":   jnp.asarray(m2, jnp.bfloat16),
        "b2t":  jnp.asarray(np.tile(np.asarray(params["conv2_b"], np.float32), 4)
                            .reshape(1, 80)),
        "wfc1": jnp.asarray(wfc1, jnp.bfloat16),
        "bfc1": jnp.asarray(params["fc1_b"], jnp.float32).reshape(1, 50),
        "wfc2": jnp.asarray(np.asarray(params["fc2_w"], np.float32).T, jnp.bfloat16),
        "bfc2": jnp.asarray(params["fc2_b"], jnp.float32).reshape(1, 10),
    }


# ----------------------------------------------------------------------------
# Pure-JAX reference (f32) for a correctness check
# ----------------------------------------------------------------------------
def reference_forward(params, x):
    dn = ("NCHW", "OIHW", "NCHW")
    z = jax.lax.conv_general_dilated(x, params["conv1_w"], (1, 1), "VALID",
                                     dimension_numbers=dn)
    z = z + params["conv1_b"].reshape(1, 10, 1, 1)
    z = jax.lax.reduce_window(z, -jnp.inf, jax.lax.max, (1, 1, 2, 2), (1, 1, 2, 2), "VALID")
    z = jnp.maximum(z, 0.0)
    z = jax.lax.conv_general_dilated(z, params["conv2_w"], (1, 1), "VALID",
                                     dimension_numbers=dn)
    z = z + params["conv2_b"].reshape(1, 20, 1, 1)
    z = jax.lax.reduce_window(z, -jnp.inf, jax.lax.max, (1, 1, 2, 2), (1, 1, 2, 2), "VALID")
    z = jnp.maximum(z, 0.0)
    z = z.reshape(z.shape[0], 320)
    z = jnp.maximum(z @ params["fc1_w"].T + params["fc1_b"], 0.0)
    z = z @ params["fc2_w"].T + params["fc2_b"]
    return jax.nn.log_softmax(z, axis=-1)


if __name__ == "__main__":
    key = jax.random.PRNGKey(0)
    pkey, xkey = jax.random.split(key)
    params = init_params(pkey)
    prep = prepare_params(params)                           # one-time prep
    x = jax.random.normal(xkey, (2, 1, 28, 28), jnp.float32)  # MNIST-shaped input

    fwd = jax.jit(simple_mnist_forward)
    out = jax.block_until_ready(fwd(prep, x))
    ref = jax.block_until_ready(jax.jit(reference_forward)(params, x))

    assert out.shape == (2, 10), out.shape
    assert bool(jnp.all(jnp.isfinite(out)))
    # log_softmax rows exponentiate-sum to 1
    assert bool(jnp.allclose(jnp.exp(out).sum(axis=1), 1.0, atol=1e-4))
    # matches the f32 reference up to bf16 matmul-operand rounding
    max_err = float(jnp.max(jnp.abs(out - ref)))
    assert max_err < 0.15, f"mismatch vs reference: {max_err}"
    print("KERNEL_OK")
</pallas_src>

<mosaic_0001>
module attributes {stable_mosaic.version = 11 : i64} {
  func.func @_mnist_kernel(%arg0: i32, %arg1: memref<28x16x28xbf16, #tpu.memory_space<vmem>>, %arg2: memref<10x28x120xbf16, #tpu.memory_space<vmem>>, %arg3: memref<1x120xf32, #tpu.memory_space<vmem>>, %arg4: memref<10x120x80xbf16, #tpu.memory_space<vmem>>, %arg5: memref<1x80xf32, #tpu.memory_space<vmem>>, %arg6: memref<4x80x50xbf16, #tpu.memory_space<vmem>>, %arg7: memref<1x50xf32, #tpu.memory_space<vmem>>, %arg8: memref<50x10xbf16, #tpu.memory_space<vmem>>, %arg9: memref<1x10xf32, #tpu.memory_space<vmem>>, %arg10: memref<16x10xf32, #tpu.memory_space<vmem>>) attributes {dimension_semantics = [#tpu.dimension_semantics<parallel>], iteration_bounds = array<i64: 1>, scalar_prefetch = 0 : i64, scratch_operands = 0 : i64, tpu.core_type = #tpu.core_type<tc>, window_params = [{transform_indices = @transform_0, window_bounds = array<i64: 28, 16, 28>}, {pipeline_mode = #tpu.pipeline_mode<synchronous>, transform_indices = @transform_1, window_bounds = array<i64: 10, 28, 120>}, {pipeline_mode = #tpu.pipeline_mode<synchronous>, transform_indices = @transform_2, window_bounds = array<i64: 1, 120>}, {pipeline_mode = #tpu.pipeline_mode<synchronous>, transform_indices = @transform_3, window_bounds = array<i64: 10, 120, 80>}, {pipeline_mode = #tpu.pipeline_mode<synchronous>, transform_indices = @transform_4, window_bounds = array<i64: 1, 80>}, {pipeline_mode = #tpu.pipeline_mode<synchronous>, transform_indices = @transform_5, window_bounds = array<i64: 4, 80, 50>}, {pipeline_mode = #tpu.pipeline_mode<synchronous>, transform_indices = @transform_6, window_bounds = array<i64: 1, 50>}, {pipeline_mode = #tpu.pipeline_mode<synchronous>, transform_indices = @transform_7, window_bounds = array<i64: 50, 10>}, {pipeline_mode = #tpu.pipeline_mode<synchronous>, transform_indices = @transform_8, window_bounds = array<i64: 1, 10>}, {transform_indices = @transform_9, window_bounds = array<i64: 16, 10>}]} {
    %cst = arith.constant 0.000000e+00 : f32
    %0 = vector.broadcast %cst : f32 to vector<192x120xf32>
    %cst_0 = arith.constant 0.000000e+00 : f32
    %1 = vector.broadcast %cst_0 : f32 to vector<192x120xf32>
    %cst_1 = arith.constant 0.000000e+00 : f32
    %2 = vector.broadcast %cst_1 : f32 to vector<192x120xf32>
    %cst_2 = arith.constant 0.000000e+00 : f32
    %3 = vector.broadcast %cst_2 : f32 to vector<192x120xf32>
    %c0 = arith.constant 0 : index
    %c0_3 = arith.constant 0 : index
    %c0_4 = arith.constant 0 : index
    %4 = vector.load %arg1[%c0, %c0_3, %c0_4] : memref<28x16x28xbf16, #tpu.memory_space<vmem>>, vector<12x16x28xbf16>
    %5 = vector.shape_cast %4 : vector<12x16x28xbf16> to vector<192x28xbf16>
    %c0_5 = arith.constant 0 : index
    %c0_6 = arith.constant 0 : index
    %c0_7 = arith.constant 0 : index
    %6 = vector.load %arg2[%c0_5, %c0_6, %c0_7] : memref<10x28x120xbf16, #tpu.memory_space<vmem>>, vector<1x28x120xbf16>
    %7 = vector.shape_cast %6 : vector<1x28x120xbf16> to vector<28x120xbf16>
    %cst_8 = arith.constant dense<0.000000e+00> : vector<192x120xf32>
    %8 = tpu.matmul %5, %7, %cst_8 {dimension_numbers = #tpu.dot_dimension_numbers<[1], [0], [0], [1], [0, 0, 1, 1], [], []>} : vector<192x28xbf16>, vector<28x120xbf16>, vector<192x120xf32> -> vector<192x120xf32>
    %9 = arith.addf %0, %8 : vector<192x120xf32>
    %c1 = arith.constant 1 : index
    %c0_9 = arith.constant 0 : index
    %c0_10 = arith.constant 0 : index
    %10 = vector.load %arg2[%c1, %c0_9, %c0_10] : memref<10x28x120xbf16, #tpu.memory_space<vmem>>, vector<1x28x120xbf16>
    %11 = vector.shape_cast %10 : vector<1x28x120xbf16> to vector<28x120xbf16>
    %cst_11 = arith.constant dense<0.000000e+00> : vector<192x120xf32>
    %12 = tpu.matmul %5, %11, %cst_11 {dimension_numbers = #tpu.dot_dimension_numbers<[1], [0], [0], [1], [0, 0, 1, 1], [], []>} : vector<192x28xbf16>, vector<28x120xbf16>, vector<192x120xf32> -> vector<192x120xf32>
    %13 = arith.addf %1, %12 : vector<192x120xf32>
    %c14 = arith.constant 14 : index
    %c0_12 = arith.constant 0 : index
    %c0_13 = arith.constant 0 : index
    %14 = vector.load %arg1[%c14, %c0_12, %c0_13] : memref<28x16x28xbf16, #tpu.memory_space<vmem>>, vector<12x16x28xbf16>
    %15 = vector.shape_cast %14 : vector<12x16x28xbf16> to vector<192x28xbf16>
    %c2 = arith.constant 2 : index
    %c0_14 = arith.constant 0 : index
    %c0_15 = arith.constant 0 : index
    %16 = vector.load %arg2[%c2, %c0_14, %c0_15] : memref<10x28x120xbf16, #tpu.memory_space<vmem>>, vector<1x28x120xbf16>
    %17 = vector.shape_cast %16 : vector<1x28x120xbf16> to vector<28x120xbf16>
    %cst_16 = arith.constant dense<0.000000e+00> : vector<192x120xf32>
    %18 = tpu.matmul %15, %17, %cst_16 {dimension_numbers = #tpu.dot_dimension_numbers<[1], [0], [0], [1], [0, 0, 1, 1], [], []>} : vector<192x28xbf16>, vector<28x120xbf16>, vector<192x120xf32> -> vector<192x120xf32>
    %19 = arith.addf %9, %18 : vector<192x120xf32>
    %c3 = arith.constant 3 : index
    %c0_17 = arith.constant 0 : index
    %c0_18 = arith.constant 0 : index
    %20 = vector.load %arg2[%c3, %c0_17, %c0_18] : memref<10x28x120xbf16, #tpu.memory_space<vmem>>, vector<1x28x120xbf16>
    %21 = vector.shape_cast %20 : vector<1x28x120xbf16> to vector<28x120xbf16>
    %cst_19 = arith.constant dense<0.000000e+00> : vector<192x120xf32>
    %22 = tpu.matmul %15, %21, %cst_19 {dimension_numbers = #tpu.dot_dimension_numbers<[1], [0], [0], [1], [0, 0, 1, 1], [], []>} : vector<192x28xbf16>, vector<28x120xbf16>, vector<192x120xf32> -> vector<192x120xf32>
    %23 = arith.addf %13, %22 : vector<192x120xf32>
    %c0_20 = arith.constant 0 : index
    %c0_21 = arith.constant 0 : index
    %c0_22 = arith.constant 0 : index
    %24 = vector.load %arg2[%c0_20, %c0_21, %c0_22] : memref<10x28x120xbf16, #tpu.memory_space<vmem>>, vector<1x28x120xbf16>
    %25 = vector.shape_cast %24 : vector<1x28x120xbf16> to vector<28x120xbf16>
    %cst_23 = arith.constant dense<0.000000e+00> : vector<192x120xf32>
    %26 = tpu.matmul %15, %25, %cst_23 {dimension_numbers = #tpu.dot_dimension_numbers<[1], [0], [0], [1], [0, 0, 1, 1], [], []>} : vector<192x28xbf16>, vector<28x120xbf16>, vector<192x120xf32> -> vector<192x120xf32>
    %27 = arith.addf %2, %26 : vector<192x120xf32>
    %c1_24 = arith.constant 1 : index
    %c0_25 = arith.constant 0 : index
    %c0_26 = arith.constant 0 : index
    %28 = vector.load %arg2[%c1_24, %c0_25, %c0_26] : memref<10x28x120xbf16, #tpu.memory_space<vmem>>, vector<1x28x120xbf16>
    %29 = vector.shape_cast %28 : vector<1x28x120xbf16> to vector<28x120xbf16>
    %cst_27 = arith.constant dense<0.000000e+00> : vector<192x120xf32>
    %30 = tpu.matmul %15, %29, %cst_27 {dimension_numbers = #tpu.dot_dimension_numbers<[1], [0], [0], [1], [0, 0, 1, 1], [], []>} : vector<192x28xbf16>, vector<28x120xbf16>, vector<192x120xf32> -> vector<192x120xf32>
    %31 = arith.addf %3, %30 : vector<192x120xf32>
    %c1_28 = arith.constant 1 : index
    %c0_29 = arith.constant 0 : index
    %c0_30 = arith.constant 0 : index
    %32 = vector.load %arg1[%c1_28, %c0_29, %c0_30] : memref<28x16x28xbf16, #tpu.memory_space<vmem>>, vector<12x16x28xbf16>
    %33 = vector.shape_cast %32 : vector<12x16x28xbf16> to vector<192x28xbf16>
    %c4 = arith.constant 4 : index
    %c0_31 = arith.constant 0 : index
    %c0_32 = arith.constant 0 : index
    %34 = vector.load %arg2[%c4, %c0_31, %c0_32] : memref<10x28x120xbf16, #tpu.memory_space<vmem>>, vector<1x28x120xbf16>
    %35 = vector.shape_cast %34 : vector<1x28x120xbf16> to vector<28x120xbf16>
    %cst_33 = arith.constant dense<0.000000e+00> : vector<192x120xf32>
    %36 = tpu.matmul %33, %35, %cst_33 {dimension_numbers = #tpu.dot_dimension_numbers<[1], [0], [0], [1], [0, 0, 1, 1], [], []>} : vector<192x28xbf16>, vector<28x120xbf16>, vector<192x120xf32> -> vector<192x120xf32>
    %37 = arith.addf %19, %36 : vector<192x120xf32>
    %c5 = arith.constant 5 : index
    %c0_34 = arith.constant 0 : index
    %c0_35 = arith.constant 0 : index
    %38 = vector.load %arg2[%c5, %c0_34, %c0_35] : memref<10x28x120xbf16, #tpu.memory_space<vmem>>, vector<1x28x120xbf16>
    %39 = vector.shape_cast %38 : vector<1x28x120xbf16> to vector<28x120xbf16>
    %cst_36 = arith.constant dense<0.000000e+00> : vector<192x120xf32>
    %40 = tpu.matmul %33, %39, %cst_36 {dimension_numbers = #tpu.dot_dimension_numbers<[1], [0], [0], [1], [0, 0, 1, 1], [], []>} : vector<192x28xbf16>, vector<28x120xbf16>, vector<192x120xf32> -> vector<192x120xf32>
    %41 = arith.addf %23, %40 : vector<192x120xf32>
    %c2_37 = arith.constant 2 : index
    %c0_38 = arith.constant 0 : index
    %c0_39 = arith.constant 0 : index
    %42 = vector.load %arg2[%c2_37, %c0_38, %c0_39] : memref<10x28x120xbf16, #tpu.memory_space<vmem>>, vector<1x28x120xbf16>
    %43 = vector.shape_cast %42 : vector<1x28x120xbf16> to vector<28x120xbf16>
    %cst_40 = arith.constant dense<0.000000e+00> : vector<192x120xf32>
    %44 = tpu.matmul %33, %43, %cst_40 {dimension_numbers = #tpu.dot_dimension_numbers<[1], [0], [0], [1], [0, 0, 1, 1], [], []>} : vector<192x28xbf16>, vector<28x120xbf16>, vector<192x120xf32> -> vector<192x120xf32>
    %45 = arith.addf %27, %44 : vector<192x120xf32>
    %c3_41 = arith.constant 3 : index
    %c0_42 = arith.constant 0 : index
    %c0_43 = arith.constant 0 : index
    %46 = vector.load %arg2[%c3_41, %c0_42, %c0_43] : memref<10x28x120xbf16, #tpu.memory_space<vmem>>, vector<1x28x120xbf16>
    %47 = vector.shape_cast %46 : vector<1x28x120xbf16> to vector<28x120xbf16>
    %cst_44 = arith.constant dense<0.000000e+00> : vector<192x120xf32>
    %48 = tpu.matmul %33, %47, %cst_44 {dimension_numbers = #tpu.dot_dimension_numbers<[1], [0], [0], [1], [0, 0, 1, 1], [], []>} : vector<192x28xbf16>, vector<28x120xbf16>, vector<192x120xf32> -> vector<192x120xf32>
    %49 = arith.addf %31, %48 : vector<192x120xf32>
    %c15 = arith.constant 15 : index
    %c0_45 = arith.constant 0 : index
    %c0_46 = arith.constant 0 : index
    %50 = vector.load %arg1[%c15, %c0_45, %c0_46] : memref<28x16x28xbf16, #tpu.memory_space<vmem>>, vector<12x16x28xbf16>
    %51 = vector.shape_cast %50 : vector<12x16x28xbf16> to vector<192x28xbf16>
    %c6 = arith.constant 6 : index
    %c0_47 = arith.constant 0 : index
    %c0_48 = arith.constant 0 : index
    %52 = vector.load %arg2[%c6, %c0_47, %c0_48] : memref<10x28x120xbf16, #tpu.memory_space<vmem>>, vector<1x28x120xbf16>
    %53 = vector.shape_cast %52 : vector<1x28x120xbf16> to vector<28x120xbf16>
    %cst_49 = arith.constant dense<0.000000e+00> : vector<192x120xf32>
    %54 = tpu.matmul %51, %53, %cst_49 {dimension_numbers = #tpu.dot_dimension_numbers<[1], [0], [0], [1], [0, 0, 1, 1], [], []>} : vector<192x28xbf16>, vector<28x120xbf16>, vector<192x120xf32> -> vector<192x120xf32>
    %55 = arith.addf %37, %54 : vector<192x120xf32>
    %c7 = arith.constant 7 : index
    %c0_50 = arith.constant 0 : index
    %c0_51 = arith.constant 0 : index
    %56 = vector.load %arg2[%c7, %c0_50, %c0_51] : memref<10x28x120xbf16, #tpu.memory_space<vmem>>, vector<1x28x120xbf16>
    %57 = vector.shape_cast %56 : vector<1x28x120xbf16> to vector<28x120xbf16>
    %cst_52 = arith.constant dense<0.000000e+00> : vector<192x120xf32>
    %58 = tpu.matmul %51, %57, %cst_52 {dimension_numbers = #tpu.dot_dimension_numbers<[1], [0], [0], [1], [0, 0, 1, 1], [], []>} : vector<192x28xbf16>, vector<28x120xbf16>, vector<192x120xf32> -> vector<192x120xf32>
    %59 = arith.addf %41, %58 : vector<192x120xf32>
    %c4_53 = arith.constant 4 : index
    %c0_54 = arith.constant 0 : index
    %c0_55 = arith.constant 0 : index
    %60 = vector.load %arg2[%c4_53, %c0_54, %c0_55] : memref<10x28x120xbf16, #tpu.memory_space<vmem>>, vector<1x28x120xbf16>
    %61 = vector.shape_cast %60 : vector<1x28x120xbf16> to vector<28x120xbf16>
    %cst_56 = arith.constant dense<0.000000e+00> : vector<192x120xf32>
    %62 = tpu.matmul %51, %61, %cst_56 {dimension_numbers = #tpu.dot_dimension_numbers<[1], [0], [0], [1], [0, 0, 1, 1], [], []>} : vector<192x28xbf16>, vector<28x120xbf16>, vector<192x120xf32> -> vector<192x120xf32>
    %63 = arith.addf %45, %62 : vector<192x120xf32>
    %c5_57 = arith.constant 5 : index
    %c0_58 = arith.constant 0 : index
    %c0_59 = arith.constant 0 : index
    %64 = vector.load %arg2[%c5_57, %c0_58, %c0_59] : memref<10x28x120xbf16, #tpu.memory_space<vmem>>, vector<1x28x120xbf16>
    %65 = vector.shape_cast %64 : vector<1x28x120xbf16> to vector<28x120xbf16>
    %cst_60 = arith.constant dense<0.000000e+00> : vector<192x120xf32>
    %66 = tpu.matmul %51, %65, %cst_60 {dimension_numbers = #tpu.dot_dimension_numbers<[1], [0], [0], [1], [0, 0, 1, 1], [], []>} : vector<192x28xbf16>, vector<28x120xbf16>, vector<192x120xf32> -> vector<192x120xf32>
    %67 = arith.addf %49, %66 : vector<192x120xf32>
    %c2_61 = arith.constant 2 : index
    %c0_62 = arith.constant 0 : index
    %c0_63 = arith.constant 0 : index
    %68 = vector.load %arg1[%c2_61, %c0_62, %c0_63] : memref<28x16x28xbf16, #tpu.memory_space<vmem>>, vector<12x16x28xbf16>
    %69 = vector.shape_cast %68 : vector<12x16x28xbf16> to vector<192x28xbf16>
    %c8 = arith.constant 8 : index
    %c0_64 = arith.constant 0 : index
    %c0_65 = arith.constant 0 : index
    %70 = vector.load %arg2[%c8, %c0_64, %c0_65] : memref<10x28x120xbf16, #tpu.memory_space<vmem>>, vector<1x28x120xbf16>
    %71 = vector.shape_cast %70 : vector<1x28x120xbf16> to vector<28x120xbf16>
    %cst_66 = arith.constant dense<0.000000e+00> : vector<192x120xf32>
    %72 = tpu.matmul %69, %71, %cst_66 {dimension_numbers = #tpu.dot_dimension_numbers<[1], [0], [0], [1], [0, 0, 1, 1], [], []>} : vector<192x28xbf16>, vector<28x120xbf16>, vector<192x120xf32> -> vector<192x120xf32>
    %73 = arith.addf %55, %72 : vector<192x120xf32>
    %c9 = arith.constant 9 : index
    %c0_67 = arith.constant 0 : index
    %c0_68 = arith.constant 0 : index
    %74 = vector.load %arg2[%c9, %c0_67, %c0_68] : memref<10x28x120xbf16, #tpu.memory_space<vmem>>, vector<1x28x120xbf16>
    %75 = vector.shape_cast %74 : vector<1x28x120xbf16> to vector<28x120xbf16>
    %cst_69 = arith.constant dense<0.000000e+00> : vector<192x120xf32>
    %76 = tpu.matmul %69, %75, %cst_69 {dimension_numbers = #tpu.dot_dimension_numbers<[1], [0], [0], [1], [0, 0, 1, 1], [], []>} : vector<192x28xbf16>, vector<28x120xbf16>, vector<192x120xf32> -> vector<192x120xf32>
    %77 = arith.addf %59, %76 : vector<192x120xf32>
    %c6_70 = arith.constant 6 : index
    %c0_71 = arith.constant 0 : index
    %c0_72 = arith.constant 0 : index
    %78 = vector.load %arg2[%c6_70, %c0_71, %c0_72] : memref<10x28x120xbf16, #tpu.memory_space<vmem>>, vector<1x28x120xbf16>
    %79 = vector.shape_cast %78 : vector<1x28x120xbf16> to vector<28x120xbf16>
    %cst_73 = arith.constant dense<0.000000e+00> : vector<192x120xf32>
    %80 = tpu.matmul %69, %79, %cst_73 {dimension_numbers = #tpu.dot_dimension_numbers<[1], [0], [0], [1], [0, 0, 1, 1], [], []>} : vector<192x28xbf16>, vector<28x120xbf16>, vector<192x120xf32> -> vector<192x120xf32>
    %81 = arith.addf %63, %80 : vector<192x120xf32>
    %c7_74 = arith.constant 7 : index
    %c0_75 = arith.constant 0 : index
    %c0_76 = arith.constant 0 : index
    %82 = vector.load %arg2[%c7_74, %c0_75, %c0_76] : memref<10x28x120xbf16, #tpu.memory_space<vmem>>, vector<1x28x120xbf16>
    %83 = vector.shape_cast %82 : vector<1x28x120xbf16> to vector<28x120xbf16>
    %cst_77 = arith.constant dense<0.000000e+00> : vector<192x120xf32>
    %84 = tpu.matmul %69, %83, %cst_77 {dimension_numbers = #tpu.dot_dimension_numbers<[1], [0], [0], [1], [0, 0, 1, 1], [], []>} : vector<192x28xbf16>, vector<28x120xbf16>, vector<192x120xf32> -> vector<192x120xf32>
    %85 = arith.addf %67, %84 : vector<192x120xf32>
    %c16 = arith.constant 16 : index
    %c0_78 = arith.constant 0 : index
    %c0_79 = arith.constant 0 : index
    %86 = vector.load %arg1[%c16, %c0_78, %c0_79] : memref<28x16x28xbf16, #tpu.memory_space<vmem>>, vector<12x16x28xbf16>
    %87 = vector.shape_cast %86 : vector<12x16x28xbf16> to vector<192x28xbf16>
    %c8_80 = arith.constant 8 : index
    %c0_81 = arith.constant 0 : index
    %c0_82 = arith.constant 0 : index
    %88 = vector.load %arg2[%c8_80, %c0_81, %c0_82] : memref<10x28x120xbf16, #tpu.memory_space<vmem>>, vector<1x28x120xbf16>
    %89 = vector.shape_cast %88 : vector<1x28x120xbf16> to vector<28x120xbf16>
    %cst_83 = arith.constant dense<0.000000e+00> : vector<192x120xf32>
    %90 = tpu.matmul %87, %89, %cst_83 {dimension_numbers = #tpu.dot_dimension_numbers<[1], [0], [0], [1], [0, 0, 1, 1], [], []>} : vector<192x28xbf16>, vector<28x120xbf16>, vector<192x120xf32> -> vector<192x120xf32>
    %91 = arith.addf %81, %90 : vector<192x120xf32>
    %c9_84 = arith.constant 9 : index
    %c0_85 = arith.constant 0 : index
    %c0_86 = arith.constant 0 : index
    %92 = vector.load %arg2[%c9_84, %c0_85, %c0_86] : memref<10x28x120xbf16, #tpu.memory_space<vmem>>, vector<1x28x120xbf16>
    %93 = vector.shape_cast %92 : vector<1x28x120xbf16> to vector<28x120xbf16>
    %cst_87 = arith.constant dense<0.000000e+00> : vector<192x120xf32>
    %94 = tpu.matmul %87, %93, %cst_87 {dimension_numbers = #tpu.dot_dimension_numbers<[1], [0], [0], [1], [0, 0, 1, 1], [], []>} : vector<192x28xbf16>, vector<28x120xbf16>, vector<192x120xf32> -> vector<192x120xf32>
    %95 = arith.addf %85, %94 : vector<192x120xf32>
    %96 = arith.maximumf %73, %77 : vector<192x120xf32>
    %97 = arith.maximumf %91, %95 : vector<192x120xf32>
    %98 = arith.maximumf %96, %97 : vector<192x120xf32>
    %c0_88 = arith.constant 0 : index
    %c0_89 = arith.constant 0 : index
    %99 = vector.load %arg3[%c0_88, %c0_89] : memref<1x120xf32, #tpu.memory_space<vmem>>, vector<1x120xf32>
    %100 = vector.broadcast %99 : vector<1x120xf32> to vector<192x120xf32>
    %101 = arith.addf %98, %100 : vector<192x120xf32>
    %cst_90 = arith.constant 0.000000e+00 : f32
    %102 = vector.broadcast %cst_90 : f32 to vector<192x120xf32>
    %103 = arith.maximumf %101, %102 : vector<192x120xf32>
    %104 = vector.shape_cast %103 : vector<192x120xf32> to vector<6x2x16x120xf32>
    %105 = arith.truncf %104 : vector<6x2x16x120xf32> to vector<6x2x16x120xbf16>
    %cst_91 = arith.constant 0.000000e+00 : f32
    %106 = vector.broadcast %cst_91 : f32 to vector<64x80xf32>
    %cst_92 = arith.constant 0.000000e+00 : f32
    %107 = vector.broadcast %cst_92 : f32 to vector<64x80xf32>
    %cst_93 = arith.constant 0.000000e+00 : f32
    %108 = vector.broadcast %cst_93 : f32 to vector<64x80xf32>
    %cst_94 = arith.constant 0.000000e+00 : f32
    %109 = vector.broadcast %cst_94 : f32 to vector<64x80xf32>
    %110 = vector.extract_strided_slice %105 {offsets = [0, 0, 0, 0], sizes = [4, 1, 16, 120], strides = [1, 1, 1, 1]} : vector<6x2x16x120xbf16> to vector<4x1x16x120xbf16>
    %111 = vector.shape_cast %110 : vector<4x1x16x120xbf16> to vector<4x16x120xbf16>
    %112 = vector.shape_cast %111 : vector<4x16x120xbf16> to vector<64x120xbf16>
    %c0_95 = arith.constant 0 : index
    %c0_96 = arith.constant 0 : index
    %c0_97 = arith.constant 0 : index
    %113 = vector.load %arg4[%c0_95, %c0_96, %c0_97] : memref<10x120x80xbf16, #tpu.memory_space<vmem>>, vector<1x120x80xbf16>
    %114 = vector.shape_cast %113 : vector<1x120x80xbf16> to vector<120x80xbf16>
    %cst_98 = arith.constant dense<0.000000e+00> : vector<64x80xf32>
    %115 = tpu.matmul %112, %114, %cst_98 {dimension_numbers = #tpu.dot_dimension_numbers<[1], [0], [0], [1], [0, 0, 1, 1], [], []>} : vector<64x120xbf16>, vector<120x80xbf16>, vector<64x80xf32> -> vector<64x80xf32>
    %116 = arith.addf %106, %115 : vector<64x80xf32>
    %c1_99 = arith.constant 1 : index
    %c0_100 = arith.constant 0 : index
    %c0_101 = arith.constant 0 : index
    %117 = vector.load %arg4[%c1_99, %c0_100, %c0_101] : memref<10x120x80xbf16, #tpu.memory_space<vmem>>, vector<1x120x80xbf16>
    %118 = vector.shape_cast %117 : vector<1x120x80xbf16> to vector<120x80xbf16>
    %cst_102 = arith.constant dense<0.000000e+00> : vector<64x80xf32>
    %119 = tpu.matmul %112, %118, %cst_102 {dimension_numbers = #tpu.dot_dimension_numbers<[1], [0], [0], [1], [0, 0, 1, 1], [], []>} : vector<64x120xbf16>, vector<120x80xbf16>, vector<64x80xf32> -> vector<64x80xf32>
    %120 = arith.addf %107, %119 : vector<64x80xf32>
    %121 = vector.extract_strided_slice %105 {offsets = [0, 1, 0, 0], sizes = [4, 1, 16, 120], strides = [1, 1, 1, 1]} : vector<6x2x16x120xbf16> to vector<4x1x16x120xbf16>
    %122 = vector.shape_cast %121 : vector<4x1x16x120xbf16> to vector<4x16x120xbf16>
    %123 = vector.shape_cast %122 : vector<4x16x120xbf16> to vector<64x120xbf16>
    %c2_103 = arith.constant 2 : index
    %c0_104 = arith.constant 0 : index
    %c0_105 = arith.constant 0 : index
    %124 = vector.load %arg4[%c2_103, %c0_104, %c0_105] : memref<10x120x80xbf16, #tpu.memory_space<vmem>>, vector<1x120x80xbf16>
    %125 = vector.shape_cast %124 : vector<1x120x80xbf16> to vector<120x80xbf16>
    %cst_106 = arith.constant dense<0.000000e+00> : vector<64x80xf32>
    %126 = tpu.matmul %123, %125, %cst_106 {dimension_numbers = #tpu.dot_dimension_numbers<[1], [0], [0], [1], [0, 0, 1, 1], [], []>} : vector<64x120xbf16>, vector<120x80xbf16>, vector<64x80xf32> -> vector<64x80xf32>
    %127 = arith.addf %116, %126 : vector<64x80xf32>
    %c3_107 = arith.constant 3 : index
    %c0_108 = arith.constant 0 : index
    %c0_109 = arith.constant 0 : index
    %128 = vector.load %arg4[%c3_107, %c0_108, %c0_109] : memref<10x120x80xbf16, #tpu.memory_space<vmem>>, vector<1x120x80xbf16>
    %129 = vector.shape_cast %128 : vector<1x120x80xbf16> to vector<120x80xbf16>
    %cst_110 = arith.constant dense<0.000000e+00> : vector<64x80xf32>
    %130 = tpu.matmul %123, %129, %cst_110 {dimension_numbers = #tpu.dot_dimension_numbers<[1], [0], [0], [1], [0, 0, 1, 1], [], []>} : vector<64x120xbf16>, vector<120x80xbf16>, vector<64x80xf32> -> vector<64x80xf32>
    %131 = arith.addf %120, %130 : vector<64x80xf32>
    %c0_111 = arith.constant 0 : index
    %c0_112 = arith.constant 0 : index
    %c0_113 = arith.constant 0 : index
    %132 = vector.load %arg4[%c0_111, %c0_112, %c0_113] : memref<10x120x80xbf16, #tpu.memory_space<vmem>>, vector<1x120x80xbf16>
    %133 = vector.shape_cast %132 : vector<1x120x80xbf16> to vector<120x80xbf16>
    %cst_114 = arith.constant dense<0.000000e+00> : vector<64x80xf32>
    %134 = tpu.matmul %123, %133, %cst_114 {dimension_numbers = #tpu.dot_dimension_numbers<[1], [0], [0], [1], [0, 0, 1, 1], [], []>} : vector<64x120xbf16>, vector<120x80xbf16>, vector<64x80xf32> -> vector<64x80xf32>
    %135 = arith.addf %108, %134 : vector<64x80xf32>
    %c1_115 = arith.constant 1 : index
    %c0_116 = arith.constant 0 : index
    %c0_117 = arith.constant 0 : index
    %136 = vector.load %arg4[%c1_115, %c0_116, %c0_117] : memref<10x120x80xbf16, #tpu.memory_space<vmem>>, vector<1x120x80xbf16>
    %137 = vector.shape_cast %136 : vector<1x120x80xbf16> to vector<120x80xbf16>
    %cst_118 = arith.constant dense<0.000000e+00> : vector<64x80xf32>
    %138 = tpu.matmul %123, %137, %cst_118 {dimension_numbers = #tpu.dot_dimension_numbers<[1], [0], [0], [1], [0, 0, 1, 1], [], []>} : vector<64x120xbf16>, vector<120x80xbf16>, vector<64x80xf32> -> vector<64x80xf32>
    %139 = arith.addf %109, %138 : vector<64x80xf32>
    %140 = vector.extract_strided_slice %105 {offsets = [1, 0, 0, 0], sizes = [4, 1, 16, 120], strides = [1, 1, 1, 1]} : vector<6x2x16x120xbf16> to vector<4x1x16x120xbf16>
    %141 = vector.shape_cast %140 : vector<4x1x16x120xbf16> to vector<4x16x120xbf16>
    %142 = vector.shape_cast %141 : vector<4x16x120xbf16> to vector<64x120xbf16>
    %c4_119 = arith.constant 4 : index
    %c0_120 = arith.constant 0 : index
    %c0_121 = arith.constant 0 : index
    %143 = vector.load %arg4[%c4_119, %c0_120, %c0_121] : memref<10x120x80xbf16, #tpu.memory_space<vmem>>, vector<1x120x80xbf16>
    %144 = vector.shape_cast %143 : vector<1x120x80xbf16> to vector<120x80xbf16>
    %cst_122 = arith.constant dense<0.000000e+00> : vector<64x80xf32>
    %145 = tpu.matmul %142, %144, %cst_122 {dimension_numbers = #tpu.dot_dimension_numbers<[1], [0], [0], [1], [0, 0, 1, 1], [], []>} : vector<64x120xbf16>, vector<120x80xbf16>, vector<64x80xf32> -> vector<64x80xf32>
    %146 = arith.addf %127, %145 : vector<64x80xf32>
    %c5_123 = arith.constant 5 : index
    %c0_124 = arith.constant 0 : index
    %c0_125 = arith.constant 0 : index
    %147 = vector.load %arg4[%c5_123, %c0_124, %c0_125] : memref<10x120x80xbf16, #tpu.memory_space<vmem>>, vector<1x120x80xbf16>
    %148 = vector.shape_cast %147 : vector<1x120x80xbf16> to vector<120x80xbf16>
    %cst_126 = arith.constant dense<0.000000e+00> : vector<64x80xf32>
    %149 = tpu.matmul %142, %148, %cst_126 {dimension_numbers = #tpu.dot_dimension_numbers<[1], [0], [0], [1], [0, 0, 1, 1], [], []>} : vector<64x120xbf16>, vector<120x80xbf16>, vector<64x80xf32> -> vector<64x80xf32>
    %150 = arith.addf %131, %149 : vector<64x80xf32>
    %c2_127 = arith.constant 2 : index
    %c0_128 = arith.constant 0 : index
    %c0_129 = arith.constant 0 : index
    %151 = vector.load %arg4[%c2_127, %c0_128, %c0_129] : memref<10x120x80xbf16, #tpu.memory_space<vmem>>, vector<1x120x80xbf16>
    %152 = vector.shape_cast %151 : vector<1x120x80xbf16> to vector<120x80xbf16>
    %cst_130 = arith.constant dense<0.000000e+00> : vector<64x80xf32>
    %153 = tpu.matmul %142, %152, %cst_130 {dimension_numbers = #tpu.dot_dimension_numbers<[1], [0], [0], [1], [0, 0, 1, 1], [], []>} : vector<64x120xbf16>, vector<120x80xbf16>, vector<64x80xf32> -> vector<64x80xf32>
    %154 = arith.addf %135, %153 : vector<64x80xf32>
    %c3_131 = arith.constant 3 : index
    %c0_132 = arith.constant 0 : index
    %c0_133 = arith.constant 0 : index
    %155 = vector.load %arg4[%c3_131, %c0_132, %c0_133] : memref<10x120x80xbf16, #tpu.memory_space<vmem>>, vector<1x120x80xbf16>
    %156 = vector.shape_cast %155 : vector<1x120x80xbf16> to vector<120x80xbf16>
    %cst_134 = arith.constant dense<0.000000e+00> : vector<64x80xf32>
    %157 = tpu.matmul %142, %156, %cst_134 {dimension_numbers = #tpu.dot_dimension_numbers<[1], [0], [0], [1], [0, 0, 1, 1], [], []>} : vector<64x120xbf16>, vector<120x80xbf16>, vector<64x80xf32> -> vector<64x80xf32>
    %158 = arith.addf %139, %157 : vector<64x80xf32>
    %159 = vector.extract_strided_slice %105 {offsets = [1, 1, 0, 0], sizes = [4, 1, 16, 120], strides = [1, 1, 1, 1]} : vector<6x2x16x120xbf16> to vector<4x1x16x120xbf16>
    %160 = vector.shape_cast %159 : vector<4x1x16x120xbf16> to vector<4x16x120xbf16>
    %161 = vector.shape_cast %160 : vector<4x16x120xbf16> to vector<64x120xbf16>
    %c6_135 = arith.constant 6 : index
    %c0_136 = arith.constant 0 : index
    %c0_137 = arith.constant 0 : index
    %162 = vector.load %arg4[%c6_135, %c0_136, %c0_137] : memref<10x120x80xbf16, #tpu.memory_space<vmem>>, vector<1x120x80xbf16>
    %163 = vector.shape_cast %162 : vector<1x120x80xbf16> to vector<120x80xbf16>
    %cst_138 = arith.constant dense<0.000000e+00> : vector<64x80xf32>
    %164 = tpu.matmul %161, %163, %cst_138 {dimension_numbers = #tpu.dot_dimension_numbers<[1], [0], [0], [1], [0, 0, 1, 1], [], []>} : vector<64x120xbf16>, vector<120x80xbf16>, vector<64x80xf32> -> vector<64x80xf32>
    %165 = arith.addf %146, %164 : vector<64x80xf32>
    %c7_139 = arith.constant 7 : index
    %c0_140 = arith.constant 0 : index
    %c0_141 = arith.constant 0 : index
    %166 = vector.load %arg4[%c7_139, %c0_140, %c0_141] : memref<10x120x80xbf16, #tpu.memory_space<vmem>>, vector<1x120x80xbf16>
    %167 = vector.shape_cast %166 : vector<1x120x80xbf16> to vector<120x80xbf16>
    %cst_142 = arith.constant dense<0.000000e+00> : vector<64x80xf32>
    %168 = tpu.matmul %161, %167, %cst_142 {dimension_numbers = #tpu.dot_dimension_numbers<[1], [0], [0], [1], [0, 0, 1, 1], [], []>} : vector<64x120xbf16>, vector<120x80xbf16>, vector<64x80xf32> -> vector<64x80xf32>
    %169 = arith.addf %150, %168 : vector<64x80xf32>
    %c4_143 = arith.constant 4 : index
    %c0_144 = arith.constant 0 : index
    %c0_145 = arith.constant 0 : index
    %170 = vector.load %arg4[%c4_143, %c0_144, %c0_145] : memref<10x120x80xbf16, #tpu.memory_space<vmem>>, vector<1x120x80xbf16>
    %171 = vector.shape_cast %170 : vector<1x120x80xbf16> to vector<120x80xbf16>
    %cst_146 = arith.constant dense<0.000000e+00> : vector<64x80xf32>
    %172 = tpu.matmul %161, %171, %cst_146 {dimension_numbers = #tpu.dot_dimension_numbers<[1], [0], [0], [1], [0, 0, 1, 1], [], []>} : vector<64x120xbf16>, vector<120x80xbf16>, vector<64x80xf32> -> vector<64x80xf32>
    %173 = arith.addf %154, %172 : vector<64x80xf32>
    %c5_147 = arith.constant 5 : index
    %c0_148 = arith.constant 0 : index
    %c0_149 = arith.constant 0 : index
    %174 = vector.load %arg4[%c5_147, %c0_148, %c0_149] : memref<10x120x80xbf16, #tpu.memory_space<vmem>>, vector<1x120x80xbf16>
    %175 = vector.shape_cast %174 : vector<1x120x80xbf16> to vector<120x80xbf16>
    %cst_150 = arith.constant dense<0.000000e+00> : vector<64x80xf32>
    %176 = tpu.matmul %161, %175, %cst_150 {dimension_numbers = #tpu.dot_dimension_numbers<[1], [0], [0], [1], [0, 0, 1, 1], [], []>} : vector<64x120xbf16>, vector<120x80xbf16>, vector<64x80xf32> -> vector<64x80xf32>
    %177 = arith.addf %158, %176 : vector<64x80xf32>
    %178 = vector.extract_strided_slice %105 {offsets = [2, 0, 0, 0], sizes = [4, 1, 16, 120], strides = [1, 1, 1, 1]} : vector<6x2x16x120xbf16> to vector<4x1x16x120xbf16>
    %179 = vector.shape_cast %178 : vector<4x1x16x120xbf16> to vector<4x16x120xbf16>
    %180 = vector.shape_cast %179 : vector<4x16x120xbf16> to vector<64x120xbf16>
    %c8_151 = arith.constant 8 : index
    %c0_152 = arith.constant 0 : index
    %c0_153 = arith.constant 0 : index
    %181 = vector.load %arg4[%c8_151, %c0_152, %c0_153] : memref<10x120x80xbf16, #tpu.memory_space<vmem>>, vector<1x120x80xbf16>
    %182 = vector.shape_cast %181 : vector<1x120x80xbf16> to vector<120x80xbf16>
    %cst_154 = arith.constant dense<0.000000e+00> : vector<64x80xf32>
    %183 = tpu.matmul %180, %182, %cst_154 {dimension_numbers = #tpu.dot_dimension_numbers<[1], [0], [0], [1], [0, 0, 1, 1], [], []>} : vector<64x120xbf16>, vector<120x80xbf16>, vector<64x80xf32> -> vector<64x80xf32>
    %184 = arith.addf %165, %183 : vector<64x80xf32>
    %c9_155 = arith.constant 9 : index
    %c0_156 = arith.constant 0 : index
    %c0_157 = arith.constant 0 : index
    %185 = vector.load %arg4[%c9_155, %c0_156, %c0_157] : memref<10x120x80xbf16, #tpu.memory_space<vmem>>, vector<1x120x80xbf16>
    %186 = vector.shape_cast %185 : vector<1x120x80xbf16> to vector<120x80xbf16>
    %cst_158 = arith.constant dense<0.000000e+00> : vector<64x80xf32>
    %187 = tpu.matmul %180, %186, %cst_158 {dimension_numbers = #tpu.dot_dimension_numbers<[1], [0], [0], [1], [0, 0, 1, 1], [], []>} : vector<64x120xbf16>, vector<120x80xbf16>, vector<64x80xf32> -> vector<64x80xf32>
    %188 = arith.addf %169, %187 : vector<64x80xf32>
    %c6_159 = arith.constant 6 : index
    %c0_160 = arith.constant 0 : index
    %c0_161 = arith.constant 0 : index
    %189 = vector.load %arg4[%c6_159, %c0_160, %c0_161] : memref<10x120x80xbf16, #tpu.memory_space<vmem>>, vector<1x120x80xbf16>
    %190 = vector.shape_cast %189 : vector<1x120x80xbf16> to vector<120x80xbf16>
    %cst_162 = arith.constant dense<0.000000e+00> : vector<64x80xf32>
    %191 = tpu.matmul %180, %190, %cst_162 {dimension_numbers = #tpu.dot_dimension_numbers<[1], [0], [0], [1], [0, 0, 1, 1], [], []>} : vector<64x120xbf16>, vector<120x80xbf16>, vector<64x80xf32> -> vector<64x80xf32>
    %192 = arith.addf %173, %191 : vector<64x80xf32>
    %c7_163 = arith.constant 7 : index
    %c0_164 = arith.constant 0 : index
    %c0_165 = arith.constant 0 : index
    %193 = vector.load %arg4[%c7_163, %c0_164, %c0_165] : memref<10x120x80xbf16, #tpu.memory_space<vmem>>, vector<1x120x80xbf16>
    %194 = vector.shape_cast %193 : vector<1x120x80xbf16> to vector<120x80xbf16>
    %cst_166 = arith.constant dense<0.000000e+00> : vector<64x80xf32>
    %195 = tpu.matmul %180, %194, %cst_166 {dimension_numbers = #tpu.dot_dimension_numbers<[1], [0], [0], [1], [0, 0, 1, 1], [], []>} : vector<64x120xbf16>, vector<120x80xbf16>, vector<64x80xf32> -> vector<64x80xf32>
    %196 = arith.addf %177, %195 : vector<64x80xf32>
    %197 = vector.extract_strided_slice %105 {offsets = [2, 1, 0, 0], sizes = [4, 1, 16, 120], strides = [1, 1, 1, 1]} : vector<6x2x16x120xbf16> to vector<4x1x16x120xbf16>
    %198 = vector.shape_cast %197 : vector<4x1x16x120xbf16> to vector<4x16x120xbf16>
    %199 = vector.shape_cast %198 : vector<4x16x120xbf16> to vector<64x120xbf16>
    %c8_167 = arith.constant 8 : index
    %c0_168 = arith.constant 0 : index
    %c0_169 = arith.constant 0 : index
    %200 = vector.load %arg4[%c8_167, %c0_168, %c0_169] : memref<10x120x80xbf16, #tpu.memory_space<vmem>>, vector<1x120x80xbf16>
    %201 = vector.shape_cast %200 : vector<1x120x80xbf16> to vector<120x80xbf16>
    %cst_170 = arith.constant dense<0.000000e+00> : vector<64x80xf32>
    %202 = tpu.matmul %199, %201, %cst_170 {dimension_numbers = #tpu.dot_dimension_numbers<[1], [0], [0], [1], [0, 0, 1, 1], [], []>} : vector<64x120xbf16>, vector<120x80xbf16>, vector<64x80xf32> -> vector<64x80xf32>
    %203 = arith.addf %192, %202 : vector<64x80xf32>
    %c9_171 = arith.constant 9 : index
    %c0_172 = arith.constant 0 : index
    %c0_173 = arith.constant 0 : index
    %204 = vector.load %arg4[%c9_171, %c0_172, %c0_173] : memref<10x120x80xbf16, #tpu.memory_space<vmem>>, vector<1x120x80xbf16>
    %205 = vector.shape_cast %204 : vector<1x120x80xbf16> to vector<120x80xbf16>
    %cst_174 = arith.constant dense<0.000000e+00> : vector<64x80xf32>
    %206 = tpu.matmul %199, %205, %cst_174 {dimension_numbers = #tpu.dot_dimension_numbers<[1], [0], [0], [1], [0, 0, 1, 1], [], []>} : vector<64x120xbf16>, vector<120x80xbf16>, vector<64x80xf32> -> vector<64x80xf32>
    %207 = arith.addf %196, %206 : vector<64x80xf32>
    %208 = arith.maximumf %184, %188 : vector<64x80xf32>
    %209 = arith.maximumf %203, %207 : vector<64x80xf32>
    %210 = arith.maximumf %208, %209 : vector<64x80xf32>
    %c0_175 = arith.constant 0 : index
    %c0_176 = arith.constant 0 : index
    %211 = vector.load %arg5[%c0_175, %c0_176] : memref<1x80xf32, #tpu.memory_space<vmem>>, vector<1x80xf32>
    %212 = vector.broadcast %211 : vector<1x80xf32> to vector<64x80xf32>
    %213 = arith.addf %210, %212 : vector<64x80xf32>
    %cst_177 = arith.constant 0.000000e+00 : f32
    %214 = vector.broadcast %cst_177 : f32 to vector<64x80xf32>
    %215 = arith.maximumf %213, %214 : vector<64x80xf32>
    %216 = vector.shape_cast %215 : vector<64x80xf32> to vector<4x16x80xf32>
    %217 = arith.truncf %216 : vector<4x16x80xf32> to vector<4x16x80xbf16>
    %cst_178 = arith.constant 0.000000e+00 : f32
    %218 = vector.broadcast %cst_178 : f32 to vector<16x50xf32>
    %219 = vector.extract_strided_slice %217 {offsets = [0, 0, 0], sizes = [1, 16, 80], strides = [1, 1, 1]} : vector<4x16x80xbf16> to vector<1x16x80xbf16>
    %220 = vector.shape_cast %219 : vector<1x16x80xbf16> to vector<16x80xbf16>
    %c0_179 = arith.constant 0 : index
    %c0_180 = arith.constant 0 : index
    %c0_181 = arith.constant 0 : index
    %221 = vector.load %arg6[%c0_179, %c0_180, %c0_181] : memref<4x80x50xbf16, #tpu.memory_space<vmem>>, vector<1x80x50xbf16>
    %222 = vector.shape_cast %221 : vector<1x80x50xbf16> to vector<80x50xbf16>
    %cst_182 = arith.constant dense<0.000000e+00> : vector<16x50xf32>
    %223 = tpu.matmul %220, %222, %cst_182 {dimension_numbers = #tpu.dot_dimension_numbers<[1], [0], [0], [1], [0, 0, 1, 1], [], []>} : vector<16x80xbf16>, vector<80x50xbf16>, vector<16x50xf32> -> vector<16x50xf32>
    %224 = arith.addf %218, %223 : vector<16x50xf32>
    %225 = vector.extract_strided_slice %217 {offsets = [1, 0, 0], sizes = [1, 16, 80], strides = [1, 1, 1]} : vector<4x16x80xbf16> to vector<1x16x80xbf16>
    %226 = vector.shape_cast %225 : vector<1x16x80xbf16> to vector<16x80xbf16>
    %c1_183 = arith.constant 1 : index
    %c0_184 = arith.constant 0 : index
    %c0_185 = arith.constant 0 : index
    %227 = vector.load %arg6[%c1_183, %c0_184, %c0_185] : memref<4x80x50xbf16, #tpu.memory_space<vmem>>, vector<1x80x50xbf16>
    %228 = vector.shape_cast %227 : vector<1x80x50xbf16> to vector<80x50xbf16>
    %cst_186 = arith.constant dense<0.000000e+00> : vector<16x50xf32>
    %229 = tpu.matmul %226, %228, %cst_186 {dimension_numbers = #tpu.dot_dimension_numbers<[1], [0], [0], [1], [0, 0, 1, 1], [], []>} : vector<16x80xbf16>, vector<80x50xbf16>, vector<16x50xf32> -> vector<16x50xf32>
    %230 = arith.addf %224, %229 : vector<16x50xf32>
    %231 = vector.extract_strided_slice %217 {offsets = [2, 0, 0], sizes = [1, 16, 80], strides = [1, 1, 1]} : vector<4x16x80xbf16> to vector<1x16x80xbf16>
    %232 = vector.shape_cast %231 : vector<1x16x80xbf16> to vector<16x80xbf16>
    %c2_187 = arith.constant 2 : index
    %c0_188 = arith.constant 0 : index
    %c0_189 = arith.constant 0 : index
    %233 = vector.load %arg6[%c2_187, %c0_188, %c0_189] : memref<4x80x50xbf16, #tpu.memory_space<vmem>>, vector<1x80x50xbf16>
    %234 = vector.shape_cast %233 : vector<1x80x50xbf16> to vector<80x50xbf16>
    %cst_190 = arith.constant dense<0.000000e+00> : vector<16x50xf32>
    %235 = tpu.matmul %232, %234, %cst_190 {dimension_numbers = #tpu.dot_dimension_numbers<[1], [0], [0], [1], [0, 0, 1, 1], [], []>} : vector<16x80xbf16>, vector<80x50xbf16>, vector<16x50xf32> -> vector<16x50xf32>
    %236 = arith.addf %230, %235 : vector<16x50xf32>
    %237 = vector.extract_strided_slice %217 {offsets = [3, 0, 0], sizes = [1, 16, 80], strides = [1, 1, 1]} : vector<4x16x80xbf16> to vector<1x16x80xbf16>
    %238 = vector.shape_cast %237 : vector<1x16x80xbf16> to vector<16x80xbf16>
    %c3_191 = arith.constant 3 : index
    %c0_192 = arith.constant 0 : index
    %c0_193 = arith.constant 0 : index
    %239 = vector.load %arg6[%c3_191, %c0_192, %c0_193] : memref<4x80x50xbf16, #tpu.memory_space<vmem>>, vector<1x80x50xbf16>
    %240 = vector.shape_cast %239 : vector<1x80x50xbf16> to vector<80x50xbf16>
    %cst_194 = arith.constant dense<0.000000e+00> : vector<16x50xf32>
    %241 = tpu.matmul %238, %240, %cst_194 {dimension_numbers = #tpu.dot_dimension_numbers<[1], [0], [0], [1], [0, 0, 1, 1], [], []>} : vector<16x80xbf16>, vector<80x50xbf16>, vector<16x50xf32> -> vector<16x50xf32>
    %242 = arith.addf %236, %241 : vector<16x50xf32>
    %c0_195 = arith.constant 0 : index
    %c0_196 = arith.constant 0 : index
    %243 = vector.load %arg7[%c0_195, %c0_196] : memref<1x50xf32, #tpu.memory_space<vmem>>, vector<1x50xf32>
    %244 = vector.broadcast %243 : vector<1x50xf32> to vector<16x50xf32>
    %245 = arith.addf %242, %244 : vector<16x50xf32>
    %cst_197 = arith.constant 0.000000e+00 : f32
    %246 = vector.broadcast %cst_197 : f32 to vector<16x50xf32>
    %247 = arith.maximumf %245, %246 : vector<16x50xf32>
    %248 = arith.truncf %247 : vector<16x50xf32> to vector<16x50xbf16>
    %c0_198 = arith.constant 0 : index
    %c0_199 = arith.constant 0 : index
    %249 = vector.load %arg8[%c0_198, %c0_199] : memref<50x10xbf16, #tpu.memory_space<vmem>>, vector<50x10xbf16>
    %cst_200 = arith.constant dense<0.000000e+00> : vector<16x10xf32>
    %250 = tpu.matmul %248, %249, %cst_200 {dimension_numbers = #tpu.dot_dimension_numbers<[1], [0], [0], [1], [0, 0, 1, 1], [], []>} : vector<16x50xbf16>, vector<50x10xbf16>, vector<16x10xf32> -> vector<16x10xf32>
    %c0_201 = arith.constant 0 : index
    %c0_202 = arith.constant 0 : index
    %251 = vector.load %arg9[%c0_201, %c0_202] : memref<1x10xf32, #tpu.memory_space<vmem>>, vector<1x10xf32>
    %252 = vector.broadcast %251 : vector<1x10xf32> to vector<16x10xf32>
    %253 = arith.addf %250, %252 : vector<16x10xf32>
    %cst_203 = arith.constant dense<0xFF800000> : vector<16xf32>
    %254 = vector.multi_reduction <maximumf>, %253, %cst_203 [1] : vector<16x10xf32> to vector<16xf32>
    %255 = vector.shape_cast %254 : vector<16xf32> to vector<16x1xf32>
    %256 = vector.broadcast %255 : vector<16x1xf32> to vector<16x10xf32>
    %257 = arith.subf %253, %256 : vector<16x10xf32>
    %258 = math.exp %257 : vector<16x10xf32>
    %cst_204 = arith.constant dense<0.000000e+00> : vector<16xf32>
    %259 = vector.multi_reduction <add>, %258, %cst_204 [1] : vector<16x10xf32> to vector<16xf32>
    %260 = vector.shape_cast %259 : vector<16xf32> to vector<16x1xf32>
    %261 = math.log %260 : vector<16x1xf32>
    %262 = vector.broadcast %261 : vector<16x1xf32> to vector<16x10xf32>
    %263 = arith.subf %257, %262 : vector<16x10xf32>
    %c0_205 = arith.constant 0 : index
    %c0_206 = arith.constant 0 : index
    %264 = vector.load %arg10[%c0_205, %c0_206] : memref<16x10xf32, #tpu.memory_space<vmem>>, vector<16x10xf32>
    tpu.vector_store %arg10[%c0_205, %c0_206], %263 {strides = array<i32>} : memref<16x10xf32, #tpu.memory_space<vmem>>, vector<16x10xf32>,
    return
  }
  func.func @transform_0(%arg0: i32) -> (i32, i32, i32) {
    %c0_i32 = arith.constant 0 : i32
    %c0_i32_0 = arith.constant 0 : i32
    %c0_i32_1 = arith.constant 0 : i32
    return %c0_i32, %arg0, %c0_i32_0 : i32, i32, i32
  }
  func.func @transform_1(%arg0: i32) -> (i32, i32, i32) {
    %c0_i32 = arith.constant 0 : i32
    %c0_i32_0 = arith.constant 0 : i32
    %c0_i32_1 = arith.constant 0 : i32
    %c0_i32_2 = arith.constant 0 : i32
    return %c0_i32, %c0_i32_0, %c0_i32_1 : i32, i32, i32
  }
  func.func @transform_2(%arg0: i32) -> (i32, i32) {
    %c0_i32 = arith.constant 0 : i32
    %c0_i32_0 = arith.constant 0 : i32
    %c0_i32_1 = arith.constant 0 : i32
    return %c0_i32, %c0_i32_0 : i32, i32
  }
  func.func @transform_3(%arg0: i32) -> (i32, i32, i32) {
    %c0_i32 = arith.constant 0 : i32
    %c0_i32_0 = arith.constant 0 : i32
    %c0_i32_1 = arith.constant 0 : i32
    %c0_i32_2 = arith.constant 0 : i32
    return %c0_i32, %c0_i32_0, %c0_i32_1 : i32, i32, i32
  }
  func.func @transform_4(%arg0: i32) -> (i32, i32) {
    %c0_i32 = arith.constant 0 : i32
    %c0_i32_0 = arith.constant 0 : i32
    %c0_i32_1 = arith.constant 0 : i32
    return %c0_i32, %c0_i32_0 : i32, i32
  }
  func.func @transform_5(%arg0: i32) -> (i32, i32, i32) {
    %c0_i32 = arith.constant 0 : i32
    %c0_i32_0 = arith.constant 0 : i32
    %c0_i32_1 = arith.constant 0 : i32
    %c0_i32_2 = arith.constant 0 : i32
    return %c0_i32, %c0_i32_0, %c0_i32_1 : i32, i32, i32
  }
  func.func @transform_6(%arg0: i32) -> (i32, i32) {
    %c0_i32 = arith.constant 0 : i32
    %c0_i32_0 = arith.constant 0 : i32
    %c0_i32_1 = arith.constant 0 : i32
    return %c0_i32, %c0_i32_0 : i32, i32
  }
  func.func @transform_7(%arg0: i32) -> (i32, i32) {
    %c0_i32 = arith.constant 0 : i32
    %c0_i32_0 = arith.constant 0 : i32
    %c0_i32_1 = arith.constant 0 : i32
    return %c0_i32, %c0_i32_0 : i32, i32
  }
  func.func @transform_8(%arg0: i32) -> (i32, i32) {
    %c0_i32 = arith.constant 0 : i32
    %c0_i32_0 = arith.constant 0 : i32
    %c0_i32_1 = arith.constant 0 : i32
    return %c0_i32, %c0_i32_0 : i32, i32
  }
  func.func @transform_9(%arg0: i32) -> (i32, i32) {
    %c0_i32 = arith.constant 0 : i32
    %c0_i32_0 = arith.constant 0 : i32
    return %arg0, %c0_i32 : i32, i32
  }
}

</mosaic_0001>

<llo_original>
// kernel: simple_mnist_forward.1
$region0: #{simple_mnist_forward.1}
  #allocation0 [shape = 'u32[]', space=smem, size = 0x4, offset = 0x4, fixed_abs, tag = 'smem constant byte address 0x4 - core index']
  #allocation1 [shape = 'u32[144,128]{1,0:T(1,128)}', space=vmem, size = 0x12000, scoped, tag = 'internal scratch']
  %s0 = inlined_call_operand.vmem [shape: bf16[28,16,28], index: 0, kind: input, shape index: {}]
  %s1 = inlined_call_operand.vmem [shape: bf16[10,28,120], index: 1, kind: input, shape index: {}]
  %s2 = inlined_call_operand.vmem [shape: f32[1,120], index: 2, kind: input, shape index: {}]
  %s3 = inlined_call_operand.vmem [shape: bf16[10,120,80], index: 3, kind: input, shape index: {}]
  %s4 = inlined_call_operand.vmem [shape: f32[1,80], index: 4, kind: input, shape index: {}]
  %s5 = inlined_call_operand.vmem [shape: bf16[4,80,50], index: 5, kind: input, shape index: {}]
  %s6 = inlined_call_operand.vmem [shape: f32[1,50], index: 6, kind: input, shape index: {}]
  %s7 = inlined_call_operand.vmem [shape: bf16[50,10], index: 7, kind: input, shape index: {}]
  %s8 = inlined_call_operand.vmem [shape: f32[1,10], index: 8, kind: input, shape index: {}]
  %s9 = inlined_call_operand.vmem [shape: f32[16,10], index: 9, kind: output, shape index: {}]
  %s10 = sld [smem:[#allocation0]]
  $region46: #{simple_mnist_forward.1} parent=0
    _
  %s12 = ssub.s32 1, %s10
  %s13 = scalar_select 0, %s12, %s10
  // Predicated region
  $region2: #{simple_mnist_forward.1} parent=0 // pred_check
    _
  $region3: #{simple_mnist_forward.1} parent=0 // pred_check_branch
    %15 = sbr.rel (0) target = $region5
  $region4: #{simple_mnist_forward.1} parent=0 // pred_region
    _
  $region5: #{simple_mnist_forward.1} parent=0 // pred_fallthru
    _
  // Predicated region
  $region6: #{simple_mnist_forward.1} parent=0 // pred_check
    _
  $region7: #{simple_mnist_forward.1} parent=0 // pred_check_branch
    %17 = sbr.rel (0) target = $region9
  $region8: #{simple_mnist_forward.1} parent=0 // pred_region
    _
  $region9: #{simple_mnist_forward.1} parent=0 // pred_fallthru
    _
  // Predicated region
  $region10: #{simple_mnist_forward.1} parent=0 // pred_check
    _
  $region11: #{simple_mnist_forward.1} parent=0 // pred_check_branch
    %19 = sbr.rel (0) target = $region13
  $region12: #{simple_mnist_forward.1} parent=0 // pred_region
    _
  $region13: #{simple_mnist_forward.1} parent=0 // pred_fallthru
    _
  // Predicated region
  $region14: #{simple_mnist_forward.1} parent=0 // pred_check
    _
  $region15: #{simple_mnist_forward.1} parent=0 // pred_check_branch
    %21 = sbr.rel (0) target = $region17
  $region16: #{simple_mnist_forward.1} parent=0 // pred_region
    _
  $region17: #{simple_mnist_forward.1} parent=0 // pred_fallthru
    _
  // Predicated region
  $region18: #{simple_mnist_forward.1} parent=0 // pred_check
    _
  $region19: #{simple_mnist_forward.1} parent=0 // pred_check_branch
    %23 = sbr.rel (0) target = $region21
  $region20: #{simple_mnist_forward.1} parent=0 // pred_region
    _
  $region21: #{simple_mnist_forward.1} parent=0 // pred_fallthru
    _
  // Predicated region
  $region22: #{simple_mnist_forward.1} parent=0 // pred_check
    _
  $region23: #{simple_mnist_forward.1} parent=0 // pred_check_branch
    %25 = sbr.rel (0) target = $region25
  $region24: #{simple_mnist_forward.1} parent=0 // pred_region
    _
  $region25: #{simple_mnist_forward.1} parent=0 // pred_fallthru
    _
  // Predicated region
  $region26: #{simple_mnist_forward.1} parent=0 // pred_check
    _
  $region27: #{simple_mnist_forward.1} parent=0 // pred_check_branch
    %27 = sbr.rel (0) target = $region29
  $region28: #{simple_mnist_forward.1} parent=0 // pred_region
    _
  $region29: #{simple_mnist_forward.1} parent=0 // pred_fallthru
    _
  // Predicated region
  $region30: #{simple_mnist_forward.1} parent=0 // pred_check
    _
  $region31: #{simple_mnist_forward.1} parent=0 // pred_check_branch
    %29 = sbr.rel (0) target = $region33
  $region32: #{simple_mnist_forward.1} parent=0 // pred_region
    _
  $region33: #{simple_mnist_forward.1} parent=0 // pred_fallthru
    _
  // Predicated region
  $region34: #{simple_mnist_forward.1} parent=0 // pred_check
    _
  $region35: #{simple_mnist_forward.1} parent=0 // pred_check_branch
    %31 = sbr.rel (0) target = $region37
  $region36: #{simple_mnist_forward.1} parent=0 // pred_region
    _
  $region37: #{simple_mnist_forward.1} parent=0 // pred_fallthru
    _
  %v33 = vld [vmem:[%s0] sm:$0xf]
  %v34 = vld [vmem:[%s0 + $0x4] sm:$0xf]
  %v35 = vld [vmem:[%s0 + $0x8] sm:$0xf]
  %v36 = vld [vmem:[%s0 + $0xc] sm:$0xf]
  %v37 = vld [vmem:[%s0 + $0x10] sm:$0xf]
  %v38 = vld [vmem:[%s0 + $0x14] sm:$0xf]
  %v39 = vld [vmem:[%s0 + $0x18] sm:$0xf]
  %v40 = vld [vmem:[%s0 + $0x1c] sm:$0xf]
  %v41 = vld [vmem:[%s0 + $0x20] sm:$0xf]
  %v42 = vld [vmem:[%s0 + $0x24] sm:$0xf]
  %v43 = vld [vmem:[%s0 + $0x28] sm:$0xf]
  %v44 = vld [vmem:[%s0 + $0x2c] sm:$0xf]
  %v45 = vld [vmem:[%s0 + $0x30] sm:$0xf]
  %v46 = vld [vmem:[%s0 + $0x34] sm:$0xf]
  %v47 = vld [vmem:[%s0 + $0x38] sm:$0xf]
  %v48 = vld [vmem:[%s0 + $0x3c] sm:$0xf]
  %v49 = vld [vmem:[%s0 + $0x40] sm:$0xf]
  %v50 = vld [vmem:[%s0 + $0x44] sm:$0xf]
  %v51 = vld [vmem:[%s0 + $0x48] sm:$0xf]
  %v52 = vld [vmem:[%s0 + $0x4c] sm:$0xf]
  %v53 = vld [vmem:[%s0 + $0x50] sm:$0xf]
  %v54 = vld [vmem:[%s0 + $0x54] sm:$0xf]
  %v55 = vld [vmem:[%s0 + $0x58] sm:$0xf]
  %v56 = vld [vmem:[%s0 + $0x5c] sm:$0xf]
  %v57 = vld [vmem:[%s1] sm:$0xf]
  %v58 = vld [vmem:[%s1 + $0x4] sm:$0xf]
  %v59 = vld [vmem:[%s1 + $0x8] sm:$0xf]
  %v60 = vld [vmem:[%s1 + $0xc] sm:$0x3]
  %s61 = scalar_lea.vmem %s1, 16
  %v62 = vld [vmem:[%s61] sm:$0xf]
  %v63 = vld [vmem:[%s61 + $0x4] sm:$0xf]
  %v64 = vld [vmem:[%s61 + $0x8] sm:$0xf]
  %v65 = vld [vmem:[%s61 + $0xc] sm:$0x3]
  %s66 = scalar_lea.vmem %s0, 112
  %v67 = vld [vmem:[%s66] sm:$0xf]
  %v68 = vld [vmem:[%s66 + $0x4] sm:$0xf]
  %v69 = vld [vmem:[%s66 + $0x8] sm:$0xf]
  %v70 = vld [vmem:[%s66 + $0xc] sm:$0xf]
  %v71 = vld [vmem:[%s66 + $0x10] sm:$0xf]
  %v72 = vld [vmem:[%s66 + $0x14] sm:$0xf]
  %v73 = vld [vmem:[%s66 + $0x18] sm:$0xf]
  %v74 = vld [vmem:[%s66 + $0x1c] sm:$0xf]
  %v75 = vld [vmem:[%s66 + $0x20] sm:$0xf]
  %v76 = vld [vmem:[%s66 + $0x24] sm:$0xf]
  %v77 = vld [vmem:[%s66 + $0x28] sm:$0xf]
  %v78 = vld [vmem:[%s66 + $0x2c] sm:$0xf]
  %v79 = vld [vmem:[%s66 + $0x30] sm:$0xf]
  %v80 = vld [vmem:[%s66 + $0x34] sm:$0xf]
  %v81 = vld [vmem:[%s66 + $0x38] sm:$0xf]
  %v82 = vld [vmem:[%s66 + $0x3c] sm:$0xf]
  %v83 = vld [vmem:[%s66 + $0x40] sm:$0xf]
  %v84 = vld [vmem:[%s66 + $0x44] sm:$0xf]
  %v85 = vld [vmem:[%s66 + $0x48] sm:$0xf]
  %v86 = vld [vmem:[%s66 + $0x4c] sm:$0xf]
  %v87 = vld [vmem:[%s66 + $0x50] sm:$0xf]
  %v88 = vld [vmem:[%s66 + $0x54] sm:$0xf]
  %v89 = vld [vmem:[%s66 + $0x58] sm:$0xf]
  %v90 = vld [vmem:[%s66 + $0x5c] sm:$0xf]
  %s91 = scalar_lea.vmem %s1, 32
  %v92 = vld [vmem:[%s91] sm:$0xf]
  %v93 = vld [vmem:[%s91 + $0x4] sm:$0xf]
  %v94 = vld [vmem:[%s91 + $0x8] sm:$0xf]
  %v95 = vld [vmem:[%s91 + $0xc] sm:$0x3]
  %v120 = vunpack.c.l.b16 %v67
  %v121 = vunpack.c.l.b16 %v68
  %v122 = vunpack.c.l.b16 %v69
  %v123 = vunpack.c.l.b16 %v70
  %v124 = vunpack.c.l.b16 %v71
  %v125 = vunpack.c.l.b16 %v72
  %v126 = vunpack.c.l.b16 %v73
  %v127 = vunpack.c.l.b16 %v74
  %v128 = vunpack.c.l.b16 %v75
  %v129 = vunpack.c.l.b16 %v76
  %v130 = vunpack.c.l.b16 %v77
  %v131 = vunpack.c.l.b16 %v78
  %v132 = vunpack.c.l.b16 %v79
  %v133 = vunpack.c.l.b16 %v80
  %v134 = vunpack.c.l.b16 %v81
  %v135 = vunpack.c.l.b16 %v82
  %v136 = vunpack.c.l.b16 %v83
  %v137 = vunpack.c.l.b16 %v84
  %v138 = vunpack.c.l.b16 %v85
  %v139 = vunpack.c.l.b16 %v86
  %v140 = vunpack.c.l.b16 %v87
  %v141 = vunpack.c.l.b16 %v88
  %v142 = vunpack.c.l.b16 %v89
  %v143 = vunpack.c.l.b16 %v90
  %v144 = vpack.c.b16 %v121, %v120
  %v145 = vpack.c.b16 %v123, %v122
  %v146 = vpack.c.b16 %v125, %v124
  %v147 = vpack.c.b16 %v127, %v126
  %v148 = vpack.c.b16 %v129, %v128
  %v149 = vpack.c.b16 %v131, %v130
  %v150 = vpack.c.b16 %v133, %v132
  %v151 = vpack.c.b16 %v135, %v134
  %v152 = vpack.c.b16 %v137, %v136
  %v153 = vpack.c.b16 %v139, %v138
  %v154 = vpack.c.b16 %v141, %v140
  %v155 = vpack.c.b16 %v143, %v142
  %v160 = vunpack.c.l.b16 %v92
  %v161 = vunpack.c.l.b16 %v93
  %v162 = vunpack.c.l.b16 %v94
  %v163 = vunpack.c.l.b16 %v95
  %v164 = vpack.c.b16 %v161, %v160
  %v165 = vpack.c.b16 %v163, %v162
  %vm167 = vcmask 228352
  %v169 = vsel %vm167, %v144, 0
  %v172 = vsel %vm167, %v145, 0
  %v175 = vsel %vm167, %v146, 0
  %v178 = vsel %vm167, %v147, 0
  %v181 = vsel %vm167, %v148, 0
  %v184 = vsel %vm167, %v149, 0
  %v187 = vsel %vm167, %v150, 0
  %v190 = vsel %vm167, %v151, 0
  %v193 = vsel %vm167, %v152, 0
  %v196 = vsel %vm167, %v153, 0
  %v199 = vsel %vm167, %v154, 0
  %v202 = vsel %vm167, %v155, 0
  %vm204 = vcmask 1045504
  %v206 = vsel %vm204, %v165, 0
  %208 = vmatprep.subr.bf16.mxu0 0
  %209 = vmatpush1.bf16.msra.mxu0 0
  %210 = vmatprep.subr.bf16.mxu0 0
  %211 = vmatpush1.bf16.msra.mxu0 0
  %212 = vmatprep.subr.bf16.mxu0 0
  %213 = vmatpush1.bf16.msra.mxu0 0
  %214 = vmatprep.subr.bf16.mxu0 0
  %215 = vmatpush1.bf16.msra.mxu0 0
  %216 = vmatprep.subr.bf16.mxu0 0
  %217 = vmatpush1.bf16.msra.mxu0 0
  %218 = vmatprep.subr.bf16.mxu0 0
  %219 = vmatpush1.bf16.msra.mxu0 0
  %220 = vmatprep.subr.bf16.mxu0 0
  %221 = vmatpush1.bf16.msra.mxu0 %v206
  %222 = vmatprep.subr.bf16.mxu0 0
  %223 = vmatpush1.bf16.msra.mxu0 %v164
  %224 = vmatprep.subr.bf16.mxu0 0
  %225 = vmatpush2.bf16.msra.mxu0 0
  %226 = vmatprep.subr.bf16.mxu0 0
  %227 = vmatpush2.bf16.msra.mxu0 0
  %228 = vmatprep.subr.bf16.mxu0 0
  %229 = vmatpush2.bf16.msra.mxu0 0
  %230 = vmatprep.subr.bf16.mxu0 0
  %231 = vmatpush2.bf16.msra.mxu0 0
  %232 = vmatprep.subr.bf16.mxu0 0
  %233 = vmatpush2.bf16.msra.mxu0 0
  %234 = vmatprep.subr.bf16.mxu0 0
  %235 = vmatpush2.bf16.msra.mxu0 0
  %236 = vmatprep.subr.bf16.mxu0 0
  %237 = vmatpush2.bf16.msra.mxu0 0
  %238 = vmatprep.subr.bf16.mxu0 0
  %239 = vmatpush2.bf16.msra.mxu0 0
  %240 = vmatprep.mubr.bf16.mxu0 0
  %241 = vmatmul.mubr.bf16.gmra.mxu0 %v169
  %v242 = vpop.f32.mrf.mxu0
  %v243 = vadd.f32 0.0, %v242
  %v244 = vpop.f32.mrf.mxu0
  %v245 = vpop.f32.mrf.mxu0
  %v246 = vadd.f32 0.0, %v245
  %v247 = vpop.f32.mrf.mxu0
  %248 = vmatprep.mubr.bf16.mxu0 0
  %249 = vmatmul.mubr.bf16.gmra.mxu0 %v172
  %v250 = vpop.f32.mrf.mxu0
  %v251 = vadd.f32 0.0, %v250
  %v252 = vpop.f32.mrf.mxu0
  %v253 = vpop.f32.mrf.mxu0
  %v254 = vadd.f32 0.0, %v253
  %v255 = vpop.f32.mrf.mxu0
  %256 = vmatprep.mubr.bf16.mxu0 0
  %257 = vmatmul.mubr.bf16.gmra.mxu0 %v175
  %v258 = vpop.f32.mrf.mxu0
  %v259 = vadd.f32 0.0, %v258
  %v260 = vpop.f32.mrf.mxu0
  %v261 = vpop.f32.mrf.mxu0
  %v262 = vadd.f32 0.0, %v261
  %v263 = vpop.f32.mrf.mxu0
  %264 = vmatprep.mubr.bf16.mxu0 0
  %265 = vmatmul.mubr.bf16.gmra.mxu0 %v178
  %v266 = vpop.f32.mrf.mxu0
  %v267 = vadd.f32 0.0, %v266
  %v268 = vpop.f32.mrf.mxu0
  %v269 = vpop.f32.mrf.mxu0
  %v270 = vadd.f32 0.0, %v269
  %v271 = vpop.f32.mrf.mxu0
  %272 = vmatprep.mubr.bf16.mxu0 0
  %273 = vmatmul.mubr.bf16.gmra.mxu0 %v181
  %v274 = vpop.f32.mrf.mxu0
  %v275 = vadd.f32 0.0, %v274
  %v276 = vpop.f32.mrf.mxu0
  %v277 = vpop.f32.mrf.mxu0
  %v278 = vadd.f32 0.0, %v277
  %v279 = vpop.f32.mrf.mxu0
  %280 = vmatprep.mubr.bf16.mxu0 0
  %281 = vmatmul.mubr.bf16.gmra.mxu0 %v184
  %v282 = vpop.f32.mrf.mxu0
  %v283 = vadd.f32 0.0, %v282
  %v284 = vpop.f32.mrf.mxu0
  %v285 = vpop.f32.mrf.mxu0
  %v286 = vadd.f32 0.0, %v285
  %v287 = vpop.f32.mrf.mxu0
  %288 = vmatprep.mubr.bf16.mxu0 0
  %289 = vmatmul.mubr.bf16.gmra.mxu0 %v187
  %v290 = vpop.f32.mrf.mxu0
  %v291 = vadd.f32 0.0, %v290
  %v292 = vpop.f32.mrf.mxu0
  %v293 = vpop.f32.mrf.mxu0
  %v294 = vadd.f32 0.0, %v293
  %v295 = vpop.f32.mrf.mxu0
  %296 = vmatprep.mubr.bf16.mxu0 0
  %297 = vmatmul.mubr.bf16.gmra.mxu0 %v190
  %v298 = vpop.f32.mrf.mxu0
  %v299 = vadd.f32 0.0, %v298
  %v300 = vpop.f32.mrf.mxu0
  %v301 = vpop.f32.mrf.mxu0
  %v302 = vadd.f32 0.0, %v301
  %v303 = vpop.f32.mrf.mxu0
  %304 = vmatprep.mubr.bf16.mxu0 0
  %305 = vmatmul.mubr.bf16.gmra.mxu0 %v193
  %v306 = vpop.f32.mrf.mxu0
  %v307 = vadd.f32 0.0, %v306
  %v308 = vpop.f32.mrf.mxu0
  %v309 = vpop.f32.mrf.mxu0
  %v310 = vadd.f32 0.0, %v309
  %v311 = vpop.f32.mrf.mxu0
  %312 = vmatprep.mubr.bf16.mxu0 0
  %313 = vmatmul.mubr.bf16.gmra.mxu0 %v196
  %v314 = vpop.f32.mrf.mxu0
  %v315 = vadd.f32 0.0, %v314
  %v316 = vpop.f32.mrf.mxu0
  %v317 = vpop.f32.mrf.mxu0
  %v318 = vadd.f32 0.0, %v317
  %v319 = vpop.f32.mrf.mxu0
  %320 = vmatprep.mubr.bf16.mxu0 0
  %321 = vmatmul.mubr.bf16.gmra.mxu0 %v199
  %v322 = vpop.f32.mrf.mxu0
  %v323 = vadd.f32 0.0, %v322
  %v324 = vpop.f32.mrf.mxu0
  %v325 = vpop.f32.mrf.mxu0
  %v326 = vadd.f32 0.0, %v325
  %v327 = vpop.f32.mrf.mxu0
  %328 = vmatprep.mubr.bf16.mxu0 0
  %329 = vmatmul.mubr.bf16.gmra.mxu0 %v202
  %v330 = vpop.f32.mrf.mxu0
  %v331 = vadd.f32 0.0, %v330
  %v332 = vpop.f32.mrf.mxu0
  %v333 = vpop.f32.mrf.mxu0
  %v334 = vadd.f32 0.0, %v333
  %v335 = vpop.f32.mrf.mxu0
  %336 = vdwg.mxu0
  %v361 = vunpack.c.l.b16 %v33
  %v362 = vunpack.c.l.b16 %v34
  %v363 = vunpack.c.l.b16 %v35
  %v364 = vunpack.c.l.b16 %v36
  %v365 = vunpack.c.l.b16 %v37
  %v366 = vunpack.c.l.b16 %v38
  %v367 = vunpack.c.l.b16 %v39
  %v368 = vunpack.c.l.b16 %v40
  %v369 = vunpack.c.l.b16 %v41
  %v370 = vunpack.c.l.b16 %v42
  %v371 = vunpack.c.l.b16 %v43
  %v372 = vunpack.c.l.b16 %v44
  %v373 = vunpack.c.l.b16 %v45
  %v374 = vunpack.c.l.b16 %v46
  %v375 = vunpack.c.l.b16 %v47
  %v376 = vunpack.c.l.b16 %v48
  %v377 = vunpack.c.l.b16 %v49
  %v378 = vunpack.c.l.b16 %v50
  %v379 = vunpack.c.l.b16 %v51
  %v380 = vunpack.c.l.b16 %v52
  %v381 = vunpack.c.l.b16 %v53
  %v382 = vunpack.c.l.b16 %v54
  %v383 = vunpack.c.l.b16 %v55
  %v384 = vunpack.c.l.b16 %v56
  %v385 = vpack.c.b16 %v362, %v361
  %v386 = vpack.c.b16 %v364, %v363
  %v387 = vpack.c.b16 %v366, %v365
  %v388 = vpack.c.b16 %v368, %v367
  %v389 = vpack.c.b16 %v370, %v369
  %v390 = vpack.c.b16 %v372, %v371
  %v391 = vpack.c.b16 %v374, %v373
  %v392 = vpack.c.b16 %v376, %v375
  %v393 = vpack.c.b16 %v378, %v377
  %v394 = vpack.c.b16 %v380, %v379
  %v395 = vpack.c.b16 %v382, %v381
  %v396 = vpack.c.b16 %v384, %v383
  %v401 = vunpack.c.l.b16 %v57
  %v402 = vunpack.c.l.b16 %v58
  %v403 = vunpack.c.l.b16 %v59
  %v404 = vunpack.c.l.b16 %v60
  %v405 = vpack.c.b16 %v402, %v401
  %v406 = vpack.c.b16 %v404, %v403
  %v409 = vsel %vm167, %v385, 0
  %v412 = vsel %vm167, %v386, 0
  %v415 = vsel %vm167, %v387, 0
  %v418 = vsel %vm167, %v388, 0
  %v421 = vsel %vm167, %v389, 0
  %v424 = vsel %vm167, %v390, 0
  %v427 = vsel %vm167, %v391, 0
  %v430 = vsel %vm167, %v392, 0
  %v433 = vsel %vm167, %v393, 0
  %v436 = vsel %vm167, %v394, 0
  %v439 = vsel %vm167, %v395, 0
  %v442 = vsel %vm167, %v396, 0
  %v445 = vsel %vm204, %v406, 0
  %447 = vmatprep.subr.bf16.mxu0 0
  %448 = vmatpush1.bf16.msra.mxu0 0
  %449 = vmatprep.subr.bf16.mxu0 0
  %450 = vmatpush1.bf16.msra.mxu0 0
  %451 = vmatprep.subr.bf16.mxu0 0
  %452 = vmatpush1.bf16.msra.mxu0 0
  %453 = vmatprep.subr.bf16.mxu0 0
  %454 = vmatpush1.bf16.msra.mxu0 0
  %455 = vmatprep.subr.bf16.mxu0 0
  %456 = vmatpush1.bf16.msra.mxu0 0
  %457 = vmatprep.subr.bf16.mxu0 0
  %458 = vmatpush1.bf16.msra.mxu0 0
  %459 = vmatprep.subr.bf16.mxu0 0
  %460 = vmatpush1.bf16.msra.mxu0 %v445
  %461 = vmatprep.subr.bf16.mxu0 0
  %462 = vmatpush1.bf16.msra.mxu0 %v405
  %463 = vmatprep.subr.bf16.mxu0 0
  %464 = vmatpush2.bf16.msra.mxu0 0
  %465 = vmatprep.subr.bf16.mxu0 0
  %466 = vmatpush2.bf16.msra.mxu0 0
  %467 = vmatprep.subr.bf16.mxu0 0
  %468 = vmatpush2.bf16.msra.mxu0 0
  %469 = vmatprep.subr.bf16.mxu0 0
  %470 = vmatpush2.bf16.msra.mxu0 0
  %471 = vmatprep.subr.bf16.mxu0 0
  %472 = vmatpush2.bf16.msra.mxu0 0
  %473 = vmatprep.subr.bf16.mxu0 0
  %474 = vmatpush2.bf16.msra.mxu0 0
  %475 = vmatprep.subr.bf16.mxu0 0
  %476 = vmatpush2.bf16.msra.mxu0 0
  %477 = vmatprep.subr.bf16.mxu0 0
  %478 = vmatpush2.bf16.msra.mxu0 0
  %479 = vmatprep.mubr.bf16.mxu0 0
  %480 = vmatmul.mubr.bf16.gmra.mxu0 %v409
  %v481 = vpop.f32.mrf.mxu0
  %v482 = vadd.f32 %v243, %v481
  %v483 = vpop.f32.mrf.mxu0
  %v484 = vpop.f32.mrf.mxu0
  %v485 = vadd.f32 %v246, %v484
  %v486 = vpop.f32.mrf.mxu0
  %487 = vmatprep.mubr.bf16.mxu0 0
  %488 = vmatmul.mubr.bf16.gmra.mxu0 %v412
  %v489 = vpop.f32.mrf.mxu0
  %v490 = vadd.f32 %v251, %v489
  %v491 = vpop.f32.mrf.mxu0
  %v492 = vpop.f32.mrf.mxu0
  %v493 = vadd.f32 %v254, %v492
  %v494 = vpop.f32.mrf.mxu0
  %495 = vmatprep.mubr.bf16.mxu0 0
  %496 = vmatmul.mubr.bf16.gmra.mxu0 %v415
  %v497 = vpop.f32.mrf.mxu0
  %v498 = vadd.f32 %v259, %v497
  %v499 = vpop.f32.mrf.mxu0
  %v500 = vpop.f32.mrf.mxu0
  %v501 = vadd.f32 %v262, %v500
  %v502 = vpop.f32.mrf.mxu0
  %503 = vmatprep.mubr.bf16.mxu0 0
  %504 = vmatmul.mubr.bf16.gmra.mxu0 %v418
  %v505 = vpop.f32.mrf.mxu0
  %v506 = vadd.f32 %v267, %v505
  %v507 = vpop.f32.mrf.mxu0
  %v508 = vpop.f32.mrf.mxu0
  %v509 = vadd.f32 %v270, %v508
  %v510 = vpop.f32.mrf.mxu0
  %511 = vmatprep.mubr.bf16.mxu0 0
  %512 = vmatmul.mubr.bf16.gmra.mxu0 %v421
  %v513 = vpop.f32.mrf.mxu0
  %v514 = vadd.f32 %v275, %v513
  %v515 = vpop.f32.mrf.mxu0
  %v516 = vpop.f32.mrf.mxu0
  %v517 = vadd.f32 %v278, %v516
  %v518 = vpop.f32.mrf.mxu0
  %519 = vmatprep.mubr.bf16.mxu0 0
  %520 = vmatmul.mubr.bf16.gmra.mxu0 %v424
  %v521 = vpop.f32.mrf.mxu0
  %v522 = vadd.f32 %v283, %v521
  %v523 = vpop.f32.mrf.mxu0
  %v524 = vpop.f32.mrf.mxu0
  %v525 = vadd.f32 %v286, %v524
  %v526 = vpop.f32.mrf.mxu0
  %527 = vmatprep.mubr.bf16.mxu0 0
  %528 = vmatmul.mubr.bf16.gmra.mxu0 %v427
  %v529 = vpop.f32.mrf.mxu0
  %v530 = vadd.f32 %v291, %v529
  %v531 = vpop.f32.mrf.mxu0
  %v532 = vpop.f32.mrf.mxu0
  %v533 = vadd.f32 %v294, %v532
  %v534 = vpop.f32.mrf.mxu0
  %535 = vmatprep.mubr.bf16.mxu0 0
  %536 = vmatmul.mubr.bf16.gmra.mxu0 %v430
  %v537 = vpop.f32.mrf.mxu0
  %v538 = vadd.f32 %v299, %v537
  %v539 = vpop.f32.mrf.mxu0
  %v540 = vpop.f32.mrf.mxu0
  %v541 = vadd.f32 %v302, %v540
  %v542 = vpop.f32.mrf.mxu0
  %543 = vmatprep.mubr.bf16.mxu0 0
  %544 = vmatmul.mubr.bf16.gmra.mxu0 %v433
  %v545 = vpop.f32.mrf.mxu0
  %v546 = vadd.f32 %v307, %v545
  %v547 = vpop.f32.mrf.mxu0
  %v548 = vpop.f32.mrf.mxu0
  %v549 = vadd.f32 %v310, %v548
  %v550 = vpop.f32.mrf.mxu0
  %551 = vmatprep.mubr.bf16.mxu0 0
  %552 = vmatmul.mubr.bf16.gmra.mxu0 %v436
  %v553 = vpop.f32.mrf.mxu0
  %v554 = vadd.f32 %v315, %v553
  %v555 = vpop.f32.mrf.mxu0
  %v556 = vpop.f32.mrf.mxu0
  %v557 = vadd.f32 %v318, %v556
  %v558 = vpop.f32.mrf.mxu0
  %559 = vmatprep.mubr.bf16.mxu0 0
  %560 = vmatmul.mubr.bf16.gmra.mxu0 %v439
  %v561 = vpop.f32.mrf.mxu0
  %v562 = vadd.f32 %v323, %v561
  %v563 = vpop.f32.mrf.mxu0
  %v564 = vpop.f32.mrf.mxu0
  %v565 = vadd.f32 %v326, %v564
  %v566 = vpop.f32.mrf.mxu0
  %567 = vmatprep.mubr.bf16.mxu0 0
  %568 = vmatmul.mubr.bf16.gmra.mxu0 %v442
  %v569 = vpop.f32.mrf.mxu0
  %v570 = vadd.f32 %v331, %v569
  %v571 = vpop.f32.mrf.mxu0
  %v572 = vpop.f32.mrf.mxu0
  %v573 = vadd.f32 %v334, %v572
  %v574 = vpop.f32.mrf.mxu0
  %575 = vdwg.mxu0
  %s576 = scalar_lea.vmem %s1, 48
  %v577 = vld [vmem:[%s576] sm:$0xf]
  %v578 = vld [vmem:[%s576 + $0x4] sm:$0xf]
  %v579 = vld [vmem:[%s576 + $0x8] sm:$0xf]
  %v580 = vld [vmem:[%s576 + $0xc] sm:$0x3]
  %v585 = vunpack.c.l.b16 %v577
  %v586 = vunpack.c.l.b16 %v578
  %v587 = vunpack.c.l.b16 %v579
  %v588 = vunpack.c.l.b16 %v580
  %v589 = vpack.c.b16 %v586, %v585
  %v590 = vpack.c.b16 %v588, %v587
  %v593 = vsel %vm204, %v590, 0
  %595 = vmatprep.subr.bf16.mxu0 0
  %596 = vmatpush1.bf16.msra.mxu0 0
  %597 = vmatprep.subr.bf16.mxu0 0
  %598 = vmatpush1.bf16.msra.mxu0 0
  %599 = vmatprep.subr.bf16.mxu0 0
  %600 = vmatpush1.bf16.msra.mxu0 0
  %601 = vmatprep.subr.bf16.mxu0 0
  %602 = vmatpush1.bf16.msra.mxu0 0
  %603 = vmatprep.subr.bf16.mxu0 0
  %604 = vmatpush1.bf16.msra.mxu0 0
  %605 = vmatprep.subr.bf16.mxu0 0
  %606 = vmatpush1.bf16.msra.mxu0 0
  %607 = vmatprep.subr.bf16.mxu0 0
  %608 = vmatpush1.bf16.msra.mxu0 %v593
  %609 = vmatprep.subr.bf16.mxu0 0
  %610 = vmatpush1.bf16.msra.mxu0 %v589
  %611 = vmatprep.subr.bf16.mxu0 0
  %612 = vmatpush2.bf16.msra.mxu0 0
  %613 = vmatprep.subr.bf16.mxu0 0
  %614 = vmatpush2.bf16.msra.mxu0 0
  %615 = vmatprep.subr.bf16.mxu0 0
  %616 = vmatpush2.bf16.msra.mxu0 0
  %617 = vmatprep.subr.bf16.mxu0 0
  %618 = vmatpush2.bf16.msra.mxu0 0
  %619 = vmatprep.subr.bf16.mxu0 0
  %620 = vmatpush2.bf16.msra.mxu0 0
  %621 = vmatprep.subr.bf16.mxu0 0
  %622 = vmatpush2.bf16.msra.mxu0 0
  %623 = vmatprep.subr.bf16.mxu0 0
  %624 = vmatpush2.bf16.msra.mxu0 0
  %625 = vmatprep.subr.bf16.mxu0 0
  %626 = vmatpush2.bf16.msra.mxu0 0
  %627 = vmatprep.mubr.bf16.mxu0 0
  %628 = vmatmul.mubr.bf16.gmra.mxu0 %v169
  %v629 = vpop.f32.mrf.mxu0
  %v630 = vadd.f32 0.0, %v629
  %v631 = vpop.f32.mrf.mxu0
  %v632 = vpop.f32.mrf.mxu0
  %v633 = vadd.f32 0.0, %v632
  %v634 = vpop.f32.mrf.mxu0
  %635 = vmatprep.mubr.bf16.mxu0 0
  %636 = vmatmul.mubr.bf16.gmra.mxu0 %v172
  %v637 = vpop.f32.mrf.mxu0
  %v638 = vadd.f32 0.0, %v637
  %v639 = vpop.f32.mrf.mxu0
  %v640 = vpop.f32.mrf.mxu0
  %v641 = vadd.f32 0.0, %v640
  %v642 = vpop.f32.mrf.mxu0
  %643 = vmatprep.mubr.bf16.mxu0 0
  %644 = vmatmul.mubr.bf16.gmra.mxu0 %v175
  %v645 = vpop.f32.mrf.mxu0
  %v646 = vadd.f32 0.0, %v645
  %v647 = vpop.f32.mrf.mxu0
  %v648 = vpop.f32.mrf.mxu0
  %v649 = vadd.f32 0.0, %v648
  %v650 = vpop.f32.mrf.mxu0
  %651 = vmatprep.mubr.bf16.mxu0 0
  %652 = vmatmul.mubr.bf16.gmra.mxu0 %v178
  %v653 = vpop.f32.mrf.mxu0
  %v654 = vadd.f32 0.0, %v653
  %v655 = vpop.f32.mrf.mxu0
  %v656 = vpop.f32.mrf.mxu0
  %v657 = vadd.f32 0.0, %v656
  %v658 = vpop.f32.mrf.mxu0
  %659 = vmatprep.mubr.bf16.mxu0 0
  %660 = vmatmul.mubr.bf16.gmra.mxu0 %v181
  %v661 = vpop.f32.mrf.mxu0
  %v662 = vadd.f32 0.0, %v661
  %v663 = vpop.f32.mrf.mxu0
  %v664 = vpop.f32.mrf.mxu0
  %v665 = vadd.f32 0.0, %v664
  %v666 = vpop.f32.mrf.mxu0
  %667 = vmatprep.mubr.bf16.mxu0 0
  %668 = vmatmul.mubr.bf16.gmra.mxu0 %v184
  %v669 = vpop.f32.mrf.mxu0
  %v670 = vadd.f32 0.0, %v669
  %v671 = vpop.f32.mrf.mxu0
  %v672 = vpop.f32.mrf.mxu0
  %v673 = vadd.f32 0.0, %v672
  %v674 = vpop.f32.mrf.mxu0
  %675 = vmatprep.mubr.bf16.mxu0 0
  %676 = vmatmul.mubr.bf16.gmra.mxu0 %v187
  %v677 = vpop.f32.mrf.mxu0
  %v678 = vadd.f32 0.0, %v677
  %v679 = vpop.f32.mrf.mxu0
  %v680 = vpop.f32.mrf.mxu0
  %v681 = vadd.f32 0.0, %v680
  %v682 = vpop.f32.mrf.mxu0
  %683 = vmatprep.mubr.bf16.mxu0 0
  %684 = vmatmul.mubr.bf16.gmra.mxu0 %v190
  %v685 = vpop.f32.mrf.mxu0
  %v686 = vadd.f32 0.0, %v685
  %v687 = vpop.f32.mrf.mxu0
  %v688 = vpop.f32.mrf.mxu0
  %v689 = vadd.f32 0.0, %v688
  %v690 = vpop.f32.mrf.mxu0
  %691 = vmatprep.mubr.bf16.mxu0 0
  %692 = vmatmul.mubr.bf16.gmra.mxu0 %v193
  %v693 = vpop.f32.mrf.mxu0
  %v694 = vadd.f32 0.0, %v693
  %v695 = vpop.f32.mrf.mxu0
  %v696 = vpop.f32.mrf.mxu0
  %v697 = vadd.f32 0.0, %v696
  %v698 = vpop.f32.mrf.mxu0
  %699 = vmatprep.mubr.bf16.mxu0 0
  %700 = vmatmul.mubr.bf16.gmra.mxu0 %v196
  %v701 = vpop.f32.mrf.mxu0
  %v702 = vadd.f32 0.0, %v701
  %v703 = vpop.f32.mrf.mxu0
  %v704 = vpop.f32.mrf.mxu0
  %v705 = vadd.f32 0.0, %v704
  %v706 = vpop.f32.mrf.mxu0
  %707 = vmatprep.mubr.bf16.mxu0 0
  %708 = vmatmul.mubr.bf16.gmra.mxu0 %v199
  %v709 = vpop.f32.mrf.mxu0
  %v710 = vadd.f32 0.0, %v709
  %v711 = vpop.f32.mrf.mxu0
  %v712 = vpop.f32.mrf.mxu0
  %v713 = vadd.f32 0.0, %v712
  %v714 = vpop.f32.mrf.mxu0
  %715 = vmatprep.mubr.bf16.mxu0 0
  %716 = vmatmul.mubr.bf16.gmra.mxu0 %v202
  %v717 = vpop.f32.mrf.mxu0
  %v718 = vadd.f32 0.0, %v717
  %v719 = vpop.f32.mrf.mxu0
  %v720 = vpop.f32.mrf.mxu0
  %v721 = vadd.f32 0.0, %v720
  %v722 = vpop.f32.mrf.mxu0
  %723 = vdwg.mxu0
  %v728 = vunpack.c.l.b16 %v62
  %v729 = vunpack.c.l.b16 %v63
  %v730 = vunpack.c.l.b16 %v64
  %v731 = vunpack.c.l.b16 %v65
  %v732 = vpack.c.b16 %v729, %v728
  %v733 = vpack.c.b16 %v731, %v730
  %v736 = vsel %vm204, %v733, 0
  %738 = vmatprep.subr.bf16.mxu0 0
  %739 = vmatpush1.bf16.msra.mxu0 0
  %740 = vmatprep.subr.bf16.mxu0 0
  %741 = vmatpush1.bf16.msra.mxu0 0
  %742 = vmatprep.subr.bf16.mxu0 0
  %743 = vmatpush1.bf16.msra.mxu0 0
  %744 = vmatprep.subr.bf16.mxu0 0
  %745 = vmatpush1.bf16.msra.mxu0 0
  %746 = vmatprep.subr.bf16.mxu0 0
  %747 = vmatpush1.bf16.msra.mxu0 0
  %748 = vmatprep.subr.bf16.mxu0 0
  %749 = vmatpush1.bf16.msra.mxu0 0
  %750 = vmatprep.subr.bf16.mxu0 0
  %751 = vmatpush1.bf16.msra.mxu0 %v736
  %752 = vmatprep.subr.bf16.mxu0 0
  %753 = vmatpush1.bf16.msra.mxu0 %v732
  %754 = vmatprep.subr.bf16.mxu0 0
  %755 = vmatpush2.bf16.msra.mxu0 0
  %756 = vmatprep.subr.bf16.mxu0 0
  %757 = vmatpush2.bf16.msra.mxu0 0
  %758 = vmatprep.subr.bf16.mxu0 0
  %759 = vmatpush2.bf16.msra.mxu0 0
  %760 = vmatprep.subr.bf16.mxu0 0
  %761 = vmatpush2.bf16.msra.mxu0 0
  %762 = vmatprep.subr.bf16.mxu0 0
  %763 = vmatpush2.bf16.msra.mxu0 0
  %764 = vmatprep.subr.bf16.mxu0 0
  %765 = vmatpush2.bf16.msra.mxu0 0
  %766 = vmatprep.subr.bf16.mxu0 0
  %767 = vmatpush2.bf16.msra.mxu0 0
  %768 = vmatprep.subr.bf16.mxu0 0
  %769 = vmatpush2.bf16.msra.mxu0 0
  %770 = vmatprep.mubr.bf16.mxu0 0
  %771 = vmatmul.mubr.bf16.gmra.mxu0 %v409
  %v772 = vpop.f32.mrf.mxu0
  %v773 = vadd.f32 %v630, %v772
  %v774 = vpop.f32.mrf.mxu0
  %v775 = vpop.f32.mrf.mxu0
  %v776 = vadd.f32 %v633, %v775
  %v777 = vpop.f32.mrf.mxu0
  %778 = vmatprep.mubr.bf16.mxu0 0
  %779 = vmatmul.mubr.bf16.gmra.mxu0 %v412
  %v780 = vpop.f32.mrf.mxu0
  %v781 = vadd.f32 %v638, %v780
  %v782 = vpop.f32.mrf.mxu0
  %v783 = vpop.f32.mrf.mxu0
  %v784 = vadd.f32 %v641, %v783
  %v785 = vpop.f32.mrf.mxu0
  %786 = vmatprep.mubr.bf16.mxu0 0
  %787 = vmatmul.mubr.bf16.gmra.mxu0 %v415
  %v788 = vpop.f32.mrf.mxu0
  %v789 = vadd.f32 %v646, %v788
  %v790 = vpop.f32.mrf.mxu0
  %v791 = vpop.f32.mrf.mxu0
  %v792 = vadd.f32 %v649, %v791
  %v793 = vpop.f32.mrf.mxu0
  %794 = vmatprep.mubr.bf16.mxu0 0
  %795 = vmatmul.mubr.bf16.gmra.mxu0 %v418
  %v796 = vpop.f32.mrf.mxu0
  %v797 = vadd.f32 %v654, %v796
  %v798 = vpop.f32.mrf.mxu0
  %v799 = vpop.f32.mrf.mxu0
  %v800 = vadd.f32 %v657, %v799
  %v801 = vpop.f32.mrf.mxu0
  %802 = vmatprep.mubr.bf16.mxu0 0
  %803 = vmatmul.mubr.bf16.gmra.mxu0 %v421
  %v804 = vpop.f32.mrf.mxu0
  %v805 = vadd.f32 %v662, %v804
  %v806 = vpop.f32.mrf.mxu0
  %v807 = vpop.f32.mrf.mxu0
  %v808 = vadd.f32 %v665, %v807
  %v809 = vpop.f32.mrf.mxu0
  %810 = vmatprep.mubr.bf16.mxu0 0
  %811 = vmatmul.mubr.bf16.gmra.mxu0 %v424
  %v812 = vpop.f32.mrf.mxu0
  %v813 = vadd.f32 %v670, %v812
  %v814 = vpop.f32.mrf.mxu0
  %v815 = vpop.f32.mrf.mxu0
  %v816 = vadd.f32 %v673, %v815
  %v817 = vpop.f32.mrf.mxu0
  %818 = vmatprep.mubr.bf16.mxu0 0
  %819 = vmatmul.mubr.bf16.gmra.mxu0 %v427
  %v820 = vpop.f32.mrf.mxu0
  %v821 = vadd.f32 %v678, %v820
  %v822 = vpop.f32.mrf.mxu0
  %v823 = vpop.f32.mrf.mxu0
  %v824 = vadd.f32 %v681, %v823
  %v825 = vpop.f32.mrf.mxu0
  %826 = vmatprep.mubr.bf16.mxu0 0
  %827 = vmatmul.mubr.bf16.gmra.mxu0 %v430
  %v828 = vpop.f32.mrf.mxu0
  %v829 = vadd.f32 %v686, %v828
  %v830 = vpop.f32.mrf.mxu0
  %v831 = vpop.f32.mrf.mxu0
  %v832 = vadd.f32 %v689, %v831
  %v833 = vpop.f32.mrf.mxu0
  %834 = vmatprep.mubr.bf16.mxu0 0
  %835 = vmatmul.mubr.bf16.gmra.mxu0 %v433
  %v836 = vpop.f32.mrf.mxu0
  %v837 = vadd.f32 %v694, %v836
  %v838 = vpop.f32.mrf.mxu0
  %v839 = vpop.f32.mrf.mxu0
  %v840 = vadd.f32 %v697, %v839
  %v841 = vpop.f32.mrf.mxu0
  %842 = vmatprep.mubr.bf16.mxu0 0
  %843 = vmatmul.mubr.bf16.gmra.mxu0 %v436
  %v844 = vpop.f32.mrf.mxu0
  %v845 = vadd.f32 %v702, %v844
  %v846 = vpop.f32.mrf.mxu0
  %v847 = vpop.f32.mrf.mxu0
  %v848 = vadd.f32 %v705, %v847
  %v849 = vpop.f32.mrf.mxu0
  %850 = vmatprep.mubr.bf16.mxu0 0
  %851 = vmatmul.mubr.bf16.gmra.mxu0 %v439
  %v852 = vpop.f32.mrf.mxu0
  %v853 = vadd.f32 %v710, %v852
  %v854 = vpop.f32.mrf.mxu0
  %v855 = vpop.f32.mrf.mxu0
  %v856 = vadd.f32 %v713, %v855
  %v857 = vpop.f32.mrf.mxu0
  %858 = vmatprep.mubr.bf16.mxu0 0
  %859 = vmatmul.mubr.bf16.gmra.mxu0 %v442
  %v860 = vpop.f32.mrf.mxu0
  %v861 = vadd.f32 %v718, %v860
  %v862 = vpop.f32.mrf.mxu0
  %v863 = vpop.f32.mrf.mxu0
  %v864 = vadd.f32 %v721, %v863
  %v865 = vpop.f32.mrf.mxu0
  %866 = vdwg.mxu0
  %s867 = scalar_lea.vmem %s0, 8
  %v868 = vld [vmem:[%s867] sm:$0xf]
  %v869 = vld [vmem:[%s867 + $0x4] sm:$0xf]
  %v870 = vld [vmem:[%s867 + $0x8] sm:$0xf]
  %v871 = vld [vmem:[%s867 + $0xc] sm:$0xf]
  %v872 = vld [vmem:[%s867 + $0x10] sm:$0xf]
  %v873 = vld [vmem:[%s867 + $0x14] sm:$0xf]
  %v874 = vld [vmem:[%s867 + $0x18] sm:$0xf]
  %v875 = vld [vmem:[%s867 + $0x1c] sm:$0xf]
  %v876 = vld [vmem:[%s867 + $0x20] sm:$0xf]
  %v877 = vld [vmem:[%s867 + $0x24] sm:$0xf]
  %v878 = vld [vmem:[%s867 + $0x28] sm:$0xf]
  %v879 = vld [vmem:[%s867 + $0x2c] sm:$0xf]
  %v880 = vld [vmem:[%s867 + $0x30] sm:$0xf]
  %v881 = vld [vmem:[%s867 + $0x34] sm:$0xf]
  %v882 = vld [vmem:[%s867 + $0x38] sm:$0xf]
  %v883 = vld [vmem:[%s867 + $0x3c] sm:$0xf]
  %v884 = vld [vmem:[%s867 + $0x40] sm:$0xf]
  %v885 = vld [vmem:[%s867 + $0x44] sm:$0xf]
  %v886 = vld [vmem:[%s867 + $0x48] sm:$0xf]
  %v887 = vld [vmem:[%s867 + $0x4c] sm:$0xf]
  %v888 = vld [vmem:[%s867 + $0x50] sm:$0xf]
  %v889 = vld [vmem:[%s867 + $0x54] sm:$0xf]
  %v890 = vld [vmem:[%s867 + $0x58] sm:$0xf]
  %v891 = vld [vmem:[%s867 + $0x5c] sm:$0xf]
  %s892 = scalar_lea.vmem %s1, 64
  %v893 = vld [vmem:[%s892] sm:$0xf]
  %v894 = vld [vmem:[%s892 + $0x4] sm:$0xf]
  %v895 = vld [vmem:[%s892 + $0x8] sm:$0xf]
  %v896 = vld [vmem:[%s892 + $0xc] sm:$0x3]
  %v921 = vunpack.c.l.b16 %v868
  %v922 = vunpack.c.l.b16 %v869
  %v923 = vunpack.c.l.b16 %v870
  %v924 = vunpack.c.l.b16 %v871
  %v925 = vunpack.c.l.b16 %v872
  %v926 = vunpack.c.l.b16 %v873
  %v927 = vunpack.c.l.b16 %v874
  %v928 = vunpack.c.l.b16 %v875
  %v929 = vunpack.c.l.b16 %v876
  %v930 = vunpack.c.l.b16 %v877
  %v931 = vunpack.c.l.b16 %v878
  %v932 = vunpack.c.l.b16 %v879
  %v933 = vunpack.c.l.b16 %v880
  %v934 = vunpack.c.l.b16 %v881
  %v935 = vunpack.c.l.b16 %v882
  %v936 = vunpack.c.l.b16 %v883
  %v937 = vunpack.c.l.b16 %v884
  %v938 = vunpack.c.l.b16 %v885
  %v939 = vunpack.c.l.b16 %v886
  %v940 = vunpack.c.l.b16 %v887
  %v941 = vunpack.c.l.b16 %v888
  %v942 = vunpack.c.l.b16 %v889
  %v943 = vunpack.c.l.b16 %v890
  %v944 = vunpack.c.l.b16 %v891
  %v945 = vpack.c.b16 %v922, %v921
  %v946 = vpack.c.b16 %v924, %v923
  %v947 = vpack.c.b16 %v926, %v925
  %v948 = vpack.c.b16 %v928, %v927
  %v949 = vpack.c.b16 %v930, %v929
  %v950 = vpack.c.b16 %v932, %v931
  %v951 = vpack.c.b16 %v934, %v933
  %v952 = vpack.c.b16 %v936, %v935
  %v953 = vpack.c.b16 %v938, %v937
  %v954 = vpack.c.b16 %v940, %v939
  %v955 = vpack.c.b16 %v942, %v941
  %v956 = vpack.c.b16 %v944, %v943
  %v961 = vunpack.c.l.b16 %v893
  %v962 = vunpack.c.l.b16 %v894
  %v963 = vunpack.c.l.b16 %v895
  %v964 = vunpack.c.l.b16 %v896
  %v965 = vpack.c.b16 %v962, %v961
  %v966 = vpack.c.b16 %v964, %v963
  %v969 = vsel %vm167, %v945, 0
  %v972 = vsel %vm167, %v946, 0
  %v975 = vsel %vm167, %v947, 0
  %v978 = vsel %vm167, %v948, 0
  %v981 = vsel %vm167, %v949, 0
  %v984 = vsel %vm167, %v950, 0
  %v987 = vsel %vm167, %v951, 0
  %v990 = vsel %vm167, %v952, 0
  %v993 = vsel %vm167, %v953, 0
  %v996 = vsel %vm167, %v954, 0
  %v999 = vsel %vm167, %v955, 0
  %v1002 = vsel %vm167, %v956, 0
  %v1005 = vsel %vm204, %v966, 0
  %1007 = vmatprep.subr.bf16.mxu0 0
  %1008 = vmatpush1.bf16.msra.mxu0 0
  %1009 = vmatprep.subr.bf16.mxu0 0
  %1010 = vmatpush1.bf16.msra.mxu0 0
  %1011 = vmatprep.subr.bf16.mxu0 0
  %1012 = vmatpush1.bf16.msra.mxu0 0
  %1013 = vmatprep.subr.bf16.mxu0 0
  %1014 = vmatpush1.bf16.msra.mxu0 0
  %1015 = vmatprep.subr.bf16.mxu0 0
  %1016 = vmatpush1.bf16.msra.mxu0 0
  %1017 = vmatprep.subr.bf16.mxu0 0
  %1018 = vmatpush1.bf16.msra.mxu0 0
  %1019 = vmatprep.subr.bf16.mxu0 0
  %1020 = vmatpush1.bf16.msra.mxu0 %v1005
  %1021 = vmatprep.subr.bf16.mxu0 0
  %1022 = vmatpush1.bf16.msra.mxu0 %v965
  %1023 = vmatprep.subr.bf16.mxu0 0
  %1024 = vmatpush2.bf16.msra.mxu0 0
  %1025 = vmatprep.subr.bf16.mxu0 0
  %1026 = vmatpush2.bf16.msra.mxu0 0
  %1027 = vmatprep.subr.bf16.mxu0 0
  %1028 = vmatpush2.bf16.msra.mxu0 0
  %1029 = vmatprep.subr.bf16.mxu0 0
  %1030 = vmatpush2.bf16.msra.mxu0 0
  %1031 = vmatprep.subr.bf16.mxu0 0
  %1032 = vmatpush2.bf16.msra.mxu0 0
  %1033 = vmatprep.subr.bf16.mxu0 0
  %1034 = vmatpush2.bf16.msra.mxu0 0
  %1035 = vmatprep.subr.bf16.mxu0 0
  %1036 = vmatpush2.bf16.msra.mxu0 0
  %1037 = vmatprep.subr.bf16.mxu0 0
  %1038 = vmatpush2.bf16.msra.mxu0 0
  %1039 = vmatprep.mubr.bf16.mxu0 0
  %1040 = vmatmul.mubr.bf16.gmra.mxu0 %v969
  %v1041 = vpop.f32.mrf.mxu0
  %v1042 = vadd.f32 0.0, %v1041
  %v1043 = vpop.f32.mrf.mxu0
  %v1044 = vpop.f32.mrf.mxu0
  %v1045 = vadd.f32 0.0, %v1044
  %v1046 = vpop.f32.mrf.mxu0
  %1047 = vmatprep.mubr.bf16.mxu0 0
  %1048 = vmatmul.mubr.bf16.gmra.mxu0 %v972
  %v1049 = vpop.f32.mrf.mxu0
  %v1050 = vadd.f32 0.0, %v1049
  %v1051 = vpop.f32.mrf.mxu0
  %v1052 = vpop.f32.mrf.mxu0
  %v1053 = vadd.f32 0.0, %v1052
  %v1054 = vpop.f32.mrf.mxu0
  %1055 = vmatprep.mubr.bf16.mxu0 0
  %1056 = vmatmul.mubr.bf16.gmra.mxu0 %v975
  %v1057 = vpop.f32.mrf.mxu0
  %v1058 = vadd.f32 0.0, %v1057
  %v1059 = vpop.f32.mrf.mxu0
  %v1060 = vpop.f32.mrf.mxu0
  %v1061 = vadd.f32 0.0, %v1060
  %v1062 = vpop.f32.mrf.mxu0
  %1063 = vmatprep.mubr.bf16.mxu0 0
  %1064 = vmatmul.mubr.bf16.gmra.mxu0 %v978
  %v1065 = vpop.f32.mrf.mxu0
  %v1066 = vadd.f32 0.0, %v1065
  %v1067 = vpop.f32.mrf.mxu0
  %v1068 = vpop.f32.mrf.mxu0
  %v1069 = vadd.f32 0.0, %v1068
  %v1070 = vpop.f32.mrf.mxu0
  %1071 = vmatprep.mubr.bf16.mxu0 0
  %1072 = vmatmul.mubr.bf16.gmra.mxu0 %v981
  %v1073 = vpop.f32.mrf.mxu0
  %v1074 = vadd.f32 0.0, %v1073
  %v1075 = vpop.f32.mrf.mxu0
  %v1076 = vpop.f32.mrf.mxu0
  %v1077 = vadd.f32 0.0, %v1076
  %v1078 = vpop.f32.mrf.mxu0
  %1079 = vmatprep.mubr.bf16.mxu0 0
  %1080 = vmatmul.mubr.bf16.gmra.mxu0 %v984
  %v1081 = vpop.f32.mrf.mxu0
  %v1082 = vadd.f32 0.0, %v1081
  %v1083 = vpop.f32.mrf.mxu0
  %v1084 = vpop.f32.mrf.mxu0
  %v1085 = vadd.f32 0.0, %v1084
  %v1086 = vpop.f32.mrf.mxu0
  %1087 = vmatprep.mubr.bf16.mxu0 0
  %1088 = vmatmul.mubr.bf16.gmra.mxu0 %v987
  %v1089 = vpop.f32.mrf.mxu0
  %v1090 = vadd.f32 0.0, %v1089
  %v1091 = vpop.f32.mrf.mxu0
  %v1092 = vpop.f32.mrf.mxu0
  %v1093 = vadd.f32 0.0, %v1092
  %v1094 = vpop.f32.mrf.mxu0
  %1095 = vmatprep.mubr.bf16.mxu0 0
  %1096 = vmatmul.mubr.bf16.gmra.mxu0 %v990
  %v1097 = vpop.f32.mrf.mxu0
  %v1098 = vadd.f32 0.0, %v1097
  %v1099 = vpop.f32.mrf.mxu0
  %v1100 = vpop.f32.mrf.mxu0
  %v1101 = vadd.f32 0.0, %v1100
  %v1102 = vpop.f32.mrf.mxu0
  %1103 = vmatprep.mubr.bf16.mxu0 0
  %1104 = vmatmul.mubr.bf16.gmra.mxu0 %v993
  %v1105 = vpop.f32.mrf.mxu0
  %v1106 = vadd.f32 0.0, %v1105
  %v1107 = vpop.f32.mrf.mxu0
  %v1108 = vpop.f32.mrf.mxu0
  %v1109 = vadd.f32 0.0, %v1108
  %v1110 = vpop.f32.mrf.mxu0
  %1111 = vmatprep.mubr.bf16.mxu0 0
  %1112 = vmatmul.mubr.bf16.gmra.mxu0 %v996
  %v1113 = vpop.f32.mrf.mxu0
  %v1114 = vadd.f32 0.0, %v1113
  %v1115 = vpop.f32.mrf.mxu0
  %v1116 = vpop.f32.mrf.mxu0
  %v1117 = vadd.f32 0.0, %v1116
  %v1118 = vpop.f32.mrf.mxu0
  %1119 = vmatprep.mubr.bf16.mxu0 0
  %1120 = vmatmul.mubr.bf16.gmra.mxu0 %v999
  %v1121 = vpop.f32.mrf.mxu0
  %v1122 = vadd.f32 0.0, %v1121
  %v1123 = vpop.f32.mrf.mxu0
  %v1124 = vpop.f32.mrf.mxu0
  %v1125 = vadd.f32 0.0, %v1124
  %v1126 = vpop.f32.mrf.mxu0
  %1127 = vmatprep.mubr.bf16.mxu0 0
  %1128 = vmatmul.mubr.bf16.gmra.mxu0 %v1002
  %v1129 = vpop.f32.mrf.mxu0
  %v1130 = vadd.f32 0.0, %v1129
  %v1131 = vpop.f32.mrf.mxu0
  %v1132 = vpop.f32.mrf.mxu0
  %v1133 = vadd.f32 0.0, %v1132
  %v1134 = vpop.f32.mrf.mxu0
  %1135 = vdwg.mxu0
  %v1136 = vadd.f32 %v482, %v1042
  %v1137 = vadd.f32 %v485, %v1045
  %v1138 = vadd.f32 %v490, %v1050
  %v1139 = vadd.f32 %v493, %v1053
  %v1140 = vadd.f32 %v498, %v1058
  %v1141 = vadd.f32 %v501, %v1061
  %v1142 = vadd.f32 %v506, %v1066
  %v1143 = vadd.f32 %v509, %v1069
  %v1144 = vadd.f32 %v514, %v1074
  %v1145 = vadd.f32 %v517, %v1077
  %v1146 = vadd.f32 %v522, %v1082
  %v1147 = vadd.f32 %v525, %v1085
  %v1148 = vadd.f32 %v530, %v1090
  %v1149 = vadd.f32 %v533, %v1093
  %v1150 = vadd.f32 %v538, %v1098
  %v1151 = vadd.f32 %v541, %v1101
  %v1152 = vadd.f32 %v546, %v1106
  %v1153 = vadd.f32 %v549, %v1109
  %v1154 = vadd.f32 %v554, %v1114
  %v1155 = vadd.f32 %v557, %v1117
  %v1156 = vadd.f32 %v562, %v1122
  %v1157 = vadd.f32 %v565, %v1125
  %v1158 = vadd.f32 %v570, %v1130
  %v1159 = vadd.f32 %v573, %v1133
  %s1160 = scalar_lea.vmem %s1, 80
  %v1161 = vld [vmem:[%s1160] sm:$0xf]
  %v1162 = vld [vmem:[%s1160 + $0x4] sm:$0xf]
  %v1163 = vld [vmem:[%s1160 + $0x8] sm:$0xf]
  %v1164 = vld [vmem:[%s1160 + $0xc] sm:$0x3]
  %v1169 = vunpack.c.l.b16 %v1161
  %v1170 = vunpack.c.l.b16 %v1162
  %v1171 = vunpack.c.l.b16 %v1163
  %v1172 = vunpack.c.l.b16 %v1164
  %v1173 = vpack.c.b16 %v1170, %v1169
  %v1174 = vpack.c.b16 %v1172, %v1171
  %v1177 = vsel %vm204, %v1174, 0
  %1179 = vmatprep.subr.bf16.mxu0 0
  %1180 = vmatpush1.bf16.msra.mxu0 0
  %1181 = vmatprep.subr.bf16.mxu0 0
  %1182 = vmatpush1.bf16.msra.mxu0 0
  %1183 = vmatprep.subr.bf16.mxu0 0
  %1184 = vmatpush1.bf16.msra.mxu0 0
  %1185 = vmatprep.subr.bf16.mxu0 0
  %1186 = vmatpush1.bf16.msra.mxu0 0
  %1187 = vmatprep.subr.bf16.mxu0 0
  %1188 = vmatpush1.bf16.msra.mxu0 0
  %1189 = vmatprep.subr.bf16.mxu0 0
  %1190 = vmatpush1.bf16.msra.mxu0 0
  %1191 = vmatprep.subr.bf16.mxu0 0
  %1192 = vmatpush1.bf16.msra.mxu0 %v1177
  %1193 = vmatprep.subr.bf16.mxu0 0
  %1194 = vmatpush1.bf16.msra.mxu0 %v1173
  %1195 = vmatprep.subr.bf16.mxu0 0
  %1196 = vmatpush2.bf16.msra.mxu0 0
  %1197 = vmatprep.subr.bf16.mxu0 0
  %1198 = vmatpush2.bf16.msra.mxu0 0
  %1199 = vmatprep.subr.bf16.mxu0 0
  %1200 = vmatpush2.bf16.msra.mxu0 0
  %1201 = vmatprep.subr.bf16.mxu0 0
  %1202 = vmatpush2.bf16.msra.mxu0 0
  %1203 = vmatprep.subr.bf16.mxu0 0
  %1204 = vmatpush2.bf16.msra.mxu0 0
  %1205 = vmatprep.subr.bf16.mxu0 0
  %1206 = vmatpush2.bf16.msra.mxu0 0
  %1207 = vmatprep.subr.bf16.mxu0 0
  %1208 = vmatpush2.bf16.msra.mxu0 0
  %1209 = vmatprep.subr.bf16.mxu0 0
  %1210 = vmatpush2.bf16.msra.mxu0 0
  %1211 = vmatprep.mubr.bf16.mxu0 0
  %1212 = vmatmul.mubr.bf16.gmra.mxu0 %v969
  %v1213 = vpop.f32.mrf.mxu0
  %v1214 = vadd.f32 0.0, %v1213
  %v1215 = vpop.f32.mrf.mxu0
  %v1216 = vpop.f32.mrf.mxu0
  %v1217 = vadd.f32 0.0, %v1216
  %v1218 = vpop.f32.mrf.mxu0
  %1219 = vmatprep.mubr.bf16.mxu0 0
  %1220 = vmatmul.mubr.bf16.gmra.mxu0 %v972
  %v1221 = vpop.f32.mrf.mxu0
  %v1222 = vadd.f32 0.0, %v1221
  %v1223 = vpop.f32.mrf.mxu0
  %v1224 = vpop.f32.mrf.mxu0
  %v1225 = vadd.f32 0.0, %v1224
  %v1226 = vpop.f32.mrf.mxu0
  %1227 = vmatprep.mubr.bf16.mxu0 0
  %1228 = vmatmul.mubr.bf16.gmra.mxu0 %v975
  %v1229 = vpop.f32.mrf.mxu0
  %v1230 = vadd.f32 0.0, %v1229
  %v1231 = vpop.f32.mrf.mxu0
  %v1232 = vpop.f32.mrf.mxu0
  %v1233 = vadd.f32 0.0, %v1232
  %v1234 = vpop.f32.mrf.mxu0
  %1235 = vmatprep.mubr.bf16.mxu0 0
  %1236 = vmatmul.mubr.bf16.gmra.mxu0 %v978
  %v1237 = vpop.f32.mrf.mxu0
  %v1238 = vadd.f32 0.0, %v1237
  %v1239 = vpop.f32.mrf.mxu0
  %v1240 = vpop.f32.mrf.mxu0
  %v1241 = vadd.f32 0.0, %v1240
  %v1242 = vpop.f32.mrf.mxu0
  %1243 = vmatprep.mubr.bf16.mxu0 0
  %1244 = vmatmul.mubr.bf16.gmra.mxu0 %v981
  %v1245 = vpop.f32.mrf.mxu0
  %v1246 = vadd.f32 0.0, %v1245
  %v1247 = vpop.f32.mrf.mxu0
  %v1248 = vpop.f32.mrf.mxu0
  %v1249 = vadd.f32 0.0, %v1248
  %v1250 = vpop.f32.mrf.mxu0
  %1251 = vmatprep.mubr.bf16.mxu0 0
  %1252 = vmatmul.mubr.bf16.gmra.mxu0 %v984
  %v1253 = vpop.f32.mrf.mxu0
  %v1254 = vadd.f32 0.0, %v1253
  %v1255 = vpop.f32.mrf.mxu0
  %v1256 = vpop.f32.mrf.mxu0
  %v1257 = vadd.f32 0.0, %v1256
  %v1258 = vpop.f32.mrf.mxu0
  %1259 = vmatprep.mubr.bf16.mxu0 0
  %1260 = vmatmul.mubr.bf16.gmra.mxu0 %v987
  %v1261 = vpop.f32.mrf.mxu0
  %v1262 = vadd.f32 0.0, %v1261
  %v1263 = vpop.f32.mrf.mxu0
  %v1264 = vpop.f32.mrf.mxu0
  %v1265 = vadd.f32 0.0, %v1264
  %v1266 = vpop.f32.mrf.mxu0
  %1267 = vmatprep.mubr.bf16.mxu0 0
  %1268 = vmatmul.mubr.bf16.gmra.mxu0 %v990
  %v1269 = vpop.f32.mrf.mxu0
  %v1270 = vadd.f32 0.0, %v1269
  %v1271 = vpop.f32.mrf.mxu0
  %v1272 = vpop.f32.mrf.mxu0
  %v1273 = vadd.f32 0.0, %v1272
  %v1274 = vpop.f32.mrf.mxu0
  %1275 = vmatprep.mubr.bf16.mxu0 0
  %1276 = vmatmul.mubr.bf16.gmra.mxu0 %v993
  %v1277 = vpop.f32.mrf.mxu0
  %v1278 = vadd.f32 0.0, %v1277
  %v1279 = vpop.f32.mrf.mxu0
  %v1280 = vpop.f32.mrf.mxu0
  %v1281 = vadd.f32 0.0, %v1280
  %v1282 = vpop.f32.mrf.mxu0
  %1283 = vmatprep.mubr.bf16.mxu0 0
  %1284 = vmatmul.mubr.bf16.gmra.mxu0 %v996
  %v1285 = vpop.f32.mrf.mxu0
  %v1286 = vadd.f32 0.0, %v1285
  %v1287 = vpop.f32.mrf.mxu0
  %v1288 = vpop.f32.mrf.mxu0
  %v1289 = vadd.f32 0.0, %v1288
  %v1290 = vpop.f32.mrf.mxu0
  %1291 = vmatprep.mubr.bf16.mxu0 0
  %1292 = vmatmul.mubr.bf16.gmra.mxu0 %v999
  %v1293 = vpop.f32.mrf.mxu0
  %v1294 = vadd.f32 0.0, %v1293
  %v1295 = vpop.f32.mrf.mxu0
  %v1296 = vpop.f32.mrf.mxu0
  %v1297 = vadd.f32 0.0, %v1296
  %v1298 = vpop.f32.mrf.mxu0
  %1299 = vmatprep.mubr.bf16.mxu0 0
  %1300 = vmatmul.mubr.bf16.gmra.mxu0 %v1002
  %v1301 = vpop.f32.mrf.mxu0
  %v1302 = vadd.f32 0.0, %v1301
  %v1303 = vpop.f32.mrf.mxu0
  %v1304 = vpop.f32.mrf.mxu0
  %v1305 = vadd.f32 0.0, %v1304
  %v1306 = vpop.f32.mrf.mxu0
  %1307 = vdwg.mxu0
  %v1308 = vadd.f32 %v773, %v1214
  %v1309 = vadd.f32 %v776, %v1217
  %v1310 = vadd.f32 %v781, %v1222
  %v1311 = vadd.f32 %v784, %v1225
  %v1312 = vadd.f32 %v789, %v1230
  %v1313 = vadd.f32 %v792, %v1233
  %v1314 = vadd.f32 %v797, %v1238
  %v1315 = vadd.f32 %v800, %v1241
  %v1316 = vadd.f32 %v805, %v1246
  %v1317 = vadd.f32 %v808, %v1249
  %v1318 = vadd.f32 %v813, %v1254
  %v1319 = vadd.f32 %v816, %v1257
  %v1320 = vadd.f32 %v821, %v1262
  %v1321 = vadd.f32 %v824, %v1265
  %v1322 = vadd.f32 %v829, %v1270
  %v1323 = vadd.f32 %v832, %v1273
  %v1324 = vadd.f32 %v837, %v1278
  %v1325 = vadd.f32 %v840, %v1281
  %v1326 = vadd.f32 %v845, %v1286
  %v1327 = vadd.f32 %v848, %v1289
  %v1328 = vadd.f32 %v853, %v1294
  %v1329 = vadd.f32 %v856, %v1297
  %v1330 = vadd.f32 %v861, %v1302
  %v1331 = vadd.f32 %v864, %v1305
  %1332 = vmatprep.subr.bf16.mxu0 0
  %1333 = vmatpush1.bf16.msra.mxu0 0
  %1334 = vmatprep.subr.bf16.mxu0 0
  %1335 = vmatpush1.bf16.msra.mxu0 0
  %1336 = vmatprep.subr.bf16.mxu0 0
  %1337 = vmatpush1.bf16.msra.mxu0 0
  %1338 = vmatprep.subr.bf16.mxu0 0
  %1339 = vmatpush1.bf16.msra.mxu0 0
  %1340 = vmatprep.subr.bf16.mxu0 0
  %1341 = vmatpush1.bf16.msra.mxu0 0
  %1342 = vmatprep.subr.bf16.mxu0 0
  %1343 = vmatpush1.bf16.msra.mxu0 0
  %1344 = vmatprep.subr.bf16.mxu0 0
  %1345 = vmatpush1.bf16.msra.mxu0 %v206
  %1346 = vmatprep.subr.bf16.mxu0 0
  %1347 = vmatpush1.bf16.msra.mxu0 %v164
  %1348 = vmatprep.subr.bf16.mxu0 0
  %1349 = vmatpush2.bf16.msra.mxu0 0
  %1350 = vmatprep.subr.bf16.mxu0 0
  %1351 = vmatpush2.bf16.msra.mxu0 0
  %1352 = vmatprep.subr.bf16.mxu0 0
  %1353 = vmatpush2.bf16.msra.mxu0 0
  %1354 = vmatprep.subr.bf16.mxu0 0
  %1355 = vmatpush2.bf16.msra.mxu0 0
  %1356 = vmatprep.subr.bf16.mxu0 0
  %1357 = vmatpush2.bf16.msra.mxu0 0
  %1358 = vmatprep.subr.bf16.mxu0 0
  %1359 = vmatpush2.bf16.msra.mxu0 0
  %1360 = vmatprep.subr.bf16.mxu0 0
  %1361 = vmatpush2.bf16.msra.mxu0 0
  %1362 = vmatprep.subr.bf16.mxu0 0
  %1363 = vmatpush2.bf16.msra.mxu0 0
  %1364 = vmatprep.mubr.bf16.mxu0 0
  %1365 = vmatmul.mubr.bf16.gmra.mxu0 %v969
  %v1366 = vpop.f32.mrf.mxu0
  %v1367 = vadd.f32 0.0, %v1366
  %v1368 = vpop.f32.mrf.mxu0
  %v1369 = vpop.f32.mrf.mxu0
  %v1370 = vadd.f32 0.0, %v1369
  %v1371 = vpop.f32.mrf.mxu0
  %1372 = vmatprep.mubr.bf16.mxu0 0
  %1373 = vmatmul.mubr.bf16.gmra.mxu0 %v972
  %v1374 = vpop.f32.mrf.mxu0
  %v1375 = vadd.f32 0.0, %v1374
  %v1376 = vpop.f32.mrf.mxu0
  %v1377 = vpop.f32.mrf.mxu0
  %v1378 = vadd.f32 0.0, %v1377
  %v1379 = vpop.f32.mrf.mxu0
  %1380 = vmatprep.mubr.bf16.mxu0 0
  %1381 = vmatmul.mubr.bf16.gmra.mxu0 %v975
  %v1382 = vpop.f32.mrf.mxu0
  %v1383 = vadd.f32 0.0, %v1382
  %v1384 = vpop.f32.mrf.mxu0
  %v1385 = vpop.f32.mrf.mxu0
  %v1386 = vadd.f32 0.0, %v1385
  %v1387 = vpop.f32.mrf.mxu0
  %1388 = vmatprep.mubr.bf16.mxu0 0
  %1389 = vmatmul.mubr.bf16.gmra.mxu0 %v978
  %v1390 = vpop.f32.mrf.mxu0
  %v1391 = vadd.f32 0.0, %v1390
  %v1392 = vpop.f32.mrf.mxu0
  %v1393 = vpop.f32.mrf.mxu0
  %v1394 = vadd.f32 0.0, %v1393
  %v1395 = vpop.f32.mrf.mxu0
  %1396 = vmatprep.mubr.bf16.mxu0 0
  %1397 = vmatmul.mubr.bf16.gmra.mxu0 %v981
  %v1398 = vpop.f32.mrf.mxu0
  %v1399 = vadd.f32 0.0, %v1398
  %v1400 = vpop.f32.mrf.mxu0
  %v1401 = vpop.f32.mrf.mxu0
  %v1402 = vadd.f32 0.0, %v1401
  %v1403 = vpop.f32.mrf.mxu0
  %1404 = vmatprep.mubr.bf16.mxu0 0
  %1405 = vmatmul.mubr.bf16.gmra.mxu0 %v984
  %v1406 = vpop.f32.mrf.mxu0
  %v1407 = vadd.f32 0.0, %v1406
  %v1408 = vpop.f32.mrf.mxu0
  %v1409 = vpop.f32.mrf.mxu0
  %v1410 = vadd.f32 0.0, %v1409
  %v1411 = vpop.f32.mrf.mxu0
  %1412 = vmatprep.mubr.bf16.mxu0 0
  %1413 = vmatmul.mubr.bf16.gmra.mxu0 %v987
  %v1414 = vpop.f32.mrf.mxu0
  %v1415 = vadd.f32 0.0, %v1414
  %v1416 = vpop.f32.mrf.mxu0
  %v1417 = vpop.f32.mrf.mxu0
  %v1418 = vadd.f32 0.0, %v1417
  %v1419 = vpop.f32.mrf.mxu0
  %1420 = vmatprep.mubr.bf16.mxu0 0
  %1421 = vmatmul.mubr.bf16.gmra.mxu0 %v990
  %v1422 = vpop.f32.mrf.mxu0
  %v1423 = vadd.f32 0.0, %v1422
  %v1424 = vpop.f32.mrf.mxu0
  %v1425 = vpop.f32.mrf.mxu0
  %v1426 = vadd.f32 0.0, %v1425
  %v1427 = vpop.f32.mrf.mxu0
  %1428 = vmatprep.mubr.bf16.mxu0 0
  %1429 = vmatmul.mubr.bf16.gmra.mxu0 %v993
  %v1430 = vpop.f32.mrf.mxu0
  %v1431 = vadd.f32 0.0, %v1430
  %v1432 = vpop.f32.mrf.mxu0
  %v1433 = vpop.f32.mrf.mxu0
  %v1434 = vadd.f32 0.0, %v1433
  %v1435 = vpop.f32.mrf.mxu0
  %1436 = vmatprep.mubr.bf16.mxu0 0
  %1437 = vmatmul.mubr.bf16.gmra.mxu0 %v996
  %v1438 = vpop.f32.mrf.mxu0
  %v1439 = vadd.f32 0.0, %v1438
  %v1440 = vpop.f32.mrf.mxu0
  %v1441 = vpop.f32.mrf.mxu0
  %v1442 = vadd.f32 0.0, %v1441
  %v1443 = vpop.f32.mrf.mxu0
  %1444 = vmatprep.mubr.bf16.mxu0 0
  %1445 = vmatmul.mubr.bf16.gmra.mxu0 %v999
  %v1446 = vpop.f32.mrf.mxu0
  %v1447 = vadd.f32 0.0, %v1446
  %v1448 = vpop.f32.mrf.mxu0
  %v1449 = vpop.f32.mrf.mxu0
  %v1450 = vadd.f32 0.0, %v1449
  %v1451 = vpop.f32.mrf.mxu0
  %1452 = vmatprep.mubr.bf16.mxu0 0
  %1453 = vmatmul.mubr.bf16.gmra.mxu0 %v1002
  %v1454 = vpop.f32.mrf.mxu0
  %v1455 = vadd.f32 0.0, %v1454
  %v1456 = vpop.f32.mrf.mxu0
  %v1457 = vpop.f32.mrf.mxu0
  %v1458 = vadd.f32 0.0, %v1457
  %v1459 = vpop.f32.mrf.mxu0
  %1460 = vdwg.mxu0
  %1461 = vmatprep.subr.bf16.mxu0 0
  %1462 = vmatpush1.bf16.msra.mxu0 0
  %1463 = vmatprep.subr.bf16.mxu0 0
  %1464 = vmatpush1.bf16.msra.mxu0 0
  %1465 = vmatprep.subr.bf16.mxu0 0
  %1466 = vmatpush1.bf16.msra.mxu0 0
  %1467 = vmatprep.subr.bf16.mxu0 0
  %1468 = vmatpush1.bf16.msra.mxu0 0
  %1469 = vmatprep.subr.bf16.mxu0 0
  %1470 = vmatpush1.bf16.msra.mxu0 0
  %1471 = vmatprep.subr.bf16.mxu0 0
  %1472 = vmatpush1.bf16.msra.mxu0 0
  %1473 = vmatprep.subr.bf16.mxu0 0
  %1474 = vmatpush1.bf16.msra.mxu0 %v445
  %1475 = vmatprep.subr.bf16.mxu0 0
  %1476 = vmatpush1.bf16.msra.mxu0 %v405
  %1477 = vmatprep.subr.bf16.mxu0 0
  %1478 = vmatpush2.bf16.msra.mxu0 0
  %1479 = vmatprep.subr.bf16.mxu0 0
  %1480 = vmatpush2.bf16.msra.mxu0 0
  %1481 = vmatprep.subr.bf16.mxu0 0
  %1482 = vmatpush2.bf16.msra.mxu0 0
  %1483 = vmatprep.subr.bf16.mxu0 0
  %1484 = vmatpush2.bf16.msra.mxu0 0
  %1485 = vmatprep.subr.bf16.mxu0 0
  %1486 = vmatpush2.bf16.msra.mxu0 0
  %1487 = vmatprep.subr.bf16.mxu0 0
  %1488 = vmatpush2.bf16.msra.mxu0 0
  %1489 = vmatprep.subr.bf16.mxu0 0
  %1490 = vmatpush2.bf16.msra.mxu0 0
  %1491 = vmatprep.subr.bf16.mxu0 0
  %1492 = vmatpush2.bf16.msra.mxu0 0
  %1493 = vmatprep.mubr.bf16.mxu0 0
  %1494 = vmatmul.mubr.bf16.gmra.mxu0 %v169
  %v1495 = vpop.f32.mrf.mxu0
  %v1496 = vadd.f32 %v1367, %v1495
  %v1497 = vpop.f32.mrf.mxu0
  %v1498 = vpop.f32.mrf.mxu0
  %v1499 = vadd.f32 %v1370, %v1498
  %v1500 = vpop.f32.mrf.mxu0
  %1501 = vmatprep.mubr.bf16.mxu0 0
  %1502 = vmatmul.mubr.bf16.gmra.mxu0 %v172
  %v1503 = vpop.f32.mrf.mxu0
  %v1504 = vadd.f32 %v1375, %v1503
  %v1505 = vpop.f32.mrf.mxu0
  %v1506 = vpop.f32.mrf.mxu0
  %v1507 = vadd.f32 %v1378, %v1506
  %v1508 = vpop.f32.mrf.mxu0
  %1509 = vmatprep.mubr.bf16.mxu0 0
  %1510 = vmatmul.mubr.bf16.gmra.mxu0 %v175
  %v1511 = vpop.f32.mrf.mxu0
  %v1512 = vadd.f32 %v1383, %v1511
  %v1513 = vpop.f32.mrf.mxu0
  %v1514 = vpop.f32.mrf.mxu0
  %v1515 = vadd.f32 %v1386, %v1514
  %v1516 = vpop.f32.mrf.mxu0
  %1517 = vmatprep.mubr.bf16.mxu0 0
  %1518 = vmatmul.mubr.bf16.gmra.mxu0 %v178
  %v1519 = vpop.f32.mrf.mxu0
  %v1520 = vadd.f32 %v1391, %v1519
  %v1521 = vpop.f32.mrf.mxu0
  %v1522 = vpop.f32.mrf.mxu0
  %v1523 = vadd.f32 %v1394, %v1522
  %v1524 = vpop.f32.mrf.mxu0
  %1525 = vmatprep.mubr.bf16.mxu0 0
  %1526 = vmatmul.mubr.bf16.gmra.mxu0 %v181
  %v1527 = vpop.f32.mrf.mxu0
  %v1528 = vadd.f32 %v1399, %v1527
  %v1529 = vpop.f32.mrf.mxu0
  %v1530 = vpop.f32.mrf.mxu0
  %v1531 = vadd.f32 %v1402, %v1530
  %v1532 = vpop.f32.mrf.mxu0
  %1533 = vmatprep.mubr.bf16.mxu0 0
  %1534 = vmatmul.mubr.bf16.gmra.mxu0 %v184
  %v1535 = vpop.f32.mrf.mxu0
  %v1536 = vadd.f32 %v1407, %v1535
  %v1537 = vpop.f32.mrf.mxu0
  %v1538 = vpop.f32.mrf.mxu0
  %v1539 = vadd.f32 %v1410, %v1538
  %v1540 = vpop.f32.mrf.mxu0
  %1541 = vmatprep.mubr.bf16.mxu0 0
  %1542 = vmatmul.mubr.bf16.gmra.mxu0 %v187
  %v1543 = vpop.f32.mrf.mxu0
  %v1544 = vadd.f32 %v1415, %v1543
  %v1545 = vpop.f32.mrf.mxu0
  %v1546 = vpop.f32.mrf.mxu0
  %v1547 = vadd.f32 %v1418, %v1546
  %v1548 = vpop.f32.mrf.mxu0
  %1549 = vmatprep.mubr.bf16.mxu0 0
  %1550 = vmatmul.mubr.bf16.gmra.mxu0 %v190
  %v1551 = vpop.f32.mrf.mxu0
  %v1552 = vadd.f32 %v1423, %v1551
  %v1553 = vpop.f32.mrf.mxu0
  %v1554 = vpop.f32.mrf.mxu0
  %v1555 = vadd.f32 %v1426, %v1554
  %v1556 = vpop.f32.mrf.mxu0
  %1557 = vmatprep.mubr.bf16.mxu0 0
  %1558 = vmatmul.mubr.bf16.gmra.mxu0 %v193
  %v1559 = vpop.f32.mrf.mxu0
  %v1560 = vadd.f32 %v1431, %v1559
  %v1561 = vpop.f32.mrf.mxu0
  %v1562 = vpop.f32.mrf.mxu0
  %v1563 = vadd.f32 %v1434, %v1562
  %v1564 = vpop.f32.mrf.mxu0
  %1565 = vmatprep.mubr.bf16.mxu0 0
  %1566 = vmatmul.mubr.bf16.gmra.mxu0 %v196
  %v1567 = vpop.f32.mrf.mxu0
  %v1568 = vadd.f32 %v1439, %v1567
  %v1569 = vpop.f32.mrf.mxu0
  %v1570 = vpop.f32.mrf.mxu0
  %v1571 = vadd.f32 %v1442, %v1570
  %v1572 = vpop.f32.mrf.mxu0
  %1573 = vmatprep.mubr.bf16.mxu0 0
  %1574 = vmatmul.mubr.bf16.gmra.mxu0 %v199
  %v1575 = vpop.f32.mrf.mxu0
  %v1576 = vadd.f32 %v1447, %v1575
  %v1577 = vpop.f32.mrf.mxu0
  %v1578 = vpop.f32.mrf.mxu0
  %v1579 = vadd.f32 %v1450, %v1578
  %v1580 = vpop.f32.mrf.mxu0
  %1581 = vmatprep.mubr.bf16.mxu0 0
  %1582 = vmatmul.mubr.bf16.gmra.mxu0 %v202
  %v1583 = vpop.f32.mrf.mxu0
  %v1584 = vadd.f32 %v1455, %v1583
  %v1585 = vpop.f32.mrf.mxu0
  %v1586 = vpop.f32.mrf.mxu0
  %v1587 = vadd.f32 %v1458, %v1586
  %v1588 = vpop.f32.mrf.mxu0
  %1589 = vdwg.mxu0
  %1590 = vmatprep.subr.bf16.mxu0 0
  %1591 = vmatpush1.bf16.msra.mxu0 0
  %1592 = vmatprep.subr.bf16.mxu0 0
  %1593 = vmatpush1.bf16.msra.mxu0 0
  %1594 = vmatprep.subr.bf16.mxu0 0
  %1595 = vmatpush1.bf16.msra.mxu0 0
  %1596 = vmatprep.subr.bf16.mxu0 0
  %1597 = vmatpush1.bf16.msra.mxu0 0
  %1598 = vmatprep.subr.bf16.mxu0 0
  %1599 = vmatpush1.bf16.msra.mxu0 0
  %1600 = vmatprep.subr.bf16.mxu0 0
  %1601 = vmatpush1.bf16.msra.mxu0 0
  %1602 = vmatprep.subr.bf16.mxu0 0
  %1603 = vmatpush1.bf16.msra.mxu0 %v593
  %1604 = vmatprep.subr.bf16.mxu0 0
  %1605 = vmatpush1.bf16.msra.mxu0 %v589
  %1606 = vmatprep.subr.bf16.mxu0 0
  %1607 = vmatpush2.bf16.msra.mxu0 0
  %1608 = vmatprep.subr.bf16.mxu0 0
  %1609 = vmatpush2.bf16.msra.mxu0 0
  %1610 = vmatprep.subr.bf16.mxu0 0
  %1611 = vmatpush2.bf16.msra.mxu0 0
  %1612 = vmatprep.subr.bf16.mxu0 0
  %1613 = vmatpush2.bf16.msra.mxu0 0
  %1614 = vmatprep.subr.bf16.mxu0 0
  %1615 = vmatpush2.bf16.msra.mxu0 0
  %1616 = vmatprep.subr.bf16.mxu0 0
  %1617 = vmatpush2.bf16.msra.mxu0 0
  %1618 = vmatprep.subr.bf16.mxu0 0
  %1619 = vmatpush2.bf16.msra.mxu0 0
  %1620 = vmatprep.subr.bf16.mxu0 0
  %1621 = vmatpush2.bf16.msra.mxu0 0
  %1622 = vmatprep.mubr.bf16.mxu0 0
  %1623 = vmatmul.mubr.bf16.gmra.mxu0 %v969
  %v1624 = vpop.f32.mrf.mxu0
  %v1625 = vadd.f32 0.0, %v1624
  %v1626 = vpop.f32.mrf.mxu0
  %v1627 = vpop.f32.mrf.mxu0
  %v1628 = vadd.f32 0.0, %v1627
  %v1629 = vpop.f32.mrf.mxu0
  %1630 = vmatprep.mubr.bf16.mxu0 0
  %1631 = vmatmul.mubr.bf16.gmra.mxu0 %v972
  %v1632 = vpop.f32.mrf.mxu0
  %v1633 = vadd.f32 0.0, %v1632
  %v1634 = vpop.f32.mrf.mxu0
  %v1635 = vpop.f32.mrf.mxu0
  %v1636 = vadd.f32 0.0, %v1635
  %v1637 = vpop.f32.mrf.mxu0
  %1638 = vmatprep.mubr.bf16.mxu0 0
  %1639 = vmatmul.mubr.bf16.gmra.mxu0 %v975
  %v1640 = vpop.f32.mrf.mxu0
  %v1641 = vadd.f32 0.0, %v1640
  %v1642 = vpop.f32.mrf.mxu0
  %v1643 = vpop.f32.mrf.mxu0
  %v1644 = vadd.f32 0.0, %v1643
  %v1645 = vpop.f32.mrf.mxu0
  %1646 = vmatprep.mubr.bf16.mxu0 0
  %1647 = vmatmul.mubr.bf16.gmra.mxu0 %v978
  %v1648 = vpop.f32.mrf.mxu0
  %v1649 = vadd.f32 0.0, %v1648
  %v1650 = vpop.f32.mrf.mxu0
  %v1651 = vpop.f32.mrf.mxu0
  %v1652 = vadd.f32 0.0, %v1651
  %v1653 = vpop.f32.mrf.mxu0
  %1654 = vmatprep.mubr.bf16.mxu0 0
  %1655 = vmatmul.mubr.bf16.gmra.mxu0 %v981
  %v1656 = vpop.f32.mrf.mxu0
  %v1657 = vadd.f32 0.0, %v1656
  %v1658 = vpop.f32.mrf.mxu0
  %v1659 = vpop.f32.mrf.mxu0
  %v1660 = vadd.f32 0.0, %v1659
  %v1661 = vpop.f32.mrf.mxu0
  %1662 = vmatprep.mubr.bf16.mxu0 0
  %1663 = vmatmul.mubr.bf16.gmra.mxu0 %v984
  %v1664 = vpop.f32.mrf.mxu0
  %v1665 = vadd.f32 0.0, %v1664
  %v1666 = vpop.f32.mrf.mxu0
  %v1667 = vpop.f32.mrf.mxu0
  %v1668 = vadd.f32 0.0, %v1667
  %v1669 = vpop.f32.mrf.mxu0
  %1670 = vmatprep.mubr.bf16.mxu0 0
  %1671 = vmatmul.mubr.bf16.gmra.mxu0 %v987
  %v1672 = vpop.f32.mrf.mxu0
  %v1673 = vadd.f32 0.0, %v1672
  %v1674 = vpop.f32.mrf.mxu0
  %v1675 = vpop.f32.mrf.mxu0
  %v1676 = vadd.f32 0.0, %v1675
  %v1677 = vpop.f32.mrf.mxu0
  %1678 = vmatprep.mubr.bf16.mxu0 0
  %1679 = vmatmul.mubr.bf16.gmra.mxu0 %v990
  %v1680 = vpop.f32.mrf.mxu0
  %v1681 = vadd.f32 0.0, %v1680
  %v1682 = vpop.f32.mrf.mxu0
  %v1683 = vpop.f32.mrf.mxu0
  %v1684 = vadd.f32 0.0, %v1683
  %v1685 = vpop.f32.mrf.mxu0
  %1686 = vmatprep.mubr.bf16.mxu0 0
  %1687 = vmatmul.mubr.bf16.gmra.mxu0 %v993
  %v1688 = vpop.f32.mrf.mxu0
  %v1689 = vadd.f32 0.0, %v1688
  %v1690 = vpop.f32.mrf.mxu0
  %v1691 = vpop.f32.mrf.mxu0
  %v1692 = vadd.f32 0.0, %v1691
  %v1693 = vpop.f32.mrf.mxu0
  %1694 = vmatprep.mubr.bf16.mxu0 0
  %1695 = vmatmul.mubr.bf16.gmra.mxu0 %v996
  %v1696 = vpop.f32.mrf.mxu0
  %v1697 = vadd.f32 0.0, %v1696
  %v1698 = vpop.f32.mrf.mxu0
  %v1699 = vpop.f32.mrf.mxu0
  %v1700 = vadd.f32 0.0, %v1699
  %v1701 = vpop.f32.mrf.mxu0
  %1702 = vmatprep.mubr.bf16.mxu0 0
  %1703 = vmatmul.mubr.bf16.gmra.mxu0 %v999
  %v1704 = vpop.f32.mrf.mxu0
  %v1705 = vadd.f32 0.0, %v1704
  %v1706 = vpop.f32.mrf.mxu0
  %v1707 = vpop.f32.mrf.mxu0
  %v1708 = vadd.f32 0.0, %v1707
  %v1709 = vpop.f32.mrf.mxu0
  %1710 = vmatprep.mubr.bf16.mxu0 0
  %1711 = vmatmul.mubr.bf16.gmra.mxu0 %v1002
  %v1712 = vpop.f32.mrf.mxu0
  %v1713 = vadd.f32 0.0, %v1712
  %v1714 = vpop.f32.mrf.mxu0
  %v1715 = vpop.f32.mrf.mxu0
  %v1716 = vadd.f32 0.0, %v1715
  %v1717 = vpop.f32.mrf.mxu0
  %1718 = vdwg.mxu0
  %1719 = vmatprep.subr.bf16.mxu0 0
  %1720 = vmatpush1.bf16.msra.mxu0 0
  %1721 = vmatprep.subr.bf16.mxu0 0
  %1722 = vmatpush1.bf16.msra.mxu0 0
  %1723 = vmatprep.subr.bf16.mxu0 0
  %1724 = vmatpush1.bf16.msra.mxu0 0
  %1725 = vmatprep.subr.bf16.mxu0 0
  %1726 = vmatpush1.bf16.msra.mxu0 0
  %1727 = vmatprep.subr.bf16.mxu0 0
  %1728 = vmatpush1.bf16.msra.mxu0 0
  %1729 = vmatprep.subr.bf16.mxu0 0
  %1730 = vmatpush1.bf16.msra.mxu0 0
  %1731 = vmatprep.subr.bf16.mxu0 0
  %1732 = vmatpush1.bf16.msra.mxu0 %v736
  %1733 = vmatprep.subr.bf16.mxu0 0
  %1734 = vmatpush1.bf16.msra.mxu0 %v732
  %1735 = vmatprep.subr.bf16.mxu0 0
  %1736 = vmatpush2.bf16.msra.mxu0 0
  %1737 = vmatprep.subr.bf16.mxu0 0
  %1738 = vmatpush2.bf16.msra.mxu0 0
  %1739 = vmatprep.subr.bf16.mxu0 0
  %1740 = vmatpush2.bf16.msra.mxu0 0
  %1741 = vmatprep.subr.bf16.mxu0 0
  %1742 = vmatpush2.bf16.msra.mxu0 0
  %1743 = vmatprep.subr.bf16.mxu0 0
  %1744 = vmatpush2.bf16.msra.mxu0 0
  %1745 = vmatprep.subr.bf16.mxu0 0
  %1746 = vmatpush2.bf16.msra.mxu0 0
  %1747 = vmatprep.subr.bf16.mxu0 0
  %1748 = vmatpush2.bf16.msra.mxu0 0
  %1749 = vmatprep.subr.bf16.mxu0 0
  %1750 = vmatpush2.bf16.msra.mxu0 0
  %1751 = vmatprep.mubr.bf16.mxu0 0
  %1752 = vmatmul.mubr.bf16.gmra.mxu0 %v169
  %v1753 = vpop.f32.mrf.mxu0
  %v1754 = vadd.f32 %v1625, %v1753
  %v1755 = vpop.f32.mrf.mxu0
  %v1756 = vpop.f32.mrf.mxu0
  %v1757 = vadd.f32 %v1628, %v1756
  %v1758 = vpop.f32.mrf.mxu0
  %1759 = vmatprep.mubr.bf16.mxu0 0
  %1760 = vmatmul.mubr.bf16.gmra.mxu0 %v172
  %v1761 = vpop.f32.mrf.mxu0
  %v1762 = vadd.f32 %v1633, %v1761
  %v1763 = vpop.f32.mrf.mxu0
  %v1764 = vpop.f32.mrf.mxu0
  %v1765 = vadd.f32 %v1636, %v1764
  %v1766 = vpop.f32.mrf.mxu0
  %1767 = vmatprep.mubr.bf16.mxu0 0
  %1768 = vmatmul.mubr.bf16.gmra.mxu0 %v175
  %v1769 = vpop.f32.mrf.mxu0
  %v1770 = vadd.f32 %v1641, %v1769
  %v1771 = vpop.f32.mrf.mxu0
  %v1772 = vpop.f32.mrf.mxu0
  %v1773 = vadd.f32 %v1644, %v1772
  %v1774 = vpop.f32.mrf.mxu0
  %1775 = vmatprep.mubr.bf16.mxu0 0
  %1776 = vmatmul.mubr.bf16.gmra.mxu0 %v178
  %v1777 = vpop.f32.mrf.mxu0
  %v1778 = vadd.f32 %v1649, %v1777
  %v1779 = vpop.f32.mrf.mxu0
  %v1780 = vpop.f32.mrf.mxu0
  %v1781 = vadd.f32 %v1652, %v1780
  %v1782 = vpop.f32.mrf.mxu0
  %1783 = vmatprep.mubr.bf16.mxu0 0
  %1784 = vmatmul.mubr.bf16.gmra.mxu0 %v181
  %v1785 = vpop.f32.mrf.mxu0
  %v1786 = vadd.f32 %v1657, %v1785
  %v1787 = vpop.f32.mrf.mxu0
  %v1788 = vpop.f32.mrf.mxu0
  %v1789 = vadd.f32 %v1660, %v1788
  %v1790 = vpop.f32.mrf.mxu0
  %1791 = vmatprep.mubr.bf16.mxu0 0
  %1792 = vmatmul.mubr.bf16.gmra.mxu0 %v184
  %v1793 = vpop.f32.mrf.mxu0
  %v1794 = vadd.f32 %v1665, %v1793
  %v1795 = vpop.f32.mrf.mxu0
  %v1796 = vpop.f32.mrf.mxu0
  %v1797 = vadd.f32 %v1668, %v1796
  %v1798 = vpop.f32.mrf.mxu0
  %1799 = vmatprep.mubr.bf16.mxu0 0
  %1800 = vmatmul.mubr.bf16.gmra.mxu0 %v187
  %v1801 = vpop.f32.mrf.mxu0
  %v1802 = vadd.f32 %v1673, %v1801
  %v1803 = vpop.f32.mrf.mxu0
  %v1804 = vpop.f32.mrf.mxu0
  %v1805 = vadd.f32 %v1676, %v1804
  %v1806 = vpop.f32.mrf.mxu0
  %1807 = vmatprep.mubr.bf16.mxu0 0
  %1808 = vmatmul.mubr.bf16.gmra.mxu0 %v190
  %v1809 = vpop.f32.mrf.mxu0
  %v1810 = vadd.f32 %v1681, %v1809
  %v1811 = vpop.f32.mrf.mxu0
  %v1812 = vpop.f32.mrf.mxu0
  %v1813 = vadd.f32 %v1684, %v1812
  %v1814 = vpop.f32.mrf.mxu0
  %1815 = vmatprep.mubr.bf16.mxu0 0
  %1816 = vmatmul.mubr.bf16.gmra.mxu0 %v193
  %v1817 = vpop.f32.mrf.mxu0
  %v1818 = vadd.f32 %v1689, %v1817
  %v1819 = vpop.f32.mrf.mxu0
  %v1820 = vpop.f32.mrf.mxu0
  %v1821 = vadd.f32 %v1692, %v1820
  %v1822 = vpop.f32.mrf.mxu0
  %1823 = vmatprep.mubr.bf16.mxu0 0
  %1824 = vmatmul.mubr.bf16.gmra.mxu0 %v196
  %v1825 = vpop.f32.mrf.mxu0
  %v1826 = vadd.f32 %v1697, %v1825
  %v1827 = vpop.f32.mrf.mxu0
  %v1828 = vpop.f32.mrf.mxu0
  %v1829 = vadd.f32 %v1700, %v1828
  %v1830 = vpop.f32.mrf.mxu0
  %1831 = vmatprep.mubr.bf16.mxu0 0
  %1832 = vmatmul.mubr.bf16.gmra.mxu0 %v199
  %v1833 = vpop.f32.mrf.mxu0
  %v1834 = vadd.f32 %v1705, %v1833
  %v1835 = vpop.f32.mrf.mxu0
  %v1836 = vpop.f32.mrf.mxu0
  %v1837 = vadd.f32 %v1708, %v1836
  %v1838 = vpop.f32.mrf.mxu0
  %1839 = vmatprep.mubr.bf16.mxu0 0
  %1840 = vmatmul.mubr.bf16.gmra.mxu0 %v202
  %v1841 = vpop.f32.mrf.mxu0
  %v1842 = vadd.f32 %v1713, %v1841
  %v1843 = vpop.f32.mrf.mxu0
  %v1844 = vpop.f32.mrf.mxu0
  %v1845 = vadd.f32 %v1716, %v1844
  %v1846 = vpop.f32.mrf.mxu0
  %1847 = vdwg.mxu0
  %s1848 = scalar_lea.vmem %s0, 120
  %v1849 = vld [vmem:[%s1848] sm:$0xf]
  %v1850 = vld [vmem:[%s1848 + $0x4] sm:$0xf]
  %v1851 = vld [vmem:[%s1848 + $0x8] sm:$0xf]
  %v1852 = vld [vmem:[%s1848 + $0xc] sm:$0xf]
  %v1853 = vld [vmem:[%s1848 + $0x10] sm:$0xf]
  %v1854 = vld [vmem:[%s1848 + $0x14] sm:$0xf]
  %v1855 = vld [vmem:[%s1848 + $0x18] sm:$0xf]
  %v1856 = vld [vmem:[%s1848 + $0x1c] sm:$0xf]
  %v1857 = vld [vmem:[%s1848 + $0x20] sm:$0xf]
  %v1858 = vld [vmem:[%s1848 + $0x24] sm:$0xf]
  %v1859 = vld [vmem:[%s1848 + $0x28] sm:$0xf]
  %v1860 = vld [vmem:[%s1848 + $0x2c] sm:$0xf]
  %v1861 = vld [vmem:[%s1848 + $0x30] sm:$0xf]
  %v1862 = vld [vmem:[%s1848 + $0x34] sm:$0xf]
  %v1863 = vld [vmem:[%s1848 + $0x38] sm:$0xf]
  %v1864 = vld [vmem:[%s1848 + $0x3c] sm:$0xf]
  %v1865 = vld [vmem:[%s1848 + $0x40] sm:$0xf]
  %v1866 = vld [vmem:[%s1848 + $0x44] sm:$0xf]
  %v1867 = vld [vmem:[%s1848 + $0x48] sm:$0xf]
  %v1868 = vld [vmem:[%s1848 + $0x4c] sm:$0xf]
  %v1869 = vld [vmem:[%s1848 + $0x50] sm:$0xf]
  %v1870 = vld [vmem:[%s1848 + $0x54] sm:$0xf]
  %v1871 = vld [vmem:[%s1848 + $0x58] sm:$0xf]
  %v1872 = vld [vmem:[%s1848 + $0x5c] sm:$0xf]
  %s1873 = scalar_lea.vmem %s1, 96
  %v1874 = vld [vmem:[%s1873] sm:$0xf]
  %v1875 = vld [vmem:[%s1873 + $0x4] sm:$0xf]
  %v1876 = vld [vmem:[%s1873 + $0x8] sm:$0xf]
  %v1877 = vld [vmem:[%s1873 + $0xc] sm:$0x3]
  %v1902 = vunpack.c.l.b16 %v1849
  %v1903 = vunpack.c.l.b16 %v1850
  %v1904 = vunpack.c.l.b16 %v1851
  %v1905 = vunpack.c.l.b16 %v1852
  %v1906 = vunpack.c.l.b16 %v1853
  %v1907 = vunpack.c.l.b16 %v1854
  %v1908 = vunpack.c.l.b16 %v1855
  %v1909 = vunpack.c.l.b16 %v1856
  %v1910 = vunpack.c.l.b16 %v1857
  %v1911 = vunpack.c.l.b16 %v1858
  %v1912 = vunpack.c.l.b16 %v1859
  %v1913 = vunpack.c.l.b16 %v1860
  %v1914 = vunpack.c.l.b16 %v1861
  %v1915 = vunpack.c.l.b16 %v1862
  %v1916 = vunpack.c.l.b16 %v1863
  %v1917 = vunpack.c.l.b16 %v1864
  %v1918 = vunpack.c.l.b16 %v1865
  %v1919 = vunpack.c.l.b16 %v1866
  %v1920 = vunpack.c.l.b16 %v1867
  %v1921 = vunpack.c.l.b16 %v1868
  %v1922 = vunpack.c.l.b16 %v1869
  %v1923 = vunpack.c.l.b16 %v1870
  %v1924 = vunpack.c.l.b16 %v1871
  %v1925 = vunpack.c.l.b16 %v1872
  %v1926 = vpack.c.b16 %v1903, %v1902
  %v1927 = vpack.c.b16 %v1905, %v1904
  %v1928 = vpack.c.b16 %v1907, %v1906
  %v1929 = vpack.c.b16 %v1909, %v1908
  %v1930 = vpack.c.b16 %v1911, %v1910
  %v1931 = vpack.c.b16 %v1913, %v1912
  %v1932 = vpack.c.b16 %v1915, %v1914
  %v1933 = vpack.c.b16 %v1917, %v1916
  %v1934 = vpack.c.b16 %v1919, %v1918
  %v1935 = vpack.c.b16 %v1921, %v1920
  %v1936 = vpack.c.b16 %v1923, %v1922
  %v1937 = vpack.c.b16 %v1925, %v1924
  %v1942 = vunpack.c.l.b16 %v1874
  %v1943 = vunpack.c.l.b16 %v1875
  %v1944 = vunpack.c.l.b16 %v1876
  %v1945 = vunpack.c.l.b16 %v1877
  %v1946 = vpack.c.b16 %v1943, %v1942
  %v1947 = vpack.c.b16 %v1945, %v1944
  %v1950 = vsel %vm167, %v1926, 0
  %v1953 = vsel %vm167, %v1927, 0
  %v1956 = vsel %vm167, %v1928, 0
  %v1959 = vsel %vm167, %v1929, 0
  %v1962 = vsel %vm167, %v1930, 0
  %v1965 = vsel %vm167, %v1931, 0
  %v1968 = vsel %vm167, %v1932, 0
  %v1971 = vsel %vm167, %v1933, 0
  %v1974 = vsel %vm167, %v1934, 0
  %v1977 = vsel %vm167, %v1935, 0
  %v1980 = vsel %vm167, %v1936, 0
  %v1983 = vsel %vm167, %v1937, 0
  %v1986 = vsel %vm204, %v1947, 0
  %1988 = vmatprep.subr.bf16.mxu0 0
  %1989 = vmatpush1.bf16.msra.mxu0 0
  %1990 = vmatprep.subr.bf16.mxu0 0
  %1991 = vmatpush1.bf16.msra.mxu0 0
  %1992 = vmatprep.subr.bf16.mxu0 0
  %1993 = vmatpush1.bf16.msra.mxu0 0
  %1994 = vmatprep.subr.bf16.mxu0 0
  %1995 = vmatpush1.bf16.msra.mxu0 0
  %1996 = vmatprep.subr.bf16.mxu0 0
  %1997 = vmatpush1.bf16.msra.mxu0 0
  %1998 = vmatprep.subr.bf16.mxu0 0
  %1999 = vmatpush1.bf16.msra.mxu0 0
  %2000 = vmatprep.subr.bf16.mxu0 0
  %2001 = vmatpush1.bf16.msra.mxu0 %v1986
  %2002 = vmatprep.subr.bf16.mxu0 0
  %2003 = vmatpush1.bf16.msra.mxu0 %v1946
  %2004 = vmatprep.subr.bf16.mxu0 0
  %2005 = vmatpush2.bf16.msra.mxu0 0
  %2006 = vmatprep.subr.bf16.mxu0 0
  %2007 = vmatpush2.bf16.msra.mxu0 0
  %2008 = vmatprep.subr.bf16.mxu0 0
  %2009 = vmatpush2.bf16.msra.mxu0 0
  %2010 = vmatprep.subr.bf16.mxu0 0
  %2011 = vmatpush2.bf16.msra.mxu0 0
  %2012 = vmatprep.subr.bf16.mxu0 0
  %2013 = vmatpush2.bf16.msra.mxu0 0
  %2014 = vmatprep.subr.bf16.mxu0 0
  %2015 = vmatpush2.bf16.msra.mxu0 0
  %2016 = vmatprep.subr.bf16.mxu0 0
  %2017 = vmatpush2.bf16.msra.mxu0 0
  %2018 = vmatprep.subr.bf16.mxu0 0
  %2019 = vmatpush2.bf16.msra.mxu0 0
  %2020 = vmatprep.mubr.bf16.mxu0 0
  %2021 = vmatmul.mubr.bf16.gmra.mxu0 %v1950
  %v2022 = vpop.f32.mrf.mxu0
  %v2023 = vadd.f32 0.0, %v2022
  %v2024 = vpop.f32.mrf.mxu0
  %v2025 = vpop.f32.mrf.mxu0
  %v2026 = vadd.f32 0.0, %v2025
  %v2027 = vpop.f32.mrf.mxu0
  %2028 = vmatprep.mubr.bf16.mxu0 0
  %2029 = vmatmul.mubr.bf16.gmra.mxu0 %v1953
  %v2030 = vpop.f32.mrf.mxu0
  %v2031 = vadd.f32 0.0, %v2030
  %v2032 = vpop.f32.mrf.mxu0
  %v2033 = vpop.f32.mrf.mxu0
  %v2034 = vadd.f32 0.0, %v2033
  %v2035 = vpop.f32.mrf.mxu0
  %2036 = vmatprep.mubr.bf16.mxu0 0
  %2037 = vmatmul.mubr.bf16.gmra.mxu0 %v1956
  %v2038 = vpop.f32.mrf.mxu0
  %v2039 = vadd.f32 0.0, %v2038
  %v2040 = vpop.f32.mrf.mxu0
  %v2041 = vpop.f32.mrf.mxu0
  %v2042 = vadd.f32 0.0, %v2041
  %v2043 = vpop.f32.mrf.mxu0
  %2044 = vmatprep.mubr.bf16.mxu0 0
  %2045 = vmatmul.mubr.bf16.gmra.mxu0 %v1959
  %v2046 = vpop.f32.mrf.mxu0
  %v2047 = vadd.f32 0.0, %v2046
  %v2048 = vpop.f32.mrf.mxu0
  %v2049 = vpop.f32.mrf.mxu0
  %v2050 = vadd.f32 0.0, %v2049
  %v2051 = vpop.f32.mrf.mxu0
  %2052 = vmatprep.mubr.bf16.mxu0 0
  %2053 = vmatmul.mubr.bf16.gmra.mxu0 %v1962
  %v2054 = vpop.f32.mrf.mxu0
  %v2055 = vadd.f32 0.0, %v2054
  %v2056 = vpop.f32.mrf.mxu0
  %v2057 = vpop.f32.mrf.mxu0
  %v2058 = vadd.f32 0.0, %v2057
  %v2059 = vpop.f32.mrf.mxu0
  %2060 = vmatprep.mubr.bf16.mxu0 0
  %2061 = vmatmul.mubr.bf16.gmra.mxu0 %v1965
  %v2062 = vpop.f32.mrf.mxu0
  %v2063 = vadd.f32 0.0, %v2062
  %v2064 = vpop.f32.mrf.mxu0
  %v2065 = vpop.f32.mrf.mxu0
  %v2066 = vadd.f32 0.0, %v2065
  %v2067 = vpop.f32.mrf.mxu0
  %2068 = vmatprep.mubr.bf16.mxu0 0
  %2069 = vmatmul.mubr.bf16.gmra.mxu0 %v1968
  %v2070 = vpop.f32.mrf.mxu0
  %v2071 = vadd.f32 0.0, %v2070
  %v2072 = vpop.f32.mrf.mxu0
  %v2073 = vpop.f32.mrf.mxu0
  %v2074 = vadd.f32 0.0, %v2073
  %v2075 = vpop.f32.mrf.mxu0
  %2076 = vmatprep.mubr.bf16.mxu0 0
  %2077 = vmatmul.mubr.bf16.gmra.mxu0 %v1971
  %v2078 = vpop.f32.mrf.mxu0
  %v2079 = vadd.f32 0.0, %v2078
  %v2080 = vpop.f32.mrf.mxu0
  %v2081 = vpop.f32.mrf.mxu0
  %v2082 = vadd.f32 0.0, %v2081
  %v2083 = vpop.f32.mrf.mxu0
  %2084 = vmatprep.mubr.bf16.mxu0 0
  %2085 = vmatmul.mubr.bf16.gmra.mxu0 %v1974
  %v2086 = vpop.f32.mrf.mxu0
  %v2087 = vadd.f32 0.0, %v2086
  %v2088 = vpop.f32.mrf.mxu0
  %v2089 = vpop.f32.mrf.mxu0
  %v2090 = vadd.f32 0.0, %v2089
  %v2091 = vpop.f32.mrf.mxu0
  %2092 = vmatprep.mubr.bf16.mxu0 0
  %2093 = vmatmul.mubr.bf16.gmra.mxu0 %v1977
  %v2094 = vpop.f32.mrf.mxu0
  %v2095 = vadd.f32 0.0, %v2094
  %v2096 = vpop.f32.mrf.mxu0
  %v2097 = vpop.f32.mrf.mxu0
  %v2098 = vadd.f32 0.0, %v2097
  %v2099 = vpop.f32.mrf.mxu0
  %2100 = vmatprep.mubr.bf16.mxu0 0
  %2101 = vmatmul.mubr.bf16.gmra.mxu0 %v1980
  %v2102 = vpop.f32.mrf.mxu0
  %v2103 = vadd.f32 0.0, %v2102
  %v2104 = vpop.f32.mrf.mxu0
  %v2105 = vpop.f32.mrf.mxu0
  %v2106 = vadd.f32 0.0, %v2105
  %v2107 = vpop.f32.mrf.mxu0
  %2108 = vmatprep.mubr.bf16.mxu0 0
  %2109 = vmatmul.mubr.bf16.gmra.mxu0 %v1983
  %v2110 = vpop.f32.mrf.mxu0
  %v2111 = vadd.f32 0.0, %v2110
  %v2112 = vpop.f32.mrf.mxu0
  %v2113 = vpop.f32.mrf.mxu0
  %v2114 = vadd.f32 0.0, %v2113
  %v2115 = vpop.f32.mrf.mxu0
  %2116 = vdwg.mxu0
  %v2117 = vadd.f32 %v1136, %v2023
  %v2118 = vadd.f32 %v1137, %v2026
  %v2119 = vadd.f32 %v1138, %v2031
  %v2120 = vadd.f32 %v1139, %v2034
  %v2121 = vadd.f32 %v1140, %v2039
  %v2122 = vadd.f32 %v1141, %v2042
  %v2123 = vadd.f32 %v1142, %v2047
  %v2124 = vadd.f32 %v1143, %v2050
  %v2125 = vadd.f32 %v1144, %v2055
  %v2126 = vadd.f32 %v1145, %v2058
  %v2127 = vadd.f32 %v1146, %v2063
  %v2128 = vadd.f32 %v1147, %v2066
  %v2129 = vadd.f32 %v1148, %v2071
  %v2130 = vadd.f32 %v1149, %v2074
  %v2131 = vadd.f32 %v1150, %v2079
  %v2132 = vadd.f32 %v1151, %v2082
  %v2133 = vadd.f32 %v1152, %v2087
  %v2134 = vadd.f32 %v1153, %v2090
  %v2135 = vadd.f32 %v1154, %v2095
  %v2136 = vadd.f32 %v1155, %v2098
  %v2137 = vadd.f32 %v1156, %v2103
  %v2138 = vadd.f32 %v1157, %v2106
  %v2139 = vadd.f32 %v1158, %v2111
  %v2140 = vadd.f32 %v1159, %v2114
  %s2141 = scalar_lea.vmem %s1, 112
  %v2142 = vld [vmem:[%s2141] sm:$0xf]
  %v2143 = vld [vmem:[%s2141 + $0x4] sm:$0xf]
  %v2144 = vld [vmem:[%s2141 + $0x8] sm:$0xf]
  %v2145 = vld [vmem:[%s2141 + $0xc] sm:$0x3]
  %v2150 = vunpack.c.l.b16 %v2142
  %v2151 = vunpack.c.l.b16 %v2143
  %v2152 = vunpack.c.l.b16 %v2144
  %v2153 = vunpack.c.l.b16 %v2145
  %v2154 = vpack.c.b16 %v2151, %v2150
  %v2155 = vpack.c.b16 %v2153, %v2152
  %v2158 = vsel %vm204, %v2155, 0
  %2160 = vmatprep.subr.bf16.mxu0 0
  %2161 = vmatpush1.bf16.msra.mxu0 0
  %2162 = vmatprep.subr.bf16.mxu0 0
  %2163 = vmatpush1.bf16.msra.mxu0 0
  %2164 = vmatprep.subr.bf16.mxu0 0
  %2165 = vmatpush1.bf16.msra.mxu0 0
  %2166 = vmatprep.subr.bf16.mxu0 0
  %2167 = vmatpush1.bf16.msra.mxu0 0
  %2168 = vmatprep.subr.bf16.mxu0 0
  %2169 = vmatpush1.bf16.msra.mxu0 0
  %2170 = vmatprep.subr.bf16.mxu0 0
  %2171 = vmatpush1.bf16.msra.mxu0 0
  %2172 = vmatprep.subr.bf16.mxu0 0
  %2173 = vmatpush1.bf16.msra.mxu0 %v2158
  %2174 = vmatprep.subr.bf16.mxu0 0
  %2175 = vmatpush1.bf16.msra.mxu0 %v2154
  %2176 = vmatprep.subr.bf16.mxu0 0
  %2177 = vmatpush2.bf16.msra.mxu0 0
  %2178 = vmatprep.subr.bf16.mxu0 0
  %2179 = vmatpush2.bf16.msra.mxu0 0
  %2180 = vmatprep.subr.bf16.mxu0 0
  %2181 = vmatpush2.bf16.msra.mxu0 0
  %2182 = vmatprep.subr.bf16.mxu0 0
  %2183 = vmatpush2.bf16.msra.mxu0 0
  %2184 = vmatprep.subr.bf16.mxu0 0
  %2185 = vmatpush2.bf16.msra.mxu0 0
  %2186 = vmatprep.subr.bf16.mxu0 0
  %2187 = vmatpush2.bf16.msra.mxu0 0
  %2188 = vmatprep.subr.bf16.mxu0 0
  %2189 = vmatpush2.bf16.msra.mxu0 0
  %2190 = vmatprep.subr.bf16.mxu0 0
  %2191 = vmatpush2.bf16.msra.mxu0 0
  %2192 = vmatprep.mubr.bf16.mxu0 0
  %2193 = vmatmul.mubr.bf16.gmra.mxu0 %v1950
  %v2194 = vpop.f32.mrf.mxu0
  %v2195 = vadd.f32 0.0, %v2194
  %v2196 = vpop.f32.mrf.mxu0
  %v2197 = vpop.f32.mrf.mxu0
  %v2198 = vadd.f32 0.0, %v2197
  %v2199 = vpop.f32.mrf.mxu0
  %2200 = vmatprep.mubr.bf16.mxu0 0
  %2201 = vmatmul.mubr.bf16.gmra.mxu0 %v1953
  %v2202 = vpop.f32.mrf.mxu0
  %v2203 = vadd.f32 0.0, %v2202
  %v2204 = vpop.f32.mrf.mxu0
  %v2205 = vpop.f32.mrf.mxu0
  %v2206 = vadd.f32 0.0, %v2205
  %v2207 = vpop.f32.mrf.mxu0
  %2208 = vmatprep.mubr.bf16.mxu0 0
  %2209 = vmatmul.mubr.bf16.gmra.mxu0 %v1956
  %v2210 = vpop.f32.mrf.mxu0
  %v2211 = vadd.f32 0.0, %v2210
  %v2212 = vpop.f32.mrf.mxu0
  %v2213 = vpop.f32.mrf.mxu0
  %v2214 = vadd.f32 0.0, %v2213
  %v2215 = vpop.f32.mrf.mxu0
  %2216 = vmatprep.mubr.bf16.mxu0 0
  %2217 = vmatmul.mubr.bf16.gmra.mxu0 %v1959
  %v2218 = vpop.f32.mrf.mxu0
  %v2219 = vadd.f32 0.0, %v2218
  %v2220 = vpop.f32.mrf.mxu0
  %v2221 = vpop.f32.mrf.mxu0
  %v2222 = vadd.f32 0.0, %v2221
  %v2223 = vpop.f32.mrf.mxu0
  %2224 = vmatprep.mubr.bf16.mxu0 0
  %2225 = vmatmul.mubr.bf16.gmra.mxu0 %v1962
  %v2226 = vpop.f32.mrf.mxu0
  %v2227 = vadd.f32 0.0, %v2226
  %v2228 = vpop.f32.mrf.mxu0
  %v2229 = vpop.f32.mrf.mxu0
  %v2230 = vadd.f32 0.0, %v2229
  %v2231 = vpop.f32.mrf.mxu0
  %2232 = vmatprep.mubr.bf16.mxu0 0
  %2233 = vmatmul.mubr.bf16.gmra.mxu0 %v1965
  %v2234 = vpop.f32.mrf.mxu0
  %v2235 = vadd.f32 0.0, %v2234
  %v2236 = vpop.f32.mrf.mxu0
  %v2237 = vpop.f32.mrf.mxu0
  %v2238 = vadd.f32 0.0, %v2237
  %v2239 = vpop.f32.mrf.mxu0
  %2240 = vmatprep.mubr.bf16.mxu0 0
  %2241 = vmatmul.mubr.bf16.gmra.mxu0 %v1968
  %v2242 = vpop.f32.mrf.mxu0
  %v2243 = vadd.f32 0.0, %v2242
  %v2244 = vpop.f32.mrf.mxu0
  %v2245 = vpop.f32.mrf.mxu0
  %v2246 = vadd.f32 0.0, %v2245
  %v2247 = vpop.f32.mrf.mxu0
  %2248 = vmatprep.mubr.bf16.mxu0 0
  %2249 = vmatmul.mubr.bf16.gmra.mxu0 %v1971
  %v2250 = vpop.f32.mrf.mxu0
  %v2251 = vadd.f32 0.0, %v2250
  %v2252 = vpop.f32.mrf.mxu0
  %v2253 = vpop.f32.mrf.mxu0
  %v2254 = vadd.f32 0.0, %v2253
  %v2255 = vpop.f32.mrf.mxu0
  %2256 = vmatprep.mubr.bf16.mxu0 0
  %2257 = vmatmul.mubr.bf16.gmra.mxu0 %v1974
  %v2258 = vpop.f32.mrf.mxu0
  %v2259 = vadd.f32 0.0, %v2258
  %v2260 = vpop.f32.mrf.mxu0
  %v2261 = vpop.f32.mrf.mxu0
  %v2262 = vadd.f32 0.0, %v2261
  %v2263 = vpop.f32.mrf.mxu0
  %2264 = vmatprep.mubr.bf16.mxu0 0
  %2265 = vmatmul.mubr.bf16.gmra.mxu0 %v1977
  %v2266 = vpop.f32.mrf.mxu0
  %v2267 = vadd.f32 0.0, %v2266
  %v2268 = vpop.f32.mrf.mxu0
  %v2269 = vpop.f32.mrf.mxu0
  %v2270 = vadd.f32 0.0, %v2269
  %v2271 = vpop.f32.mrf.mxu0
  %2272 = vmatprep.mubr.bf16.mxu0 0
  %2273 = vmatmul.mubr.bf16.gmra.mxu0 %v1980
  %v2274 = vpop.f32.mrf.mxu0
  %v2275 = vadd.f32 0.0, %v2274
  %v2276 = vpop.f32.mrf.mxu0
  %v2277 = vpop.f32.mrf.mxu0
  %v2278 = vadd.f32 0.0, %v2277
  %v2279 = vpop.f32.mrf.mxu0
  %2280 = vmatprep.mubr.bf16.mxu0 0
  %2281 = vmatmul.mubr.bf16.gmra.mxu0 %v1983
  %v2282 = vpop.f32.mrf.mxu0
  %v2283 = vadd.f32 0.0, %v2282
  %v2284 = vpop.f32.mrf.mxu0
  %v2285 = vpop.f32.mrf.mxu0
  %v2286 = vadd.f32 0.0, %v2285
  %v2287 = vpop.f32.mrf.mxu0
  %2288 = vdwg.mxu0
  %v2289 = vadd.f32 %v1308, %v2195
  %v2290 = vadd.f32 %v1309, %v2198
  %v2291 = vadd.f32 %v1310, %v2203
  %v2292 = vadd.f32 %v1311, %v2206
  %v2293 = vadd.f32 %v1312, %v2211
  %v2294 = vadd.f32 %v1313, %v2214
  %v2295 = vadd.f32 %v1314, %v2219
  %v2296 = vadd.f32 %v1315, %v2222
  %v2297 = vadd.f32 %v1316, %v2227
  %v2298 = vadd.f32 %v1317, %v2230
  %v2299 = vadd.f32 %v1318, %v2235
  %v2300 = vadd.f32 %v1319, %v2238
  %v2301 = vadd.f32 %v1320, %v2243
  %v2302 = vadd.f32 %v1321, %v2246
  %v2303 = vadd.f32 %v1322, %v2251
  %v2304 = vadd.f32 %v1323, %v2254
  %v2305 = vadd.f32 %v1324, %v2259
  %v2306 = vadd.f32 %v1325, %v2262
  %v2307 = vadd.f32 %v1326, %v2267
  %v2308 = vadd.f32 %v1327, %v2270
  %v2309 = vadd.f32 %v1328, %v2275
  %v2310 = vadd.f32 %v1329, %v2278
  %v2311 = vadd.f32 %v1330, %v2283
  %v2312 = vadd.f32 %v1331, %v2286
  %2313 = vmatprep.subr.bf16.mxu0 0
  %2314 = vmatpush1.bf16.msra.mxu0 0
  %2315 = vmatprep.subr.bf16.mxu0 0
  %2316 = vmatpush1.bf16.msra.mxu0 0
  %2317 = vmatprep.subr.bf16.mxu0 0
  %2318 = vmatpush1.bf16.msra.mxu0 0
  %2319 = vmatprep.subr.bf16.mxu0 0
  %2320 = vmatpush1.bf16.msra.mxu0 0
  %2321 = vmatprep.subr.bf16.mxu0 0
  %2322 = vmatpush1.bf16.msra.mxu0 0
  %2323 = vmatprep.subr.bf16.mxu0 0
  %2324 = vmatpush1.bf16.msra.mxu0 0
  %2325 = vmatprep.subr.bf16.mxu0 0
  %2326 = vmatpush1.bf16.msra.mxu0 %v1005
  %2327 = vmatprep.subr.bf16.mxu0 0
  %2328 = vmatpush1.bf16.msra.mxu0 %v965
  %2329 = vmatprep.subr.bf16.mxu0 0
  %2330 = vmatpush2.bf16.msra.mxu0 0
  %2331 = vmatprep.subr.bf16.mxu0 0
  %2332 = vmatpush2.bf16.msra.mxu0 0
  %2333 = vmatprep.subr.bf16.mxu0 0
  %2334 = vmatpush2.bf16.msra.mxu0 0
  %2335 = vmatprep.subr.bf16.mxu0 0
  %2336 = vmatpush2.bf16.msra.mxu0 0
  %2337 = vmatprep.subr.bf16.mxu0 0
  %2338 = vmatpush2.bf16.msra.mxu0 0
  %2339 = vmatprep.subr.bf16.mxu0 0
  %2340 = vmatpush2.bf16.msra.mxu0 0
  %2341 = vmatprep.subr.bf16.mxu0 0
  %2342 = vmatpush2.bf16.msra.mxu0 0
  %2343 = vmatprep.subr.bf16.mxu0 0
  %2344 = vmatpush2.bf16.msra.mxu0 0
  %2345 = vmatprep.mubr.bf16.mxu0 0
  %2346 = vmatmul.mubr.bf16.gmra.mxu0 %v1950
  %v2347 = vpop.f32.mrf.mxu0
  %v2348 = vadd.f32 0.0, %v2347
  %v2349 = vpop.f32.mrf.mxu0
  %v2350 = vpop.f32.mrf.mxu0
  %v2351 = vadd.f32 0.0, %v2350
  %v2352 = vpop.f32.mrf.mxu0
  %2353 = vmatprep.mubr.bf16.mxu0 0
  %2354 = vmatmul.mubr.bf16.gmra.mxu0 %v1953
  %v2355 = vpop.f32.mrf.mxu0
  %v2356 = vadd.f32 0.0, %v2355
  %v2357 = vpop.f32.mrf.mxu0
  %v2358 = vpop.f32.mrf.mxu0
  %v2359 = vadd.f32 0.0, %v2358
  %v2360 = vpop.f32.mrf.mxu0
  %2361 = vmatprep.mubr.bf16.mxu0 0
  %2362 = vmatmul.mubr.bf16.gmra.mxu0 %v1956
  %v2363 = vpop.f32.mrf.mxu0
  %v2364 = vadd.f32 0.0, %v2363
  %v2365 = vpop.f32.mrf.mxu0
  %v2366 = vpop.f32.mrf.mxu0
  %v2367 = vadd.f32 0.0, %v2366
  %v2368 = vpop.f32.mrf.mxu0
  %2369 = vmatprep.mubr.bf16.mxu0 0
  %2370 = vmatmul.mubr.bf16.gmra.mxu0 %v1959
  %v2371 = vpop.f32.mrf.mxu0
  %v2372 = vadd.f32 0.0, %v2371
  %v2373 = vpop.f32.mrf.mxu0
  %v2374 = vpop.f32.mrf.mxu0
  %v2375 = vadd.f32 0.0, %v2374
  %v2376 = vpop.f32.mrf.mxu0
  %2377 = vmatprep.mubr.bf16.mxu0 0
  %2378 = vmatmul.mubr.bf16.gmra.mxu0 %v1962
  %v2379 = vpop.f32.mrf.mxu0
  %v2380 = vadd.f32 0.0, %v2379
  %v2381 = vpop.f32.mrf.mxu0
  %v2382 = vpop.f32.mrf.mxu0
  %v2383 = vadd.f32 0.0, %v2382
  %v2384 = vpop.f32.mrf.mxu0
  %2385 = vmatprep.mubr.bf16.mxu0 0
  %2386 = vmatmul.mubr.bf16.gmra.mxu0 %v1965
  %v2387 = vpop.f32.mrf.mxu0
  %v2388 = vadd.f32 0.0, %v2387
  %v2389 = vpop.f32.mrf.mxu0
  %v2390 = vpop.f32.mrf.mxu0
  %v2391 = vadd.f32 0.0, %v2390
  %v2392 = vpop.f32.mrf.mxu0
  %2393 = vmatprep.mubr.bf16.mxu0 0
  %2394 = vmatmul.mubr.bf16.gmra.mxu0 %v1968
  %v2395 = vpop.f32.mrf.mxu0
  %v2396 = vadd.f32 0.0, %v2395
  %v2397 = vpop.f32.mrf.mxu0
  %v2398 = vpop.f32.mrf.mxu0
  %v2399 = vadd.f32 0.0, %v2398
  %v2400 = vpop.f32.mrf.mxu0
  %2401 = vmatprep.mubr.bf16.mxu0 0
  %2402 = vmatmul.mubr.bf16.gmra.mxu0 %v1971
  %v2403 = vpop.f32.mrf.mxu0
  %v2404 = vadd.f32 0.0, %v2403
  %v2405 = vpop.f32.mrf.mxu0
  %v2406 = vpop.f32.mrf.mxu0
  %v2407 = vadd.f32 0.0, %v2406
  %v2408 = vpop.f32.mrf.mxu0
  %2409 = vmatprep.mubr.bf16.mxu0 0
  %2410 = vmatmul.mubr.bf16.gmra.mxu0 %v1974
  %v2411 = vpop.f32.mrf.mxu0
  %v2412 = vadd.f32 0.0, %v2411
  %v2413 = vpop.f32.mrf.mxu0
  %v2414 = vpop.f32.mrf.mxu0
  %v2415 = vadd.f32 0.0, %v2414
  %v2416 = vpop.f32.mrf.mxu0
  %2417 = vmatprep.mubr.bf16.mxu0 0
  %2418 = vmatmul.mubr.bf16.gmra.mxu0 %v1977
  %v2419 = vpop.f32.mrf.mxu0
  %v2420 = vadd.f32 0.0, %v2419
  %v2421 = vpop.f32.mrf.mxu0
  %v2422 = vpop.f32.mrf.mxu0
  %v2423 = vadd.f32 0.0, %v2422
  %v2424 = vpop.f32.mrf.mxu0
  %2425 = vmatprep.mubr.bf16.mxu0 0
  %2426 = vmatmul.mubr.bf16.gmra.mxu0 %v1980
  %v2427 = vpop.f32.mrf.mxu0
  %v2428 = vadd.f32 0.0, %v2427
  %v2429 = vpop.f32.mrf.mxu0
  %v2430 = vpop.f32.mrf.mxu0
  %v2431 = vadd.f32 0.0, %v2430
  %v2432 = vpop.f32.mrf.mxu0
  %2433 = vmatprep.mubr.bf16.mxu0 0
  %2434 = vmatmul.mubr.bf16.gmra.mxu0 %v1983
  %v2435 = vpop.f32.mrf.mxu0
  %v2436 = vadd.f32 0.0, %v2435
  %v2437 = vpop.f32.mrf.mxu0
  %v2438 = vpop.f32.mrf.mxu0
  %v2439 = vadd.f32 0.0, %v2438
  %v2440 = vpop.f32.mrf.mxu0
  %2441 = vdwg.mxu0
  %v2442 = vadd.f32 %v1496, %v2348
  %v2443 = vadd.f32 %v1499, %v2351
  %v2444 = vadd.f32 %v1504, %v2356
  %v2445 = vadd.f32 %v1507, %v2359
  %v2446 = vadd.f32 %v1512, %v2364
  %v2447 = vadd.f32 %v1515, %v2367
  %v2448 = vadd.f32 %v1520, %v2372
  %v2449 = vadd.f32 %v1523, %v2375
  %v2450 = vadd.f32 %v1528, %v2380
  %v2451 = vadd.f32 %v1531, %v2383
  %v2452 = vadd.f32 %v1536, %v2388
  %v2453 = vadd.f32 %v1539, %v2391
  %v2454 = vadd.f32 %v1544, %v2396
  %v2455 = vadd.f32 %v1547, %v2399
  %v2456 = vadd.f32 %v1552, %v2404
  %v2457 = vadd.f32 %v1555, %v2407
  %v2458 = vadd.f32 %v1560, %v2412
  %v2459 = vadd.f32 %v1563, %v2415
  %v2460 = vadd.f32 %v1568, %v2420
  %v2461 = vadd.f32 %v1571, %v2423
  %v2462 = vadd.f32 %v1576, %v2428
  %v2463 = vadd.f32 %v1579, %v2431
  %v2464 = vadd.f32 %v1584, %v2436
  %v2465 = vadd.f32 %v1587, %v2439
  %2466 = vmatprep.subr.bf16.mxu0 0
  %2467 = vmatpush1.bf16.msra.mxu0 0
  %2468 = vmatprep.subr.bf16.mxu0 0
  %2469 = vmatpush1.bf16.msra.mxu0 0
  %2470 = vmatprep.subr.bf16.mxu0 0
  %2471 = vmatpush1.bf16.msra.mxu0 0
  %2472 = vmatprep.subr.bf16.mxu0 0
  %2473 = vmatpush1.bf16.msra.mxu0 0
  %2474 = vmatprep.subr.bf16.mxu0 0
  %2475 = vmatpush1.bf16.msra.mxu0 0
  %2476 = vmatprep.subr.bf16.mxu0 0
  %2477 = vmatpush1.bf16.msra.mxu0 0
  %2478 = vmatprep.subr.bf16.mxu0 0
  %2479 = vmatpush1.bf16.msra.mxu0 %v1177
  %2480 = vmatprep.subr.bf16.mxu0 0
  %2481 = vmatpush1.bf16.msra.mxu0 %v1173
  %2482 = vmatprep.subr.bf16.mxu0 0
  %2483 = vmatpush2.bf16.msra.mxu0 0
  %2484 = vmatprep.subr.bf16.mxu0 0
  %2485 = vmatpush2.bf16.msra.mxu0 0
  %2486 = vmatprep.subr.bf16.mxu0 0
  %2487 = vmatpush2.bf16.msra.mxu0 0
  %2488 = vmatprep.subr.bf16.mxu0 0
  %2489 = vmatpush2.bf16.msra.mxu0 0
  %2490 = vmatprep.subr.bf16.mxu0 0
  %2491 = vmatpush2.bf16.msra.mxu0 0
  %2492 = vmatprep.subr.bf16.mxu0 0
  %2493 = vmatpush2.bf16.msra.mxu0 0
  %2494 = vmatprep.subr.bf16.mxu0 0
  %2495 = vmatpush2.bf16.msra.mxu0 0
  %2496 = vmatprep.subr.bf16.mxu0 0
  %2497 = vmatpush2.bf16.msra.mxu0 0
  %2498 = vmatprep.mubr.bf16.mxu0 0
  %2499 = vmatmul.mubr.bf16.gmra.mxu0 %v1950
  %v2500 = vpop.f32.mrf.mxu0
  %v2501 = vadd.f32 0.0, %v2500
  %v2502 = vpop.f32.mrf.mxu0
  %v2503 = vpop.f32.mrf.mxu0
  %v2504 = vadd.f32 0.0, %v2503
  %v2505 = vpop.f32.mrf.mxu0
  %2506 = vmatprep.mubr.bf16.mxu0 0
  %2507 = vmatmul.mubr.bf16.gmra.mxu0 %v1953
  %v2508 = vpop.f32.mrf.mxu0
  %v2509 = vadd.f32 0.0, %v2508
  %v2510 = vpop.f32.mrf.mxu0
  %v2511 = vpop.f32.mrf.mxu0
  %v2512 = vadd.f32 0.0, %v2511
  %v2513 = vpop.f32.mrf.mxu0
  %2514 = vmatprep.mubr.bf16.mxu0 0
  %2515 = vmatmul.mubr.bf16.gmra.mxu0 %v1956
  %v2516 = vpop.f32.mrf.mxu0
  %v2517 = vadd.f32 0.0, %v2516
  %v2518 = vpop.f32.mrf.mxu0
  %v2519 = vpop.f32.mrf.mxu0
  %v2520 = vadd.f32 0.0, %v2519
  %v2521 = vpop.f32.mrf.mxu0
  %2522 = vmatprep.mubr.bf16.mxu0 0
  %2523 = vmatmul.mubr.bf16.gmra.mxu0 %v1959
  %v2524 = vpop.f32.mrf.mxu0
  %v2525 = vadd.f32 0.0, %v2524
  %v2526 = vpop.f32.mrf.mxu0
  %v2527 = vpop.f32.mrf.mxu0
  %v2528 = vadd.f32 0.0, %v2527
  %v2529 = vpop.f32.mrf.mxu0
  %2530 = vmatprep.mubr.bf16.mxu0 0
  %2531 = vmatmul.mubr.bf16.gmra.mxu0 %v1962
  %v2532 = vpop.f32.mrf.mxu0
  %v2533 = vadd.f32 0.0, %v2532
  %v2534 = vpop.f32.mrf.mxu0
  %v2535 = vpop.f32.mrf.mxu0
  %v2536 = vadd.f32 0.0, %v2535
  %v2537 = vpop.f32.mrf.mxu0
  %2538 = vmatprep.mubr.bf16.mxu0 0
  %2539 = vmatmul.mubr.bf16.gmra.mxu0 %v1965
  %v2540 = vpop.f32.mrf.mxu0
  %v2541 = vadd.f32 0.0, %v2540
  %v2542 = vpop.f32.mrf.mxu0
  %v2543 = vpop.f32.mrf.mxu0
  %v2544 = vadd.f32 0.0, %v2543
  %v2545 = vpop.f32.mrf.mxu0
  %2546 = vmatprep.mubr.bf16.mxu0 0
  %2547 = vmatmul.mubr.bf16.gmra.mxu0 %v1968
  %v2548 = vpop.f32.mrf.mxu0
  %v2549 = vadd.f32 0.0, %v2548
  %v2550 = vpop.f32.mrf.mxu0
  %v2551 = vpop.f32.mrf.mxu0
  %v2552 = vadd.f32 0.0, %v2551
  %v2553 = vpop.f32.mrf.mxu0
  %2554 = vmatprep.mubr.bf16.mxu0 0
  %2555 = vmatmul.mubr.bf16.gmra.mxu0 %v1971
  %v2556 = vpop.f32.mrf.mxu0
  %v2557 = vadd.f32 0.0, %v2556
  %v2558 = vpop.f32.mrf.mxu0
  %v2559 = vpop.f32.mrf.mxu0
  %v2560 = vadd.f32 0.0, %v2559
  %v2561 = vpop.f32.mrf.mxu0
  %2562 = vmatprep.mubr.bf16.mxu0 0
  %2563 = vmatmul.mubr.bf16.gmra.mxu0 %v1974
  %v2564 = vpop.f32.mrf.mxu0
  %v2565 = vadd.f32 0.0, %v2564
  %v2566 = vpop.f32.mrf.mxu0
  %v2567 = vpop.f32.mrf.mxu0
  %v2568 = vadd.f32 0.0, %v2567
  %v2569 = vpop.f32.mrf.mxu0
  %2570 = vmatprep.mubr.bf16.mxu0 0
  %2571 = vmatmul.mubr.bf16.gmra.mxu0 %v1977
  %v2572 = vpop.f32.mrf.mxu0
  %v2573 = vadd.f32 0.0, %v2572
  %v2574 = vpop.f32.mrf.mxu0
  %v2575 = vpop.f32.mrf.mxu0
  %v2576 = vadd.f32 0.0, %v2575
  %v2577 = vpop.f32.mrf.mxu0
  %2578 = vmatprep.mubr.bf16.mxu0 0
  %2579 = vmatmul.mubr.bf16.gmra.mxu0 %v1980
  %v2580 = vpop.f32.mrf.mxu0
  %v2581 = vadd.f32 0.0, %v2580
  %v2582 = vpop.f32.mrf.mxu0
  %v2583 = vpop.f32.mrf.mxu0
  %v2584 = vadd.f32 0.0, %v2583
  %v2585 = vpop.f32.mrf.mxu0
  %2586 = vmatprep.mubr.bf16.mxu0 0
  %2587 = vmatmul.mubr.bf16.gmra.mxu0 %v1983
  %v2588 = vpop.f32.mrf.mxu0
  %v2589 = vadd.f32 0.0, %v2588
  %v2590 = vpop.f32.mrf.mxu0
  %v2591 = vpop.f32.mrf.mxu0
  %v2592 = vadd.f32 0.0, %v2591
  %v2593 = vpop.f32.mrf.mxu0
  %2594 = vdwg.mxu0
  %v2595 = vadd.f32 %v1754, %v2501
  %v2596 = vadd.f32 %v1757, %v2504
  %v2597 = vadd.f32 %v1762, %v2509
  %v2598 = vadd.f32 %v1765, %v2512
  %v2599 = vadd.f32 %v1770, %v2517
  %v2600 = vadd.f32 %v1773, %v2520
  %v2601 = vadd.f32 %v1778, %v2525
  %v2602 = vadd.f32 %v1781, %v2528
  %v2603 = vadd.f32 %v1786, %v2533
  %v2604 = vadd.f32 %v1789, %v2536
  %v2605 = vadd.f32 %v1794, %v2541
  %v2606 = vadd.f32 %v1797, %v2544
  %v2607 = vadd.f32 %v1802, %v2549
  %v2608 = vadd.f32 %v1805, %v2552
  %v2609 = vadd.f32 %v1810, %v2557
  %v2610 = vadd.f32 %v1813, %v2560
  %v2611 = vadd.f32 %v1818, %v2565
  %v2612 = vadd.f32 %v1821, %v2568
  %v2613 = vadd.f32 %v1826, %v2573
  %v2614 = vadd.f32 %v1829, %v2576
  %v2615 = vadd.f32 %v1834, %v2581
  %v2616 = vadd.f32 %v1837, %v2584
  %v2617 = vadd.f32 %v1842, %v2589
  %v2618 = vadd.f32 %v1845, %v2592
  %s2619 = scalar_lea.vmem %s0, 16
  %v2620 = vld [vmem:[%s2619] sm:$0xf]
  %v2621 = vld [vmem:[%s2619 + $0x4] sm:$0xf]
  %v2622 = vld [vmem:[%s2619 + $0x8] sm:$0xf]
  %v2623 = vld [vmem:[%s2619 + $0xc] sm:$0xf]
  %v2624 = vld [vmem:[%s2619 + $0x10] sm:$0xf]
  %v2625 = vld [vmem:[%s2619 + $0x14] sm:$0xf]
  %v2626 = vld [vmem:[%s2619 + $0x18] sm:$0xf]
  %v2627 = vld [vmem:[%s2619 + $0x1c] sm:$0xf]
  %v2628 = vld [vmem:[%s2619 + $0x20] sm:$0xf]
  %v2629 = vld [vmem:[%s2619 + $0x24] sm:$0xf]
  %v2630 = vld [vmem:[%s2619 + $0x28] sm:$0xf]
  %v2631 = vld [vmem:[%s2619 + $0x2c] sm:$0xf]
  %v2632 = vld [vmem:[%s2619 + $0x30] sm:$0xf]
  %v2633 = vld [vmem:[%s2619 + $0x34] sm:$0xf]
  %v2634 = vld [vmem:[%s2619 + $0x38] sm:$0xf]
  %v2635 = vld [vmem:[%s2619 + $0x3c] sm:$0xf]
  %v2636 = vld [vmem:[%s2619 + $0x40] sm:$0xf]
  %v2637 = vld [vmem:[%s2619 + $0x44] sm:$0xf]
  %v2638 = vld [vmem:[%s2619 + $0x48] sm:$0xf]
  %v2639 = vld [vmem:[%s2619 + $0x4c] sm:$0xf]
  %v2640 = vld [vmem:[%s2619 + $0x50] sm:$0xf]
  %v2641 = vld [vmem:[%s2619 + $0x54] sm:$0xf]
  %v2642 = vld [vmem:[%s2619 + $0x58] sm:$0xf]
  %v2643 = vld [vmem:[%s2619 + $0x5c] sm:$0xf]
  %s2644 = scalar_lea.vmem %s1, 128
  %v2645 = vld [vmem:[%s2644] sm:$0xf]
  %v2646 = vld [vmem:[%s2644 + $0x4] sm:$0xf]
  %v2647 = vld [vmem:[%s2644 + $0x8] sm:$0xf]
  %v2648 = vld [vmem:[%s2644 + $0xc] sm:$0x3]
  %v2673 = vunpack.c.l.b16 %v2620
  %v2674 = vunpack.c.l.b16 %v2621
  %v2675 = vunpack.c.l.b16 %v2622
  %v2676 = vunpack.c.l.b16 %v2623
  %v2677 = vunpack.c.l.b16 %v2624
  %v2678 = vunpack.c.l.b16 %v2625
  %v2679 = vunpack.c.l.b16 %v2626
  %v2680 = vunpack.c.l.b16 %v2627
  %v2681 = vunpack.c.l.b16 %v2628
  %v2682 = vunpack.c.l.b16 %v2629
  %v2683 = vunpack.c.l.b16 %v2630
  %v2684 = vunpack.c.l.b16 %v2631
  %v2685 = vunpack.c.l.b16 %v2632
  %v2686 = vunpack.c.l.b16 %v2633
  %v2687 = vunpack.c.l.b16 %v2634
  %v2688 = vunpack.c.l.b16 %v2635
  %v2689 = vunpack.c.l.b16 %v2636
  %v2690 = vunpack.c.l.b16 %v2637
  %v2691 = vunpack.c.l.b16 %v2638
  %v2692 = vunpack.c.l.b16 %v2639
  %v2693 = vunpack.c.l.b16 %v2640
  %v2694 = vunpack.c.l.b16 %v2641
  %v2695 = vunpack.c.l.b16 %v2642
  %v2696 = vunpack.c.l.b16 %v2643
  %v2697 = vpack.c.b16 %v2674, %v2673
  %v2698 = vpack.c.b16 %v2676, %v2675
  %v2699 = vpack.c.b16 %v2678, %v2677
  %v2700 = vpack.c.b16 %v2680, %v2679
  %v2701 = vpack.c.b16 %v2682, %v2681
  %v2702 = vpack.c.b16 %v2684, %v2683
  %v2703 = vpack.c.b16 %v2686, %v2685
  %v2704 = vpack.c.b16 %v2688, %v2687
  %v2705 = vpack.c.b16 %v2690, %v2689
  %v2706 = vpack.c.b16 %v2692, %v2691
  %v2707 = vpack.c.b16 %v2694, %v2693
  %v2708 = vpack.c.b16 %v2696, %v2695
  %v2713 = vunpack.c.l.b16 %v2645
  %v2714 = vunpack.c.l.b16 %v2646
  %v2715 = vunpack.c.l.b16 %v2647
  %v2716 = vunpack.c.l.b16 %v2648
  %v2717 = vpack.c.b16 %v2714, %v2713
  %v2718 = vpack.c.b16 %v2716, %v2715
  %v2721 = vsel %vm167, %v2697, 0
  %v2724 = vsel %vm167, %v2698, 0
  %v2727 = vsel %vm167, %v2699, 0
  %v2730 = vsel %vm167, %v2700, 0
  %v2733 = vsel %vm167, %v2701, 0
  %v2736 = vsel %vm167, %v2702, 0
  %v2739 = vsel %vm167, %v2703, 0
  %v2742 = vsel %vm167, %v2704, 0
  %v2745 = vsel %vm167, %v2705, 0
  %v2748 = vsel %vm167, %v2706, 0
  %v2751 = vsel %vm167, %v2707, 0
  %v2754 = vsel %vm167, %v2708, 0
  %v2757 = vsel %vm204, %v2718, 0
  %2759 = vmatprep.subr.bf16.mxu0 0
  %2760 = vmatpush1.bf16.msra.mxu0 0
  %2761 = vmatprep.subr.bf16.mxu0 0
  %2762 = vmatpush1.bf16.msra.mxu0 0
  %2763 = vmatprep.subr.bf16.mxu0 0
  %2764 = vmatpush1.bf16.msra.mxu0 0
  %2765 = vmatprep.subr.bf16.mxu0 0
  %2766 = vmatpush1.bf16.msra.mxu0 0
  %2767 = vmatprep.subr.bf16.mxu0 0
  %2768 = vmatpush1.bf16.msra.mxu0 0
  %2769 = vmatprep.subr.bf16.mxu0 0
  %2770 = vmatpush1.bf16.msra.mxu0 0
  %2771 = vmatprep.subr.bf16.mxu0 0
  %2772 = vmatpush1.bf16.msra.mxu0 %v2757
  %2773 = vmatprep.subr.bf16.mxu0 0
  %2774 = vmatpush1.bf16.msra.mxu0 %v2717
  %2775 = vmatprep.subr.bf16.mxu0 0
  %2776 = vmatpush2.bf16.msra.mxu0 0
  %2777 = vmatprep.subr.bf16.mxu0 0
  %2778 = vmatpush2.bf16.msra.mxu0 0
  %2779 = vmatprep.subr.bf16.mxu0 0
  %2780 = vmatpush2.bf16.msra.mxu0 0
  %2781 = vmatprep.subr.bf16.mxu0 0
  %2782 = vmatpush2.bf16.msra.mxu0 0
  %2783 = vmatprep.subr.bf16.mxu0 0
  %2784 = vmatpush2.bf16.msra.mxu0 0
  %2785 = vmatprep.subr.bf16.mxu0 0
  %2786 = vmatpush2.bf16.msra.mxu0 0
  %2787 = vmatprep.subr.bf16.mxu0 0
  %2788 = vmatpush2.bf16.msra.mxu0 0
  %2789 = vmatprep.subr.bf16.mxu0 0
  %2790 = vmatpush2.bf16.msra.mxu0 0
  %2791 = vmatprep.mubr.bf16.mxu0 0
  %2792 = vmatmul.mubr.bf16.gmra.mxu0 %v2721
  %v2793 = vpop.f32.mrf.mxu0
  %v2794 = vadd.f32 0.0, %v2793
  %v2795 = vpop.f32.mrf.mxu0
  %v2796 = vpop.f32.mrf.mxu0
  %v2797 = vadd.f32 0.0, %v2796
  %v2798 = vpop.f32.mrf.mxu0
  %2799 = vmatprep.mubr.bf16.mxu0 0
  %2800 = vmatmul.mubr.bf16.gmra.mxu0 %v2724
  %v2801 = vpop.f32.mrf.mxu0
  %v2802 = vadd.f32 0.0, %v2801
  %v2803 = vpop.f32.mrf.mxu0
  %v2804 = vpop.f32.mrf.mxu0
  %v2805 = vadd.f32 0.0, %v2804
  %v2806 = vpop.f32.mrf.mxu0
  %2807 = vmatprep.mubr.bf16.mxu0 0
  %2808 = vmatmul.mubr.bf16.gmra.mxu0 %v2727
  %v2809 = vpop.f32.mrf.mxu0
  %v2810 = vadd.f32 0.0, %v2809
  %v2811 = vpop.f32.mrf.mxu0
  %v2812 = vpop.f32.mrf.mxu0
  %v2813 = vadd.f32 0.0, %v2812
  %v2814 = vpop.f32.mrf.mxu0
  %2815 = vmatprep.mubr.bf16.mxu0 0
  %2816 = vmatmul.mubr.bf16.gmra.mxu0 %v2730
  %v2817 = vpop.f32.mrf.mxu0
  %v2818 = vadd.f32 0.0, %v2817
  %v2819 = vpop.f32.mrf.mxu0
  %v2820 = vpop.f32.mrf.mxu0
  %v2821 = vadd.f32 0.0, %v2820
  %v2822 = vpop.f32.mrf.mxu0
  %2823 = vmatprep.mubr.bf16.mxu0 0
  %2824 = vmatmul.mubr.bf16.gmra.mxu0 %v2733
  %v2825 = vpop.f32.mrf.mxu0
  %v2826 = vadd.f32 0.0, %v2825
  %v2827 = vpop.f32.mrf.mxu0
  %v2828 = vpop.f32.mrf.mxu0
  %v2829 = vadd.f32 0.0, %v2828
  %v2830 = vpop.f32.mrf.mxu0
  %2831 = vmatprep.mubr.bf16.mxu0 0
  %2832 = vmatmul.mubr.bf16.gmra.mxu0 %v2736
  %v2833 = vpop.f32.mrf.mxu0
  %v2834 = vadd.f32 0.0, %v2833
  %v2835 = vpop.f32.mrf.mxu0
  %v2836 = vpop.f32.mrf.mxu0
  %v2837 = vadd.f32 0.0, %v2836
  %v2838 = vpop.f32.mrf.mxu0
  %2839 = vmatprep.mubr.bf16.mxu0 0
  %2840 = vmatmul.mubr.bf16.gmra.mxu0 %v2739
  %v2841 = vpop.f32.mrf.mxu0
  %v2842 = vadd.f32 0.0, %v2841
  %v2843 = vpop.f32.mrf.mxu0
  %v2844 = vpop.f32.mrf.mxu0
  %v2845 = vadd.f32 0.0, %v2844
  %v2846 = vpop.f32.mrf.mxu0
  %2847 = vmatprep.mubr.bf16.mxu0 0
  %2848 = vmatmul.mubr.bf16.gmra.mxu0 %v2742
  %v2849 = vpop.f32.mrf.mxu0
  %v2850 = vadd.f32 0.0, %v2849
  %v2851 = vpop.f32.mrf.mxu0
  %v2852 = vpop.f32.mrf.mxu0
  %v2853 = vadd.f32 0.0, %v2852
  %v2854 = vpop.f32.mrf.mxu0
  %2855 = vmatprep.mubr.bf16.mxu0 0
  %2856 = vmatmul.mubr.bf16.gmra.mxu0 %v2745
  %v2857 = vpop.f32.mrf.mxu0
  %v2858 = vadd.f32 0.0, %v2857
  %v2859 = vpop.f32.mrf.mxu0
  %v2860 = vpop.f32.mrf.mxu0
  %v2861 = vadd.f32 0.0, %v2860
  %v2862 = vpop.f32.mrf.mxu0
  %2863 = vmatprep.mubr.bf16.mxu0 0
  %2864 = vmatmul.mubr.bf16.gmra.mxu0 %v2748
  %v2865 = vpop.f32.mrf.mxu0
  %v2866 = vadd.f32 0.0, %v2865
  %v2867 = vpop.f32.mrf.mxu0
  %v2868 = vpop.f32.mrf.mxu0
  %v2869 = vadd.f32 0.0, %v2868
  %v2870 = vpop.f32.mrf.mxu0
  %2871 = vmatprep.mubr.bf16.mxu0 0
  %2872 = vmatmul.mubr.bf16.gmra.mxu0 %v2751
  %v2873 = vpop.f32.mrf.mxu0
  %v2874 = vadd.f32 0.0, %v2873
  %v2875 = vpop.f32.mrf.mxu0
  %v2876 = vpop.f32.mrf.mxu0
  %v2877 = vadd.f32 0.0, %v2876
  %v2878 = vpop.f32.mrf.mxu0
  %2879 = vmatprep.mubr.bf16.mxu0 0
  %2880 = vmatmul.mubr.bf16.gmra.mxu0 %v2754
  %v2881 = vpop.f32.mrf.mxu0
  %v2882 = vadd.f32 0.0, %v2881
  %v2883 = vpop.f32.mrf.mxu0
  %v2884 = vpop.f32.mrf.mxu0
  %v2885 = vadd.f32 0.0, %v2884
  %v2886 = vpop.f32.mrf.mxu0
  %2887 = vdwg.mxu0
  %v2888 = vadd.f32 %v2117, %v2794
  %v2889 = vadd.f32 %v2118, %v2797
  %v2890 = vadd.f32 %v2119, %v2802
  %v2891 = vadd.f32 %v2120, %v2805
  %v2892 = vadd.f32 %v2121, %v2810
  %v2893 = vadd.f32 %v2122, %v2813
  %v2894 = vadd.f32 %v2123, %v2818
  %v2895 = vadd.f32 %v2124, %v2821
  %v2896 = vadd.f32 %v2125, %v2826
  %v2897 = vadd.f32 %v2126, %v2829
  %v2898 = vadd.f32 %v2127, %v2834
  %v2899 = vadd.f32 %v2128, %v2837
  %v2900 = vadd.f32 %v2129, %v2842
  %v2901 = vadd.f32 %v2130, %v2845
  %v2902 = vadd.f32 %v2131, %v2850
  %v2903 = vadd.f32 %v2132, %v2853
  %v2904 = vadd.f32 %v2133, %v2858
  %v2905 = vadd.f32 %v2134, %v2861
  %v2906 = vadd.f32 %v2135, %v2866
  %v2907 = vadd.f32 %v2136, %v2869
  %v2908 = vadd.f32 %v2137, %v2874
  %v2909 = vadd.f32 %v2138, %v2877
  %v2910 = vadd.f32 %v2139, %v2882
  %v2911 = vadd.f32 %v2140, %v2885
  %s2912 = scalar_lea.vmem %s1, 144
  %v2913 = vld [vmem:[%s2912] sm:$0xf]
  %v2914 = vld [vmem:[%s2912 + $0x4] sm:$0xf]
  %v2915 = vld [vmem:[%s2912 + $0x8] sm:$0xf]
  %v2916 = vld [vmem:[%s2912 + $0xc] sm:$0x3]
  %v2921 = vunpack.c.l.b16 %v2913
  %v2922 = vunpack.c.l.b16 %v2914
  %v2923 = vunpack.c.l.b16 %v2915
  %v2924 = vunpack.c.l.b16 %v2916
  %v2925 = vpack.c.b16 %v2922, %v2921
  %v2926 = vpack.c.b16 %v2924, %v2923
  %v2929 = vsel %vm204, %v2926, 0
  %2931 = vmatprep.subr.bf16.mxu0 0
  %2932 = vmatpush1.bf16.msra.mxu0 0
  %2933 = vmatprep.subr.bf16.mxu0 0
  %2934 = vmatpush1.bf16.msra.mxu0 0
  %2935 = vmatprep.subr.bf16.mxu0 0
  %2936 = vmatpush1.bf16.msra.mxu0 0
  %2937 = vmatprep.subr.bf16.mxu0 0
  %2938 = vmatpush1.bf16.msra.mxu0 0
  %2939 = vmatprep.subr.bf16.mxu0 0
  %2940 = vmatpush1.bf16.msra.mxu0 0
  %2941 = vmatprep.subr.bf16.mxu0 0
  %2942 = vmatpush1.bf16.msra.mxu0 0
  %2943 = vmatprep.subr.bf16.mxu0 0
  %2944 = vmatpush1.bf16.msra.mxu0 %v2929
  %2945 = vmatprep.subr.bf16.mxu0 0
  %2946 = vmatpush1.bf16.msra.mxu0 %v2925
  %2947 = vmatprep.subr.bf16.mxu0 0
  %2948 = vmatpush2.bf16.msra.mxu0 0
  %2949 = vmatprep.subr.bf16.mxu0 0
  %2950 = vmatpush2.bf16.msra.mxu0 0
  %2951 = vmatprep.subr.bf16.mxu0 0
  %2952 = vmatpush2.bf16.msra.mxu0 0
  %2953 = vmatprep.subr.bf16.mxu0 0
  %2954 = vmatpush2.bf16.msra.mxu0 0
  %2955 = vmatprep.subr.bf16.mxu0 0
  %2956 = vmatpush2.bf16.msra.mxu0 0
  %2957 = vmatprep.subr.bf16.mxu0 0
  %2958 = vmatpush2.bf16.msra.mxu0 0
  %2959 = vmatprep.subr.bf16.mxu0 0
  %2960 = vmatpush2.bf16.msra.mxu0 0
  %2961 = vmatprep.subr.bf16.mxu0 0
  %2962 = vmatpush2.bf16.msra.mxu0 0
  %2963 = vmatprep.mubr.bf16.mxu0 0
  %2964 = vmatmul.mubr.bf16.gmra.mxu0 %v2721
  %v2965 = vpop.f32.mrf.mxu0
  %v2966 = vadd.f32 0.0, %v2965
  %v2967 = vpop.f32.mrf.mxu0
  %v2968 = vpop.f32.mrf.mxu0
  %v2969 = vadd.f32 0.0, %v2968
  %v2970 = vpop.f32.mrf.mxu0
  %2971 = vmatprep.mubr.bf16.mxu0 0
  %2972 = vmatmul.mubr.bf16.gmra.mxu0 %v2724
  %v2973 = vpop.f32.mrf.mxu0
  %v2974 = vadd.f32 0.0, %v2973
  %v2975 = vpop.f32.mrf.mxu0
  %v2976 = vpop.f32.mrf.mxu0
  %v2977 = vadd.f32 0.0, %v2976
  %v2978 = vpop.f32.mrf.mxu0
  %2979 = vmatprep.mubr.bf16.mxu0 0
  %2980 = vmatmul.mubr.bf16.gmra.mxu0 %v2727
  %v2981 = vpop.f32.mrf.mxu0
  %v2982 = vadd.f32 0.0, %v2981
  %v2983 = vpop.f32.mrf.mxu0
  %v2984 = vpop.f32.mrf.mxu0
  %v2985 = vadd.f32 0.0, %v2984
  %v2986 = vpop.f32.mrf.mxu0
  %2987 = vmatprep.mubr.bf16.mxu0 0
  %2988 = vmatmul.mubr.bf16.gmra.mxu0 %v2730
  %v2989 = vpop.f32.mrf.mxu0
  %v2990 = vadd.f32 0.0, %v2989
  %v2991 = vpop.f32.mrf.mxu0
  %v2992 = vpop.f32.mrf.mxu0
  %v2993 = vadd.f32 0.0, %v2992
  %v2994 = vpop.f32.mrf.mxu0
  %2995 = vmatprep.mubr.bf16.mxu0 0
  %2996 = vmatmul.mubr.bf16.gmra.mxu0 %v2733
  %v2997 = vpop.f32.mrf.mxu0
  %v2998 = vadd.f32 0.0, %v2997
  %v2999 = vpop.f32.mrf.mxu0
  %v3000 = vpop.f32.mrf.mxu0
  %v3001 = vadd.f32 0.0, %v3000
  %v3002 = vpop.f32.mrf.mxu0
  %3003 = vmatprep.mubr.bf16.mxu0 0
  %3004 = vmatmul.mubr.bf16.gmra.mxu0 %v2736
  %v3005 = vpop.f32.mrf.mxu0
  %v3006 = vadd.f32 0.0, %v3005
  %v3007 = vpop.f32.mrf.mxu0
  %v3008 = vpop.f32.mrf.mxu0
  %v3009 = vadd.f32 0.0, %v3008
  %v3010 = vpop.f32.mrf.mxu0
  %3011 = vmatprep.mubr.bf16.mxu0 0
  %3012 = vmatmul.mubr.bf16.gmra.mxu0 %v2739
  %v3013 = vpop.f32.mrf.mxu0
  %v3014 = vadd.f32 0.0, %v3013
  %v3015 = vpop.f32.mrf.mxu0
  %v3016 = vpop.f32.mrf.mxu0
  %v3017 = vadd.f32 0.0, %v3016
  %v3018 = vpop.f32.mrf.mxu0
  %3019 = vmatprep.mubr.bf16.mxu0 0
  %3020 = vmatmul.mubr.bf16.gmra.mxu0 %v2742
  %v3021 = vpop.f32.mrf.mxu0
  %v3022 = vadd.f32 0.0, %v3021
  %v3023 = vpop.f32.mrf.mxu0
  %v3024 = vpop.f32.mrf.mxu0
  %v3025 = vadd.f32 0.0, %v3024
  %v3026 = vpop.f32.mrf.mxu0
  %3027 = vmatprep.mubr.bf16.mxu0 0
  %3028 = vmatmul.mubr.bf16.gmra.mxu0 %v2745
  %v3029 = vpop.f32.mrf.mxu0
  %v3030 = vadd.f32 0.0, %v3029
  %v3031 = vpop.f32.mrf.mxu0
  %v3032 = vpop.f32.mrf.mxu0
  %v3033 = vadd.f32 0.0, %v3032
  %v3034 = vpop.f32.mrf.mxu0
  %3035 = vmatprep.mubr.bf16.mxu0 0
  %3036 = vmatmul.mubr.bf16.gmra.mxu0 %v2748
  %v3037 = vpop.f32.mrf.mxu0
  %v3038 = vadd.f32 0.0, %v3037
  %v3039 = vpop.f32.mrf.mxu0
  %v3040 = vpop.f32.mrf.mxu0
  %v3041 = vadd.f32 0.0, %v3040
  %v3042 = vpop.f32.mrf.mxu0
  %3043 = vmatprep.mubr.bf16.mxu0 0
  %3044 = vmatmul.mubr.bf16.gmra.mxu0 %v2751
  %v3045 = vpop.f32.mrf.mxu0
  %v3046 = vadd.f32 0.0, %v3045
  %v3047 = vpop.f32.mrf.mxu0
  %v3048 = vpop.f32.mrf.mxu0
  %v3049 = vadd.f32 0.0, %v3048
  %v3050 = vpop.f32.mrf.mxu0
  %3051 = vmatprep.mubr.bf16.mxu0 0
  %3052 = vmatmul.mubr.bf16.gmra.mxu0 %v2754
  %v3053 = vpop.f32.mrf.mxu0
  %v3054 = vadd.f32 0.0, %v3053
  %v3055 = vpop.f32.mrf.mxu0
  %v3056 = vpop.f32.mrf.mxu0
  %v3057 = vadd.f32 0.0, %v3056
  %v3058 = vpop.f32.mrf.mxu0
  %3059 = vdwg.mxu0
  %v3060 = vadd.f32 %v2289, %v2966
  %v3061 = vadd.f32 %v2290, %v2969
  %v3062 = vadd.f32 %v2291, %v2974
  %v3063 = vadd.f32 %v2292, %v2977
  %v3064 = vadd.f32 %v2293, %v2982
  %v3065 = vadd.f32 %v2294, %v2985
  %v3066 = vadd.f32 %v2295, %v2990
  %v3067 = vadd.f32 %v2296, %v2993
  %v3068 = vadd.f32 %v2297, %v2998
  %v3069 = vadd.f32 %v2298, %v3001
  %v3070 = vadd.f32 %v2299, %v3006
  %v3071 = vadd.f32 %v2300, %v3009
  %v3072 = vadd.f32 %v2301, %v3014
  %v3073 = vadd.f32 %v2302, %v3017
  %v3074 = vadd.f32 %v2303, %v3022
  %v3075 = vadd.f32 %v2304, %v3025
  %v3076 = vadd.f32 %v2305, %v3030
  %v3077 = vadd.f32 %v2306, %v3033
  %v3078 = vadd.f32 %v2307, %v3038
  %v3079 = vadd.f32 %v2308, %v3041
  %v3080 = vadd.f32 %v2309, %v3046
  %v3081 = vadd.f32 %v2310, %v3049
  %v3082 = vadd.f32 %v2311, %v3054
  %v3083 = vadd.f32 %v2312, %v3057
  %3084 = vmatprep.subr.bf16.mxu0 0
  %3085 = vmatpush1.bf16.msra.mxu0 0
  %3086 = vmatprep.subr.bf16.mxu0 0
  %3087 = vmatpush1.bf16.msra.mxu0 0
  %3088 = vmatprep.subr.bf16.mxu0 0
  %3089 = vmatpush1.bf16.msra.mxu0 0
  %3090 = vmatprep.subr.bf16.mxu0 0
  %3091 = vmatpush1.bf16.msra.mxu0 0
  %3092 = vmatprep.subr.bf16.mxu0 0
  %3093 = vmatpush1.bf16.msra.mxu0 0
  %3094 = vmatprep.subr.bf16.mxu0 0
  %3095 = vmatpush1.bf16.msra.mxu0 0
  %3096 = vmatprep.subr.bf16.mxu0 0
  %3097 = vmatpush1.bf16.msra.mxu0 %v1986
  %3098 = vmatprep.subr.bf16.mxu0 0
  %3099 = vmatpush1.bf16.msra.mxu0 %v1946
  %3100 = vmatprep.subr.bf16.mxu0 0
  %3101 = vmatpush2.bf16.msra.mxu0 0
  %3102 = vmatprep.subr.bf16.mxu0 0
  %3103 = vmatpush2.bf16.msra.mxu0 0
  %3104 = vmatprep.subr.bf16.mxu0 0
  %3105 = vmatpush2.bf16.msra.mxu0 0
  %3106 = vmatprep.subr.bf16.mxu0 0
  %3107 = vmatpush2.bf16.msra.mxu0 0
  %3108 = vmatprep.subr.bf16.mxu0 0
  %3109 = vmatpush2.bf16.msra.mxu0 0
  %3110 = vmatprep.subr.bf16.mxu0 0
  %3111 = vmatpush2.bf16.msra.mxu0 0
  %3112 = vmatprep.subr.bf16.mxu0 0
  %3113 = vmatpush2.bf16.msra.mxu0 0
  %3114 = vmatprep.subr.bf16.mxu0 0
  %3115 = vmatpush2.bf16.msra.mxu0 0
  %3116 = vmatprep.mubr.bf16.mxu0 0
  %3117 = vmatmul.mubr.bf16.gmra.mxu0 %v2721
  %v3118 = vpop.f32.mrf.mxu0
  %v3119 = vadd.f32 0.0, %v3118
  %v3120 = vpop.f32.mrf.mxu0
  %v3121 = vpop.f32.mrf.mxu0
  %v3122 = vadd.f32 0.0, %v3121
  %v3123 = vpop.f32.mrf.mxu0
  %3124 = vmatprep.mubr.bf16.mxu0 0
  %3125 = vmatmul.mubr.bf16.gmra.mxu0 %v2724
  %v3126 = vpop.f32.mrf.mxu0
  %v3127 = vadd.f32 0.0, %v3126
  %v3128 = vpop.f32.mrf.mxu0
  %v3129 = vpop.f32.mrf.mxu0
  %v3130 = vadd.f32 0.0, %v3129
  %v3131 = vpop.f32.mrf.mxu0
  %3132 = vmatprep.mubr.bf16.mxu0 0
  %3133 = vmatmul.mubr.bf16.gmra.mxu0 %v2727
  %v3134 = vpop.f32.mrf.mxu0
  %v3135 = vadd.f32 0.0, %v3134
  %v3136 = vpop.f32.mrf.mxu0
  %v3137 = vpop.f32.mrf.mxu0
  %v3138 = vadd.f32 0.0, %v3137
  %v3139 = vpop.f32.mrf.mxu0
  %3140 = vmatprep.mubr.bf16.mxu0 0
  %3141 = vmatmul.mubr.bf16.gmra.mxu0 %v2730
  %v3142 = vpop.f32.mrf.mxu0
  %v3143 = vadd.f32 0.0, %v3142
  %v3144 = vpop.f32.mrf.mxu0
  %v3145 = vpop.f32.mrf.mxu0
  %v3146 = vadd.f32 0.0, %v3145
  %v3147 = vpop.f32.mrf.mxu0
  %3148 = vmatprep.mubr.bf16.mxu0 0
  %3149 = vmatmul.mubr.bf16.gmra.mxu0 %v2733
  %v3150 = vpop.f32.mrf.mxu0
  %v3151 = vadd.f32 0.0, %v3150
  %v3152 = vpop.f32.mrf.mxu0
  %v3153 = vpop.f32.mrf.mxu0
  %v3154 = vadd.f32 0.0, %v3153
  %v3155 = vpop.f32.mrf.mxu0
  %3156 = vmatprep.mubr.bf16.mxu0 0
  %3157 = vmatmul.mubr.bf16.gmra.mxu0 %v2736
  %v3158 = vpop.f32.mrf.mxu0
  %v3159 = vadd.f32 0.0, %v3158
  %v3160 = vpop.f32.mrf.mxu0
  %v3161 = vpop.f32.mrf.mxu0
  %v3162 = vadd.f32 0.0, %v3161
  %v3163 = vpop.f32.mrf.mxu0
  %3164 = vmatprep.mubr.bf16.mxu0 0
  %3165 = vmatmul.mubr.bf16.gmra.mxu0 %v2739
  %v3166 = vpop.f32.mrf.mxu0
  %v3167 = vadd.f32 0.0, %v3166
  %v3168 = vpop.f32.mrf.mxu0
  %v3169 = vpop.f32.mrf.mxu0
  %v3170 = vadd.f32 0.0, %v3169
  %v3171 = vpop.f32.mrf.mxu0
  %3172 = vmatprep.mubr.bf16.mxu0 0
  %3173 = vmatmul.mubr.bf16.gmra.mxu0 %v2742
  %v3174 = vpop.f32.mrf.mxu0
  %v3175 = vadd.f32 0.0, %v3174
  %v3176 = vpop.f32.mrf.mxu0
  %v3177 = vpop.f32.mrf.mxu0
  %v3178 = vadd.f32 0.0, %v3177
  %v3179 = vpop.f32.mrf.mxu0
  %3180 = vmatprep.mubr.bf16.mxu0 0
  %3181 = vmatmul.mubr.bf16.gmra.mxu0 %v2745
  %v3182 = vpop.f32.mrf.mxu0
  %v3183 = vadd.f32 0.0, %v3182
  %v3184 = vpop.f32.mrf.mxu0
  %v3185 = vpop.f32.mrf.mxu0
  %v3186 = vadd.f32 0.0, %v3185
  %v3187 = vpop.f32.mrf.mxu0
  %3188 = vmatprep.mubr.bf16.mxu0 0
  %3189 = vmatmul.mubr.bf16.gmra.mxu0 %v2748
  %v3190 = vpop.f32.mrf.mxu0
  %v3191 = vadd.f32 0.0, %v3190
  %v3192 = vpop.f32.mrf.mxu0
  %v3193 = vpop.f32.mrf.mxu0
  %v3194 = vadd.f32 0.0, %v3193
  %v3195 = vpop.f32.mrf.mxu0
  %3196 = vmatprep.mubr.bf16.mxu0 0
  %3197 = vmatmul.mubr.bf16.gmra.mxu0 %v2751
  %v3198 = vpop.f32.mrf.mxu0
  %v3199 = vadd.f32 0.0, %v3198
  %v3200 = vpop.f32.mrf.mxu0
  %v3201 = vpop.f32.mrf.mxu0
  %v3202 = vadd.f32 0.0, %v3201
  %v3203 = vpop.f32.mrf.mxu0
  %3204 = vmatprep.mubr.bf16.mxu0 0
  %3205 = vmatmul.mubr.bf16.gmra.mxu0 %v2754
  %v3206 = vpop.f32.mrf.mxu0
  %v3207 = vadd.f32 0.0, %v3206
  %v3208 = vpop.f32.mrf.mxu0
  %v3209 = vpop.f32.mrf.mxu0
  %v3210 = vadd.f32 0.0, %v3209
  %v3211 = vpop.f32.mrf.mxu0
  %3212 = vdwg.mxu0
  %v3213 = vadd.f32 %v2442, %v3119
  %v3214 = vadd.f32 %v2443, %v3122
  %v3215 = vadd.f32 %v2444, %v3127
  %v3216 = vadd.f32 %v2445, %v3130
  %v3217 = vadd.f32 %v2446, %v3135
  %v3218 = vadd.f32 %v2447, %v3138
  %v3219 = vadd.f32 %v2448, %v3143
  %v3220 = vadd.f32 %v2449, %v3146
  %v3221 = vadd.f32 %v2450, %v3151
  %v3222 = vadd.f32 %v2451, %v3154
  %v3223 = vadd.f32 %v2452, %v3159
  %v3224 = vadd.f32 %v2453, %v3162
  %v3225 = vadd.f32 %v2454, %v3167
  %v3226 = vadd.f32 %v2455, %v3170
  %v3227 = vadd.f32 %v2456, %v3175
  %v3228 = vadd.f32 %v2457, %v3178
  %v3229 = vadd.f32 %v2458, %v3183
  %v3230 = vadd.f32 %v2459, %v3186
  %v3231 = vadd.f32 %v2460, %v3191
  %v3232 = vadd.f32 %v2461, %v3194
  %v3233 = vadd.f32 %v2462, %v3199
  %v3234 = vadd.f32 %v2463, %v3202
  %v3235 = vadd.f32 %v2464, %v3207
  %v3236 = vadd.f32 %v2465, %v3210
  %3237 = vmatprep.subr.bf16.mxu0 0
  %3238 = vmatpush1.bf16.msra.mxu0 0
  %3239 = vmatprep.subr.bf16.mxu0 0
  %3240 = vmatpush1.bf16.msra.mxu0 0
  %3241 = vmatprep.subr.bf16.mxu0 0
  %3242 = vmatpush1.bf16.msra.mxu0 0
  %3243 = vmatprep.subr.bf16.mxu0 0
  %3244 = vmatpush1.bf16.msra.mxu0 0
  %3245 = vmatprep.subr.bf16.mxu0 0
  %3246 = vmatpush1.bf16.msra.mxu0 0
  %3247 = vmatprep.subr.bf16.mxu0 0
  %3248 = vmatpush1.bf16.msra.mxu0 0
  %3249 = vmatprep.subr.bf16.mxu0 0
  %3250 = vmatpush1.bf16.msra.mxu0 %v2158
  %3251 = vmatprep.subr.bf16.mxu0 0
  %3252 = vmatpush1.bf16.msra.mxu0 %v2154
  %3253 = vmatprep.subr.bf16.mxu0 0
  %3254 = vmatpush2.bf16.msra.mxu0 0
  %3255 = vmatprep.subr.bf16.mxu0 0
  %3256 = vmatpush2.bf16.msra.mxu0 0
  %3257 = vmatprep.subr.bf16.mxu0 0
  %3258 = vmatpush2.bf16.msra.mxu0 0
  %3259 = vmatprep.subr.bf16.mxu0 0
  %3260 = vmatpush2.bf16.msra.mxu0 0
  %3261 = vmatprep.subr.bf16.mxu0 0
  %3262 = vmatpush2.bf16.msra.mxu0 0
  %3263 = vmatprep.subr.bf16.mxu0 0
  %3264 = vmatpush2.bf16.msra.mxu0 0
  %3265 = vmatprep.subr.bf16.mxu0 0
  %3266 = vmatpush2.bf16.msra.mxu0 0
  %3267 = vmatprep.subr.bf16.mxu0 0
  %3268 = vmatpush2.bf16.msra.mxu0 0
  %3269 = vmatprep.mubr.bf16.mxu0 0
  %3270 = vmatmul.mubr.bf16.gmra.mxu0 %v2721
  %v3271 = vpop.f32.mrf.mxu0
  %v3272 = vadd.f32 0.0, %v3271
  %v3273 = vpop.f32.mrf.mxu0
  %v3274 = vpop.f32.mrf.mxu0
  %v3275 = vadd.f32 0.0, %v3274
  %v3276 = vpop.f32.mrf.mxu0
  %3277 = vmatprep.mubr.bf16.mxu0 0
  %3278 = vmatmul.mubr.bf16.gmra.mxu0 %v2724
  %v3279 = vpop.f32.mrf.mxu0
  %v3280 = vadd.f32 0.0, %v3279
  %v3281 = vpop.f32.mrf.mxu0
  %v3282 = vpop.f32.mrf.mxu0
  %v3283 = vadd.f32 0.0, %v3282
  %v3284 = vpop.f32.mrf.mxu0
  %3285 = vmatprep.mubr.bf16.mxu0 0
  %3286 = vmatmul.mubr.bf16.gmra.mxu0 %v2727
  %v3287 = vpop.f32.mrf.mxu0
  %v3288 = vadd.f32 0.0, %v3287
  %v3289 = vpop.f32.mrf.mxu0
  %v3290 = vpop.f32.mrf.mxu0
  %v3291 = vadd.f32 0.0, %v3290
  %v3292 = vpop.f32.mrf.mxu0
  %3293 = vmatprep.mubr.bf16.mxu0 0
  %3294 = vmatmul.mubr.bf16.gmra.mxu0 %v2730
  %v3295 = vpop.f32.mrf.mxu0
  %v3296 = vadd.f32 0.0, %v3295
  %v3297 = vpop.f32.mrf.mxu0
  %v3298 = vpop.f32.mrf.mxu0
  %v3299 = vadd.f32 0.0, %v3298
  %v3300 = vpop.f32.mrf.mxu0
  %3301 = vmatprep.mubr.bf16.mxu0 0
  %3302 = vmatmul.mubr.bf16.gmra.mxu0 %v2733
  %v3303 = vpop.f32.mrf.mxu0
  %v3304 = vadd.f32 0.0, %v3303
  %v3305 = vpop.f32.mrf.mxu0
  %v3306 = vpop.f32.mrf.mxu0
  %v3307 = vadd.f32 0.0, %v3306
  %v3308 = vpop.f32.mrf.mxu0
  %3309 = vmatprep.mubr.bf16.mxu0 0
  %3310 = vmatmul.mubr.bf16.gmra.mxu0 %v2736
  %v3311 = vpop.f32.mrf.mxu0
  %v3312 = vadd.f32 0.0, %v3311
  %v3313 = vpop.f32.mrf.mxu0
  %v3314 = vpop.f32.mrf.mxu0
  %v3315 = vadd.f32 0.0, %v3314
  %v3316 = vpop.f32.mrf.mxu0
  %3317 = vmatprep.mubr.bf16.mxu0 0
  %3318 = vmatmul.mubr.bf16.gmra.mxu0 %v2739
  %v3319 = vpop.f32.mrf.mxu0
  %v3320 = vadd.f32 0.0, %v3319
  %v3321 = vpop.f32.mrf.mxu0
  %v3322 = vpop.f32.mrf.mxu0
  %v3323 = vadd.f32 0.0, %v3322
  %v3324 = vpop.f32.mrf.mxu0
  %3325 = vmatprep.mubr.bf16.mxu0 0
  %3326 = vmatmul.mubr.bf16.gmra.mxu0 %v2742
  %v3327 = vpop.f32.mrf.mxu0
  %v3328 = vadd.f32 0.0, %v3327
  %v3329 = vpop.f32.mrf.mxu0
  %v3330 = vpop.f32.mrf.mxu0
  %v3331 = vadd.f32 0.0, %v3330
  %v3332 = vpop.f32.mrf.mxu0
  %3333 = vmatprep.mubr.bf16.mxu0 0
  %3334 = vmatmul.mubr.bf16.gmra.mxu0 %v2745
  %v3335 = vpop.f32.mrf.mxu0
  %v3336 = vadd.f32 0.0, %v3335
  %v3337 = vpop.f32.mrf.mxu0
  %v3338 = vpop.f32.mrf.mxu0
  %v3339 = vadd.f32 0.0, %v3338
  %v3340 = vpop.f32.mrf.mxu0
  %3341 = vmatprep.mubr.bf16.mxu0 0
  %3342 = vmatmul.mubr.bf16.gmra.mxu0 %v2748
  %v3343 = vpop.f32.mrf.mxu0
  %v3344 = vadd.f32 0.0, %v3343
  %v3345 = vpop.f32.mrf.mxu0
  %v3346 = vpop.f32.mrf.mxu0
  %v3347 = vadd.f32 0.0, %v3346
  %v3348 = vpop.f32.mrf.mxu0
  %3349 = vmatprep.mubr.bf16.mxu0 0
  %3350 = vmatmul.mubr.bf16.gmra.mxu0 %v2751
  %v3351 = vpop.f32.mrf.mxu0
  %v3352 = vadd.f32 0.0, %v3351
  %v3353 = vpop.f32.mrf.mxu0
  %v3354 = vpop.f32.mrf.mxu0
  %v3355 = vadd.f32 0.0, %v3354
  %v3356 = vpop.f32.mrf.mxu0
  %3357 = vmatprep.mubr.bf16.mxu0 0
  %3358 = vmatmul.mubr.bf16.gmra.mxu0 %v2754
  %v3359 = vpop.f32.mrf.mxu0
  %v3360 = vadd.f32 0.0, %v3359
  %v3361 = vpop.f32.mrf.mxu0
  %v3362 = vpop.f32.mrf.mxu0
  %v3363 = vadd.f32 0.0, %v3362
  %v3364 = vpop.f32.mrf.mxu0
  %3365 = vdwg.mxu0
  %v3366 = vadd.f32 %v2595, %v3272
  %v3367 = vadd.f32 %v2596, %v3275
  %v3368 = vadd.f32 %v2597, %v3280
  %v3369 = vadd.f32 %v2598, %v3283
  %v3370 = vadd.f32 %v2599, %v3288
  %v3371 = vadd.f32 %v2600, %v3291
  %v3372 = vadd.f32 %v2601, %v3296
  %v3373 = vadd.f32 %v2602, %v3299
  %v3374 = vadd.f32 %v2603, %v3304
  %v3375 = vadd.f32 %v2604, %v3307
  %v3376 = vadd.f32 %v2605, %v3312
  %v3377 = vadd.f32 %v2606, %v3315
  %v3378 = vadd.f32 %v2607, %v3320
  %v3379 = vadd.f32 %v2608, %v3323
  %v3380 = vadd.f32 %v2609, %v3328
  %v3381 = vadd.f32 %v2610, %v3331
  %v3382 = vadd.f32 %v2611, %v3336
  %v3383 = vadd.f32 %v2612, %v3339
  %v3384 = vadd.f32 %v2613, %v3344
  %v3385 = vadd.f32 %v2614, %v3347
  %v3386 = vadd.f32 %v2615, %v3352
  %v3387 = vadd.f32 %v2616, %v3355
  %v3388 = vadd.f32 %v2617, %v3360
  %v3389 = vadd.f32 %v2618, %v3363
  %s3390 = scalar_lea.vmem %s0, 128
  %v3391 = vld [vmem:[%s3390] sm:$0xf]
  %v3392 = vld [vmem:[%s3390 + $0x4] sm:$0xf]
  %v3393 = vld [vmem:[%s3390 + $0x8] sm:$0xf]
  %v3394 = vld [vmem:[%s3390 + $0xc] sm:$0xf]
  %v3395 = vld [vmem:[%s3390 + $0x10] sm:$0xf]
  %v3396 = vld [vmem:[%s3390 + $0x14] sm:$0xf]
  %v3397 = vld [vmem:[%s3390 + $0x18] sm:$0xf]
  %v3398 = vld [vmem:[%s3390 + $0x1c] sm:$0xf]
  %v3399 = vld [vmem:[%s3390 + $0x20] sm:$0xf]
  %v3400 = vld [vmem:[%s3390 + $0x24] sm:$0xf]
  %v3401 = vld [vmem:[%s3390 + $0x28] sm:$0xf]
  %v3402 = vld [vmem:[%s3390 + $0x2c] sm:$0xf]
  %v3403 = vld [vmem:[%s3390 + $0x30] sm:$0xf]
  %v3404 = vld [vmem:[%s3390 + $0x34] sm:$0xf]
  %v3405 = vld [vmem:[%s3390 + $0x38] sm:$0xf]
  %v3406 = vld [vmem:[%s3390 + $0x3c] sm:$0xf]
  %v3407 = vld [vmem:[%s3390 + $0x40] sm:$0xf]
  %v3408 = vld [vmem:[%s3390 + $0x44] sm:$0xf]
  %v3409 = vld [vmem:[%s3390 + $0x48] sm:$0xf]
  %v3410 = vld [vmem:[%s3390 + $0x4c] sm:$0xf]
  %v3411 = vld [vmem:[%s3390 + $0x50] sm:$0xf]
  %v3412 = vld [vmem:[%s3390 + $0x54] sm:$0xf]
  %v3413 = vld [vmem:[%s3390 + $0x58] sm:$0xf]
  %v3414 = vld [vmem:[%s3390 + $0x5c] sm:$0xf]
  %v3439 = vunpack.c.l.b16 %v3391
  %v3440 = vunpack.c.l.b16 %v3392
  %v3441 = vunpack.c.l.b16 %v3393
  %v3442 = vunpack.c.l.b16 %v3394
  %v3443 = vunpack.c.l.b16 %v3395
  %v3444 = vunpack.c.l.b16 %v3396
  %v3445 = vunpack.c.l.b16 %v3397
  %v3446 = vunpack.c.l.b16 %v3398
  %v3447 = vunpack.c.l.b16 %v3399
  %v3448 = vunpack.c.l.b16 %v3400
  %v3449 = vunpack.c.l.b16 %v3401
  %v3450 = vunpack.c.l.b16 %v3402
  %v3451 = vunpack.c.l.b16 %v3403
  %v3452 = vunpack.c.l.b16 %v3404
  %v3453 = vunpack.c.l.b16 %v3405
  %v3454 = vunpack.c.l.b16 %v3406
  %v3455 = vunpack.c.l.b16 %v3407
  %v3456 = vunpack.c.l.b16 %v3408
  %v3457 = vunpack.c.l.b16 %v3409
  %v3458 = vunpack.c.l.b16 %v3410
  %v3459 = vunpack.c.l.b16 %v3411
  %v3460 = vunpack.c.l.b16 %v3412
  %v3461 = vunpack.c.l.b16 %v3413
  %v3462 = vunpack.c.l.b16 %v3414
  %v3463 = vpack.c.b16 %v3440, %v3439
  %v3464 = vpack.c.b16 %v3442, %v3441
  %v3465 = vpack.c.b16 %v3444, %v3443
  %v3466 = vpack.c.b16 %v3446, %v3445
  %v3467 = vpack.c.b16 %v3448, %v3447
  %v3468 = vpack.c.b16 %v3450, %v3449
  %v3469 = vpack.c.b16 %v3452, %v3451
  %v3470 = vpack.c.b16 %v3454, %v3453
  %v3471 = vpack.c.b16 %v3456, %v3455
  %v3472 = vpack.c.b16 %v3458, %v3457
  %v3473 = vpack.c.b16 %v3460, %v3459
  %v3474 = vpack.c.b16 %v3462, %v3461
  %v3476 = vsel %vm167, %v3463, 0
  %v3479 = vsel %vm167, %v3464, 0
  %v3482 = vsel %vm167, %v3465, 0
  %v3485 = vsel %vm167, %v3466, 0
  %v3488 = vsel %vm167, %v3467, 0
  %v3491 = vsel %vm167, %v3468, 0
  %v3494 = vsel %vm167, %v3469, 0
  %v3497 = vsel %vm167, %v3470, 0
  %v3500 = vsel %vm167, %v3471, 0
  %v3503 = vsel %vm167, %v3472, 0
  %v3506 = vsel %vm167, %v3473, 0
  %v3509 = vsel %vm167, %v3474, 0
  %3511 = vmatprep.subr.bf16.mxu0 0
  %3512 = vmatpush1.bf16.msra.mxu0 0
  %3513 = vmatprep.subr.bf16.mxu0 0
  %3514 = vmatpush1.bf16.msra.mxu0 0
  %3515 = vmatprep.subr.bf16.mxu0 0
  %3516 = vmatpush1.bf16.msra.mxu0 0
  %3517 = vmatprep.subr.bf16.mxu0 0
  %3518 = vmatpush1.bf16.msra.mxu0 0
  %3519 = vmatprep.subr.bf16.mxu0 0
  %3520 = vmatpush1.bf16.msra.mxu0 0
  %3521 = vmatprep.subr.bf16.mxu0 0
  %3522 = vmatpush1.bf16.msra.mxu0 0
  %3523 = vmatprep.subr.bf16.mxu0 0
  %3524 = vmatpush1.bf16.msra.mxu0 %v2757
  %3525 = vmatprep.subr.bf16.mxu0 0
  %3526 = vmatpush1.bf16.msra.mxu0 %v2717
  %3527 = vmatprep.subr.bf16.mxu0 0
  %3528 = vmatpush2.bf16.msra.mxu0 0
  %3529 = vmatprep.subr.bf16.mxu0 0
  %3530 = vmatpush2.bf16.msra.mxu0 0
  %3531 = vmatprep.subr.bf16.mxu0 0
  %3532 = vmatpush2.bf16.msra.mxu0 0
  %3533 = vmatprep.subr.bf16.mxu0 0
  %3534 = vmatpush2.bf16.msra.mxu0 0
  %3535 = vmatprep.subr.bf16.mxu0 0
  %3536 = vmatpush2.bf16.msra.mxu0 0
  %3537 = vmatprep.subr.bf16.mxu0 0
  %3538 = vmatpush2.bf16.msra.mxu0 0
  %3539 = vmatprep.subr.bf16.mxu0 0
  %3540 = vmatpush2.bf16.msra.mxu0 0
  %3541 = vmatprep.subr.bf16.mxu0 0
  %3542 = vmatpush2.bf16.msra.mxu0 0
  %3543 = vmatprep.mubr.bf16.mxu0 0
  %3544 = vmatmul.mubr.bf16.gmra.mxu0 %v3476
  %v3545 = vpop.f32.mrf.mxu0
  %v3546 = vadd.f32 0.0, %v3545
  %v3547 = vpop.f32.mrf.mxu0
  %v3548 = vpop.f32.mrf.mxu0
  %v3549 = vadd.f32 0.0, %v3548
  %v3550 = vpop.f32.mrf.mxu0
  %3551 = vmatprep.mubr.bf16.mxu0 0
  %3552 = vmatmul.mubr.bf16.gmra.mxu0 %v3479
  %v3553 = vpop.f32.mrf.mxu0
  %v3554 = vadd.f32 0.0, %v3553
  %v3555 = vpop.f32.mrf.mxu0
  %v3556 = vpop.f32.mrf.mxu0
  %v3557 = vadd.f32 0.0, %v3556
  %v3558 = vpop.f32.mrf.mxu0
  %3559 = vmatprep.mubr.bf16.mxu0 0
  %3560 = vmatmul.mubr.bf16.gmra.mxu0 %v3482
  %v3561 = vpop.f32.mrf.mxu0
  %v3562 = vadd.f32 0.0, %v3561
  %v3563 = vpop.f32.mrf.mxu0
  %v3564 = vpop.f32.mrf.mxu0
  %v3565 = vadd.f32 0.0, %v3564
  %v3566 = vpop.f32.mrf.mxu0
  %3567 = vmatprep.mubr.bf16.mxu0 0
  %3568 = vmatmul.mubr.bf16.gmra.mxu0 %v3485
  %v3569 = vpop.f32.mrf.mxu0
  %v3570 = vadd.f32 0.0, %v3569
  %v3571 = vpop.f32.mrf.mxu0
  %v3572 = vpop.f32.mrf.mxu0
  %v3573 = vadd.f32 0.0, %v3572
  %v3574 = vpop.f32.mrf.mxu0
  %3575 = vmatprep.mubr.bf16.mxu0 0
  %3576 = vmatmul.mubr.bf16.gmra.mxu0 %v3488
  %v3577 = vpop.f32.mrf.mxu0
  %v3578 = vadd.f32 0.0, %v3577
  %v3579 = vpop.f32.mrf.mxu0
  %v3580 = vpop.f32.mrf.mxu0
  %v3581 = vadd.f32 0.0, %v3580
  %v3582 = vpop.f32.mrf.mxu0
  %3583 = vmatprep.mubr.bf16.mxu0 0
  %3584 = vmatmul.mubr.bf16.gmra.mxu0 %v3491
  %v3585 = vpop.f32.mrf.mxu0
  %v3586 = vadd.f32 0.0, %v3585
  %v3587 = vpop.f32.mrf.mxu0
  %v3588 = vpop.f32.mrf.mxu0
  %v3589 = vadd.f32 0.0, %v3588
  %v3590 = vpop.f32.mrf.mxu0
  %3591 = vmatprep.mubr.bf16.mxu0 0
  %3592 = vmatmul.mubr.bf16.gmra.mxu0 %v3494
  %v3593 = vpop.f32.mrf.mxu0
  %v3594 = vadd.f32 0.0, %v3593
  %v3595 = vpop.f32.mrf.mxu0
  %v3596 = vpop.f32.mrf.mxu0
  %v3597 = vadd.f32 0.0, %v3596
  %v3598 = vpop.f32.mrf.mxu0
  %3599 = vmatprep.mubr.bf16.mxu0 0
  %3600 = vmatmul.mubr.bf16.gmra.mxu0 %v3497
  %v3601 = vpop.f32.mrf.mxu0
  %v3602 = vadd.f32 0.0, %v3601
  %v3603 = vpop.f32.mrf.mxu0
  %v3604 = vpop.f32.mrf.mxu0
  %v3605 = vadd.f32 0.0, %v3604
  %v3606 = vpop.f32.mrf.mxu0
  %3607 = vmatprep.mubr.bf16.mxu0 0
  %3608 = vmatmul.mubr.bf16.gmra.mxu0 %v3500
  %v3609 = vpop.f32.mrf.mxu0
  %v3610 = vadd.f32 0.0, %v3609
  %v3611 = vpop.f32.mrf.mxu0
  %v3612 = vpop.f32.mrf.mxu0
  %v3613 = vadd.f32 0.0, %v3612
  %v3614 = vpop.f32.mrf.mxu0
  %3615 = vmatprep.mubr.bf16.mxu0 0
  %3616 = vmatmul.mubr.bf16.gmra.mxu0 %v3503
  %v3617 = vpop.f32.mrf.mxu0
  %v3618 = vadd.f32 0.0, %v3617
  %v3619 = vpop.f32.mrf.mxu0
  %v3620 = vpop.f32.mrf.mxu0
  %v3621 = vadd.f32 0.0, %v3620
  %v3622 = vpop.f32.mrf.mxu0
  %3623 = vmatprep.mubr.bf16.mxu0 0
  %3624 = vmatmul.mubr.bf16.gmra.mxu0 %v3506
  %v3625 = vpop.f32.mrf.mxu0
  %v3626 = vadd.f32 0.0, %v3625
  %v3627 = vpop.f32.mrf.mxu0
  %v3628 = vpop.f32.mrf.mxu0
  %v3629 = vadd.f32 0.0, %v3628
  %v3630 = vpop.f32.mrf.mxu0
  %3631 = vmatprep.mubr.bf16.mxu0 0
  %3632 = vmatmul.mubr.bf16.gmra.mxu0 %v3509
  %v3633 = vpop.f32.mrf.mxu0
  %v3634 = vadd.f32 0.0, %v3633
  %v3635 = vpop.f32.mrf.mxu0
  %v3636 = vpop.f32.mrf.mxu0
  %v3637 = vadd.f32 0.0, %v3636
  %v3638 = vpop.f32.mrf.mxu0
  %3639 = vdwg.mxu0
  %v3640 = vadd.f32 %v3213, %v3546
  %v3641 = vadd.f32 %v3214, %v3549
  %v3642 = vadd.f32 %v3215, %v3554
  %v3643 = vadd.f32 %v3216, %v3557
  %v3644 = vadd.f32 %v3217, %v3562
  %v3645 = vadd.f32 %v3218, %v3565
  %v3646 = vadd.f32 %v3219, %v3570
  %v3647 = vadd.f32 %v3220, %v3573
  %v3648 = vadd.f32 %v3221, %v3578
  %v3649 = vadd.f32 %v3222, %v3581
  %v3650 = vadd.f32 %v3223, %v3586
  %v3651 = vadd.f32 %v3224, %v3589
  %v3652 = vadd.f32 %v3225, %v3594
  %v3653 = vadd.f32 %v3226, %v3597
  %v3654 = vadd.f32 %v3227, %v3602
  %v3655 = vadd.f32 %v3228, %v3605
  %v3656 = vadd.f32 %v3229, %v3610
  %v3657 = vadd.f32 %v3230, %v3613
  %v3658 = vadd.f32 %v3231, %v3618
  %v3659 = vadd.f32 %v3232, %v3621
  %v3660 = vadd.f32 %v3233, %v3626
  %v3661 = vadd.f32 %v3234, %v3629
  %v3662 = vadd.f32 %v3235, %v3634
  %v3663 = vadd.f32 %v3236, %v3637
  %3664 = vmatprep.subr.bf16.mxu0 0
  %3665 = vmatpush1.bf16.msra.mxu0 0
  %3666 = vmatprep.subr.bf16.mxu0 0
  %3667 = vmatpush1.bf16.msra.mxu0 0
  %3668 = vmatprep.subr.bf16.mxu0 0
  %3669 = vmatpush1.bf16.msra.mxu0 0
  %3670 = vmatprep.subr.bf16.mxu0 0
  %3671 = vmatpush1.bf16.msra.mxu0 0
  %3672 = vmatprep.subr.bf16.mxu0 0
  %3673 = vmatpush1.bf16.msra.mxu0 0
  %3674 = vmatprep.subr.bf16.mxu0 0
  %3675 = vmatpush1.bf16.msra.mxu0 0
  %3676 = vmatprep.subr.bf16.mxu0 0
  %3677 = vmatpush1.bf16.msra.mxu0 %v2929
  %3678 = vmatprep.subr.bf16.mxu0 0
  %3679 = vmatpush1.bf16.msra.mxu0 %v2925
  %3680 = vmatprep.subr.bf16.mxu0 0
  %3681 = vmatpush2.bf16.msra.mxu0 0
  %3682 = vmatprep.subr.bf16.mxu0 0
  %3683 = vmatpush2.bf16.msra.mxu0 0
  %3684 = vmatprep.subr.bf16.mxu0 0
  %3685 = vmatpush2.bf16.msra.mxu0 0
  %3686 = vmatprep.subr.bf16.mxu0 0
  %3687 = vmatpush2.bf16.msra.mxu0 0
  %3688 = vmatprep.subr.bf16.mxu0 0
  %3689 = vmatpush2.bf16.msra.mxu0 0
  %3690 = vmatprep.subr.bf16.mxu0 0
  %3691 = vmatpush2.bf16.msra.mxu0 0
  %3692 = vmatprep.subr.bf16.mxu0 0
  %3693 = vmatpush2.bf16.msra.mxu0 0
  %3694 = vmatprep.subr.bf16.mxu0 0
  %3695 = vmatpush2.bf16.msra.mxu0 0
  %3696 = vmatprep.mubr.bf16.mxu0 0
  %3697 = vmatmul.mubr.bf16.gmra.mxu0 %v3476
  %v3698 = vpop.f32.mrf.mxu0
  %v3699 = vadd.f32 0.0, %v3698
  %v3700 = vpop.f32.mrf.mxu0
  %v3701 = vpop.f32.mrf.mxu0
  %v3702 = vadd.f32 0.0, %v3701
  %v3703 = vpop.f32.mrf.mxu0
  %3704 = vmatprep.mubr.bf16.mxu0 0
  %3705 = vmatmul.mubr.bf16.gmra.mxu0 %v3479
  %v3706 = vpop.f32.mrf.mxu0
  %v3707 = vadd.f32 0.0, %v3706
  %v3708 = vpop.f32.mrf.mxu0
  %v3709 = vpop.f32.mrf.mxu0
  %v3710 = vadd.f32 0.0, %v3709
  %v3711 = vpop.f32.mrf.mxu0
  %3712 = vmatprep.mubr.bf16.mxu0 0
  %3713 = vmatmul.mubr.bf16.gmra.mxu0 %v3482
  %v3714 = vpop.f32.mrf.mxu0
  %v3715 = vadd.f32 0.0, %v3714
  %v3716 = vpop.f32.mrf.mxu0
  %v3717 = vpop.f32.mrf.mxu0
  %v3718 = vadd.f32 0.0, %v3717
  %v3719 = vpop.f32.mrf.mxu0
  %3720 = vmatprep.mubr.bf16.mxu0 0
  %3721 = vmatmul.mubr.bf16.gmra.mxu0 %v3485
  %v3722 = vpop.f32.mrf.mxu0
  %v3723 = vadd.f32 0.0, %v3722
  %v3724 = vpop.f32.mrf.mxu0
  %v3725 = vpop.f32.mrf.mxu0
  %v3726 = vadd.f32 0.0, %v3725
  %v3727 = vpop.f32.mrf.mxu0
  %3728 = vmatprep.mubr.bf16.mxu0 0
  %3729 = vmatmul.mubr.bf16.gmra.mxu0 %v3488
  %v3730 = vpop.f32.mrf.mxu0
  %v3731 = vadd.f32 0.0, %v3730
  %v3732 = vpop.f32.mrf.mxu0
  %v3733 = vpop.f32.mrf.mxu0
  %v3734 = vadd.f32 0.0, %v3733
  %v3735 = vpop.f32.mrf.mxu0
  %3736 = vmatprep.mubr.bf16.mxu0 0
  %3737 = vmatmul.mubr.bf16.gmra.mxu0 %v3491
  %v3738 = vpop.f32.mrf.mxu0
  %v3739 = vadd.f32 0.0, %v3738
  %v3740 = vpop.f32.mrf.mxu0
  %v3741 = vpop.f32.mrf.mxu0
  %v3742 = vadd.f32 0.0, %v3741
  %v3743 = vpop.f32.mrf.mxu0
  %3744 = vmatprep.mubr.bf16.mxu0 0
  %3745 = vmatmul.mubr.bf16.gmra.mxu0 %v3494
  %v3746 = vpop.f32.mrf.mxu0
  %v3747 = vadd.f32 0.0, %v3746
  %v3748 = vpop.f32.mrf.mxu0
  %v3749 = vpop.f32.mrf.mxu0
  %v3750 = vadd.f32 0.0, %v3749
  %v3751 = vpop.f32.mrf.mxu0
  %3752 = vmatprep.mubr.bf16.mxu0 0
  %3753 = vmatmul.mubr.bf16.gmra.mxu0 %v3497
  %v3754 = vpop.f32.mrf.mxu0
  %v3755 = vadd.f32 0.0, %v3754
  %v3756 = vpop.f32.mrf.mxu0
  %v3757 = vpop.f32.mrf.mxu0
  %v3758 = vadd.f32 0.0, %v3757
  %v3759 = vpop.f32.mrf.mxu0
  %3760 = vmatprep.mubr.bf16.mxu0 0
  %3761 = vmatmul.mubr.bf16.gmra.mxu0 %v3500
  %v3762 = vpop.f32.mrf.mxu0
  %v3763 = vadd.f32 0.0, %v3762
  %v3764 = vpop.f32.mrf.mxu0
  %v3765 = vpop.f32.mrf.mxu0
  %v3766 = vadd.f32 0.0, %v3765
  %v3767 = vpop.f32.mrf.mxu0
  %3768 = vmatprep.mubr.bf16.mxu0 0
  %3769 = vmatmul.mubr.bf16.gmra.mxu0 %v3503
  %v3770 = vpop.f32.mrf.mxu0
  %v3771 = vadd.f32 0.0, %v3770
  %v3772 = vpop.f32.mrf.mxu0
  %v3773 = vpop.f32.mrf.mxu0
  %v3774 = vadd.f32 0.0, %v3773
  %v3775 = vpop.f32.mrf.mxu0
  %3776 = vmatprep.mubr.bf16.mxu0 0
  %3777 = vmatmul.mubr.bf16.gmra.mxu0 %v3506
  %v3778 = vpop.f32.mrf.mxu0
  %v3779 = vadd.f32 0.0, %v3778
  %v3780 = vpop.f32.mrf.mxu0
  %v3781 = vpop.f32.mrf.mxu0
  %v3782 = vadd.f32 0.0, %v3781
  %v3783 = vpop.f32.mrf.mxu0
  %3784 = vmatprep.mubr.bf16.mxu0 0
  %3785 = vmatmul.mubr.bf16.gmra.mxu0 %v3509
  %v3786 = vpop.f32.mrf.mxu0
  %v3787 = vadd.f32 0.0, %v3786
  %v3788 = vpop.f32.mrf.mxu0
  %v3789 = vpop.f32.mrf.mxu0
  %v3790 = vadd.f32 0.0, %v3789
  %v3791 = vpop.f32.mrf.mxu0
  %3792 = vdwg.mxu0
  %v3793 = vadd.f32 %v3366, %v3699
  %v3794 = vadd.f32 %v3367, %v3702
  %v3795 = vadd.f32 %v3368, %v3707
  %v3796 = vadd.f32 %v3369, %v3710
  %v3797 = vadd.f32 %v3370, %v3715
  %v3798 = vadd.f32 %v3371, %v3718
  %v3799 = vadd.f32 %v3372, %v3723
  %v3800 = vadd.f32 %v3373, %v3726
  %v3801 = vadd.f32 %v3374, %v3731
  %v3802 = vadd.f32 %v3375, %v3734
  %v3803 = vadd.f32 %v3376, %v3739
  %v3804 = vadd.f32 %v3377, %v3742
  %v3805 = vadd.f32 %v3378, %v3747
  %v3806 = vadd.f32 %v3379, %v3750
  %v3807 = vadd.f32 %v3380, %v3755
  %v3808 = vadd.f32 %v3381, %v3758
  %v3809 = vadd.f32 %v3382, %v3763
  %v3810 = vadd.f32 %v3383, %v3766
  %v3811 = vadd.f32 %v3384, %v3771
  %v3812 = vadd.f32 %v3385, %v3774
  %v3813 = vadd.f32 %v3386, %v3779
  %v3814 = vadd.f32 %v3387, %v3782
  %v3815 = vadd.f32 %v3388, %v3787
  %v3816 = vadd.f32 %v3389, %v3790
  %v3817 = vmax.f32 %v2888, %v3060
  %v3818 = vmax.f32 %v2889, %v3061
  %v3819 = vmax.f32 %v2890, %v3062
  %v3820 = vmax.f32 %v2891, %v3063
  %v3821 = vmax.f32 %v2892, %v3064
  %v3822 = vmax.f32 %v2893, %v3065
  %v3823 = vmax.f32 %v2894, %v3066
  %v3824 = vmax.f32 %v2895, %v3067
  %v3825 = vmax.f32 %v2896, %v3068
  %v3826 = vmax.f32 %v2897, %v3069
  %v3827 = vmax.f32 %v2898, %v3070
  %v3828 = vmax.f32 %v2899, %v3071
  %v3829 = vmax.f32 %v2900, %v3072
  %v3830 = vmax.f32 %v2901, %v3073
  %v3831 = vmax.f32 %v2902, %v3074
  %v3832 = vmax.f32 %v2903, %v3075
  %v3833 = vmax.f32 %v2904, %v3076
  %v3834 = vmax.f32 %v2905, %v3077
  %v3835 = vmax.f32 %v2906, %v3078
  %v3836 = vmax.f32 %v2907, %v3079
  %v3837 = vmax.f32 %v2908, %v3080
  %v3838 = vmax.f32 %v2909, %v3081
  %v3839 = vmax.f32 %v2910, %v3082
  %v3840 = vmax.f32 %v2911, %v3083
  %v3841 = vmax.f32 %v3640, %v3793
  %v3842 = vmax.f32 %v3641, %v3794
  %v3843 = vmax.f32 %v3642, %v3795
  %v3844 = vmax.f32 %v3643, %v3796
  %v3845 = vmax.f32 %v3644, %v3797
  %v3846 = vmax.f32 %v3645, %v3798
  %v3847 = vmax.f32 %v3646, %v3799
  %v3848 = vmax.f32 %v3647, %v3800
  %v3849 = vmax.f32 %v3648, %v3801
  %v3850 = vmax.f32 %v3649, %v3802
  %v3851 = vmax.f32 %v3650, %v3803
  %v3852 = vmax.f32 %v3651, %v3804
  %v3853 = vmax.f32 %v3652, %v3805
  %v3854 = vmax.f32 %v3653, %v3806
  %v3855 = vmax.f32 %v3654, %v3807
  %v3856 = vmax.f32 %v3655, %v3808
  %v3857 = vmax.f32 %v3656, %v3809
  %v3858 = vmax.f32 %v3657, %v3810
  %v3859 = vmax.f32 %v3658, %v3811
  %v3860 = vmax.f32 %v3659, %v3812
  %v3861 = vmax.f32 %v3660, %v3813
  %v3862 = vmax.f32 %v3661, %v3814
  %v3863 = vmax.f32 %v3662, %v3815
  %v3864 = vmax.f32 %v3663, %v3816
  %v3865 = vmax.f32 %v3817, %v3841
  %v3866 = vmax.f32 %v3818, %v3842
  %v3867 = vmax.f32 %v3819, %v3843
  %v3868 = vmax.f32 %v3820, %v3844
  %v3869 = vmax.f32 %v3821, %v3845
  %v3870 = vmax.f32 %v3822, %v3846
  %v3871 = vmax.f32 %v3823, %v3847
  %v3872 = vmax.f32 %v3824, %v3848
  %v3873 = vmax.f32 %v3825, %v3849
  %v3874 = vmax.f32 %v3826, %v3850
  %v3875 = vmax.f32 %v3827, %v3851
  %v3876 = vmax.f32 %v3828, %v3852
  %v3877 = vmax.f32 %v3829, %v3853
  %v3878 = vmax.f32 %v3830, %v3854
  %v3879 = vmax.f32 %v3831, %v3855
  %v3880 = vmax.f32 %v3832, %v3856
  %v3881 = vmax.f32 %v3833, %v3857
  %v3882 = vmax.f32 %v3834, %v3858
  %v3883 = vmax.f32 %v3835, %v3859
  %v3884 = vmax.f32 %v3836, %v3860
  %v3885 = vmax.f32 %v3837, %v3861
  %v3886 = vmax.f32 %v3838, %v3862
  %v3887 = vmax.f32 %v3839, %v3863
  %v3888 = vmax.f32 %v3840, %v3864
  %v3889 = vld [vmem:[%s2] sm:$0x1]
  %v3891 = vlaneseq
  %v3892 = vshrl.u32 %v3891, 7
  %v3893 = vsub.s32 0, %v3892
  %v3894 = vrot.slane %v3889, %v3893
  %v3896 = vadd.f32 %v3865, %v3894
  %v3897 = vadd.f32 %v3866, %v3894
  %v3898 = vadd.f32 %v3867, %v3894
  %v3899 = vadd.f32 %v3868, %v3894
  %v3900 = vadd.f32 %v3869, %v3894
  %v3901 = vadd.f32 %v3870, %v3894
  %v3902 = vadd.f32 %v3871, %v3894
  %v3903 = vadd.f32 %v3872, %v3894
  %v3904 = vadd.f32 %v3873, %v3894
  %v3905 = vadd.f32 %v3874, %v3894
  %v3906 = vadd.f32 %v3875, %v3894
  %v3907 = vadd.f32 %v3876, %v3894
  %v3908 = vadd.f32 %v3877, %v3894
  %v3909 = vadd.f32 %v3878, %v3894
  %v3910 = vadd.f32 %v3879, %v3894
  %v3911 = vadd.f32 %v3880, %v3894
  %v3912 = vadd.f32 %v3881, %v3894
  %v3913 = vadd.f32 %v3882, %v3894
  %v3914 = vadd.f32 %v3883, %v3894
  %v3915 = vadd.f32 %v3884, %v3894
  %v3916 = vadd.f32 %v3885, %v3894
  %v3917 = vadd.f32 %v3886, %v3894
  %v3918 = vadd.f32 %v3887, %v3894
  %v3919 = vadd.f32 %v3888, %v3894
  %v3920 = vmax.f32 %v3896, 0.0
  %v3921 = vmax.f32 %v3897, 0.0
  %v3922 = vmax.f32 %v3898, 0.0
  %v3923 = vmax.f32 %v3899, 0.0
  %v3924 = vmax.f32 %v3900, 0.0
  %v3925 = vmax.f32 %v3901, 0.0
  %v3926 = vmax.f32 %v3902, 0.0
  %v3927 = vmax.f32 %v3903, 0.0
  %v3928 = vmax.f32 %v3904, 0.0
  %v3929 = vmax.f32 %v3905, 0.0
  %v3930 = vmax.f32 %v3906, 0.0
  %v3931 = vmax.f32 %v3907, 0.0
  %v3932 = vmax.f32 %v3908, 0.0
  %v3933 = vmax.f32 %v3909, 0.0
  %v3934 = vmax.f32 %v3910, 0.0
  %v3935 = vmax.f32 %v3911, 0.0
  %v3936 = vmax.f32 %v3912, 0.0
  %v3937 = vmax.f32 %v3913, 0.0
  %v3938 = vmax.f32 %v3914, 0.0
  %v3939 = vmax.f32 %v3915, 0.0
  %v3940 = vmax.f32 %v3916, 0.0
  %v3941 = vmax.f32 %v3917, 0.0
  %v3942 = vmax.f32 %v3918, 0.0
  %v3943 = vmax.f32 %v3919, 0.0
  %v3944 = vpack.c.bf16 %v3921, %v3920
  %v3945 = vpack.c.bf16 %v3923, %v3922
  %v3946 = vpack.c.bf16 %v3925, %v3924
  %v3947 = vpack.c.bf16 %v3927, %v3926
  %v3948 = vpack.c.bf16 %v3929, %v3928
  %v3949 = vpack.c.bf16 %v3931, %v3930
  %v3950 = vpack.c.bf16 %v3933, %v3932
  %v3951 = vpack.c.bf16 %v3935, %v3934
  %v3952 = vpack.c.bf16 %v3937, %v3936
  %v3953 = vpack.c.bf16 %v3939, %v3938
  %v3954 = vpack.c.bf16 %v3941, %v3940
  %v3955 = vpack.c.bf16 %v3943, %v3942
  %v3956 = vld [vmem:[%s3] sm:$0xf]
  %v3957 = vld [vmem:[%s3 + $0x4] sm:$0xf]
  %v3958 = vld [vmem:[%s3 + $0x8] sm:$0xf]
  %v3959 = vld [vmem:[%s3 + $0xc] sm:$0xf]
  %v3960 = vld [vmem:[%s3 + $0x10] sm:$0xf]
  %v3961 = vld [vmem:[%s3 + $0x14] sm:$0xf]
  %v3962 = vld [vmem:[%s3 + $0x18] sm:$0xf]
  %v3963 = vld [vmem:[%s3 + $0x1c] sm:$0xf]
  %v3964 = vld [vmem:[%s3 + $0x20] sm:$0xf]
  %v3965 = vld [vmem:[%s3 + $0x24] sm:$0xf]
  %v3966 = vld [vmem:[%s3 + $0x28] sm:$0xf]
  %v3967 = vld [vmem:[%s3 + $0x2c] sm:$0xf]
  %v3968 = vld [vmem:[%s3 + $0x30] sm:$0xf]
  %v3969 = vld [vmem:[%s3 + $0x34] sm:$0xf]
  %v3970 = vld [vmem:[%s3 + $0x38] sm:$0xf]
  %s3971 = scalar_lea.vmem %s3, 60
  %v3972 = vld [vmem:[%s3971] sm:$0xf]
  %v3973 = vld [vmem:[%s3971 + $0x4] sm:$0xf]
  %v3974 = vld [vmem:[%s3971 + $0x8] sm:$0xf]
  %v3975 = vld [vmem:[%s3971 + $0xc] sm:$0xf]
  %v3976 = vld [vmem:[%s3971 + $0x10] sm:$0xf]
  %v3977 = vld [vmem:[%s3971 + $0x14] sm:$0xf]
  %v3978 = vld [vmem:[%s3971 + $0x18] sm:$0xf]
  %v3979 = vld [vmem:[%s3971 + $0x1c] sm:$0xf]
  %v3980 = vld [vmem:[%s3971 + $0x20] sm:$0xf]
  %v3981 = vld [vmem:[%s3971 + $0x24] sm:$0xf]
  %v3982 = vld [vmem:[%s3971 + $0x28] sm:$0xf]
  %v3983 = vld [vmem:[%s3971 + $0x2c] sm:$0xf]
  %v3984 = vld [vmem:[%s3971 + $0x30] sm:$0xf]
  %v3985 = vld [vmem:[%s3971 + $0x34] sm:$0xf]
  %v3986 = vld [vmem:[%s3971 + $0x38] sm:$0xf]
  %s3987 = scalar_lea.vmem %s3, 120
  %v3988 = vld [vmem:[%s3987] sm:$0xf]
  %v3989 = vld [vmem:[%s3987 + $0x4] sm:$0xf]
  %v3990 = vld [vmem:[%s3987 + $0x8] sm:$0xf]
  %v3991 = vld [vmem:[%s3987 + $0xc] sm:$0xf]
  %v3992 = vld [vmem:[%s3987 + $0x10] sm:$0xf]
  %v3993 = vld [vmem:[%s3987 + $0x14] sm:$0xf]
  %v3994 = vld [vmem:[%s3987 + $0x18] sm:$0xf]
  %v3995 = vld [vmem:[%s3987 + $0x1c] sm:$0xf]
  %v3996 = vld [vmem:[%s3987 + $0x20] sm:$0xf]
  %v3997 = vld [vmem:[%s3987 + $0x24] sm:$0xf]
  %v3998 = vld [vmem:[%s3987 + $0x28] sm:$0xf]
  %v3999 = vld [vmem:[%s3987 + $0x2c] sm:$0xf]
  %v4000 = vld [vmem:[%s3987 + $0x30] sm:$0xf]
  %v4001 = vld [vmem:[%s3987 + $0x34] sm:$0xf]
  %v4002 = vld [vmem:[%s3987 + $0x38] sm:$0xf]
  %v4018 = vunpack.c.l.b16 %v3988
  %v4019 = vunpack.c.l.b16 %v3989
  %v4020 = vunpack.c.l.b16 %v3990
  %v4021 = vunpack.c.l.b16 %v3991
  %v4022 = vunpack.c.l.b16 %v3992
  %v4023 = vunpack.c.l.b16 %v3993
  %v4024 = vunpack.c.l.b16 %v3994
  %v4025 = vunpack.c.l.b16 %v3995
  %v4026 = vunpack.c.l.b16 %v3996
  %v4027 = vunpack.c.l.b16 %v3997
  %v4028 = vunpack.c.l.b16 %v3998
  %v4029 = vunpack.c.l.b16 %v3999
  %v4030 = vunpack.c.l.b16 %v4000
  %v4031 = vunpack.c.l.b16 %v4001
  %v4032 = vunpack.c.l.b16 %v4002
  %v4033 = vpack.c.b16 %v4019, %v4018
  %v4034 = vpack.c.b16 %v4021, %v4020
  %v4035 = vpack.c.b16 %v4023, %v4022
  %v4036 = vpack.c.b16 %v4025, %v4024
  %v4037 = vpack.c.b16 %v4027, %v4026
  %v4038 = vpack.c.b16 %v4029, %v4028
  %v4039 = vpack.c.b16 %v4031, %v4030
  %v4040 = vpack.c.b16 %v4032, %v4032
  %vm4048 = vcmask 982016
  %v4050 = vsel %vm4048, %v3945, 0
  %v4053 = vsel %vm4048, %v3947, 0
  %v4056 = vsel %vm4048, %v3949, 0
  %v4059 = vsel %vm4048, %v3951, 0
  %vm4061 = vcmask 1043456
  %v4063 = vsel %vm4061, %v4040, 0
  %4065 = vmatprep.subr.bf16.mxu0 0
  %4066 = vmatpush1.bf16.msra.mxu0 %v4063
  %4067 = vmatprep.subr.bf16.mxu0 0
  %4068 = vmatpush1.bf16.msra.mxu0 %v4039
  %4069 = vmatprep.subr.bf16.mxu0 0
  %4070 = vmatpush1.bf16.msra.mxu0 %v4038
  %4071 = vmatprep.subr.bf16.mxu0 0
  %4072 = vmatpush1.bf16.msra.mxu0 %v4037
  %4073 = vmatprep.subr.bf16.mxu0 0
  %4074 = vmatpush1.bf16.msra.mxu0 %v4036
  %4075 = vmatprep.subr.bf16.mxu0 0
  %4076 = vmatpush1.bf16.msra.mxu0 %v4035
  %4077 = vmatprep.subr.bf16.mxu0 0
  %4078 = vmatpush1.bf16.msra.mxu0 %v4034
  %4079 = vmatprep.subr.bf16.mxu0 0
  %4080 = vmatpush1.bf16.msra.mxu0 %v4033
  %4081 = vmatprep.subr.bf16.mxu0 0
  %4082 = vmatpush2.bf16.msra.mxu0 0
  %4083 = vmatprep.subr.bf16.mxu0 0
  %4084 = vmatpush2.bf16.msra.mxu0 0
  %4085 = vmatprep.subr.bf16.mxu0 0
  %4086 = vmatpush2.bf16.msra.mxu0 0
  %4087 = vmatprep.subr.bf16.mxu0 0
  %4088 = vmatpush2.bf16.msra.mxu0 0
  %4089 = vmatprep.subr.bf16.mxu0 0
  %4090 = vmatpush2.bf16.msra.mxu0 0
  %4091 = vmatprep.subr.bf16.mxu0 0
  %4092 = vmatpush2.bf16.msra.mxu0 0
  %4093 = vmatprep.subr.bf16.mxu0 0
  %4094 = vmatpush2.bf16.msra.mxu0 0
  %4095 = vmatprep.subr.bf16.mxu0 0
  %4096 = vmatpush2.bf16.msra.mxu0 0
  %4097 = vmatprep.mubr.bf16.mxu0 0
  %4098 = vmatmul.mubr.bf16.gmra.mxu0 %v4050
  %v4099 = vpop.f32.mrf.mxu0
  %v4100 = vadd.f32 0.0, %v4099
  %v4101 = vpop.f32.mrf.mxu0
  %v4102 = vpop.f32.mrf.mxu0
  %v4103 = vadd.f32 0.0, %v4102
  %v4104 = vpop.f32.mrf.mxu0
  %4105 = vmatprep.mubr.bf16.mxu0 0
  %4106 = vmatmul.mubr.bf16.gmra.mxu0 %v4053
  %v4107 = vpop.f32.mrf.mxu0
  %v4108 = vadd.f32 0.0, %v4107
  %v4109 = vpop.f32.mrf.mxu0
  %v4110 = vpop.f32.mrf.mxu0
  %v4111 = vadd.f32 0.0, %v4110
  %v4112 = vpop.f32.mrf.mxu0
  %4113 = vmatprep.mubr.bf16.mxu0 0
  %4114 = vmatmul.mubr.bf16.gmra.mxu0 %v4056
  %v4115 = vpop.f32.mrf.mxu0
  %v4116 = vadd.f32 0.0, %v4115
  %v4117 = vpop.f32.mrf.mxu0
  %v4118 = vpop.f32.mrf.mxu0
  %v4119 = vadd.f32 0.0, %v4118
  %v4120 = vpop.f32.mrf.mxu0
  %4121 = vmatprep.mubr.bf16.mxu0 0
  %4122 = vmatmul.mubr.bf16.gmra.mxu0 %v4059
  %v4123 = vpop.f32.mrf.mxu0
  %v4124 = vadd.f32 0.0, %v4123
  %v4125 = vpop.f32.mrf.mxu0
  %v4126 = vpop.f32.mrf.mxu0
  %v4127 = vadd.f32 0.0, %v4126
  %v4128 = vpop.f32.mrf.mxu0
  %4129 = vdwg.mxu0
  %v4145 = vunpack.c.l.b16 %v3956
  %v4146 = vunpack.c.l.b16 %v3957
  %v4147 = vunpack.c.l.b16 %v3958
  %v4148 = vunpack.c.l.b16 %v3959
  %v4149 = vunpack.c.l.b16 %v3960
  %v4150 = vunpack.c.l.b16 %v3961
  %v4151 = vunpack.c.l.b16 %v3962
  %v4152 = vunpack.c.l.b16 %v3963
  %v4153 = vunpack.c.l.b16 %v3964
  %v4154 = vunpack.c.l.b16 %v3965
  %v4155 = vunpack.c.l.b16 %v3966
  %v4156 = vunpack.c.l.b16 %v3967
  %v4157 = vunpack.c.l.b16 %v3968
  %v4158 = vunpack.c.l.b16 %v3969
  %v4159 = vunpack.c.l.b16 %v3970
  %v4160 = vpack.c.b16 %v4146, %v4145
  %v4161 = vpack.c.b16 %v4148, %v4147
  %v4162 = vpack.c.b16 %v4150, %v4149
  %v4163 = vpack.c.b16 %v4152, %v4151
  %v4164 = vpack.c.b16 %v4154, %v4153
  %v4165 = vpack.c.b16 %v4156, %v4155
  %v4166 = vpack.c.b16 %v4158, %v4157
  %v4167 = vpack.c.b16 %v4159, %v4159
  %v4176 = vsel %vm4048, %v3944, 0
  %v4179 = vsel %vm4048, %v3946, 0
  %v4182 = vsel %vm4048, %v3948, 0
  %v4185 = vsel %vm4048, %v3950, 0
  %v4188 = vsel %vm4061, %v4167, 0
  %4190 = vmatprep.subr.bf16.mxu0 0
  %4191 = vmatpush1.bf16.msra.mxu0 %v4188
  %4192 = vmatprep.subr.bf16.mxu0 0
  %4193 = vmatpush1.bf16.msra.mxu0 %v4166
  %4194 = vmatprep.subr.bf16.mxu0 0
  %4195 = vmatpush1.bf16.msra.mxu0 %v4165
  %4196 = vmatprep.subr.bf16.mxu0 0
  %4197 = vmatpush1.bf16.msra.mxu0 %v4164
  %4198 = vmatprep.subr.bf16.mxu0 0
  %4199 = vmatpush1.bf16.msra.mxu0 %v4163
  %4200 = vmatprep.subr.bf16.mxu0 0
  %4201 = vmatpush1.bf16.msra.mxu0 %v4162
  %4202 = vmatprep.subr.bf16.mxu0 0
  %4203 = vmatpush1.bf16.msra.mxu0 %v4161
  %4204 = vmatprep.subr.bf16.mxu0 0
  %4205 = vmatpush1.bf16.msra.mxu0 %v4160
  %4206 = vmatprep.subr.bf16.mxu0 0
  %4207 = vmatpush2.bf16.msra.mxu0 0
  %4208 = vmatprep.subr.bf16.mxu0 0
  %4209 = vmatpush2.bf16.msra.mxu0 0
  %4210 = vmatprep.subr.bf16.mxu0 0
  %4211 = vmatpush2.bf16.msra.mxu0 0
  %4212 = vmatprep.subr.bf16.mxu0 0
  %4213 = vmatpush2.bf16.msra.mxu0 0
  %4214 = vmatprep.subr.bf16.mxu0 0
  %4215 = vmatpush2.bf16.msra.mxu0 0
  %4216 = vmatprep.subr.bf16.mxu0 0
  %4217 = vmatpush2.bf16.msra.mxu0 0
  %4218 = vmatprep.subr.bf16.mxu0 0
  %4219 = vmatpush2.bf16.msra.mxu0 0
  %4220 = vmatprep.subr.bf16.mxu0 0
  %4221 = vmatpush2.bf16.msra.mxu0 0
  %4222 = vmatprep.mubr.bf16.mxu0 0
  %4223 = vmatmul.mubr.bf16.gmra.mxu0 %v4176
  %v4224 = vpop.f32.mrf.mxu0
  %v4225 = vadd.f32 %v4100, %v4224
  %v4226 = vpop.f32.mrf.mxu0
  %v4227 = vpop.f32.mrf.mxu0
  %v4228 = vadd.f32 %v4103, %v4227
  %v4229 = vpop.f32.mrf.mxu0
  %4230 = vmatprep.mubr.bf16.mxu0 0
  %4231 = vmatmul.mubr.bf16.gmra.mxu0 %v4179
  %v4232 = vpop.f32.mrf.mxu0
  %v4233 = vadd.f32 %v4108, %v4232
  %v4234 = vpop.f32.mrf.mxu0
  %v4235 = vpop.f32.mrf.mxu0
  %v4236 = vadd.f32 %v4111, %v4235
  %v4237 = vpop.f32.mrf.mxu0
  %4238 = vmatprep.mubr.bf16.mxu0 0
  %4239 = vmatmul.mubr.bf16.gmra.mxu0 %v4182
  %v4240 = vpop.f32.mrf.mxu0
  %v4241 = vadd.f32 %v4116, %v4240
  %v4242 = vpop.f32.mrf.mxu0
  %v4243 = vpop.f32.mrf.mxu0
  %v4244 = vadd.f32 %v4119, %v4243
  %v4245 = vpop.f32.mrf.mxu0
  %4246 = vmatprep.mubr.bf16.mxu0 0
  %4247 = vmatmul.mubr.bf16.gmra.mxu0 %v4185
  %v4248 = vpop.f32.mrf.mxu0
  %v4249 = vadd.f32 %v4124, %v4248
  %v4250 = vpop.f32.mrf.mxu0
  %v4251 = vpop.f32.mrf.mxu0
  %v4252 = vadd.f32 %v4127, %v4251
  %v4253 = vpop.f32.mrf.mxu0
  %4254 = vdwg.mxu0
  %s4255 = scalar_lea.vmem %s3, 180
  %v4256 = vld [vmem:[%s4255] sm:$0xf]
  %v4257 = vld [vmem:[%s4255 + $0x4] sm:$0xf]
  %v4258 = vld [vmem:[%s4255 + $0x8] sm:$0xf]
  %v4259 = vld [vmem:[%s4255 + $0xc] sm:$0xf]
  %v4260 = vld [vmem:[%s4255 + $0x10] sm:$0xf]
  %v4261 = vld [vmem:[%s4255 + $0x14] sm:$0xf]
  %v4262 = vld [vmem:[%s4255 + $0x18] sm:$0xf]
  %v4263 = vld [vmem:[%s4255 + $0x1c] sm:$0xf]
  %v4264 = vld [vmem:[%s4255 + $0x20] sm:$0xf]
  %v4265 = vld [vmem:[%s4255 + $0x24] sm:$0xf]
  %v4266 = vld [vmem:[%s4255 + $0x28] sm:$0xf]
  %v4267 = vld [vmem:[%s4255 + $0x2c] sm:$0xf]
  %v4268 = vld [vmem:[%s4255 + $0x30] sm:$0xf]
  %v4269 = vld [vmem:[%s4255 + $0x34] sm:$0xf]
  %v4270 = vld [vmem:[%s4255 + $0x38] sm:$0xf]
  %v4286 = vunpack.c.l.b16 %v4256
  %v4287 = vunpack.c.l.b16 %v4257
  %v4288 = vunpack.c.l.b16 %v4258
  %v4289 = vunpack.c.l.b16 %v4259
  %v4290 = vunpack.c.l.b16 %v4260
  %v4291 = vunpack.c.l.b16 %v4261
  %v4292 = vunpack.c.l.b16 %v4262
  %v4293 = vunpack.c.l.b16 %v4263
  %v4294 = vunpack.c.l.b16 %v4264
  %v4295 = vunpack.c.l.b16 %v4265
  %v4296 = vunpack.c.l.b16 %v4266
  %v4297 = vunpack.c.l.b16 %v4267
  %v4298 = vunpack.c.l.b16 %v4268
  %v4299 = vunpack.c.l.b16 %v4269
  %v4300 = vunpack.c.l.b16 %v4270
  %v4301 = vpack.c.b16 %v4287, %v4286
  %v4302 = vpack.c.b16 %v4289, %v4288
  %v4303 = vpack.c.b16 %v4291, %v4290
  %v4304 = vpack.c.b16 %v4293, %v4292
  %v4305 = vpack.c.b16 %v4295, %v4294
  %v4306 = vpack.c.b16 %v4297, %v4296
  %v4307 = vpack.c.b16 %v4299, %v4298
  %v4308 = vpack.c.b16 %v4300, %v4300
  %v4317 = vsel %vm4061, %v4308, 0
  %4319 = vmatprep.subr.bf16.mxu0 0
  %4320 = vmatpush1.bf16.msra.mxu0 %v4317
  %4321 = vmatprep.subr.bf16.mxu0 0
  %4322 = vmatpush1.bf16.msra.mxu0 %v4307
  %4323 = vmatprep.subr.bf16.mxu0 0
  %4324 = vmatpush1.bf16.msra.mxu0 %v4306
  %4325 = vmatprep.subr.bf16.mxu0 0
  %4326 = vmatpush1.bf16.msra.mxu0 %v4305
  %4327 = vmatprep.subr.bf16.mxu0 0
  %4328 = vmatpush1.bf16.msra.mxu0 %v4304
  %4329 = vmatprep.subr.bf16.mxu0 0
  %4330 = vmatpush1.bf16.msra.mxu0 %v4303
  %4331 = vmatprep.subr.bf16.mxu0 0
  %4332 = vmatpush1.bf16.msra.mxu0 %v4302
  %4333 = vmatprep.subr.bf16.mxu0 0
  %4334 = vmatpush1.bf16.msra.mxu0 %v4301
  %4335 = vmatprep.subr.bf16.mxu0 0
  %4336 = vmatpush2.bf16.msra.mxu0 0
  %4337 = vmatprep.subr.bf16.mxu0 0
  %4338 = vmatpush2.bf16.msra.mxu0 0
  %4339 = vmatprep.subr.bf16.mxu0 0
  %4340 = vmatpush2.bf16.msra.mxu0 0
  %4341 = vmatprep.subr.bf16.mxu0 0
  %4342 = vmatpush2.bf16.msra.mxu0 0
  %4343 = vmatprep.subr.bf16.mxu0 0
  %4344 = vmatpush2.bf16.msra.mxu0 0
  %4345 = vmatprep.subr.bf16.mxu0 0
  %4346 = vmatpush2.bf16.msra.mxu0 0
  %4347 = vmatprep.subr.bf16.mxu0 0
  %4348 = vmatpush2.bf16.msra.mxu0 0
  %4349 = vmatprep.subr.bf16.mxu0 0
  %4350 = vmatpush2.bf16.msra.mxu0 0
  %4351 = vmatprep.mubr.bf16.mxu0 0
  %4352 = vmatmul.mubr.bf16.gmra.mxu0 %v4050
  %v4353 = vpop.f32.mrf.mxu0
  %v4354 = vadd.f32 0.0, %v4353
  %v4355 = vpop.f32.mrf.mxu0
  %v4356 = vpop.f32.mrf.mxu0
  %v4357 = vadd.f32 0.0, %v4356
  %v4358 = vpop.f32.mrf.mxu0
  %4359 = vmatprep.mubr.bf16.mxu0 0
  %4360 = vmatmul.mubr.bf16.gmra.mxu0 %v4053
  %v4361 = vpop.f32.mrf.mxu0
  %v4362 = vadd.f32 0.0, %v4361
  %v4363 = vpop.f32.mrf.mxu0
  %v4364 = vpop.f32.mrf.mxu0
  %v4365 = vadd.f32 0.0, %v4364
  %v4366 = vpop.f32.mrf.mxu0
  %4367 = vmatprep.mubr.bf16.mxu0 0
  %4368 = vmatmul.mubr.bf16.gmra.mxu0 %v4056
  %v4369 = vpop.f32.mrf.mxu0
  %v4370 = vadd.f32 0.0, %v4369
  %v4371 = vpop.f32.mrf.mxu0
  %v4372 = vpop.f32.mrf.mxu0
  %v4373 = vadd.f32 0.0, %v4372
  %v4374 = vpop.f32.mrf.mxu0
  %4375 = vmatprep.mubr.bf16.mxu0 0
  %4376 = vmatmul.mubr.bf16.gmra.mxu0 %v4059
  %v4377 = vpop.f32.mrf.mxu0
  %v4378 = vadd.f32 0.0, %v4377
  %v4379 = vpop.f32.mrf.mxu0
  %v4380 = vpop.f32.mrf.mxu0
  %v4381 = vadd.f32 0.0, %v4380
  %v4382 = vpop.f32.mrf.mxu0
  %4383 = vdwg.mxu0
  %v4399 = vunpack.c.l.b16 %v3972
  %v4400 = vunpack.c.l.b16 %v3973
  %v4401 = vunpack.c.l.b16 %v3974
  %v4402 = vunpack.c.l.b16 %v3975
  %v4403 = vunpack.c.l.b16 %v3976
  %v4404 = vunpack.c.l.b16 %v3977
  %v4405 = vunpack.c.l.b16 %v3978
  %v4406 = vunpack.c.l.b16 %v3979
  %v4407 = vunpack.c.l.b16 %v3980
  %v4408 = vunpack.c.l.b16 %v3981
  %v4409 = vunpack.c.l.b16 %v3982
  %v4410 = vunpack.c.l.b16 %v3983
  %v4411 = vunpack.c.l.b16 %v3984
  %v4412 = vunpack.c.l.b16 %v3985
  %v4413 = vunpack.c.l.b16 %v3986
  %v4414 = vpack.c.b16 %v4400, %v4399
  %v4415 = vpack.c.b16 %v4402, %v4401
  %v4416 = vpack.c.b16 %v4404, %v4403
  %v4417 = vpack.c.b16 %v4406, %v4405
  %v4418 = vpack.c.b16 %v4408, %v4407
  %v4419 = vpack.c.b16 %v4410, %v4409
  %v4420 = vpack.c.b16 %v4412, %v4411
  %v4421 = vpack.c.b16 %v4413, %v4413
  %v4430 = vsel %vm4061, %v4421, 0
  %4432 = vmatprep.subr.bf16.mxu0 0
  %4433 = vmatpush1.bf16.msra.mxu0 %v4430
  %4434 = vmatprep.subr.bf16.mxu0 0
  %4435 = vmatpush1.bf16.msra.mxu0 %v4420
  %4436 = vmatprep.subr.bf16.mxu0 0
  %4437 = vmatpush1.bf16.msra.mxu0 %v4419
  %4438 = vmatprep.subr.bf16.mxu0 0
  %4439 = vmatpush1.bf16.msra.mxu0 %v4418
  %4440 = vmatprep.subr.bf16.mxu0 0
  %4441 = vmatpush1.bf16.msra.mxu0 %v4417
  %4442 = vmatprep.subr.bf16.mxu0 0
  %4443 = vmatpush1.bf16.msra.mxu0 %v4416
  %4444 = vmatprep.subr.bf16.mxu0 0
  %4445 = vmatpush1.bf16.msra.mxu0 %v4415
  %4446 = vmatprep.subr.bf16.mxu0 0
  %4447 = vmatpush1.bf16.msra.mxu0 %v4414
  %4448 = vmatprep.subr.bf16.mxu0 0
  %4449 = vmatpush2.bf16.msra.mxu0 0
  %4450 = vmatprep.subr.bf16.mxu0 0
  %4451 = vmatpush2.bf16.msra.mxu0 0
  %4452 = vmatprep.subr.bf16.mxu0 0
  %4453 = vmatpush2.bf16.msra.mxu0 0
  %4454 = vmatprep.subr.bf16.mxu0 0
  %4455 = vmatpush2.bf16.msra.mxu0 0
  %4456 = vmatprep.subr.bf16.mxu0 0
  %4457 = vmatpush2.bf16.msra.mxu0 0
  %4458 = vmatprep.subr.bf16.mxu0 0
  %4459 = vmatpush2.bf16.msra.mxu0 0
  %4460 = vmatprep.subr.bf16.mxu0 0
  %4461 = vmatpush2.bf16.msra.mxu0 0
  %4462 = vmatprep.subr.bf16.mxu0 0
  %4463 = vmatpush2.bf16.msra.mxu0 0
  %4464 = vmatprep.mubr.bf16.mxu0 0
  %4465 = vmatmul.mubr.bf16.gmra.mxu0 %v4176
  %v4466 = vpop.f32.mrf.mxu0
  %v4467 = vadd.f32 %v4354, %v4466
  %v4468 = vpop.f32.mrf.mxu0
  %v4469 = vpop.f32.mrf.mxu0
  %v4470 = vadd.f32 %v4357, %v4469
  %v4471 = vpop.f32.mrf.mxu0
  %4472 = vmatprep.mubr.bf16.mxu0 0
  %4473 = vmatmul.mubr.bf16.gmra.mxu0 %v4179
  %v4474 = vpop.f32.mrf.mxu0
  %v4475 = vadd.f32 %v4362, %v4474
  %v4476 = vpop.f32.mrf.mxu0
  %v4477 = vpop.f32.mrf.mxu0
  %v4478 = vadd.f32 %v4365, %v4477
  %v4479 = vpop.f32.mrf.mxu0
  %4480 = vmatprep.mubr.bf16.mxu0 0
  %4481 = vmatmul.mubr.bf16.gmra.mxu0 %v4182
  %v4482 = vpop.f32.mrf.mxu0
  %v4483 = vadd.f32 %v4370, %v4482
  %v4484 = vpop.f32.mrf.mxu0
  %v4485 = vpop.f32.mrf.mxu0
  %v4486 = vadd.f32 %v4373, %v4485
  %v4487 = vpop.f32.mrf.mxu0
  %4488 = vmatprep.mubr.bf16.mxu0 0
  %4489 = vmatmul.mubr.bf16.gmra.mxu0 %v4185
  %v4490 = vpop.f32.mrf.mxu0
  %v4491 = vadd.f32 %v4378, %v4490
  %v4492 = vpop.f32.mrf.mxu0
  %v4493 = vpop.f32.mrf.mxu0
  %v4494 = vadd.f32 %v4381, %v4493
  %v4495 = vpop.f32.mrf.mxu0
  %4496 = vdwg.mxu0
  %s4497 = scalar_lea.vmem %s3, 240
  %v4498 = vld [vmem:[%s4497] sm:$0xf]
  %v4499 = vld [vmem:[%s4497 + $0x4] sm:$0xf]
  %v4500 = vld [vmem:[%s4497 + $0x8] sm:$0xf]
  %v4501 = vld [vmem:[%s4497 + $0xc] sm:$0xf]
  %v4502 = vld [vmem:[%s4497 + $0x10] sm:$0xf]
  %v4503 = vld [vmem:[%s4497 + $0x14] sm:$0xf]
  %v4504 = vld [vmem:[%s4497 + $0x18] sm:$0xf]
  %v4505 = vld [vmem:[%s4497 + $0x1c] sm:$0xf]
  %v4506 = vld [vmem:[%s4497 + $0x20] sm:$0xf]
  %v4507 = vld [vmem:[%s4497 + $0x24] sm:$0xf]
  %v4508 = vld [vmem:[%s4497 + $0x28] sm:$0xf]
  %v4509 = vld [vmem:[%s4497 + $0x2c] sm:$0xf]
  %v4510 = vld [vmem:[%s4497 + $0x30] sm:$0xf]
  %v4511 = vld [vmem:[%s4497 + $0x34] sm:$0xf]
  %v4512 = vld [vmem:[%s4497 + $0x38] sm:$0xf]
  %v4528 = vunpack.c.l.b16 %v4498
  %v4529 = vunpack.c.l.b16 %v4499
  %v4530 = vunpack.c.l.b16 %v4500
  %v4531 = vunpack.c.l.b16 %v4501
  %v4532 = vunpack.c.l.b16 %v4502
  %v4533 = vunpack.c.l.b16 %v4503
  %v4534 = vunpack.c.l.b16 %v4504
  %v4535 = vunpack.c.l.b16 %v4505
  %v4536 = vunpack.c.l.b16 %v4506
  %v4537 = vunpack.c.l.b16 %v4507
  %v4538 = vunpack.c.l.b16 %v4508
  %v4539 = vunpack.c.l.b16 %v4509
  %v4540 = vunpack.c.l.b16 %v4510
  %v4541 = vunpack.c.l.b16 %v4511
  %v4542 = vunpack.c.l.b16 %v4512
  %v4543 = vpack.c.b16 %v4529, %v4528
  %v4544 = vpack.c.b16 %v4531, %v4530
  %v4545 = vpack.c.b16 %v4533, %v4532
  %v4546 = vpack.c.b16 %v4535, %v4534
  %v4547 = vpack.c.b16 %v4537, %v4536
  %v4548 = vpack.c.b16 %v4539, %v4538
  %v4549 = vpack.c.b16 %v4541, %v4540
  %v4550 = vpack.c.b16 %v4542, %v4542
  %v4559 = vsel %vm4048, %v3952, 0
  %v4562 = vsel %vm4061, %v4550, 0
  %4564 = vmatprep.subr.bf16.mxu0 0
  %4565 = vmatpush1.bf16.msra.mxu0 %v4562
  %4566 = vmatprep.subr.bf16.mxu0 0
  %4567 = vmatpush1.bf16.msra.mxu0 %v4549
  %4568 = vmatprep.subr.bf16.mxu0 0
  %4569 = vmatpush1.bf16.msra.mxu0 %v4548
  %4570 = vmatprep.subr.bf16.mxu0 0
  %4571 = vmatpush1.bf16.msra.mxu0 %v4547
  %4572 = vmatprep.subr.bf16.mxu0 0
  %4573 = vmatpush1.bf16.msra.mxu0 %v4546
  %4574 = vmatprep.subr.bf16.mxu0 0
  %4575 = vmatpush1.bf16.msra.mxu0 %v4545
  %4576 = vmatprep.subr.bf16.mxu0 0
  %4577 = vmatpush1.bf16.msra.mxu0 %v4544
  %4578 = vmatprep.subr.bf16.mxu0 0
  %4579 = vmatpush1.bf16.msra.mxu0 %v4543
  %4580 = vmatprep.subr.bf16.mxu0 0
  %4581 = vmatpush2.bf16.msra.mxu0 0
  %4582 = vmatprep.subr.bf16.mxu0 0
  %4583 = vmatpush2.bf16.msra.mxu0 0
  %4584 = vmatprep.subr.bf16.mxu0 0
  %4585 = vmatpush2.bf16.msra.mxu0 0
  %4586 = vmatprep.subr.bf16.mxu0 0
  %4587 = vmatpush2.bf16.msra.mxu0 0
  %4588 = vmatprep.subr.bf16.mxu0 0
  %4589 = vmatpush2.bf16.msra.mxu0 0
  %4590 = vmatprep.subr.bf16.mxu0 0
  %4591 = vmatpush2.bf16.msra.mxu0 0
  %4592 = vmatprep.subr.bf16.mxu0 0
  %4593 = vmatpush2.bf16.msra.mxu0 0
  %4594 = vmatprep.subr.bf16.mxu0 0
  %4595 = vmatpush2.bf16.msra.mxu0 0
  %4596 = vmatprep.mubr.bf16.mxu0 0
  %4597 = vmatmul.mubr.bf16.gmra.mxu0 %v4179
  %v4598 = vpop.f32.mrf.mxu0
  %v4599 = vadd.f32 0.0, %v4598
  %v4600 = vpop.f32.mrf.mxu0
  %v4601 = vpop.f32.mrf.mxu0
  %v4602 = vadd.f32 0.0, %v4601
  %v4603 = vpop.f32.mrf.mxu0
  %4604 = vmatprep.mubr.bf16.mxu0 0
  %4605 = vmatmul.mubr.bf16.gmra.mxu0 %v4182
  %v4606 = vpop.f32.mrf.mxu0
  %v4607 = vadd.f32 0.0, %v4606
  %v4608 = vpop.f32.mrf.mxu0
  %v4609 = vpop.f32.mrf.mxu0
  %v4610 = vadd.f32 0.0, %v4609
  %v4611 = vpop.f32.mrf.mxu0
  %4612 = vmatprep.mubr.bf16.mxu0 0
  %4613 = vmatmul.mubr.bf16.gmra.mxu0 %v4185
  %v4614 = vpop.f32.mrf.mxu0
  %v4615 = vadd.f32 0.0, %v4614
  %v4616 = vpop.f32.mrf.mxu0
  %v4617 = vpop.f32.mrf.mxu0
  %v4618 = vadd.f32 0.0, %v4617
  %v4619 = vpop.f32.mrf.mxu0
  %4620 = vmatprep.mubr.bf16.mxu0 0
  %4621 = vmatmul.mubr.bf16.gmra.mxu0 %v4559
  %v4622 = vpop.f32.mrf.mxu0
  %v4623 = vadd.f32 0.0, %v4622
  %v4624 = vpop.f32.mrf.mxu0
  %v4625 = vpop.f32.mrf.mxu0
  %v4626 = vadd.f32 0.0, %v4625
  %v4627 = vpop.f32.mrf.mxu0
  %4628 = vdwg.mxu0
  %v4629 = vadd.f32 %v4225, %v4599
  %v4630 = vadd.f32 %v4228, %v4602
  %v4631 = vadd.f32 %v4233, %v4607
  %v4632 = vadd.f32 %v4236, %v4610
  %v4633 = vadd.f32 %v4241, %v4615
  %v4634 = vadd.f32 %v4244, %v4618
  %v4635 = vadd.f32 %v4249, %v4623
  %v4636 = vadd.f32 %v4252, %v4626
  %s4637 = scalar_lea.vmem %s3, 300
  %v4638 = vld [vmem:[%s4637] sm:$0xf]
  %v4639 = vld [vmem:[%s4637 + $0x4] sm:$0xf]
  %v4640 = vld [vmem:[%s4637 + $0x8] sm:$0xf]
  %v4641 = vld [vmem:[%s4637 + $0xc] sm:$0xf]
  %v4642 = vld [vmem:[%s4637 + $0x10] sm:$0xf]
  %v4643 = vld [vmem:[%s4637 + $0x14] sm:$0xf]
  %v4644 = vld [vmem:[%s4637 + $0x18] sm:$0xf]
  %v4645 = vld [vmem:[%s4637 + $0x1c] sm:$0xf]
  %v4646 = vld [vmem:[%s4637 + $0x20] sm:$0xf]
  %v4647 = vld [vmem:[%s4637 + $0x24] sm:$0xf]
  %v4648 = vld [vmem:[%s4637 + $0x28] sm:$0xf]
  %v4649 = vld [vmem:[%s4637 + $0x2c] sm:$0xf]
  %v4650 = vld [vmem:[%s4637 + $0x30] sm:$0xf]
  %v4651 = vld [vmem:[%s4637 + $0x34] sm:$0xf]
  %v4652 = vld [vmem:[%s4637 + $0x38] sm:$0xf]
  %v4668 = vunpack.c.l.b16 %v4638
  %v4669 = vunpack.c.l.b16 %v4639
  %v4670 = vunpack.c.l.b16 %v4640
  %v4671 = vunpack.c.l.b16 %v4641
  %v4672 = vunpack.c.l.b16 %v4642
  %v4673 = vunpack.c.l.b16 %v4643
  %v4674 = vunpack.c.l.b16 %v4644
  %v4675 = vunpack.c.l.b16 %v4645
  %v4676 = vunpack.c.l.b16 %v4646
  %v4677 = vunpack.c.l.b16 %v4647
  %v4678 = vunpack.c.l.b16 %v4648
  %v4679 = vunpack.c.l.b16 %v4649
  %v4680 = vunpack.c.l.b16 %v4650
  %v4681 = vunpack.c.l.b16 %v4651
  %v4682 = vunpack.c.l.b16 %v4652
  %v4683 = vpack.c.b16 %v4669, %v4668
  %v4684 = vpack.c.b16 %v4671, %v4670
  %v4685 = vpack.c.b16 %v4673, %v4672
  %v4686 = vpack.c.b16 %v4675, %v4674
  %v4687 = vpack.c.b16 %v4677, %v4676
  %v4688 = vpack.c.b16 %v4679, %v4678
  %v4689 = vpack.c.b16 %v4681, %v4680
  %v4690 = vpack.c.b16 %v4682, %v4682
  %v4699 = vsel %vm4061, %v4690, 0
  %4701 = vmatprep.subr.bf16.mxu0 0
  %4702 = vmatpush1.bf16.msra.mxu0 %v4699
  %4703 = vmatprep.subr.bf16.mxu0 0
  %4704 = vmatpush1.bf16.msra.mxu0 %v4689
  %4705 = vmatprep.subr.bf16.mxu0 0
  %4706 = vmatpush1.bf16.msra.mxu0 %v4688
  %4707 = vmatprep.subr.bf16.mxu0 0
  %4708 = vmatpush1.bf16.msra.mxu0 %v4687
  %4709 = vmatprep.subr.bf16.mxu0 0
  %4710 = vmatpush1.bf16.msra.mxu0 %v4686
  %4711 = vmatprep.subr.bf16.mxu0 0
  %4712 = vmatpush1.bf16.msra.mxu0 %v4685
  %4713 = vmatprep.subr.bf16.mxu0 0
  %4714 = vmatpush1.bf16.msra.mxu0 %v4684
  %4715 = vmatprep.subr.bf16.mxu0 0
  %4716 = vmatpush1.bf16.msra.mxu0 %v4683
  %4717 = vmatprep.subr.bf16.mxu0 0
  %4718 = vmatpush2.bf16.msra.mxu0 0
  %4719 = vmatprep.subr.bf16.mxu0 0
  %4720 = vmatpush2.bf16.msra.mxu0 0
  %4721 = vmatprep.subr.bf16.mxu0 0
  %4722 = vmatpush2.bf16.msra.mxu0 0
  %4723 = vmatprep.subr.bf16.mxu0 0
  %4724 = vmatpush2.bf16.msra.mxu0 0
  %4725 = vmatprep.subr.bf16.mxu0 0
  %4726 = vmatpush2.bf16.msra.mxu0 0
  %4727 = vmatprep.subr.bf16.mxu0 0
  %4728 = vmatpush2.bf16.msra.mxu0 0
  %4729 = vmatprep.subr.bf16.mxu0 0
  %4730 = vmatpush2.bf16.msra.mxu0 0
  %4731 = vmatprep.subr.bf16.mxu0 0
  %4732 = vmatpush2.bf16.msra.mxu0 0
  %4733 = vmatprep.mubr.bf16.mxu0 0
  %4734 = vmatmul.mubr.bf16.gmra.mxu0 %v4179
  %v4735 = vpop.f32.mrf.mxu0
  %v4736 = vadd.f32 0.0, %v4735
  %v4737 = vpop.f32.mrf.mxu0
  %v4738 = vpop.f32.mrf.mxu0
  %v4739 = vadd.f32 0.0, %v4738
  %v4740 = vpop.f32.mrf.mxu0
  %4741 = vmatprep.mubr.bf16.mxu0 0
  %4742 = vmatmul.mubr.bf16.gmra.mxu0 %v4182
  %v4743 = vpop.f32.mrf.mxu0
  %v4744 = vadd.f32 0.0, %v4743
  %v4745 = vpop.f32.mrf.mxu0
  %v4746 = vpop.f32.mrf.mxu0
  %v4747 = vadd.f32 0.0, %v4746
  %v4748 = vpop.f32.mrf.mxu0
  %4749 = vmatprep.mubr.bf16.mxu0 0
  %4750 = vmatmul.mubr.bf16.gmra.mxu0 %v4185
  %v4751 = vpop.f32.mrf.mxu0
  %v4752 = vadd.f32 0.0, %v4751
  %v4753 = vpop.f32.mrf.mxu0
  %v4754 = vpop.f32.mrf.mxu0
  %v4755 = vadd.f32 0.0, %v4754
  %v4756 = vpop.f32.mrf.mxu0
  %4757 = vmatprep.mubr.bf16.mxu0 0
  %4758 = vmatmul.mubr.bf16.gmra.mxu0 %v4559
  %v4759 = vpop.f32.mrf.mxu0
  %v4760 = vadd.f32 0.0, %v4759
  %v4761 = vpop.f32.mrf.mxu0
  %v4762 = vpop.f32.mrf.mxu0
  %v4763 = vadd.f32 0.0, %v4762
  %v4764 = vpop.f32.mrf.mxu0
  %4765 = vdwg.mxu0
  %v4766 = vadd.f32 %v4467, %v4736
  %v4767 = vadd.f32 %v4470, %v4739
  %v4768 = vadd.f32 %v4475, %v4744
  %v4769 = vadd.f32 %v4478, %v4747
  %v4770 = vadd.f32 %v4483, %v4752
  %v4771 = vadd.f32 %v4486, %v4755
  %v4772 = vadd.f32 %v4491, %v4760
  %v4773 = vadd.f32 %v4494, %v4763
  %4774 = vmatprep.subr.bf16.mxu0 0
  %4775 = vmatpush1.bf16.msra.mxu0 %v4063
  %4776 = vmatprep.subr.bf16.mxu0 0
  %4777 = vmatpush1.bf16.msra.mxu0 %v4039
  %4778 = vmatprep.subr.bf16.mxu0 0
  %4779 = vmatpush1.bf16.msra.mxu0 %v4038
  %4780 = vmatprep.subr.bf16.mxu0 0
  %4781 = vmatpush1.bf16.msra.mxu0 %v4037
  %4782 = vmatprep.subr.bf16.mxu0 0
  %4783 = vmatpush1.bf16.msra.mxu0 %v4036
  %4784 = vmatprep.subr.bf16.mxu0 0
  %4785 = vmatpush1.bf16.msra.mxu0 %v4035
  %4786 = vmatprep.subr.bf16.mxu0 0
  %4787 = vmatpush1.bf16.msra.mxu0 %v4034
  %4788 = vmatprep.subr.bf16.mxu0 0
  %4789 = vmatpush1.bf16.msra.mxu0 %v4033
  %4790 = vmatprep.subr.bf16.mxu0 0
  %4791 = vmatpush2.bf16.msra.mxu0 0
  %4792 = vmatprep.subr.bf16.mxu0 0
  %4793 = vmatpush2.bf16.msra.mxu0 0
  %4794 = vmatprep.subr.bf16.mxu0 0
  %4795 = vmatpush2.bf16.msra.mxu0 0
  %4796 = vmatprep.subr.bf16.mxu0 0
  %4797 = vmatpush2.bf16.msra.mxu0 0
  %4798 = vmatprep.subr.bf16.mxu0 0
  %4799 = vmatpush2.bf16.msra.mxu0 0
  %4800 = vmatprep.subr.bf16.mxu0 0
  %4801 = vmatpush2.bf16.msra.mxu0 0
  %4802 = vmatprep.subr.bf16.mxu0 0
  %4803 = vmatpush2.bf16.msra.mxu0 0
  %4804 = vmatprep.subr.bf16.mxu0 0
  %4805 = vmatpush2.bf16.msra.mxu0 0
  %4806 = vmatprep.mubr.bf16.mxu0 0
  %4807 = vmatmul.mubr.bf16.gmra.mxu0 %v4179
  %v4808 = vpop.f32.mrf.mxu0
  %v4809 = vadd.f32 0.0, %v4808
  %v4810 = vpop.f32.mrf.mxu0
  %v4811 = vpop.f32.mrf.mxu0
  %v4812 = vadd.f32 0.0, %v4811
  %v4813 = vpop.f32.mrf.mxu0
  %4814 = vmatprep.mubr.bf16.mxu0 0
  %4815 = vmatmul.mubr.bf16.gmra.mxu0 %v4182
  %v4816 = vpop.f32.mrf.mxu0
  %v4817 = vadd.f32 0.0, %v4816
  %v4818 = vpop.f32.mrf.mxu0
  %v4819 = vpop.f32.mrf.mxu0
  %v4820 = vadd.f32 0.0, %v4819
  %v4821 = vpop.f32.mrf.mxu0
  %4822 = vmatprep.mubr.bf16.mxu0 0
  %4823 = vmatmul.mubr.bf16.gmra.mxu0 %v4185
  %v4824 = vpop.f32.mrf.mxu0
  %v4825 = vadd.f32 0.0, %v4824
  %v4826 = vpop.f32.mrf.mxu0
  %v4827 = vpop.f32.mrf.mxu0
  %v4828 = vadd.f32 0.0, %v4827
  %v4829 = vpop.f32.mrf.mxu0
  %4830 = vmatprep.mubr.bf16.mxu0 0
  %4831 = vmatmul.mubr.bf16.gmra.mxu0 %v4559
  %v4832 = vpop.f32.mrf.mxu0
  %v4833 = vadd.f32 0.0, %v4832
  %v4834 = vpop.f32.mrf.mxu0
  %v4835 = vpop.f32.mrf.mxu0
  %v4836 = vadd.f32 0.0, %v4835
  %v4837 = vpop.f32.mrf.mxu0
  %4838 = vdwg.mxu0
  %4839 = vmatprep.subr.bf16.mxu0 0
  %4840 = vmatpush1.bf16.msra.mxu0 %v4188
  %4841 = vmatprep.subr.bf16.mxu0 0
  %4842 = vmatpush1.bf16.msra.mxu0 %v4166
  %4843 = vmatprep.subr.bf16.mxu0 0
  %4844 = vmatpush1.bf16.msra.mxu0 %v4165
  %4845 = vmatprep.subr.bf16.mxu0 0
  %4846 = vmatpush1.bf16.msra.mxu0 %v4164
  %4847 = vmatprep.subr.bf16.mxu0 0
  %4848 = vmatpush1.bf16.msra.mxu0 %v4163
  %4849 = vmatprep.subr.bf16.mxu0 0
  %4850 = vmatpush1.bf16.msra.mxu0 %v4162
  %4851 = vmatprep.subr.bf16.mxu0 0
  %4852 = vmatpush1.bf16.msra.mxu0 %v4161
  %4853 = vmatprep.subr.bf16.mxu0 0
  %4854 = vmatpush1.bf16.msra.mxu0 %v4160
  %4855 = vmatprep.subr.bf16.mxu0 0
  %4856 = vmatpush2.bf16.msra.mxu0 0
  %4857 = vmatprep.subr.bf16.mxu0 0
  %4858 = vmatpush2.bf16.msra.mxu0 0
  %4859 = vmatprep.subr.bf16.mxu0 0
  %4860 = vmatpush2.bf16.msra.mxu0 0
  %4861 = vmatprep.subr.bf16.mxu0 0
  %4862 = vmatpush2.bf16.msra.mxu0 0
  %4863 = vmatprep.subr.bf16.mxu0 0
  %4864 = vmatpush2.bf16.msra.mxu0 0
  %4865 = vmatprep.subr.bf16.mxu0 0
  %4866 = vmatpush2.bf16.msra.mxu0 0
  %4867 = vmatprep.subr.bf16.mxu0 0
  %4868 = vmatpush2.bf16.msra.mxu0 0
  %4869 = vmatprep.subr.bf16.mxu0 0
  %4870 = vmatpush2.bf16.msra.mxu0 0
  %4871 = vmatprep.mubr.bf16.mxu0 0
  %4872 = vmatmul.mubr.bf16.gmra.mxu0 %v4050
  %v4873 = vpop.f32.mrf.mxu0
  %v4874 = vadd.f32 %v4809, %v4873
  %v4875 = vpop.f32.mrf.mxu0
  %v4876 = vpop.f32.mrf.mxu0
  %v4877 = vadd.f32 %v4812, %v4876
  %v4878 = vpop.f32.mrf.mxu0
  %4879 = vmatprep.mubr.bf16.mxu0 0
  %4880 = vmatmul.mubr.bf16.gmra.mxu0 %v4053
  %v4881 = vpop.f32.mrf.mxu0
  %v4882 = vadd.f32 %v4817, %v4881
  %v4883 = vpop.f32.mrf.mxu0
  %v4884 = vpop.f32.mrf.mxu0
  %v4885 = vadd.f32 %v4820, %v4884
  %v4886 = vpop.f32.mrf.mxu0
  %4887 = vmatprep.mubr.bf16.mxu0 0
  %4888 = vmatmul.mubr.bf16.gmra.mxu0 %v4056
  %v4889 = vpop.f32.mrf.mxu0
  %v4890 = vadd.f32 %v4825, %v4889
  %v4891 = vpop.f32.mrf.mxu0
  %v4892 = vpop.f32.mrf.mxu0
  %v4893 = vadd.f32 %v4828, %v4892
  %v4894 = vpop.f32.mrf.mxu0
  %4895 = vmatprep.mubr.bf16.mxu0 0
  %4896 = vmatmul.mubr.bf16.gmra.mxu0 %v4059
  %v4897 = vpop.f32.mrf.mxu0
  %v4898 = vadd.f32 %v4833, %v4897
  %v4899 = vpop.f32.mrf.mxu0
  %v4900 = vpop.f32.mrf.mxu0
  %v4901 = vadd.f32 %v4836, %v4900
  %v4902 = vpop.f32.mrf.mxu0
  %4903 = vdwg.mxu0
  %4904 = vmatprep.subr.bf16.mxu0 0
  %4905 = vmatpush1.bf16.msra.mxu0 %v4317
  %4906 = vmatprep.subr.bf16.mxu0 0
  %4907 = vmatpush1.bf16.msra.mxu0 %v4307
  %4908 = vmatprep.subr.bf16.mxu0 0
  %4909 = vmatpush1.bf16.msra.mxu0 %v4306
  %4910 = vmatprep.subr.bf16.mxu0 0
  %4911 = vmatpush1.bf16.msra.mxu0 %v4305
  %4912 = vmatprep.subr.bf16.mxu0 0
  %4913 = vmatpush1.bf16.msra.mxu0 %v4304
  %4914 = vmatprep.subr.bf16.mxu0 0
  %4915 = vmatpush1.bf16.msra.mxu0 %v4303
  %4916 = vmatprep.subr.bf16.mxu0 0
  %4917 = vmatpush1.bf16.msra.mxu0 %v4302
  %4918 = vmatprep.subr.bf16.mxu0 0
  %4919 = vmatpush1.bf16.msra.mxu0 %v4301
  %4920 = vmatprep.subr.bf16.mxu0 0
  %4921 = vmatpush2.bf16.msra.mxu0 0
  %4922 = vmatprep.subr.bf16.mxu0 0
  %4923 = vmatpush2.bf16.msra.mxu0 0
  %4924 = vmatprep.subr.bf16.mxu0 0
  %4925 = vmatpush2.bf16.msra.mxu0 0
  %4926 = vmatprep.subr.bf16.mxu0 0
  %4927 = vmatpush2.bf16.msra.mxu0 0
  %4928 = vmatprep.subr.bf16.mxu0 0
  %4929 = vmatpush2.bf16.msra.mxu0 0
  %4930 = vmatprep.subr.bf16.mxu0 0
  %4931 = vmatpush2.bf16.msra.mxu0 0
  %4932 = vmatprep.subr.bf16.mxu0 0
  %4933 = vmatpush2.bf16.msra.mxu0 0
  %4934 = vmatprep.subr.bf16.mxu0 0
  %4935 = vmatpush2.bf16.msra.mxu0 0
  %4936 = vmatprep.mubr.bf16.mxu0 0
  %4937 = vmatmul.mubr.bf16.gmra.mxu0 %v4179
  %v4938 = vpop.f32.mrf.mxu0
  %v4939 = vadd.f32 0.0, %v4938
  %v4940 = vpop.f32.mrf.mxu0
  %v4941 = vpop.f32.mrf.mxu0
  %v4942 = vadd.f32 0.0, %v4941
  %v4943 = vpop.f32.mrf.mxu0
  %4944 = vmatprep.mubr.bf16.mxu0 0
  %4945 = vmatmul.mubr.bf16.gmra.mxu0 %v4182
  %v4946 = vpop.f32.mrf.mxu0
  %v4947 = vadd.f32 0.0, %v4946
  %v4948 = vpop.f32.mrf.mxu0
  %v4949 = vpop.f32.mrf.mxu0
  %v4950 = vadd.f32 0.0, %v4949
  %v4951 = vpop.f32.mrf.mxu0
  %4952 = vmatprep.mubr.bf16.mxu0 0
  %4953 = vmatmul.mubr.bf16.gmra.mxu0 %v4185
  %v4954 = vpop.f32.mrf.mxu0
  %v4955 = vadd.f32 0.0, %v4954
  %v4956 = vpop.f32.mrf.mxu0
  %v4957 = vpop.f32.mrf.mxu0
  %v4958 = vadd.f32 0.0, %v4957
  %v4959 = vpop.f32.mrf.mxu0
  %4960 = vmatprep.mubr.bf16.mxu0 0
  %4961 = vmatmul.mubr.bf16.gmra.mxu0 %v4559
  %v4962 = vpop.f32.mrf.mxu0
  %v4963 = vadd.f32 0.0, %v4962
  %v4964 = vpop.f32.mrf.mxu0
  %v4965 = vpop.f32.mrf.mxu0
  %v4966 = vadd.f32 0.0, %v4965
  %v4967 = vpop.f32.mrf.mxu0
  %4968 = vdwg.mxu0
  %4969 = vmatprep.subr.bf16.mxu0 0
  %4970 = vmatpush1.bf16.msra.mxu0 %v4430
  %4971 = vmatprep.subr.bf16.mxu0 0
  %4972 = vmatpush1.bf16.msra.mxu0 %v4420
  %4973 = vmatprep.subr.bf16.mxu0 0
  %4974 = vmatpush1.bf16.msra.mxu0 %v4419
  %4975 = vmatprep.subr.bf16.mxu0 0
  %4976 = vmatpush1.bf16.msra.mxu0 %v4418
  %4977 = vmatprep.subr.bf16.mxu0 0
  %4978 = vmatpush1.bf16.msra.mxu0 %v4417
  %4979 = vmatprep.subr.bf16.mxu0 0
  %4980 = vmatpush1.bf16.msra.mxu0 %v4416
  %4981 = vmatprep.subr.bf16.mxu0 0
  %4982 = vmatpush1.bf16.msra.mxu0 %v4415
  %4983 = vmatprep.subr.bf16.mxu0 0
  %4984 = vmatpush1.bf16.msra.mxu0 %v4414
  %4985 = vmatprep.subr.bf16.mxu0 0
  %4986 = vmatpush2.bf16.msra.mxu0 0
  %4987 = vmatprep.subr.bf16.mxu0 0
  %4988 = vmatpush2.bf16.msra.mxu0 0
  %4989 = vmatprep.subr.bf16.mxu0 0
  %4990 = vmatpush2.bf16.msra.mxu0 0
  %4991 = vmatprep.subr.bf16.mxu0 0
  %4992 = vmatpush2.bf16.msra.mxu0 0
  %4993 = vmatprep.subr.bf16.mxu0 0
  %4994 = vmatpush2.bf16.msra.mxu0 0
  %4995 = vmatprep.subr.bf16.mxu0 0
  %4996 = vmatpush2.bf16.msra.mxu0 0
  %4997 = vmatprep.subr.bf16.mxu0 0
  %4998 = vmatpush2.bf16.msra.mxu0 0
  %4999 = vmatprep.subr.bf16.mxu0 0
  %5000 = vmatpush2.bf16.msra.mxu0 0
  %5001 = vmatprep.mubr.bf16.mxu0 0
  %5002 = vmatmul.mubr.bf16.gmra.mxu0 %v4050
  %v5003 = vpop.f32.mrf.mxu0
  %v5004 = vadd.f32 %v4939, %v5003
  %v5005 = vpop.f32.mrf.mxu0
  %v5006 = vpop.f32.mrf.mxu0
  %v5007 = vadd.f32 %v4942, %v5006
  %v5008 = vpop.f32.mrf.mxu0
  %5009 = vmatprep.mubr.bf16.mxu0 0
  %5010 = vmatmul.mubr.bf16.gmra.mxu0 %v4053
  %v5011 = vpop.f32.mrf.mxu0
  %v5012 = vadd.f32 %v4947, %v5011
  %v5013 = vpop.f32.mrf.mxu0
  %v5014 = vpop.f32.mrf.mxu0
  %v5015 = vadd.f32 %v4950, %v5014
  %v5016 = vpop.f32.mrf.mxu0
  %5017 = vmatprep.mubr.bf16.mxu0 0
  %5018 = vmatmul.mubr.bf16.gmra.mxu0 %v4056
  %v5019 = vpop.f32.mrf.mxu0
  %v5020 = vadd.f32 %v4955, %v5019
  %v5021 = vpop.f32.mrf.mxu0
  %v5022 = vpop.f32.mrf.mxu0
  %v5023 = vadd.f32 %v4958, %v5022
  %v5024 = vpop.f32.mrf.mxu0
  %5025 = vmatprep.mubr.bf16.mxu0 0
  %5026 = vmatmul.mubr.bf16.gmra.mxu0 %v4059
  %v5027 = vpop.f32.mrf.mxu0
  %v5028 = vadd.f32 %v4963, %v5027
  %v5029 = vpop.f32.mrf.mxu0
  %v5030 = vpop.f32.mrf.mxu0
  %v5031 = vadd.f32 %v4966, %v5030
  %v5032 = vpop.f32.mrf.mxu0
  %5033 = vdwg.mxu0
  %s5034 = scalar_lea.vmem %s3, 360
  %v5035 = vld [vmem:[%s5034] sm:$0xf]
  %v5036 = vld [vmem:[%s5034 + $0x4] sm:$0xf]
  %v5037 = vld [vmem:[%s5034 + $0x8] sm:$0xf]
  %v5038 = vld [vmem:[%s5034 + $0xc] sm:$0xf]
  %v5039 = vld [vmem:[%s5034 + $0x10] sm:$0xf]
  %v5040 = vld [vmem:[%s5034 + $0x14] sm:$0xf]
  %v5041 = vld [vmem:[%s5034 + $0x18] sm:$0xf]
  %v5042 = vld [vmem:[%s5034 + $0x1c] sm:$0xf]
  %v5043 = vld [vmem:[%s5034 + $0x20] sm:$0xf]
  %v5044 = vld [vmem:[%s5034 + $0x24] sm:$0xf]
  %v5045 = vld [vmem:[%s5034 + $0x28] sm:$0xf]
  %v5046 = vld [vmem:[%s5034 + $0x2c] sm:$0xf]
  %v5047 = vld [vmem:[%s5034 + $0x30] sm:$0xf]
  %v5048 = vld [vmem:[%s5034 + $0x34] sm:$0xf]
  %v5049 = vld [vmem:[%s5034 + $0x38] sm:$0xf]
  %v5065 = vunpack.c.l.b16 %v5035
  %v5066 = vunpack.c.l.b16 %v5036
  %v5067 = vunpack.c.l.b16 %v5037
  %v5068 = vunpack.c.l.b16 %v5038
  %v5069 = vunpack.c.l.b16 %v5039
  %v5070 = vunpack.c.l.b16 %v5040
  %v5071 = vunpack.c.l.b16 %v5041
  %v5072 = vunpack.c.l.b16 %v5042
  %v5073 = vunpack.c.l.b16 %v5043
  %v5074 = vunpack.c.l.b16 %v5044
  %v5075 = vunpack.c.l.b16 %v5045
  %v5076 = vunpack.c.l.b16 %v5046
  %v5077 = vunpack.c.l.b16 %v5047
  %v5078 = vunpack.c.l.b16 %v5048
  %v5079 = vunpack.c.l.b16 %v5049
  %v5080 = vpack.c.b16 %v5066, %v5065
  %v5081 = vpack.c.b16 %v5068, %v5067
  %v5082 = vpack.c.b16 %v5070, %v5069
  %v5083 = vpack.c.b16 %v5072, %v5071
  %v5084 = vpack.c.b16 %v5074, %v5073
  %v5085 = vpack.c.b16 %v5076, %v5075
  %v5086 = vpack.c.b16 %v5078, %v5077
  %v5087 = vpack.c.b16 %v5079, %v5079
  %v5096 = vsel %vm4048, %v3953, 0
  %v5099 = vsel %vm4061, %v5087, 0
  %5101 = vmatprep.subr.bf16.mxu0 0
  %5102 = vmatpush1.bf16.msra.mxu0 %v5099
  %5103 = vmatprep.subr.bf16.mxu0 0
  %5104 = vmatpush1.bf16.msra.mxu0 %v5086
  %5105 = vmatprep.subr.bf16.mxu0 0
  %5106 = vmatpush1.bf16.msra.mxu0 %v5085
  %5107 = vmatprep.subr.bf16.mxu0 0
  %5108 = vmatpush1.bf16.msra.mxu0 %v5084
  %5109 = vmatprep.subr.bf16.mxu0 0
  %5110 = vmatpush1.bf16.msra.mxu0 %v5083
  %5111 = vmatprep.subr.bf16.mxu0 0
  %5112 = vmatpush1.bf16.msra.mxu0 %v5082
  %5113 = vmatprep.subr.bf16.mxu0 0
  %5114 = vmatpush1.bf16.msra.mxu0 %v5081
  %5115 = vmatprep.subr.bf16.mxu0 0
  %5116 = vmatpush1.bf16.msra.mxu0 %v5080
  %5117 = vmatprep.subr.bf16.mxu0 0
  %5118 = vmatpush2.bf16.msra.mxu0 0
  %5119 = vmatprep.subr.bf16.mxu0 0
  %5120 = vmatpush2.bf16.msra.mxu0 0
  %5121 = vmatprep.subr.bf16.mxu0 0
  %5122 = vmatpush2.bf16.msra.mxu0 0
  %5123 = vmatprep.subr.bf16.mxu0 0
  %5124 = vmatpush2.bf16.msra.mxu0 0
  %5125 = vmatprep.subr.bf16.mxu0 0
  %5126 = vmatpush2.bf16.msra.mxu0 0
  %5127 = vmatprep.subr.bf16.mxu0 0
  %5128 = vmatpush2.bf16.msra.mxu0 0
  %5129 = vmatprep.subr.bf16.mxu0 0
  %5130 = vmatpush2.bf16.msra.mxu0 0
  %5131 = vmatprep.subr.bf16.mxu0 0
  %5132 = vmatpush2.bf16.msra.mxu0 0
  %5133 = vmatprep.mubr.bf16.mxu0 0
  %5134 = vmatmul.mubr.bf16.gmra.mxu0 %v4053
  %v5135 = vpop.f32.mrf.mxu0
  %v5136 = vadd.f32 0.0, %v5135
  %v5137 = vpop.f32.mrf.mxu0
  %v5138 = vpop.f32.mrf.mxu0
  %v5139 = vadd.f32 0.0, %v5138
  %v5140 = vpop.f32.mrf.mxu0
  %5141 = vmatprep.mubr.bf16.mxu0 0
  %5142 = vmatmul.mubr.bf16.gmra.mxu0 %v4056
  %v5143 = vpop.f32.mrf.mxu0
  %v5144 = vadd.f32 0.0, %v5143
  %v5145 = vpop.f32.mrf.mxu0
  %v5146 = vpop.f32.mrf.mxu0
  %v5147 = vadd.f32 0.0, %v5146
  %v5148 = vpop.f32.mrf.mxu0
  %5149 = vmatprep.mubr.bf16.mxu0 0
  %5150 = vmatmul.mubr.bf16.gmra.mxu0 %v4059
  %v5151 = vpop.f32.mrf.mxu0
  %v5152 = vadd.f32 0.0, %v5151
  %v5153 = vpop.f32.mrf.mxu0
  %v5154 = vpop.f32.mrf.mxu0
  %v5155 = vadd.f32 0.0, %v5154
  %v5156 = vpop.f32.mrf.mxu0
  %5157 = vmatprep.mubr.bf16.mxu0 0
  %5158 = vmatmul.mubr.bf16.gmra.mxu0 %v5096
  %v5159 = vpop.f32.mrf.mxu0
  %v5160 = vadd.f32 0.0, %v5159
  %v5161 = vpop.f32.mrf.mxu0
  %v5162 = vpop.f32.mrf.mxu0
  %v5163 = vadd.f32 0.0, %v5162
  %v5164 = vpop.f32.mrf.mxu0
  %5165 = vdwg.mxu0
  %v5166 = vadd.f32 %v4629, %v5136
  %v5167 = vadd.f32 %v4630, %v5139
  %v5168 = vadd.f32 %v4631, %v5144
  %v5169 = vadd.f32 %v4632, %v5147
  %v5170 = vadd.f32 %v4633, %v5152
  %v5171 = vadd.f32 %v4634, %v5155
  %v5172 = vadd.f32 %v4635, %v5160
  %v5173 = vadd.f32 %v4636, %v5163
  %s5174 = scalar_lea.vmem %s3, 420
  %v5175 = vld [vmem:[%s5174] sm:$0xf]
  %v5176 = vld [vmem:[%s5174 + $0x4] sm:$0xf]
  %v5177 = vld [vmem:[%s5174 + $0x8] sm:$0xf]
  %v5178 = vld [vmem:[%s5174 + $0xc] sm:$0xf]
  %v5179 = vld [vmem:[%s5174 + $0x10] sm:$0xf]
  %v5180 = vld [vmem:[%s5174 + $0x14] sm:$0xf]
  %v5181 = vld [vmem:[%s5174 + $0x18] sm:$0xf]
  %v5182 = vld [vmem:[%s5174 + $0x1c] sm:$0xf]
  %v5183 = vld [vmem:[%s5174 + $0x20] sm:$0xf]
  %v5184 = vld [vmem:[%s5174 + $0x24] sm:$0xf]
  %v5185 = vld [vmem:[%s5174 + $0x28] sm:$0xf]
  %v5186 = vld [vmem:[%s5174 + $0x2c] sm:$0xf]
  %v5187 = vld [vmem:[%s5174 + $0x30] sm:$0xf]
  %v5188 = vld [vmem:[%s5174 + $0x34] sm:$0xf]
  %v5189 = vld [vmem:[%s5174 + $0x38] sm:$0xf]
  %v5205 = vunpack.c.l.b16 %v5175
  %v5206 = vunpack.c.l.b16 %v5176
  %v5207 = vunpack.c.l.b16 %v5177
  %v5208 = vunpack.c.l.b16 %v5178
  %v5209 = vunpack.c.l.b16 %v5179
  %v5210 = vunpack.c.l.b16 %v5180
  %v5211 = vunpack.c.l.b16 %v5181
  %v5212 = vunpack.c.l.b16 %v5182
  %v5213 = vunpack.c.l.b16 %v5183
  %v5214 = vunpack.c.l.b16 %v5184
  %v5215 = vunpack.c.l.b16 %v5185
  %v5216 = vunpack.c.l.b16 %v5186
  %v5217 = vunpack.c.l.b16 %v5187
  %v5218 = vunpack.c.l.b16 %v5188
  %v5219 = vunpack.c.l.b16 %v5189
  %v5220 = vpack.c.b16 %v5206, %v5205
  %v5221 = vpack.c.b16 %v5208, %v5207
  %v5222 = vpack.c.b16 %v5210, %v5209
  %v5223 = vpack.c.b16 %v5212, %v5211
  %v5224 = vpack.c.b16 %v5214, %v5213
  %v5225 = vpack.c.b16 %v5216, %v5215
  %v5226 = vpack.c.b16 %v5218, %v5217
  %v5227 = vpack.c.b16 %v5219, %v5219
  %v5236 = vsel %vm4061, %v5227, 0
  %5238 = vmatprep.subr.bf16.mxu0 0
  %5239 = vmatpush1.bf16.msra.mxu0 %v5236
  %5240 = vmatprep.subr.bf16.mxu0 0
  %5241 = vmatpush1.bf16.msra.mxu0 %v5226
  %5242 = vmatprep.subr.bf16.mxu0 0
  %5243 = vmatpush1.bf16.msra.mxu0 %v5225
  %5244 = vmatprep.subr.bf16.mxu0 0
  %5245 = vmatpush1.bf16.msra.mxu0 %v5224
  %5246 = vmatprep.subr.bf16.mxu0 0
  %5247 = vmatpush1.bf16.msra.mxu0 %v5223
  %5248 = vmatprep.subr.bf16.mxu0 0
  %5249 = vmatpush1.bf16.msra.mxu0 %v5222
  %5250 = vmatprep.subr.bf16.mxu0 0
  %5251 = vmatpush1.bf16.msra.mxu0 %v5221
  %5252 = vmatprep.subr.bf16.mxu0 0
  %5253 = vmatpush1.bf16.msra.mxu0 %v5220
  %5254 = vmatprep.subr.bf16.mxu0 0
  %5255 = vmatpush2.bf16.msra.mxu0 0
  %5256 = vmatprep.subr.bf16.mxu0 0
  %5257 = vmatpush2.bf16.msra.mxu0 0
  %5258 = vmatprep.subr.bf16.mxu0 0
  %5259 = vmatpush2.bf16.msra.mxu0 0
  %5260 = vmatprep.subr.bf16.mxu0 0
  %5261 = vmatpush2.bf16.msra.mxu0 0
  %5262 = vmatprep.subr.bf16.mxu0 0
  %5263 = vmatpush2.bf16.msra.mxu0 0
  %5264 = vmatprep.subr.bf16.mxu0 0
  %5265 = vmatpush2.bf16.msra.mxu0 0
  %5266 = vmatprep.subr.bf16.mxu0 0
  %5267 = vmatpush2.bf16.msra.mxu0 0
  %5268 = vmatprep.subr.bf16.mxu0 0
  %5269 = vmatpush2.bf16.msra.mxu0 0
  %5270 = vmatprep.mubr.bf16.mxu0 0
  %5271 = vmatmul.mubr.bf16.gmra.mxu0 %v4053
  %v5272 = vpop.f32.mrf.mxu0
  %v5273 = vadd.f32 0.0, %v5272
  %v5274 = vpop.f32.mrf.mxu0
  %v5275 = vpop.f32.mrf.mxu0
  %v5276 = vadd.f32 0.0, %v5275
  %v5277 = vpop.f32.mrf.mxu0
  %5278 = vmatprep.mubr.bf16.mxu0 0
  %5279 = vmatmul.mubr.bf16.gmra.mxu0 %v4056
  %v5280 = vpop.f32.mrf.mxu0
  %v5281 = vadd.f32 0.0, %v5280
  %v5282 = vpop.f32.mrf.mxu0
  %v5283 = vpop.f32.mrf.mxu0
  %v5284 = vadd.f32 0.0, %v5283
  %v5285 = vpop.f32.mrf.mxu0
  %5286 = vmatprep.mubr.bf16.mxu0 0
  %5287 = vmatmul.mubr.bf16.gmra.mxu0 %v4059
  %v5288 = vpop.f32.mrf.mxu0
  %v5289 = vadd.f32 0.0, %v5288
  %v5290 = vpop.f32.mrf.mxu0
  %v5291 = vpop.f32.mrf.mxu0
  %v5292 = vadd.f32 0.0, %v5291
  %v5293 = vpop.f32.mrf.mxu0
  %5294 = vmatprep.mubr.bf16.mxu0 0
  %5295 = vmatmul.mubr.bf16.gmra.mxu0 %v5096
  %v5296 = vpop.f32.mrf.mxu0
  %v5297 = vadd.f32 0.0, %v5296
  %v5298 = vpop.f32.mrf.mxu0
  %v5299 = vpop.f32.mrf.mxu0
  %v5300 = vadd.f32 0.0, %v5299
  %v5301 = vpop.f32.mrf.mxu0
  %5302 = vdwg.mxu0
  %v5303 = vadd.f32 %v4766, %v5273
  %v5304 = vadd.f32 %v4767, %v5276
  %v5305 = vadd.f32 %v4768, %v5281
  %v5306 = vadd.f32 %v4769, %v5284
  %v5307 = vadd.f32 %v4770, %v5289
  %v5308 = vadd.f32 %v4771, %v5292
  %v5309 = vadd.f32 %v4772, %v5297
  %v5310 = vadd.f32 %v4773, %v5300
  %5311 = vmatprep.subr.bf16.mxu0 0
  %5312 = vmatpush1.bf16.msra.mxu0 %v4562
  %5313 = vmatprep.subr.bf16.mxu0 0
  %5314 = vmatpush1.bf16.msra.mxu0 %v4549
  %5315 = vmatprep.subr.bf16.mxu0 0
  %5316 = vmatpush1.bf16.msra.mxu0 %v4548
  %5317 = vmatprep.subr.bf16.mxu0 0
  %5318 = vmatpush1.bf16.msra.mxu0 %v4547
  %5319 = vmatprep.subr.bf16.mxu0 0
  %5320 = vmatpush1.bf16.msra.mxu0 %v4546
  %5321 = vmatprep.subr.bf16.mxu0 0
  %5322 = vmatpush1.bf16.msra.mxu0 %v4545
  %5323 = vmatprep.subr.bf16.mxu0 0
  %5324 = vmatpush1.bf16.msra.mxu0 %v4544
  %5325 = vmatprep.subr.bf16.mxu0 0
  %5326 = vmatpush1.bf16.msra.mxu0 %v4543
  %5327 = vmatprep.subr.bf16.mxu0 0
  %5328 = vmatpush2.bf16.msra.mxu0 0
  %5329 = vmatprep.subr.bf16.mxu0 0
  %5330 = vmatpush2.bf16.msra.mxu0 0
  %5331 = vmatprep.subr.bf16.mxu0 0
  %5332 = vmatpush2.bf16.msra.mxu0 0
  %5333 = vmatprep.subr.bf16.mxu0 0
  %5334 = vmatpush2.bf16.msra.mxu0 0
  %5335 = vmatprep.subr.bf16.mxu0 0
  %5336 = vmatpush2.bf16.msra.mxu0 0
  %5337 = vmatprep.subr.bf16.mxu0 0
  %5338 = vmatpush2.bf16.msra.mxu0 0
  %5339 = vmatprep.subr.bf16.mxu0 0
  %5340 = vmatpush2.bf16.msra.mxu0 0
  %5341 = vmatprep.subr.bf16.mxu0 0
  %5342 = vmatpush2.bf16.msra.mxu0 0
  %5343 = vmatprep.mubr.bf16.mxu0 0
  %5344 = vmatmul.mubr.bf16.gmra.mxu0 %v4053
  %v5345 = vpop.f32.mrf.mxu0
  %v5346 = vadd.f32 0.0, %v5345
  %v5347 = vpop.f32.mrf.mxu0
  %v5348 = vpop.f32.mrf.mxu0
  %v5349 = vadd.f32 0.0, %v5348
  %v5350 = vpop.f32.mrf.mxu0
  %5351 = vmatprep.mubr.bf16.mxu0 0
  %5352 = vmatmul.mubr.bf16.gmra.mxu0 %v4056
  %v5353 = vpop.f32.mrf.mxu0
  %v5354 = vadd.f32 0.0, %v5353
  %v5355 = vpop.f32.mrf.mxu0
  %v5356 = vpop.f32.mrf.mxu0
  %v5357 = vadd.f32 0.0, %v5356
  %v5358 = vpop.f32.mrf.mxu0
  %5359 = vmatprep.mubr.bf16.mxu0 0
  %5360 = vmatmul.mubr.bf16.gmra.mxu0 %v4059
  %v5361 = vpop.f32.mrf.mxu0
  %v5362 = vadd.f32 0.0, %v5361
  %v5363 = vpop.f32.mrf.mxu0
  %v5364 = vpop.f32.mrf.mxu0
  %v5365 = vadd.f32 0.0, %v5364
  %v5366 = vpop.f32.mrf.mxu0
  %5367 = vmatprep.mubr.bf16.mxu0 0
  %5368 = vmatmul.mubr.bf16.gmra.mxu0 %v5096
  %v5369 = vpop.f32.mrf.mxu0
  %v5370 = vadd.f32 0.0, %v5369
  %v5371 = vpop.f32.mrf.mxu0
  %v5372 = vpop.f32.mrf.mxu0
  %v5373 = vadd.f32 0.0, %v5372
  %v5374 = vpop.f32.mrf.mxu0
  %5375 = vdwg.mxu0
  %v5376 = vadd.f32 %v4874, %v5346
  %v5377 = vadd.f32 %v4877, %v5349
  %v5378 = vadd.f32 %v4882, %v5354
  %v5379 = vadd.f32 %v4885, %v5357
  %v5380 = vadd.f32 %v4890, %v5362
  %v5381 = vadd.f32 %v4893, %v5365
  %v5382 = vadd.f32 %v4898, %v5370
  %v5383 = vadd.f32 %v4901, %v5373
  %5384 = vmatprep.subr.bf16.mxu0 0
  %5385 = vmatpush1.bf16.msra.mxu0 %v4699
  %5386 = vmatprep.subr.bf16.mxu0 0
  %5387 = vmatpush1.bf16.msra.mxu0 %v4689
  %5388 = vmatprep.subr.bf16.mxu0 0
  %5389 = vmatpush1.bf16.msra.mxu0 %v4688
  %5390 = vmatprep.subr.bf16.mxu0 0
  %5391 = vmatpush1.bf16.msra.mxu0 %v4687
  %5392 = vmatprep.subr.bf16.mxu0 0
  %5393 = vmatpush1.bf16.msra.mxu0 %v4686
  %5394 = vmatprep.subr.bf16.mxu0 0
  %5395 = vmatpush1.bf16.msra.mxu0 %v4685
  %5396 = vmatprep.subr.bf16.mxu0 0
  %5397 = vmatpush1.bf16.msra.mxu0 %v4684
  %5398 = vmatprep.subr.bf16.mxu0 0
  %5399 = vmatpush1.bf16.msra.mxu0 %v4683
  %5400 = vmatprep.subr.bf16.mxu0 0
  %5401 = vmatpush2.bf16.msra.mxu0 0
  %5402 = vmatprep.subr.bf16.mxu0 0
  %5403 = vmatpush2.bf16.msra.mxu0 0
  %5404 = vmatprep.subr.bf16.mxu0 0
  %5405 = vmatpush2.bf16.msra.mxu0 0
  %5406 = vmatprep.subr.bf16.mxu0 0
  %5407 = vmatpush2.bf16.msra.mxu0 0
  %5408 = vmatprep.subr.bf16.mxu0 0
  %5409 = vmatpush2.bf16.msra.mxu0 0
  %5410 = vmatprep.subr.bf16.mxu0 0
  %5411 = vmatpush2.bf16.msra.mxu0 0
  %5412 = vmatprep.subr.bf16.mxu0 0
  %5413 = vmatpush2.bf16.msra.mxu0 0
  %5414 = vmatprep.subr.bf16.mxu0 0
  %5415 = vmatpush2.bf16.msra.mxu0 0
  %5416 = vmatprep.mubr.bf16.mxu0 0
  %5417 = vmatmul.mubr.bf16.gmra.mxu0 %v4053
  %v5418 = vpop.f32.mrf.mxu0
  %v5419 = vadd.f32 0.0, %v5418
  %v5420 = vpop.f32.mrf.mxu0
  %v5421 = vpop.f32.mrf.mxu0
  %v5422 = vadd.f32 0.0, %v5421
  %v5423 = vpop.f32.mrf.mxu0
  %5424 = vmatprep.mubr.bf16.mxu0 0
  %5425 = vmatmul.mubr.bf16.gmra.mxu0 %v4056
  %v5426 = vpop.f32.mrf.mxu0
  %v5427 = vadd.f32 0.0, %v5426
  %v5428 = vpop.f32.mrf.mxu0
  %v5429 = vpop.f32.mrf.mxu0
  %v5430 = vadd.f32 0.0, %v5429
  %v5431 = vpop.f32.mrf.mxu0
  %5432 = vmatprep.mubr.bf16.mxu0 0
  %5433 = vmatmul.mubr.bf16.gmra.mxu0 %v4059
  %v5434 = vpop.f32.mrf.mxu0
  %v5435 = vadd.f32 0.0, %v5434
  %v5436 = vpop.f32.mrf.mxu0
  %v5437 = vpop.f32.mrf.mxu0
  %v5438 = vadd.f32 0.0, %v5437
  %v5439 = vpop.f32.mrf.mxu0
  %5440 = vmatprep.mubr.bf16.mxu0 0
  %5441 = vmatmul.mubr.bf16.gmra.mxu0 %v5096
  %v5442 = vpop.f32.mrf.mxu0
  %v5443 = vadd.f32 0.0, %v5442
  %v5444 = vpop.f32.mrf.mxu0
  %v5445 = vpop.f32.mrf.mxu0
  %v5446 = vadd.f32 0.0, %v5445
  %v5447 = vpop.f32.mrf.mxu0
  %5448 = vdwg.mxu0
  %v5449 = vadd.f32 %v5004, %v5419
  %v5450 = vadd.f32 %v5007, %v5422
  %v5451 = vadd.f32 %v5012, %v5427
  %v5452 = vadd.f32 %v5015, %v5430
  %v5453 = vadd.f32 %v5020, %v5435
  %v5454 = vadd.f32 %v5023, %v5438
  %v5455 = vadd.f32 %v5028, %v5443
  %v5456 = vadd.f32 %v5031, %v5446
  %s5457 = scalar_lea.vmem %s3, 480
  %v5458 = vld [vmem:[%s5457] sm:$0xf]
  %v5459 = vld [vmem:[%s5457 + $0x4] sm:$0xf]
  %v5460 = vld [vmem:[%s5457 + $0x8] sm:$0xf]
  %v5461 = vld [vmem:[%s5457 + $0xc] sm:$0xf]
  %v5462 = vld [vmem:[%s5457 + $0x10] sm:$0xf]
  %v5463 = vld [vmem:[%s5457 + $0x14] sm:$0xf]
  %v5464 = vld [vmem:[%s5457 + $0x18] sm:$0xf]
  %v5465 = vld [vmem:[%s5457 + $0x1c] sm:$0xf]
  %v5466 = vld [vmem:[%s5457 + $0x20] sm:$0xf]
  %v5467 = vld [vmem:[%s5457 + $0x24] sm:$0xf]
  %v5468 = vld [vmem:[%s5457 + $0x28] sm:$0xf]
  %v5469 = vld [vmem:[%s5457 + $0x2c] sm:$0xf]
  %v5470 = vld [vmem:[%s5457 + $0x30] sm:$0xf]
  %v5471 = vld [vmem:[%s5457 + $0x34] sm:$0xf]
  %v5472 = vld [vmem:[%s5457 + $0x38] sm:$0xf]
  %v5488 = vunpack.c.l.b16 %v5458
  %v5489 = vunpack.c.l.b16 %v5459
  %v5490 = vunpack.c.l.b16 %v5460
  %v5491 = vunpack.c.l.b16 %v5461
  %v5492 = vunpack.c.l.b16 %v5462
  %v5493 = vunpack.c.l.b16 %v5463
  %v5494 = vunpack.c.l.b16 %v5464
  %v5495 = vunpack.c.l.b16 %v5465
  %v5496 = vunpack.c.l.b16 %v5466
  %v5497 = vunpack.c.l.b16 %v5467
  %v5498 = vunpack.c.l.b16 %v5468
  %v5499 = vunpack.c.l.b16 %v5469
  %v5500 = vunpack.c.l.b16 %v5470
  %v5501 = vunpack.c.l.b16 %v5471
  %v5502 = vunpack.c.l.b16 %v5472
  %v5503 = vpack.c.b16 %v5489, %v5488
  %v5504 = vpack.c.b16 %v5491, %v5490
  %v5505 = vpack.c.b16 %v5493, %v5492
  %v5506 = vpack.c.b16 %v5495, %v5494
  %v5507 = vpack.c.b16 %v5497, %v5496
  %v5508 = vpack.c.b16 %v5499, %v5498
  %v5509 = vpack.c.b16 %v5501, %v5500
  %v5510 = vpack.c.b16 %v5502, %v5502
  %v5519 = vsel %vm4048, %v3954, 0
  %v5522 = vsel %vm4061, %v5510, 0
  %5524 = vmatprep.subr.bf16.mxu0 0
  %5525 = vmatpush1.bf16.msra.mxu0 %v5522
  %5526 = vmatprep.subr.bf16.mxu0 0
  %5527 = vmatpush1.bf16.msra.mxu0 %v5509
  %5528 = vmatprep.subr.bf16.mxu0 0
  %5529 = vmatpush1.bf16.msra.mxu0 %v5508
  %5530 = vmatprep.subr.bf16.mxu0 0
  %5531 = vmatpush1.bf16.msra.mxu0 %v5507
  %5532 = vmatprep.subr.bf16.mxu0 0
  %5533 = vmatpush1.bf16.msra.mxu0 %v5506
  %5534 = vmatprep.subr.bf16.mxu0 0
  %5535 = vmatpush1.bf16.msra.mxu0 %v5505
  %5536 = vmatprep.subr.bf16.mxu0 0
  %5537 = vmatpush1.bf16.msra.mxu0 %v5504
  %5538 = vmatprep.subr.bf16.mxu0 0
  %5539 = vmatpush1.bf16.msra.mxu0 %v5503
  %5540 = vmatprep.subr.bf16.mxu0 0
  %5541 = vmatpush2.bf16.msra.mxu0 0
  %5542 = vmatprep.subr.bf16.mxu0 0
  %5543 = vmatpush2.bf16.msra.mxu0 0
  %5544 = vmatprep.subr.bf16.mxu0 0
  %5545 = vmatpush2.bf16.msra.mxu0 0
  %5546 = vmatprep.subr.bf16.mxu0 0
  %5547 = vmatpush2.bf16.msra.mxu0 0
  %5548 = vmatprep.subr.bf16.mxu0 0
  %5549 = vmatpush2.bf16.msra.mxu0 0
  %5550 = vmatprep.subr.bf16.mxu0 0
  %5551 = vmatpush2.bf16.msra.mxu0 0
  %5552 = vmatprep.subr.bf16.mxu0 0
  %5553 = vmatpush2.bf16.msra.mxu0 0
  %5554 = vmatprep.subr.bf16.mxu0 0
  %5555 = vmatpush2.bf16.msra.mxu0 0
  %5556 = vmatprep.mubr.bf16.mxu0 0
  %5557 = vmatmul.mubr.bf16.gmra.mxu0 %v4182
  %v5558 = vpop.f32.mrf.mxu0
  %v5559 = vadd.f32 0.0, %v5558
  %v5560 = vpop.f32.mrf.mxu0
  %v5561 = vpop.f32.mrf.mxu0
  %v5562 = vadd.f32 0.0, %v5561
  %v5563 = vpop.f32.mrf.mxu0
  %5564 = vmatprep.mubr.bf16.mxu0 0
  %5565 = vmatmul.mubr.bf16.gmra.mxu0 %v4185
  %v5566 = vpop.f32.mrf.mxu0
  %v5567 = vadd.f32 0.0, %v5566
  %v5568 = vpop.f32.mrf.mxu0
  %v5569 = vpop.f32.mrf.mxu0
  %v5570 = vadd.f32 0.0, %v5569
  %v5571 = vpop.f32.mrf.mxu0
  %5572 = vmatprep.mubr.bf16.mxu0 0
  %5573 = vmatmul.mubr.bf16.gmra.mxu0 %v4559
  %v5574 = vpop.f32.mrf.mxu0
  %v5575 = vadd.f32 0.0, %v5574
  %v5576 = vpop.f32.mrf.mxu0
  %v5577 = vpop.f32.mrf.mxu0
  %v5578 = vadd.f32 0.0, %v5577
  %v5579 = vpop.f32.mrf.mxu0
  %5580 = vmatprep.mubr.bf16.mxu0 0
  %5581 = vmatmul.mubr.bf16.gmra.mxu0 %v5519
  %v5582 = vpop.f32.mrf.mxu0
  %v5583 = vadd.f32 0.0, %v5582
  %v5584 = vpop.f32.mrf.mxu0
  %v5585 = vpop.f32.mrf.mxu0
  %v5586 = vadd.f32 0.0, %v5585
  %v5587 = vpop.f32.mrf.mxu0
  %5588 = vdwg.mxu0
  %v5589 = vadd.f32 %v5166, %v5559
  %v5590 = vadd.f32 %v5167, %v5562
  %v5591 = vadd.f32 %v5168, %v5567
  %v5592 = vadd.f32 %v5169, %v5570
  %v5593 = vadd.f32 %v5170, %v5575
  %v5594 = vadd.f32 %v5171, %v5578
  %v5595 = vadd.f32 %v5172, %v5583
  %v5596 = vadd.f32 %v5173, %v5586
  %s5597 = scalar_lea.vmem %s3, 540
  %v5598 = vld [vmem:[%s5597] sm:$0xf]
  %v5599 = vld [vmem:[%s5597 + $0x4] sm:$0xf]
  %v5600 = vld [vmem:[%s5597 + $0x8] sm:$0xf]
  %v5601 = vld [vmem:[%s5597 + $0xc] sm:$0xf]
  %v5602 = vld [vmem:[%s5597 + $0x10] sm:$0xf]
  %v5603 = vld [vmem:[%s5597 + $0x14] sm:$0xf]
  %v5604 = vld [vmem:[%s5597 + $0x18] sm:$0xf]
  %v5605 = vld [vmem:[%s5597 + $0x1c] sm:$0xf]
  %v5606 = vld [vmem:[%s5597 + $0x20] sm:$0xf]
  %v5607 = vld [vmem:[%s5597 + $0x24] sm:$0xf]
  %v5608 = vld [vmem:[%s5597 + $0x28] sm:$0xf]
  %v5609 = vld [vmem:[%s5597 + $0x2c] sm:$0xf]
  %v5610 = vld [vmem:[%s5597 + $0x30] sm:$0xf]
  %v5611 = vld [vmem:[%s5597 + $0x34] sm:$0xf]
  %v5612 = vld [vmem:[%s5597 + $0x38] sm:$0xf]
  %v5628 = vunpack.c.l.b16 %v5598
  %v5629 = vunpack.c.l.b16 %v5599
  %v5630 = vunpack.c.l.b16 %v5600
  %v5631 = vunpack.c.l.b16 %v5601
  %v5632 = vunpack.c.l.b16 %v5602
  %v5633 = vunpack.c.l.b16 %v5603
  %v5634 = vunpack.c.l.b16 %v5604
  %v5635 = vunpack.c.l.b16 %v5605
  %v5636 = vunpack.c.l.b16 %v5606
  %v5637 = vunpack.c.l.b16 %v5607
  %v5638 = vunpack.c.l.b16 %v5608
  %v5639 = vunpack.c.l.b16 %v5609
  %v5640 = vunpack.c.l.b16 %v5610
  %v5641 = vunpack.c.l.b16 %v5611
  %v5642 = vunpack.c.l.b16 %v5612
  %v5643 = vpack.c.b16 %v5629, %v5628
  %v5644 = vpack.c.b16 %v5631, %v5630
  %v5645 = vpack.c.b16 %v5633, %v5632
  %v5646 = vpack.c.b16 %v5635, %v5634
  %v5647 = vpack.c.b16 %v5637, %v5636
  %v5648 = vpack.c.b16 %v5639, %v5638
  %v5649 = vpack.c.b16 %v5641, %v5640
  %v5650 = vpack.c.b16 %v5642, %v5642
  %v5659 = vsel %vm4061, %v5650, 0
  %5661 = vmatprep.subr.bf16.mxu0 0
  %5662 = vmatpush1.bf16.msra.mxu0 %v5659
  %5663 = vmatprep.subr.bf16.mxu0 0
  %5664 = vmatpush1.bf16.msra.mxu0 %v5649
  %5665 = vmatprep.subr.bf16.mxu0 0
  %5666 = vmatpush1.bf16.msra.mxu0 %v5648
  %5667 = vmatprep.subr.bf16.mxu0 0
  %5668 = vmatpush1.bf16.msra.mxu0 %v5647
  %5669 = vmatprep.subr.bf16.mxu0 0
  %5670 = vmatpush1.bf16.msra.mxu0 %v5646
  %5671 = vmatprep.subr.bf16.mxu0 0
  %5672 = vmatpush1.bf16.msra.mxu0 %v5645
  %5673 = vmatprep.subr.bf16.mxu0 0
  %5674 = vmatpush1.bf16.msra.mxu0 %v5644
  %5675 = vmatprep.subr.bf16.mxu0 0
  %5676 = vmatpush1.bf16.msra.mxu0 %v5643
  %5677 = vmatprep.subr.bf16.mxu0 0
  %5678 = vmatpush2.bf16.msra.mxu0 0
  %5679 = vmatprep.subr.bf16.mxu0 0
  %5680 = vmatpush2.bf16.msra.mxu0 0
  %5681 = vmatprep.subr.bf16.mxu0 0
  %5682 = vmatpush2.bf16.msra.mxu0 0
  %5683 = vmatprep.subr.bf16.mxu0 0
  %5684 = vmatpush2.bf16.msra.mxu0 0
  %5685 = vmatprep.subr.bf16.mxu0 0
  %5686 = vmatpush2.bf16.msra.mxu0 0
  %5687 = vmatprep.subr.bf16.mxu0 0
  %5688 = vmatpush2.bf16.msra.mxu0 0
  %5689 = vmatprep.subr.bf16.mxu0 0
  %5690 = vmatpush2.bf16.msra.mxu0 0
  %5691 = vmatprep.subr.bf16.mxu0 0
  %5692 = vmatpush2.bf16.msra.mxu0 0
  %5693 = vmatprep.mubr.bf16.mxu0 0
  %5694 = vmatmul.mubr.bf16.gmra.mxu0 %v4182
  %v5695 = vpop.f32.mrf.mxu0
  %v5696 = vadd.f32 0.0, %v5695
  %v5697 = vpop.f32.mrf.mxu0
  %v5698 = vpop.f32.mrf.mxu0
  %v5699 = vadd.f32 0.0, %v5698
  %v5700 = vpop.f32.mrf.mxu0
  %5701 = vmatprep.mubr.bf16.mxu0 0
  %5702 = vmatmul.mubr.bf16.gmra.mxu0 %v4185
  %v5703 = vpop.f32.mrf.mxu0
  %v5704 = vadd.f32 0.0, %v5703
  %v5705 = vpop.f32.mrf.mxu0
  %v5706 = vpop.f32.mrf.mxu0
  %v5707 = vadd.f32 0.0, %v5706
  %v5708 = vpop.f32.mrf.mxu0
  %5709 = vmatprep.mubr.bf16.mxu0 0
  %5710 = vmatmul.mubr.bf16.gmra.mxu0 %v4559
  %v5711 = vpop.f32.mrf.mxu0
  %v5712 = vadd.f32 0.0, %v5711
  %v5713 = vpop.f32.mrf.mxu0
  %v5714 = vpop.f32.mrf.mxu0
  %v5715 = vadd.f32 0.0, %v5714
  %v5716 = vpop.f32.mrf.mxu0
  %5717 = vmatprep.mubr.bf16.mxu0 0
  %5718 = vmatmul.mubr.bf16.gmra.mxu0 %v5519
  %v5719 = vpop.f32.mrf.mxu0
  %v5720 = vadd.f32 0.0, %v5719
  %v5721 = vpop.f32.mrf.mxu0
  %v5722 = vpop.f32.mrf.mxu0
  %v5723 = vadd.f32 0.0, %v5722
  %v5724 = vpop.f32.mrf.mxu0
  %5725 = vdwg.mxu0
  %v5726 = vadd.f32 %v5303, %v5696
  %v5727 = vadd.f32 %v5304, %v5699
  %v5728 = vadd.f32 %v5305, %v5704
  %v5729 = vadd.f32 %v5306, %v5707
  %v5730 = vadd.f32 %v5307, %v5712
  %v5731 = vadd.f32 %v5308, %v5715
  %v5732 = vadd.f32 %v5309, %v5720
  %v5733 = vadd.f32 %v5310, %v5723
  %5734 = vmatprep.subr.bf16.mxu0 0
  %5735 = vmatpush1.bf16.msra.mxu0 %v5099
  %5736 = vmatprep.subr.bf16.mxu0 0
  %5737 = vmatpush1.bf16.msra.mxu0 %v5086
  %5738 = vmatprep.subr.bf16.mxu0 0
  %5739 = vmatpush1.bf16.msra.mxu0 %v5085
  %5740 = vmatprep.subr.bf16.mxu0 0
  %5741 = vmatpush1.bf16.msra.mxu0 %v5084
  %5742 = vmatprep.subr.bf16.mxu0 0
  %5743 = vmatpush1.bf16.msra.mxu0 %v5083
  %5744 = vmatprep.subr.bf16.mxu0 0
  %5745 = vmatpush1.bf16.msra.mxu0 %v5082
  %5746 = vmatprep.subr.bf16.mxu0 0
  %5747 = vmatpush1.bf16.msra.mxu0 %v5081
  %5748 = vmatprep.subr.bf16.mxu0 0
  %5749 = vmatpush1.bf16.msra.mxu0 %v5080
  %5750 = vmatprep.subr.bf16.mxu0 0
  %5751 = vmatpush2.bf16.msra.mxu0 0
  %5752 = vmatprep.subr.bf16.mxu0 0
  %5753 = vmatpush2.bf16.msra.mxu0 0
  %5754 = vmatprep.subr.bf16.mxu0 0
  %5755 = vmatpush2.bf16.msra.mxu0 0
  %5756 = vmatprep.subr.bf16.mxu0 0
  %5757 = vmatpush2.bf16.msra.mxu0 0
  %5758 = vmatprep.subr.bf16.mxu0 0
  %5759 = vmatpush2.bf16.msra.mxu0 0
  %5760 = vmatprep.subr.bf16.mxu0 0
  %5761 = vmatpush2.bf16.msra.mxu0 0
  %5762 = vmatprep.subr.bf16.mxu0 0
  %5763 = vmatpush2.bf16.msra.mxu0 0
  %5764 = vmatprep.subr.bf16.mxu0 0
  %5765 = vmatpush2.bf16.msra.mxu0 0
  %5766 = vmatprep.mubr.bf16.mxu0 0
  %5767 = vmatmul.mubr.bf16.gmra.mxu0 %v4182
  %v5768 = vpop.f32.mrf.mxu0
  %v5769 = vadd.f32 0.0, %v5768
  %v5770 = vpop.f32.mrf.mxu0
  %v5771 = vpop.f32.mrf.mxu0
  %v5772 = vadd.f32 0.0, %v5771
  %v5773 = vpop.f32.mrf.mxu0
  %5774 = vmatprep.mubr.bf16.mxu0 0
  %5775 = vmatmul.mubr.bf16.gmra.mxu0 %v4185
  %v5776 = vpop.f32.mrf.mxu0
  %v5777 = vadd.f32 0.0, %v5776
  %v5778 = vpop.f32.mrf.mxu0
  %v5779 = vpop.f32.mrf.mxu0
  %v5780 = vadd.f32 0.0, %v5779
  %v5781 = vpop.f32.mrf.mxu0
  %5782 = vmatprep.mubr.bf16.mxu0 0
  %5783 = vmatmul.mubr.bf16.gmra.mxu0 %v4559
  %v5784 = vpop.f32.mrf.mxu0
  %v5785 = vadd.f32 0.0, %v5784
  %v5786 = vpop.f32.mrf.mxu0
  %v5787 = vpop.f32.mrf.mxu0
  %v5788 = vadd.f32 0.0, %v5787
  %v5789 = vpop.f32.mrf.mxu0
  %5790 = vmatprep.mubr.bf16.mxu0 0
  %5791 = vmatmul.mubr.bf16.gmra.mxu0 %v5519
  %v5792 = vpop.f32.mrf.mxu0
  %v5793 = vadd.f32 0.0, %v5792
  %v5794 = vpop.f32.mrf.mxu0
  %v5795 = vpop.f32.mrf.mxu0
  %v5796 = vadd.f32 0.0, %v5795
  %v5797 = vpop.f32.mrf.mxu0
  %5798 = vdwg.mxu0
  %v5799 = vadd.f32 %v5376, %v5769
  %v5800 = vadd.f32 %v5377, %v5772
  %v5801 = vadd.f32 %v5378, %v5777
  %v5802 = vadd.f32 %v5379, %v5780
  %v5803 = vadd.f32 %v5380, %v5785
  %v5804 = vadd.f32 %v5381, %v5788
  %v5805 = vadd.f32 %v5382, %v5793
  %v5806 = vadd.f32 %v5383, %v5796
  %5807 = vmatprep.subr.bf16.mxu0 0
  %5808 = vmatpush1.bf16.msra.mxu0 %v5236
  %5809 = vmatprep.subr.bf16.mxu0 0
  %5810 = vmatpush1.bf16.msra.mxu0 %v5226
  %5811 = vmatprep.subr.bf16.mxu0 0
  %5812 = vmatpush1.bf16.msra.mxu0 %v5225
  %5813 = vmatprep.subr.bf16.mxu0 0
  %5814 = vmatpush1.bf16.msra.mxu0 %v5224
  %5815 = vmatprep.subr.bf16.mxu0 0
  %5816 = vmatpush1.bf16.msra.mxu0 %v5223
  %5817 = vmatprep.subr.bf16.mxu0 0
  %5818 = vmatpush1.bf16.msra.mxu0 %v5222
  %5819 = vmatprep.subr.bf16.mxu0 0
  %5820 = vmatpush1.bf16.msra.mxu0 %v5221
  %5821 = vmatprep.subr.bf16.mxu0 0
  %5822 = vmatpush1.bf16.msra.mxu0 %v5220
  %5823 = vmatprep.subr.bf16.mxu0 0
  %5824 = vmatpush2.bf16.msra.mxu0 0
  %5825 = vmatprep.subr.bf16.mxu0 0
  %5826 = vmatpush2.bf16.msra.mxu0 0
  %5827 = vmatprep.subr.bf16.mxu0 0
  %5828 = vmatpush2.bf16.msra.mxu0 0
  %5829 = vmatprep.subr.bf16.mxu0 0
  %5830 = vmatpush2.bf16.msra.mxu0 0
  %5831 = vmatprep.subr.bf16.mxu0 0
  %5832 = vmatpush2.bf16.msra.mxu0 0
  %5833 = vmatprep.subr.bf16.mxu0 0
  %5834 = vmatpush2.bf16.msra.mxu0 0
  %5835 = vmatprep.subr.bf16.mxu0 0
  %5836 = vmatpush2.bf16.msra.mxu0 0
  %5837 = vmatprep.subr.bf16.mxu0 0
  %5838 = vmatpush2.bf16.msra.mxu0 0
  %5839 = vmatprep.mubr.bf16.mxu0 0
  %5840 = vmatmul.mubr.bf16.gmra.mxu0 %v4182
  %v5841 = vpop.f32.mrf.mxu0
  %v5842 = vadd.f32 0.0, %v5841
  %v5843 = vpop.f32.mrf.mxu0
  %v5844 = vpop.f32.mrf.mxu0
  %v5845 = vadd.f32 0.0, %v5844
  %v5846 = vpop.f32.mrf.mxu0
  %5847 = vmatprep.mubr.bf16.mxu0 0
  %5848 = vmatmul.mubr.bf16.gmra.mxu0 %v4185
  %v5849 = vpop.f32.mrf.mxu0
  %v5850 = vadd.f32 0.0, %v5849
  %v5851 = vpop.f32.mrf.mxu0
  %v5852 = vpop.f32.mrf.mxu0
  %v5853 = vadd.f32 0.0, %v5852
  %v5854 = vpop.f32.mrf.mxu0
  %5855 = vmatprep.mubr.bf16.mxu0 0
  %5856 = vmatmul.mubr.bf16.gmra.mxu0 %v4559
  %v5857 = vpop.f32.mrf.mxu0
  %v5858 = vadd.f32 0.0, %v5857
  %v5859 = vpop.f32.mrf.mxu0
  %v5860 = vpop.f32.mrf.mxu0
  %v5861 = vadd.f32 0.0, %v5860
  %v5862 = vpop.f32.mrf.mxu0
  %5863 = vmatprep.mubr.bf16.mxu0 0
  %5864 = vmatmul.mubr.bf16.gmra.mxu0 %v5519
  %v5865 = vpop.f32.mrf.mxu0
  %v5866 = vadd.f32 0.0, %v5865
  %v5867 = vpop.f32.mrf.mxu0
  %v5868 = vpop.f32.mrf.mxu0
  %v5869 = vadd.f32 0.0, %v5868
  %v5870 = vpop.f32.mrf.mxu0
  %5871 = vdwg.mxu0
  %v5872 = vadd.f32 %v5449, %v5842
  %v5873 = vadd.f32 %v5450, %v5845
  %v5874 = vadd.f32 %v5451, %v5850
  %v5875 = vadd.f32 %v5452, %v5853
  %v5876 = vadd.f32 %v5453, %v5858
  %v5877 = vadd.f32 %v5454, %v5861
  %v5878 = vadd.f32 %v5455, %v5866
  %v5879 = vadd.f32 %v5456, %v5869
  %v5881 = vsel %vm4048, %v3955, 0
  %5883 = vmatprep.subr.bf16.mxu0 0
  %5884 = vmatpush1.bf16.msra.mxu0 %v5522
  %5885 = vmatprep.subr.bf16.mxu0 0
  %5886 = vmatpush1.bf16.msra.mxu0 %v5509
  %5887 = vmatprep.subr.bf16.mxu0 0
  %5888 = vmatpush1.bf16.msra.mxu0 %v5508
  %5889 = vmatprep.subr.bf16.mxu0 0
  %5890 = vmatpush1.bf16.msra.mxu0 %v5507
  %5891 = vmatprep.subr.bf16.mxu0 0
  %5892 = vmatpush1.bf16.msra.mxu0 %v5506
  %5893 = vmatprep.subr.bf16.mxu0 0
  %5894 = vmatpush1.bf16.msra.mxu0 %v5505
  %5895 = vmatprep.subr.bf16.mxu0 0
  %5896 = vmatpush1.bf16.msra.mxu0 %v5504
  %5897 = vmatprep.subr.bf16.mxu0 0
  %5898 = vmatpush1.bf16.msra.mxu0 %v5503
  %5899 = vmatprep.subr.bf16.mxu0 0
  %5900 = vmatpush2.bf16.msra.mxu0 0
  %5901 = vmatprep.subr.bf16.mxu0 0
  %5902 = vmatpush2.bf16.msra.mxu0 0
  %5903 = vmatprep.subr.bf16.mxu0 0
  %5904 = vmatpush2.bf16.msra.mxu0 0
  %5905 = vmatprep.subr.bf16.mxu0 0
  %5906 = vmatpush2.bf16.msra.mxu0 0
  %5907 = vmatprep.subr.bf16.mxu0 0
  %5908 = vmatpush2.bf16.msra.mxu0 0
  %5909 = vmatprep.subr.bf16.mxu0 0
  %5910 = vmatpush2.bf16.msra.mxu0 0
  %5911 = vmatprep.subr.bf16.mxu0 0
  %5912 = vmatpush2.bf16.msra.mxu0 0
  %5913 = vmatprep.subr.bf16.mxu0 0
  %5914 = vmatpush2.bf16.msra.mxu0 0
  %5915 = vmatprep.mubr.bf16.mxu0 0
  %5916 = vmatmul.mubr.bf16.gmra.mxu0 %v4056
  %v5917 = vpop.f32.mrf.mxu0
  %v5918 = vadd.f32 0.0, %v5917
  %v5919 = vpop.f32.mrf.mxu0
  %v5920 = vpop.f32.mrf.mxu0
  %v5921 = vadd.f32 0.0, %v5920
  %v5922 = vpop.f32.mrf.mxu0
  %5923 = vmatprep.mubr.bf16.mxu0 0
  %5924 = vmatmul.mubr.bf16.gmra.mxu0 %v4059
  %v5925 = vpop.f32.mrf.mxu0
  %v5926 = vadd.f32 0.0, %v5925
  %v5927 = vpop.f32.mrf.mxu0
  %v5928 = vpop.f32.mrf.mxu0
  %v5929 = vadd.f32 0.0, %v5928
  %v5930 = vpop.f32.mrf.mxu0
  %5931 = vmatprep.mubr.bf16.mxu0 0
  %5932 = vmatmul.mubr.bf16.gmra.mxu0 %v5096
  %v5933 = vpop.f32.mrf.mxu0
  %v5934 = vadd.f32 0.0, %v5933
  %v5935 = vpop.f32.mrf.mxu0
  %v5936 = vpop.f32.mrf.mxu0
  %v5937 = vadd.f32 0.0, %v5936
  %v5938 = vpop.f32.mrf.mxu0
  %5939 = vmatprep.mubr.bf16.mxu0 0
  %5940 = vmatmul.mubr.bf16.gmra.mxu0 %v5881
  %v5941 = vpop.f32.mrf.mxu0
  %v5942 = vadd.f32 0.0, %v5941
  %v5943 = vpop.f32.mrf.mxu0
  %v5944 = vpop.f32.mrf.mxu0
  %v5945 = vadd.f32 0.0, %v5944
  %v5946 = vpop.f32.mrf.mxu0
  %5947 = vdwg.mxu0
  %v5948 = vadd.f32 %v5799, %v5918
  %v5949 = vadd.f32 %v5800, %v5921
  %v5950 = vadd.f32 %v5801, %v5926
  %v5951 = vadd.f32 %v5802, %v5929
  %v5952 = vadd.f32 %v5803, %v5934
  %v5953 = vadd.f32 %v5804, %v5937
  %v5954 = vadd.f32 %v5805, %v5942
  %v5955 = vadd.f32 %v5806, %v5945
  %5956 = vmatprep.subr.bf16.mxu0 0
  %5957 = vmatpush1.bf16.msra.mxu0 %v5659
  %5958 = vmatprep.subr.bf16.mxu0 0
  %5959 = vmatpush1.bf16.msra.mxu0 %v5649
  %5960 = vmatprep.subr.bf16.mxu0 0
  %5961 = vmatpush1.bf16.msra.mxu0 %v5648
  %5962 = vmatprep.subr.bf16.mxu0 0
  %5963 = vmatpush1.bf16.msra.mxu0 %v5647
  %5964 = vmatprep.subr.bf16.mxu0 0
  %5965 = vmatpush1.bf16.msra.mxu0 %v5646
  %5966 = vmatprep.subr.bf16.mxu0 0
  %5967 = vmatpush1.bf16.msra.mxu0 %v5645
  %5968 = vmatprep.subr.bf16.mxu0 0
  %5969 = vmatpush1.bf16.msra.mxu0 %v5644
  %5970 = vmatprep.subr.bf16.mxu0 0
  %5971 = vmatpush1.bf16.msra.mxu0 %v5643
  %5972 = vmatprep.subr.bf16.mxu0 0
  %5973 = vmatpush2.bf16.msra.mxu0 0
  %5974 = vmatprep.subr.bf16.mxu0 0
  %5975 = vmatpush2.bf16.msra.mxu0 0
  %5976 = vmatprep.subr.bf16.mxu0 0
  %5977 = vmatpush2.bf16.msra.mxu0 0
  %5978 = vmatprep.subr.bf16.mxu0 0
  %5979 = vmatpush2.bf16.msra.mxu0 0
  %5980 = vmatprep.subr.bf16.mxu0 0
  %5981 = vmatpush2.bf16.msra.mxu0 0
  %5982 = vmatprep.subr.bf16.mxu0 0
  %5983 = vmatpush2.bf16.msra.mxu0 0
  %5984 = vmatprep.subr.bf16.mxu0 0
  %5985 = vmatpush2.bf16.msra.mxu0 0
  %5986 = vmatprep.subr.bf16.mxu0 0
  %5987 = vmatpush2.bf16.msra.mxu0 0
  %5988 = vmatprep.mubr.bf16.mxu0 0
  %5989 = vmatmul.mubr.bf16.gmra.mxu0 %v4056
  %v5990 = vpop.f32.mrf.mxu0
  %v5991 = vadd.f32 0.0, %v5990
  %v5992 = vpop.f32.mrf.mxu0
  %v5993 = vpop.f32.mrf.mxu0
  %v5994 = vadd.f32 0.0, %v5993
  %v5995 = vpop.f32.mrf.mxu0
  %5996 = vmatprep.mubr.bf16.mxu0 0
  %5997 = vmatmul.mubr.bf16.gmra.mxu0 %v4059
  %v5998 = vpop.f32.mrf.mxu0
  %v5999 = vadd.f32 0.0, %v5998
  %v6000 = vpop.f32.mrf.mxu0
  %v6001 = vpop.f32.mrf.mxu0
  %v6002 = vadd.f32 0.0, %v6001
  %v6003 = vpop.f32.mrf.mxu0
  %6004 = vmatprep.mubr.bf16.mxu0 0
  %6005 = vmatmul.mubr.bf16.gmra.mxu0 %v5096
  %v6006 = vpop.f32.mrf.mxu0
  %v6007 = vadd.f32 0.0, %v6006
  %v6008 = vpop.f32.mrf.mxu0
  %v6009 = vpop.f32.mrf.mxu0
  %v6010 = vadd.f32 0.0, %v6009
  %v6011 = vpop.f32.mrf.mxu0
  %6012 = vmatprep.mubr.bf16.mxu0 0
  %6013 = vmatmul.mubr.bf16.gmra.mxu0 %v5881
  %v6014 = vpop.f32.mrf.mxu0
  %v6015 = vadd.f32 0.0, %v6014
  %v6016 = vpop.f32.mrf.mxu0
  %v6017 = vpop.f32.mrf.mxu0
  %v6018 = vadd.f32 0.0, %v6017
  %v6019 = vpop.f32.mrf.mxu0
  %6020 = vdwg.mxu0
  %v6021 = vadd.f32 %v5872, %v5991
  %v6022 = vadd.f32 %v5873, %v5994
  %v6023 = vadd.f32 %v5874, %v5999
  %v6024 = vadd.f32 %v5875, %v6002
  %v6025 = vadd.f32 %v5876, %v6007
  %v6026 = vadd.f32 %v5877, %v6010
  %v6027 = vadd.f32 %v5878, %v6015
  %v6028 = vadd.f32 %v5879, %v6018
  %v6029 = vmax.f32 %v5589, %v5726
  %v6030 = vmax.f32 %v5590, %v5727
  %v6031 = vmax.f32 %v5591, %v5728
  %v6032 = vmax.f32 %v5592, %v5729
  %v6033 = vmax.f32 %v5593, %v5730
  %v6034 = vmax.f32 %v5594, %v5731
  %v6035 = vmax.f32 %v5595, %v5732
  %v6036 = vmax.f32 %v5596, %v5733
  %v6037 = vmax.f32 %v5948, %v6021
  %v6038 = vmax.f32 %v5949, %v6022
  %v6039 = vmax.f32 %v5950, %v6023
  %v6040 = vmax.f32 %v5951, %v6024
  %v6041 = vmax.f32 %v5952, %v6025
  %v6042 = vmax.f32 %v5953, %v6026
  %v6043 = vmax.f32 %v5954, %v6027
  %v6044 = vmax.f32 %v5955, %v6028
  %v6045 = vmax.f32 %v6029, %v6037
  %v6046 = vmax.f32 %v6030, %v6038
  %v6047 = vmax.f32 %v6031, %v6039
  %v6048 = vmax.f32 %v6032, %v6040
  %v6049 = vmax.f32 %v6033, %v6041
  %v6050 = vmax.f32 %v6034, %v6042
  %v6051 = vmax.f32 %v6035, %v6043
  %v6052 = vmax.f32 %v6036, %v6044
  %v6053 = vld [vmem:[%s4] sm:$0x1]
  %v6055 = vlaneseq
  %v6056 = vshrl.u32 %v6055, 7
  %v6057 = vsub.s32 0, %v6056
  %v6058 = vrot.slane %v6053, %v6057
  %v6060 = vadd.f32 %v6045, %v6058
  %v6061 = vadd.f32 %v6046, %v6058
  %v6062 = vadd.f32 %v6047, %v6058
  %v6063 = vadd.f32 %v6048, %v6058
  %v6064 = vadd.f32 %v6049, %v6058
  %v6065 = vadd.f32 %v6050, %v6058
  %v6066 = vadd.f32 %v6051, %v6058
  %v6067 = vadd.f32 %v6052, %v6058
  %v6068 = vmax.f32 %v6060, 0.0
  %v6069 = vmax.f32 %v6061, 0.0
  %v6070 = vmax.f32 %v6062, 0.0
  %v6071 = vmax.f32 %v6063, 0.0
  %v6072 = vmax.f32 %v6064, 0.0
  %v6073 = vmax.f32 %v6065, 0.0
  %v6074 = vmax.f32 %v6066, 0.0
  %v6075 = vmax.f32 %v6067, 0.0
  %v6076 = vpack.c.bf16 %v6069, %v6068
  %v6077 = vpack.c.bf16 %v6071, %v6070
  %v6078 = vpack.c.bf16 %v6073, %v6072
  %v6079 = vpack.c.bf16 %v6075, %v6074
  %v6080 = vld [vmem:[%s5] sm:$0xf]
  %v6081 = vld [vmem:[%s5 + $0x4] sm:$0xf]
  %v6082 = vld [vmem:[%s5 + $0x8] sm:$0xf]
  %v6083 = vld [vmem:[%s5 + $0xc] sm:$0xf]
  %v6084 = vld [vmem:[%s5 + $0x10] sm:$0xf]
  %v6085 = vld [vmem:[%s5 + $0x14] sm:$0xf]
  %v6086 = vld [vmem:[%s5 + $0x18] sm:$0xf]
  %v6087 = vld [vmem:[%s5 + $0x1c] sm:$0xf]
  %v6088 = vld [vmem:[%s5 + $0x20] sm:$0xf]
  %v6089 = vld [vmem:[%s5 + $0x24] sm:$0xf]
  %s6090 = scalar_lea.vmem %s5, 40
  %v6091 = vld [vmem:[%s6090] sm:$0xf]
  %v6092 = vld [vmem:[%s6090 + $0x4] sm:$0xf]
  %v6093 = vld [vmem:[%s6090 + $0x8] sm:$0xf]
  %v6094 = vld [vmem:[%s6090 + $0xc] sm:$0xf]
  %v6095 = vld [vmem:[%s6090 + $0x10] sm:$0xf]
  %v6096 = vld [vmem:[%s6090 + $0x14] sm:$0xf]
  %v6097 = vld [vmem:[%s6090 + $0x18] sm:$0xf]
  %v6098 = vld [vmem:[%s6090 + $0x1c] sm:$0xf]
  %v6099 = vld [vmem:[%s6090 + $0x20] sm:$0xf]
  %v6100 = vld [vmem:[%s6090 + $0x24] sm:$0xf]
  %v6111 = vunpack.c.l.b16 %v6091
  %v6112 = vunpack.c.l.b16 %v6092
  %v6113 = vunpack.c.l.b16 %v6093
  %v6114 = vunpack.c.l.b16 %v6094
  %v6115 = vunpack.c.l.b16 %v6095
  %v6116 = vunpack.c.l.b16 %v6096
  %v6117 = vunpack.c.l.b16 %v6097
  %v6118 = vunpack.c.l.b16 %v6098
  %v6119 = vunpack.c.l.b16 %v6099
  %v6120 = vunpack.c.l.b16 %v6100
  %v6121 = vpack.c.b16 %v6112, %v6111
  %v6122 = vpack.c.b16 %v6114, %v6113
  %v6123 = vpack.c.b16 %v6116, %v6115
  %v6124 = vpack.c.b16 %v6118, %v6117
  %v6125 = vpack.c.b16 %v6120, %v6119
  %vm6131 = vcmask 654336
  %v6133 = vsel %vm6131, %v6077, 0
  %6135 = vmatprep.subr.bf16.mxu0 0
  %6136 = vmatpush1.bf16.msra.mxu0 0
  %6137 = vmatprep.subr.bf16.mxu0 0
  %6138 = vmatpush1.bf16.msra.mxu0 0
  %6139 = vmatprep.subr.bf16.mxu0 0
  %6140 = vmatpush1.bf16.msra.mxu0 0
  %6141 = vmatprep.subr.bf16.mxu0 0
  %6142 = vmatpush1.bf16.msra.mxu0 %v6125
  %6143 = vmatprep.subr.bf16.mxu0 0
  %6144 = vmatpush1.bf16.msra.mxu0 %v6124
  %6145 = vmatprep.subr.bf16.mxu0 0
  %6146 = vmatpush1.bf16.msra.mxu0 %v6123
  %6147 = vmatprep.subr.bf16.mxu0 0
  %6148 = vmatpush1.bf16.msra.mxu0 %v6122
  %6149 = vmatprep.subr.bf16.mxu0 0
  %6150 = vmatpush1.bf16.msra.mxu0 %v6121
  %6151 = vmatprep.subr.bf16.mxu0 0
  %6152 = vmatpush2.bf16.msra.mxu0 0
  %6153 = vmatprep.subr.bf16.mxu0 0
  %6154 = vmatpush2.bf16.msra.mxu0 0
  %6155 = vmatprep.subr.bf16.mxu0 0
  %6156 = vmatpush2.bf16.msra.mxu0 0
  %6157 = vmatprep.subr.bf16.mxu0 0
  %6158 = vmatpush2.bf16.msra.mxu0 0
  %6159 = vmatprep.subr.bf16.mxu0 0
  %6160 = vmatpush2.bf16.msra.mxu0 0
  %6161 = vmatprep.subr.bf16.mxu0 0
  %6162 = vmatpush2.bf16.msra.mxu0 0
  %6163 = vmatprep.subr.bf16.mxu0 0
  %6164 = vmatpush2.bf16.msra.mxu0 0
  %6165 = vmatprep.subr.bf16.mxu0 0
  %6166 = vmatpush2.bf16.msra.mxu0 0
  %6167 = vmatprep.mubr.bf16.mxu0 0
  %6168 = vmatmul.mubr.bf16.gmra.mxu0 %v6133
  %v6169 = vpop.f32.mrf.mxu0
  %v6170 = vadd.f32 0.0, %v6169
  %v6171 = vpop.f32.mrf.mxu0
  %v6172 = vpop.f32.mrf.mxu0
  %v6173 = vadd.f32 0.0, %v6172
  %v6174 = vpop.f32.mrf.mxu0
  %6175 = vdwg.mxu0
  %v6186 = vunpack.c.l.b16 %v6080
  %v6187 = vunpack.c.l.b16 %v6081
  %v6188 = vunpack.c.l.b16 %v6082
  %v6189 = vunpack.c.l.b16 %v6083
  %v6190 = vunpack.c.l.b16 %v6084
  %v6191 = vunpack.c.l.b16 %v6085
  %v6192 = vunpack.c.l.b16 %v6086
  %v6193 = vunpack.c.l.b16 %v6087
  %v6194 = vunpack.c.l.b16 %v6088
  %v6195 = vunpack.c.l.b16 %v6089
  %v6196 = vpack.c.b16 %v6187, %v6186
  %v6197 = vpack.c.b16 %v6189, %v6188
  %v6198 = vpack.c.b16 %v6191, %v6190
  %v6199 = vpack.c.b16 %v6193, %v6192
  %v6200 = vpack.c.b16 %v6195, %v6194
  %v6207 = vsel %vm6131, %v6076, 0
  %6209 = vmatprep.subr.bf16.mxu0 0
  %6210 = vmatpush1.bf16.msra.mxu0 0
  %6211 = vmatprep.subr.bf16.mxu0 0
  %6212 = vmatpush1.bf16.msra.mxu0 0
  %6213 = vmatprep.subr.bf16.mxu0 0
  %6214 = vmatpush1.bf16.msra.mxu0 0
  %6215 = vmatprep.subr.bf16.mxu0 0
  %6216 = vmatpush1.bf16.msra.mxu0 %v6200
  %6217 = vmatprep.subr.bf16.mxu0 0
  %6218 = vmatpush1.bf16.msra.mxu0 %v6199
  %6219 = vmatprep.subr.bf16.mxu0 0
  %6220 = vmatpush1.bf16.msra.mxu0 %v6198
  %6221 = vmatprep.subr.bf16.mxu0 0
  %6222 = vmatpush1.bf16.msra.mxu0 %v6197
  %6223 = vmatprep.subr.bf16.mxu0 0
  %6224 = vmatpush1.bf16.msra.mxu0 %v6196
  %6225 = vmatprep.subr.bf16.mxu0 0
  %6226 = vmatpush2.bf16.msra.mxu0 0
  %6227 = vmatprep.subr.bf16.mxu0 0
  %6228 = vmatpush2.bf16.msra.mxu0 0
  %6229 = vmatprep.subr.bf16.mxu0 0
  %6230 = vmatpush2.bf16.msra.mxu0 0
  %6231 = vmatprep.subr.bf16.mxu0 0
  %6232 = vmatpush2.bf16.msra.mxu0 0
  %6233 = vmatprep.subr.bf16.mxu0 0
  %6234 = vmatpush2.bf16.msra.mxu0 0
  %6235 = vmatprep.subr.bf16.mxu0 0
  %6236 = vmatpush2.bf16.msra.mxu0 0
  %6237 = vmatprep.subr.bf16.mxu0 0
  %6238 = vmatpush2.bf16.msra.mxu0 0
  %6239 = vmatprep.subr.bf16.mxu0 0
  %6240 = vmatpush2.bf16.msra.mxu0 0
  %6241 = vmatprep.mubr.bf16.mxu0 0
  %6242 = vmatmul.mubr.bf16.gmra.mxu0 %v6207
  %v6243 = vpop.f32.mrf.mxu0
  %v6244 = vadd.f32 %v6170, %v6243
  %v6245 = vpop.f32.mrf.mxu0
  %v6246 = vpop.f32.mrf.mxu0
  %v6247 = vadd.f32 %v6173, %v6246
  %v6248 = vpop.f32.mrf.mxu0
  %6249 = vdwg.mxu0
  %s6250 = scalar_lea.vmem %s5, 80
  %v6251 = vld [vmem:[%s6250] sm:$0xf]
  %v6252 = vld [vmem:[%s6250 + $0x4] sm:$0xf]
  %v6253 = vld [vmem:[%s6250 + $0x8] sm:$0xf]
  %v6254 = vld [vmem:[%s6250 + $0xc] sm:$0xf]
  %v6255 = vld [vmem:[%s6250 + $0x10] sm:$0xf]
  %v6256 = vld [vmem:[%s6250 + $0x14] sm:$0xf]
  %v6257 = vld [vmem:[%s6250 + $0x18] sm:$0xf]
  %v6258 = vld [vmem:[%s6250 + $0x1c] sm:$0xf]
  %v6259 = vld [vmem:[%s6250 + $0x20] sm:$0xf]
  %v6260 = vld [vmem:[%s6250 + $0x24] sm:$0xf]
  %v6271 = vunpack.c.l.b16 %v6251
  %v6272 = vunpack.c.l.b16 %v6252
  %v6273 = vunpack.c.l.b16 %v6253
  %v6274 = vunpack.c.l.b16 %v6254
  %v6275 = vunpack.c.l.b16 %v6255
  %v6276 = vunpack.c.l.b16 %v6256
  %v6277 = vunpack.c.l.b16 %v6257
  %v6278 = vunpack.c.l.b16 %v6258
  %v6279 = vunpack.c.l.b16 %v6259
  %v6280 = vunpack.c.l.b16 %v6260
  %v6281 = vpack.c.b16 %v6272, %v6271
  %v6282 = vpack.c.b16 %v6274, %v6273
  %v6283 = vpack.c.b16 %v6276, %v6275
  %v6284 = vpack.c.b16 %v6278, %v6277
  %v6285 = vpack.c.b16 %v6280, %v6279
  %v6292 = vsel %vm6131, %v6078, 0
  %6294 = vmatprep.subr.bf16.mxu0 0
  %6295 = vmatpush1.bf16.msra.mxu0 0
  %6296 = vmatprep.subr.bf16.mxu0 0
  %6297 = vmatpush1.bf16.msra.mxu0 0
  %6298 = vmatprep.subr.bf16.mxu0 0
  %6299 = vmatpush1.bf16.msra.mxu0 0
  %6300 = vmatprep.subr.bf16.mxu0 0
  %6301 = vmatpush1.bf16.msra.mxu0 %v6285
  %6302 = vmatprep.subr.bf16.mxu0 0
  %6303 = vmatpush1.bf16.msra.mxu0 %v6284
  %6304 = vmatprep.subr.bf16.mxu0 0
  %6305 = vmatpush1.bf16.msra.mxu0 %v6283
  %6306 = vmatprep.subr.bf16.mxu0 0
  %6307 = vmatpush1.bf16.msra.mxu0 %v6282
  %6308 = vmatprep.subr.bf16.mxu0 0
  %6309 = vmatpush1.bf16.msra.mxu0 %v6281
  %6310 = vmatprep.subr.bf16.mxu0 0
  %6311 = vmatpush2.bf16.msra.mxu0 0
  %6312 = vmatprep.subr.bf16.mxu0 0
  %6313 = vmatpush2.bf16.msra.mxu0 0
  %6314 = vmatprep.subr.bf16.mxu0 0
  %6315 = vmatpush2.bf16.msra.mxu0 0
  %6316 = vmatprep.subr.bf16.mxu0 0
  %6317 = vmatpush2.bf16.msra.mxu0 0
  %6318 = vmatprep.subr.bf16.mxu0 0
  %6319 = vmatpush2.bf16.msra.mxu0 0
  %6320 = vmatprep.subr.bf16.mxu0 0
  %6321 = vmatpush2.bf16.msra.mxu0 0
  %6322 = vmatprep.subr.bf16.mxu0 0
  %6323 = vmatpush2.bf16.msra.mxu0 0
  %6324 = vmatprep.subr.bf16.mxu0 0
  %6325 = vmatpush2.bf16.msra.mxu0 0
  %6326 = vmatprep.mubr.bf16.mxu0 0
  %6327 = vmatmul.mubr.bf16.gmra.mxu0 %v6292
  %v6328 = vpop.f32.mrf.mxu0
  %v6329 = vadd.f32 0.0, %v6328
  %v6330 = vpop.f32.mrf.mxu0
  %v6331 = vpop.f32.mrf.mxu0
  %v6332 = vadd.f32 0.0, %v6331
  %v6333 = vpop.f32.mrf.mxu0
  %6334 = vdwg.mxu0
  %v6335 = vadd.f32 %v6244, %v6329
  %v6336 = vadd.f32 %v6247, %v6332
  %s6337 = scalar_lea.vmem %s5, 120
  %v6338 = vld [vmem:[%s6337] sm:$0xf]
  %v6339 = vld [vmem:[%s6337 + $0x4] sm:$0xf]
  %v6340 = vld [vmem:[%s6337 + $0x8] sm:$0xf]
  %v6341 = vld [vmem:[%s6337 + $0xc] sm:$0xf]
  %v6342 = vld [vmem:[%s6337 + $0x10] sm:$0xf]
  %v6343 = vld [vmem:[%s6337 + $0x14] sm:$0xf]
  %v6344 = vld [vmem:[%s6337 + $0x18] sm:$0xf]
  %v6345 = vld [vmem:[%s6337 + $0x1c] sm:$0xf]
  %v6346 = vld [vmem:[%s6337 + $0x20] sm:$0xf]
  %v6347 = vld [vmem:[%s6337 + $0x24] sm:$0xf]
  %v6358 = vunpack.c.l.b16 %v6338
  %v6359 = vunpack.c.l.b16 %v6339
  %v6360 = vunpack.c.l.b16 %v6340
  %v6361 = vunpack.c.l.b16 %v6341
  %v6362 = vunpack.c.l.b16 %v6342
  %v6363 = vunpack.c.l.b16 %v6343
  %v6364 = vunpack.c.l.b16 %v6344
  %v6365 = vunpack.c.l.b16 %v6345
  %v6366 = vunpack.c.l.b16 %v6346
  %v6367 = vunpack.c.l.b16 %v6347
  %v6368 = vpack.c.b16 %v6359, %v6358
  %v6369 = vpack.c.b16 %v6361, %v6360
  %v6370 = vpack.c.b16 %v6363, %v6362
  %v6371 = vpack.c.b16 %v6365, %v6364
  %v6372 = vpack.c.b16 %v6367, %v6366
  %v6379 = vsel %vm6131, %v6079, 0
  %6381 = vmatprep.subr.bf16.mxu0 0
  %6382 = vmatpush1.bf16.msra.mxu0 0
  %6383 = vmatprep.subr.bf16.mxu0 0
  %6384 = vmatpush1.bf16.msra.mxu0 0
  %6385 = vmatprep.subr.bf16.mxu0 0
  %6386 = vmatpush1.bf16.msra.mxu0 0
  %6387 = vmatprep.subr.bf16.mxu0 0
  %6388 = vmatpush1.bf16.msra.mxu0 %v6372
  %6389 = vmatprep.subr.bf16.mxu0 0
  %6390 = vmatpush1.bf16.msra.mxu0 %v6371
  %6391 = vmatprep.subr.bf16.mxu0 0
  %6392 = vmatpush1.bf16.msra.mxu0 %v6370
  %6393 = vmatprep.subr.bf16.mxu0 0
  %6394 = vmatpush1.bf16.msra.mxu0 %v6369
  %6395 = vmatprep.subr.bf16.mxu0 0
  %6396 = vmatpush1.bf16.msra.mxu0 %v6368
  %6397 = vmatprep.subr.bf16.mxu0 0
  %6398 = vmatpush2.bf16.msra.mxu0 0
  %6399 = vmatprep.subr.bf16.mxu0 0
  %6400 = vmatpush2.bf16.msra.mxu0 0
  %6401 = vmatprep.subr.bf16.mxu0 0
  %6402 = vmatpush2.bf16.msra.mxu0 0
  %6403 = vmatprep.subr.bf16.mxu0 0
  %6404 = vmatpush2.bf16.msra.mxu0 0
  %6405 = vmatprep.subr.bf16.mxu0 0
  %6406 = vmatpush2.bf16.msra.mxu0 0
  %6407 = vmatprep.subr.bf16.mxu0 0
  %6408 = vmatpush2.bf16.msra.mxu0 0
  %6409 = vmatprep.subr.bf16.mxu0 0
  %6410 = vmatpush2.bf16.msra.mxu0 0
  %6411 = vmatprep.subr.bf16.mxu0 0
  %6412 = vmatpush2.bf16.msra.mxu0 0
  %6413 = vmatprep.mubr.bf16.mxu0 0
  %6414 = vmatmul.mubr.bf16.gmra.mxu0 %v6379
  %v6415 = vpop.f32.mrf.mxu0
  %v6416 = vadd.f32 0.0, %v6415
  %v6417 = vpop.f32.mrf.mxu0
  %v6418 = vpop.f32.mrf.mxu0
  %v6419 = vadd.f32 0.0, %v6418
  %v6420 = vpop.f32.mrf.mxu0
  %6421 = vdwg.mxu0
  %v6422 = vadd.f32 %v6335, %v6416
  %v6423 = vadd.f32 %v6336, %v6419
  %v6424 = vld [vmem:[%s6] sm:$0x1]
  %v6426 = vlaneseq
  %v6427 = vshrl.u32 %v6426, 7
  %v6428 = vsub.s32 0, %v6427
  %v6429 = vrot.slane %v6424, %v6428
  %v6431 = vadd.f32 %v6422, %v6429
  %v6432 = vadd.f32 %v6423, %v6429
  %v6433 = vmax.f32 %v6431, 0.0
  %v6434 = vmax.f32 %v6432, 0.0
  %v6435 = vpack.c.bf16 %v6434, %v6433
  %v6436 = vld [vmem:[%s7] sm:$0xf]
  %v6437 = vld [vmem:[%s7 + $0x4] sm:$0xf]
  %v6438 = vld [vmem:[%s7 + $0x8] sm:$0xf]
  %v6439 = vld [vmem:[%s7 + $0xc] sm:$0xf]
  %v6440 = vld [vmem:[%s7 + $0x10] sm:$0xf]
  %v6441 = vld [vmem:[%s7 + $0x14] sm:$0xf]
  %v6442 = vld [vmem:[%s7 + $0x18] sm:$0x1]
  %v6443 = vld [vmem:[%s8] sm:$0x1]
  %v6445 = vlaneseq
  %v6446 = vshrl.u32 %v6445, 7
  %v6447 = vsub.s32 0, %v6446
  %v6448 = vrot.slane %v6443, %v6447
  %v6457 = vunpack.c.l.b16 %v6436
  %v6458 = vunpack.c.l.b16 %v6437
  %v6459 = vunpack.c.l.b16 %v6438
  %v6460 = vunpack.c.l.b16 %v6439
  %v6461 = vunpack.c.l.b16 %v6440
  %v6462 = vunpack.c.l.b16 %v6441
  %v6463 = vunpack.c.l.b16 %v6442
  %v6464 = vpack.c.b16 %v6458, %v6457
  %v6465 = vpack.c.b16 %v6460, %v6459
  %v6466 = vpack.c.b16 %v6462, %v6461
  %v6467 = vpack.c.b16 %v6463, %v6463
  %vm6471 = vcmask 408576
  %v6473 = vsel %vm6471, %v6435, 0
  %vm6475 = vcmask 1040384
  %v6477 = vsel %vm6475, %v6467, 0
  %6479 = vmatprep.subr.bf16.mxu0 0
  %6480 = vmatpush1.bf16.msra.mxu0 0
  %6481 = vmatprep.subr.bf16.mxu0 0
  %6482 = vmatpush1.bf16.msra.mxu0 0
  %6483 = vmatprep.subr.bf16.mxu0 0
  %6484 = vmatpush1.bf16.msra.mxu0 0
  %6485 = vmatprep.subr.bf16.mxu0 0
  %6486 = vmatpush1.bf16.msra.mxu0 0
  %6487 = vmatprep.subr.bf16.mxu0 0
  %6488 = vmatpush1.bf16.msra.mxu0 %v6477
  %6489 = vmatprep.subr.bf16.mxu0 0
  %6490 = vmatpush1.bf16.msra.mxu0 %v6466
  %6491 = vmatprep.subr.bf16.mxu0 0
  %6492 = vmatpush1.bf16.msra.mxu0 %v6465
  %6493 = vmatprep.subr.bf16.mxu0 0
  %6494 = vmatpush1.bf16.msra.mxu0 %v6464
  %6495 = vmatprep.subr.bf16.mxu0 0
  %6496 = vmatpush2.bf16.msra.mxu0 0
  %6497 = vmatprep.subr.bf16.mxu0 0
  %6498 = vmatpush2.bf16.msra.mxu0 0
  %6499 = vmatprep.subr.bf16.mxu0 0
  %6500 = vmatpush2.bf16.msra.mxu0 0
  %6501 = vmatprep.subr.bf16.mxu0 0
  %6502 = vmatpush2.bf16.msra.mxu0 0
  %6503 = vmatprep.subr.bf16.mxu0 0
  %6504 = vmatpush2.bf16.msra.mxu0 0
  %6505 = vmatprep.subr.bf16.mxu0 0
  %6506 = vmatpush2.bf16.msra.mxu0 0
  %6507 = vmatprep.subr.bf16.mxu0 0
  %6508 = vmatpush2.bf16.msra.mxu0 0
  %6509 = vmatprep.subr.bf16.mxu0 0
  %6510 = vmatpush2.bf16.msra.mxu0 0
  %6511 = vmatprep.mubr.bf16.mxu0 0
  %6512 = vmatmul.mubr.bf16.gmra.mxu0 %v6473
  %v6513 = vpop.f32.mrf.mxu0
  %v6514 = vadd.f32 %v6448, %v6513
  %v6515 = vpop.f32.mrf.mxu0
  %v6516 = vpop.f32.mrf.mxu0
  %v6517 = vadd.f32 %v6448, %v6516
  %v6518 = vpop.f32.mrf.mxu0
  %6519 = vdwg.mxu0
  %vm6520 = vcmask 80896
  %v6521 = vsel %vm6520, %v6514, -inf
  %6522 = vmax.xlane.f32.xlu0 %v6521
  %v6523 = vpop.xlane.xlu0 %6522
  %v6524 = vsel %vm6520, %v6517, -inf
  %6525 = vmax.xlane.f32.xlu0 %v6524
  %v6526 = vpop.xlane.xlu0 %6525
  %v6527 = vsub.f32 %v6514, %v6523
  %v6528 = vsub.f32 %v6517, %v6526
  %v6529 = vmul.f32 %v6527, 1.442695
  %v6530 = vpow.pop %v6529
  %v6531 = vmul.f32 %v6528, 1.442695
  %v6532 = vpow.pop %v6531
  %v6533 = vsel %vm6520, %v6530, 0.0
  %6534 = vadd.xlane.f32.xlu0 %v6533
  %v6535 = vpop.xlane.xlu0 %6534
  %v6536 = vsel %vm6520, %v6532, 0.0
  %6537 = vadd.xlane.f32.xlu0 %v6536
  %v6538 = vpop.xlane.xlu0 %6537
  %v6539 = vlog2.pop %v6535
  %v6540 = vmul.f32 %v6539, 0.6931472
  %v6541 = vlog2.pop %v6538
  %v6542 = vmul.f32 %v6541, 0.6931472
  %v6543 = vsub.f32 %v6527, %v6540
  %v6544 = vsub.f32 %v6528, %v6542
  %6545 = vst.msk [vmem:[%s9] sm:$0xff] %vm6520, %v6543
  %6546 = vst.msk [vmem:[%s9 + $0x8] sm:$0xff] %vm6520, %v6544
  // Predicated region
  $region38: #{simple_mnist_forward.1} parent=0 // pred_check
    _
  $region39: #{simple_mnist_forward.1} parent=0 // pred_check_branch
    %6548 = sbr.rel (0) target = $region41
  $region40: #{simple_mnist_forward.1} parent=0 // pred_region
    _
  $region41: #{simple_mnist_forward.1} parent=0 // pred_fallthru
    _
  // Predicated region
  $region42: #{simple_mnist_forward.1} parent=0 // pred_check
    _
  $region43: #{simple_mnist_forward.1} parent=0 // pred_check_branch
    %6550 = sbr.rel (0) target = $region45
  $region44: #{simple_mnist_forward.1} parent=0 // pred_region
    _
  $region45: #{simple_mnist_forward.1} parent=0 // pred_fallthru
    _

</llo_original>
